<compile_context>
chip_gen: v5e
topology: v5e:2x2
jax: 0.10.0
libtpu: 0.0.40
codegen_flags: <defaults>
</compile_context>

<pallas_src>
import jax
import jax.numpy as jnp
from jax import lax
from jax.experimental import pallas as pl
from jax.experimental.pallas import tpu as pltpu

BN_EPS = 1e-5


# ----------------------------------------------------------------------------
# Fused kernel: one grid step = one (batch row, branch) pair.
#   z   = relu(dw_conv_k(f) * bns + shift_k)        (branch conv, BN folded)
#   y   = dw_conv3x3_dil3(z) + bd                   (shared dw3x3, dilation 3)
#   out = f + y * (s_cw + s_hc + s_hw) / 3          (TripletAttention + residual)
# ----------------------------------------------------------------------------
def fem_kernel(f_ref, wb_ref, bsh_ref, wd_ref, bd_ref, b01_ref, b2_ref, gp_ref,
               o_ref, pad1, pad3, y_scr, g0, g1, g2, s2s):
    _, H, W, C = f_ref.shape
    PW = 8                                   # aligned sublane offset of interiors
    f32 = jnp.float32
    bk = pl.program_id(1)

    # Zero the zero-padding halos once per batch row.  Correct because the
    # branch axis is "arbitrary" (sequential on one core), interiors are fully
    # rewritten every step, and halos are never written afterwards.
    @pl.when(bk == 0)
    def _zero_halos():
        pad1[...] = jnp.zeros_like(pad1)
        pad3[...] = jnp.zeros_like(pad3)
        g0[...] = jnp.zeros_like(g0)
        g1[...] = jnp.zeros_like(g1)
        g2[...] = jnp.zeros_like(g2)

    # ---- branch depthwise conv (branch-specialized taps) --------------------
    shift = bsh_ref[0].astype(f32)           # [1, 1, C]  (= bb*bns + bnt, folded)

    def finish_z(z):                         # folded-BN shift + ReLU -> pad3
        pad3[3:3 + H, PW:PW + W, :] = jnp.maximum(z + shift, 0.0)

    @pl.when(bk != 0)                        # branch 0 never reads pad1
    def _fill_pad1():
        pad1[1:1 + H, PW:PW + W, :] = f_ref[0].astype(f32)

    @pl.when(bk == 0)                        # 1x1 depthwise: center tap only
    def _branch0():
        w = wb_ref[0].astype(f32)
        finish_z(f_ref[0].astype(f32) * w[1:2, 1:2])

    @pl.when(bk == 1)                        # 3x3 depthwise, pad 1
    def _branch1():
        w = wb_ref[0].astype(f32)
        z = pad1[0:H, PW - 1:PW - 1 + W, :] * w[0:1, 0:1]
        for i in range(3):
            for j in range(3):
                if i == 0 and j == 0:
                    continue
                z = z + pad1[i:i + H, PW - 1 + j:PW - 1 + j + W, :] * w[i:i + 1, j:j + 1]
        finish_z(z)

    @pl.when(bk == 2)                        # 1x3 depthwise, pad (0, 1)
    def _branch2():
        w = wb_ref[0].astype(f32)
        z = (pad1[1:1 + H, PW - 1:PW - 1 + W, :] * w[1:2, 0:1] +
             pad1[1:1 + H, PW:PW + W, :] * w[1:2, 1:2] +
             pad1[1:1 + H, PW + 1:PW + 1 + W, :] * w[1:2, 2:3])
        finish_z(z)

    @pl.when(bk == 3)                        # 3x1 depthwise, pad (1, 0)
    def _branch3():
        w = wb_ref[0].astype(f32)
        z = (pad1[0:H, PW:PW + W, :] * w[0:1, 1:2] +
             pad1[1:1 + H, PW:PW + W, :] * w[1:2, 1:2] +
             pad1[2:2 + H, PW:PW + W, :] * w[2:3, 1:2])
        finish_z(z)

    # ---- shared depthwise 3x3, dilation 3, pad 3 -----------------------------
    wd = wd_ref[...].astype(f32)             # [3, 3, C]
    y = pad3[0:H, PW - 3:PW - 3 + W, :] * wd[0:1, 0:1]
    for i in range(3):
        for j in range(3):
            if i == 0 and j == 0:
                continue
            y = y + (pad3[3 * i:3 * i + H, PW - 3 + 3 * j:PW - 3 + 3 * j + W, :] *
                     wd[i:i + 1, j:j + 1])
    y = y + bd_ref[...].astype(f32)
    y_scr[...] = y                           # park y; gates/epilogue re-read VMEM

    # ---- TripletAttention pooled maps (single pass, no narrow stores) --------
    #   gate0 (ChannelGateH): pool over H -> [W, C]
    #   gate1 (ChannelGateW): pool over W -> [H, C]
    #   gate2 (SpatialGate) : pool over C -> stored TRANSPOSED as [W, H]
    p0max = p0sum = None
    p1max = jnp.zeros((H, C), f32)
    p1sum = jnp.zeros((H, C), f32)
    p2maxT = jnp.zeros((W, H), f32)
    p2sumT = jnp.zeros((W, H), f32)
    row_sel = lax.broadcasted_iota(jnp.int32, (H, C), 0)
    col_sel = lax.broadcasted_iota(jnp.int32, (W, H), 1)
    for h in range(H):
        yr = y_scr[h]                                        # [W, C]
        if h == 0:
            p0max, p0sum = yr, yr
        else:
            p0max = jnp.maximum(p0max, yr)
            p0sum = p0sum + yr
        rmax = jnp.max(yr, axis=0, keepdims=True)            # [1, C]
        rsum = jnp.sum(yr, axis=0, keepdims=True)
        p1max = jnp.where(row_sel == h, rmax, p1max)
        p1sum = jnp.where(row_sel == h, rsum, p1sum)
        cmax = jnp.max(yr, axis=1, keepdims=True)            # [W, 1]
        csum = jnp.sum(yr, axis=1, keepdims=True)
        p2maxT = jnp.where(col_sel == h, cmax, p2maxT)
        p2sumT = jnp.where(col_sel == h, csum, p2sumT)

    # lane-dense interior stores (max in lanes [0, L), mean in [L, 2L))
    g0[3:3 + W, 0:C] = p0max
    g0[3:3 + W, C:2 * C] = p0sum * (1.0 / H)
    g1[3:3 + H, 0:C] = p1max
    g1[3:3 + H, C:2 * C] = p1sum * (1.0 / W)
    g2[3:3 + W, 0:H] = p2maxT
    g2[3:3 + W, H:2 * H] = p2sumT * (1.0 / C)

    # ---- 7x7 (2 -> 1) gate convolutions as banded MXU matmuls + sigmoid ------
    # Lane-axis taps live in the banded [2L, L] weight matrices; row-axis taps
    # are 7 sublane-offset reads of the rows-zero-padded map.
    def conv7(scr, band, R):
        acc = jnp.dot(scr[0:R, :], band(0), preferred_element_type=f32)
        for dr in range(1, 7):
            acc = acc + jnp.dot(scr[dr:dr + R, :], band(dr),
                                preferred_element_type=f32)
        return acc

    s_cw = jax.nn.sigmoid(conv7(g0, lambda d: b01_ref[0, d], W) + gp_ref[0])  # [W, C]
    s_hc = jax.nn.sigmoid(conv7(g1, lambda d: b01_ref[1, d], H) + gp_ref[1])  # [H, C]
    s2s[...] = jax.nn.sigmoid(conv7(g2, lambda d: b2_ref[d], W) + gp_ref[2])  # [W, H]

    # ---- attention scale + residual, one output row at a time ----------------
    third = 1.0 / 3.0
    for h in range(H):
        col = s2s[:, h:h + 1]                                # [W, 1] narrow load
        sc = (s_cw + s_hc[h:h + 1, :] + col) * third         # [W, C]
        o_ref[0, h] = (f_ref[0, h].astype(f32) + y_scr[h] * sc).astype(o_ref.dtype)


def _fem_pallas(x, wbk, bshk, wd, bd, band01, band2, gp3):
    B, H, W, Ct = x.shape
    C = Ct // 4
    # Total resident VMEM at 16x16 is ~5 MiB (incl. 1.75 MiB f32 band weights):
    # well under default scoped limits on v5e/v6e/v7x.
    return pl.pallas_call(
        fem_kernel,
        out_shape=jax.ShapeDtypeStruct((B, H, W, Ct), x.dtype),
        grid=(B, 4),
        in_specs=[
            pl.BlockSpec((1, H, W, C), lambda b, k: (b, 0, 0, k)),      # x chunk
            pl.BlockSpec((1, 3, 3, C), lambda b, k: (k, 0, 0, 0)),      # branch dw weight (BN-scaled)
            pl.BlockSpec((1, 1, 1, C), lambda b, k: (k, 0, 0, 0)),      # folded branch bias+BN shift
            pl.BlockSpec((3, 3, C), lambda b, k: (0, 0, 0)),            # shared dw3x3 weight
            pl.BlockSpec((1, 1, C), lambda b, k: (0, 0, 0)),            # shared dw3x3 bias
            pl.BlockSpec((2, 7, 2 * C, C), lambda b, k: (0, 0, 0, 0)),  # gate0/1 banded weights
            pl.BlockSpec((7, 2 * H, H), lambda b, k: (0, 0, 0)),        # gate2 banded weights
            pl.BlockSpec(memory_space=pltpu.MemorySpace.SMEM),          # gate BN shifts (3,)
        ],
        out_specs=pl.BlockSpec((1, H, W, C), lambda b, k: (b, 0, 0, k)),
        scratch_shapes=[
            pltpu.VMEM((H + 2, W + 16, C), jnp.float32),   # branch-conv zero pad (interior @ col 8)
            pltpu.VMEM((H + 6, W + 16, C), jnp.float32),   # dilated-conv zero pad (interior @ col 8)
            pltpu.VMEM((H, W, C), jnp.float32),            # y (dw3x3 output)
            pltpu.VMEM((W + 6, 2 * C), jnp.float32),       # gate0 pooled map, rows-padded
            pltpu.VMEM((H + 6, 2 * C), jnp.float32),       # gate1 pooled map, rows-padded
            pltpu.VMEM((W + 6, 2 * H), jnp.float32),       # gate2 pooled map (transposed), rows-padded
            pltpu.VMEM((W, H), jnp.float32),               # gate2 sigmoid (transposed)
        ],
        compiler_params=pltpu.CompilerParams(
            dimension_semantics=("parallel", "arbitrary")),
    )(x, wbk, bshk, wd, bd, band01, band2, gp3)


# ----------------------------------------------------------------------------
# Wrapper: fold biases/BN, build the banded gate-conv weight matrices.
# ----------------------------------------------------------------------------
def _band_matrices(wt, L, scale):
    """wt: [2, 7, 7] as (pool_ch, row_tap, lane_tap) -> [7, 2L, L] band matrices."""
    i = jnp.arange(L)[:, None]
    o = jnp.arange(L)[None, :]
    d = i - o + 3
    valid = ((d >= 0) & (d <= 6)).astype(jnp.float32)
    dc = jnp.clip(d, 0, 6)
    b = wt[:, :, dc] * valid[None, None]                   # [2, 7, L, L]
    b = jnp.transpose(b, (1, 0, 2, 3)).reshape(7, 2 * L, L)
    return (b * scale).astype(jnp.float32)


def fem_forward(x, P):
    # x: [B, H, W, 4*128] NHWC  (NCHW module input transposed)
    B, H, W, Ct = x.shape
    assert Ct % 4 == 0, "FEM expects 4 channel chunks"
    C = Ct // 4
    assert C == 128, "FEM module hard-codes 128-channel depthwise branches"

    bns = P["bns"]
    wbk = (P["wb_s"] * bns[None, None, None, :]).astype(jnp.float32)          # fold BN scale into weights
    bshk = (P["bb_s"] * bns[None, :] + P["bnt"][None, :]).reshape(4, 1, 1, C)  # fold conv bias into BN shift

    # gate0 conv spatial = (C, W): row tap = kw, lane tap = kc -> swap taps
    wt0 = jnp.transpose(P["gw"][0], (0, 2, 1))
    # gate1 conv spatial = (H, C): row tap = kh, lane tap = kc
    wt1 = P["gw"][1]
    # gate2 conv spatial = (H, W), map stored transposed [W, H]: row = kw, lane = kh
    wt2 = jnp.transpose(P["gw"][2], (0, 2, 1))
    band01 = jnp.stack([_band_matrices(wt0, C, P["g_scale"]),
                        _band_matrices(wt1, C, P["g_scale"])], axis=0)        # [2, 7, 2C, C]
    band2 = _band_matrices(wt2, H, P["g_scale"])                               # [7, 2H, H]
    gp3 = jnp.stack([P["g_shift"], P["g_shift"], P["g_shift"]]).astype(jnp.float32)

    return _fem_pallas(x, wbk, bshk, P["wd"], P["bd"].reshape(1, 1, C),
                       band01, band2, gp3)


# ----------------------------------------------------------------------------
# Deterministic parameter construction (mirrors FEM.__init__ shapes / init).
# ----------------------------------------------------------------------------
def make_params(key, C=128):
    ks = jax.random.split(key, 12)

    def dw_weight(k, kh, kw):
        n = kh * kw * C                          # m.weight ~ N(0, sqrt(2/n))
        w = jax.random.normal(k, (kh, kw, C), jnp.float32) * jnp.sqrt(2.0 / n)
        w33 = jnp.zeros((3, 3, C), jnp.float32)
        r0, c0 = (3 - kh) // 2, (3 - kw) // 2
        return w33.at[r0:r0 + kh, c0:c0 + kw, :].set(w)   # embed 1x1/1x3/3x1 into 3x3

    wb_s = jnp.stack([dw_weight(ks[0], 1, 1), dw_weight(ks[1], 3, 3),
                      dw_weight(ks[2], 1, 3), dw_weight(ks[3], 3, 1)], axis=0)
    bb_s = jnp.stack([jax.random.uniform(ks[4 + i], (C,), jnp.float32, -0.1, 0.1)
                      for i in range(4)], axis=0)
    wd = jax.random.normal(ks[8], (3, 3, C), jnp.float32) * jnp.sqrt(2.0 / (9 * C))
    bd = jax.random.uniform(ks[9], (C,), jnp.float32, -0.1, 0.1)

    # branch BNs: gamma=1, beta=0, mean=0, var=1 -> inference scale/shift
    bns = jnp.full((C,), 1.0 / jnp.sqrt(1.0 + BN_EPS), jnp.float32)
    bnt = jnp.zeros((C,), jnp.float32)

    # three SpatialGate 7x7 convs (2->1 channels, bias=False), n = 7*7*1
    gw = jax.random.normal(ks[10], (3, 2, 7, 7), jnp.float32) * jnp.sqrt(2.0 / 49.0)
    g_scale = jnp.float32(1.0 / jnp.sqrt(1.0 + BN_EPS))
    g_shift = jnp.float32(0.0)

    return dict(wb_s=wb_s, bb_s=bb_s, bns=bns, bnt=bnt, wd=wd, bd=bd,
                gw=gw, g_scale=g_scale, g_shift=g_shift)


# ----------------------------------------------------------------------------
# Pure-JAX reference (NHWC) for validation.
# ----------------------------------------------------------------------------
def _depthwise_ref(x, w_hwc, pad, dil):
    kh, kw, C = w_hwc.shape
    w4 = w_hwc.reshape(kh, kw, 1, C)
    return lax.conv_general_dilated(
        x, w4, window_strides=(1, 1), padding=[(pad, pad), (pad, pad)],
        rhs_dilation=(dil, dil), dimension_numbers=("NHWC", "HWIO", "NHWC"),
        feature_group_count=C)


def _gate_conv_ref(p, w):                      # p: [B, A, D, 2], w: [2, 7, 7]
    w4 = jnp.transpose(w, (1, 2, 0))[:, :, :, None]
    out = lax.conv_general_dilated(
        p, w4, (1, 1), [(3, 3), (3, 3)],
        dimension_numbers=("NHWC", "HWIO", "NHWC"))
    return out[..., 0]


def _triplet_ref(y, gw0, gw1, gw2, g_scale, g_shift):
    p0 = jnp.stack([jnp.max(y, axis=1), jnp.mean(y, axis=1)], axis=-1)   # [B,W,C,2]
    p0 = jnp.transpose(p0, (0, 2, 1, 3))                                 # [B,C,W,2]
    s0 = jax.nn.sigmoid(_gate_conv_ref(p0, gw0) * g_scale + g_shift)     # [B,C,W]
    t0 = jnp.transpose(s0, (0, 2, 1))[:, None, :, :]                     # [B,1,W,C]

    p1 = jnp.stack([jnp.max(y, axis=2), jnp.mean(y, axis=2)], axis=-1)   # [B,H,C,2]
    s1 = jax.nn.sigmoid(_gate_conv_ref(p1, gw1) * g_scale + g_shift)     # [B,H,C]
    t1 = s1[:, :, None, :]

    p2 = jnp.stack([jnp.max(y, axis=3), jnp.mean(y, axis=3)], axis=-1)   # [B,H,W,2]
    s2 = jax.nn.sigmoid(_gate_conv_ref(p2, gw2) * g_scale + g_shift)     # [B,H,W]
    t2 = s2[:, :, :, None]
    return y * ((t0 + t1 + t2) / 3.0)


def ref_fem(x, P):
    B, H, W, Ct = x.shape
    C = Ct // 4
    bns = P["bns"].reshape(1, 1, 1, C)
    bnt = P["bnt"].reshape(1, 1, 1, C)
    outs = []
    for k in range(4):
        f = x[..., k * C:(k + 1) * C]
        z = _depthwise_ref(f, P["wb_s"][k], 1, 1) + P["bb_s"][k].reshape(1, 1, 1, C)
        z = jnp.maximum(z * bns + bnt, 0.0)
        y = _depthwise_ref(z, P["wd"], 3, 3) + P["bd"].reshape(1, 1, 1, C)
        outs.append(f + _triplet_ref(y, P["gw"][0], P["gw"][1], P["gw"][2],
                                     P["g_scale"], P["g_shift"]))
    return jnp.concatenate(outs, axis=-1)


if __name__ == "__main__":
    B, H, W, C = 2, 16, 16, 128                       # FEM: 4 branches of 128 channels
    key = jax.random.PRNGKey(0)
    k_x, k_p = jax.random.split(key)
    # NHWC input (the NCHW module input [2, 512, 16, 16] transposed to NHWC)
    x = jax.random.normal(k_x, (B, H, W, 4 * C), jnp.float32)
    P = make_params(k_p, C)

    out = jax.block_until_ready(jax.jit(fem_forward)(x, P))
    ref = jax.block_until_ready(ref_fem(x, P))
    if not bool(jnp.allclose(out, ref, atol=2e-3, rtol=2e-3)):
        raise AssertionError(
            f"kernel/reference mismatch, max abs err = {float(jnp.max(jnp.abs(out - ref)))}")
    print("KERNEL_OK")
</pallas_src>

<mosaic_0001>
module attributes {stable_mosaic.version = 11 : i64} {
  func.func @fem_kernel(%arg0: i32, %arg1: i32, %arg2: memref<1x16x16x128xf32, #tpu.memory_space<vmem>>, %arg3: memref<1x3x3x128xf32, #tpu.memory_space<vmem>>, %arg4: memref<1x1x1x128xf32, #tpu.memory_space<vmem>>, %arg5: memref<3x3x128xf32, #tpu.memory_space<vmem>>, %arg6: memref<1x1x128xf32, #tpu.memory_space<vmem>>, %arg7: memref<2x7x256x128xf32, #tpu.memory_space<vmem>>, %arg8: memref<7x32x16xf32, #tpu.memory_space<vmem>>, %arg9: memref<3xf32, #tpu.memory_space<smem>>, %arg10: memref<1x16x16x128xf32, #tpu.memory_space<vmem>>, %arg11: memref<18x32x128xf32, #tpu.memory_space<vmem>>, %arg12: memref<22x32x128xf32, #tpu.memory_space<vmem>>, %arg13: memref<16x16x128xf32, #tpu.memory_space<vmem>>, %arg14: memref<22x256xf32, #tpu.memory_space<vmem>>, %arg15: memref<22x256xf32, #tpu.memory_space<vmem>>, %arg16: memref<22x32xf32, #tpu.memory_space<vmem>>, %arg17: memref<16x16xf32, #tpu.memory_space<vmem>>) attributes {dimension_semantics = [#tpu.dimension_semantics<parallel>, #tpu.dimension_semantics<arbitrary>], iteration_bounds = array<i64: 2, 4>, scalar_prefetch = 0 : i64, scratch_operands = 7 : i64, tpu.core_type = #tpu.core_type<tc>, window_params = [{transform_indices = @transform_0, window_bounds = array<i64: 1, 16, 16, 128>}, {transform_indices = @transform_1, window_bounds = array<i64: 1, 3, 3, 128>}, {transform_indices = @transform_2, window_bounds = array<i64: 1, 1, 1, 128>}, {pipeline_mode = #tpu.pipeline_mode<synchronous>, transform_indices = @transform_3, window_bounds = array<i64: 3, 3, 128>}, {pipeline_mode = #tpu.pipeline_mode<synchronous>, transform_indices = @transform_4, window_bounds = array<i64: 1, 1, 128>}, {pipeline_mode = #tpu.pipeline_mode<synchronous>, transform_indices = @transform_5, window_bounds = array<i64: 2, 7, 256, 128>}, {pipeline_mode = #tpu.pipeline_mode<synchronous>, transform_indices = @transform_6, window_bounds = array<i64: 7, 32, 16>}, {transform_indices = @transform_7, window_bounds = array<i64: 3>}, {transform_indices = @transform_8, window_bounds = array<i64: 1, 16, 16, 128>}]} {
    %c0_i32 = arith.constant 0 : i32
    %0 = arith.cmpi eq, %arg1, %c0_i32 : i32
    %1 = arith.extui %0 : i1 to i32
    %c0_i32_0 = arith.constant 0 : i32
    %2 = arith.cmpi ne, %1, %c0_i32_0 : i32
    scf.if %2 {
      %cst_584 = arith.constant 0.000000e+00 : f32
      %996 = vector.broadcast %cst_584 : f32 to vector<18x32x128xf32>
      %c0_585 = arith.constant 0 : index
      %c0_586 = arith.constant 0 : index
      %c0_587 = arith.constant 0 : index
      %997 = vector.load %arg11[%c0_585, %c0_586, %c0_587] : memref<18x32x128xf32, #tpu.memory_space<vmem>>, vector<18x32x128xf32>
      tpu.vector_store %arg11[%c0_585, %c0_586, %c0_587], %996 {strides = array<i32>} : memref<18x32x128xf32, #tpu.memory_space<vmem>>, vector<18x32x128xf32>,
      %cst_588 = arith.constant 0.000000e+00 : f32
      %998 = vector.broadcast %cst_588 : f32 to vector<22x32x128xf32>
      %c0_589 = arith.constant 0 : index
      %c0_590 = arith.constant 0 : index
      %c0_591 = arith.constant 0 : index
      %999 = vector.load %arg12[%c0_589, %c0_590, %c0_591] : memref<22x32x128xf32, #tpu.memory_space<vmem>>, vector<22x32x128xf32>
      tpu.vector_store %arg12[%c0_589, %c0_590, %c0_591], %998 {strides = array<i32>} : memref<22x32x128xf32, #tpu.memory_space<vmem>>, vector<22x32x128xf32>,
      %cst_592 = arith.constant 0.000000e+00 : f32
      %1000 = vector.broadcast %cst_592 : f32 to vector<22x256xf32>
      %c0_593 = arith.constant 0 : index
      %c0_594 = arith.constant 0 : index
      %1001 = vector.load %arg14[%c0_593, %c0_594] : memref<22x256xf32, #tpu.memory_space<vmem>>, vector<22x256xf32>
      tpu.vector_store %arg14[%c0_593, %c0_594], %1000 {strides = array<i32>} : memref<22x256xf32, #tpu.memory_space<vmem>>, vector<22x256xf32>,
      %cst_595 = arith.constant 0.000000e+00 : f32
      %1002 = vector.broadcast %cst_595 : f32 to vector<22x256xf32>
      %c0_596 = arith.constant 0 : index
      %c0_597 = arith.constant 0 : index
      %1003 = vector.load %arg15[%c0_596, %c0_597] : memref<22x256xf32, #tpu.memory_space<vmem>>, vector<22x256xf32>
      tpu.vector_store %arg15[%c0_596, %c0_597], %1002 {strides = array<i32>} : memref<22x256xf32, #tpu.memory_space<vmem>>, vector<22x256xf32>,
      %cst_598 = arith.constant 0.000000e+00 : f32
      %1004 = vector.broadcast %cst_598 : f32 to vector<22x32xf32>
      %c0_599 = arith.constant 0 : index
      %c0_600 = arith.constant 0 : index
      %1005 = vector.load %arg16[%c0_599, %c0_600] : memref<22x32xf32, #tpu.memory_space<vmem>>, vector<22x32xf32>
      tpu.vector_store %arg16[%c0_599, %c0_600], %1004 {strides = array<i32>} : memref<22x32xf32, #tpu.memory_space<vmem>>, vector<22x32xf32>,
    } else {
    }
    %c0 = arith.constant 0 : index
    %c0_1 = arith.constant 0 : index
    %c0_2 = arith.constant 0 : index
    %c0_3 = arith.constant 0 : index
    %3 = vector.load %arg4[%c0, %c0_1, %c0_2, %c0_3] : memref<1x1x1x128xf32, #tpu.memory_space<vmem>>, vector<1x1x1x128xf32>
    %4 = vector.shape_cast %3 : vector<1x1x1x128xf32> to vector<1x1x128xf32>
    %c0_i32_4 = arith.constant 0 : i32
    %5 = arith.cmpi ne, %arg1, %c0_i32_4 : i32
    %6 = arith.extui %5 : i1 to i32
    %c0_i32_5 = arith.constant 0 : i32
    %7 = arith.cmpi ne, %6, %c0_i32_5 : i32
    scf.if %7 {
      %c0_584 = arith.constant 0 : index
      %c0_585 = arith.constant 0 : index
      %c0_586 = arith.constant 0 : index
      %c0_587 = arith.constant 0 : index
      %996 = vector.load %arg2[%c0_584, %c0_585, %c0_586, %c0_587] : memref<1x16x16x128xf32, #tpu.memory_space<vmem>>, vector<1x16x16x128xf32>
      %997 = vector.shape_cast %996 : vector<1x16x16x128xf32> to vector<16x16x128xf32>
      %c1_588 = arith.constant 1 : index
      %c8_589 = arith.constant 8 : index
      %c0_590 = arith.constant 0 : index
      %998 = vector.load %arg11[%c1_588, %c8_589, %c0_590] : memref<18x32x128xf32, #tpu.memory_space<vmem>>, vector<16x16x128xf32>
      tpu.vector_store %arg11[%c1_588, %c8_589, %c0_590], %997 {strides = array<i32>} : memref<18x32x128xf32, #tpu.memory_space<vmem>>, vector<16x16x128xf32>,
    } else {
    }
    %c0_i32_6 = arith.constant 0 : i32
    %8 = arith.cmpi eq, %arg1, %c0_i32_6 : i32
    %9 = arith.extui %8 : i1 to i32
    %c0_i32_7 = arith.constant 0 : i32
    %10 = arith.cmpi ne, %9, %c0_i32_7 : i32
    scf.if %10 {
      %c0_584 = arith.constant 0 : index
      %c0_585 = arith.constant 0 : index
      %c0_586 = arith.constant 0 : index
      %c0_587 = arith.constant 0 : index
      %996 = vector.load %arg3[%c0_584, %c0_585, %c0_586, %c0_587] : memref<1x3x3x128xf32, #tpu.memory_space<vmem>>, vector<1x3x3x128xf32>
      %997 = vector.shape_cast %996 : vector<1x3x3x128xf32> to vector<3x3x128xf32>
      %c0_588 = arith.constant 0 : index
      %c0_589 = arith.constant 0 : index
      %c0_590 = arith.constant 0 : index
      %c0_591 = arith.constant 0 : index
      %998 = vector.load %arg2[%c0_588, %c0_589, %c0_590, %c0_591] : memref<1x16x16x128xf32, #tpu.memory_space<vmem>>, vector<1x16x16x128xf32>
      %999 = vector.shape_cast %998 : vector<1x16x16x128xf32> to vector<16x16x128xf32>
      %1000 = vector.extract_strided_slice %997 {offsets = [1, 1, 0], sizes = [1, 1, 128], strides = [1, 1, 1]} : vector<3x3x128xf32> to vector<1x1x128xf32>
      %1001 = vector.broadcast %1000 : vector<1x1x128xf32> to vector<16x16x128xf32>
      %1002 = arith.mulf %999, %1001 : vector<16x16x128xf32>
      %1003 = vector.broadcast %4 : vector<1x1x128xf32> to vector<16x16x128xf32>
      %1004 = arith.addf %1002, %1003 : vector<16x16x128xf32>
      %cst_592 = arith.constant 0.000000e+00 : f32
      %1005 = vector.broadcast %cst_592 : f32 to vector<16x16x128xf32>
      %1006 = arith.maximumf %1004, %1005 : vector<16x16x128xf32>
      %c3_593 = arith.constant 3 : index
      %c8_594 = arith.constant 8 : index
      %c0_595 = arith.constant 0 : index
      %1007 = vector.load %arg12[%c3_593, %c8_594, %c0_595] : memref<22x32x128xf32, #tpu.memory_space<vmem>>, vector<16x16x128xf32>
      tpu.vector_store %arg12[%c3_593, %c8_594, %c0_595], %1006 {strides = array<i32>} : memref<22x32x128xf32, #tpu.memory_space<vmem>>, vector<16x16x128xf32>,
    } else {
    }
    %c1_i32 = arith.constant 1 : i32
    %11 = arith.cmpi eq, %arg1, %c1_i32 : i32
    %12 = arith.extui %11 : i1 to i32
    %c0_i32_8 = arith.constant 0 : i32
    %13 = arith.cmpi ne, %12, %c0_i32_8 : i32
    scf.if %13 {
      %c0_584 = arith.constant 0 : index
      %c0_585 = arith.constant 0 : index
      %c0_586 = arith.constant 0 : index
      %c0_587 = arith.constant 0 : index
      %996 = vector.load %arg3[%c0_584, %c0_585, %c0_586, %c0_587] : memref<1x3x3x128xf32, #tpu.memory_space<vmem>>, vector<1x3x3x128xf32>
      %997 = vector.shape_cast %996 : vector<1x3x3x128xf32> to vector<3x3x128xf32>
      %c0_588 = arith.constant 0 : index
      %c7_589 = arith.constant 7 : index
      %c0_590 = arith.constant 0 : index
      %998 = vector.load %arg11[%c0_588, %c7_589, %c0_590] : memref<18x32x128xf32, #tpu.memory_space<vmem>>, vector<16x16x128xf32>
      %999 = vector.extract_strided_slice %997 {offsets = [0, 0, 0], sizes = [1, 1, 128], strides = [1, 1, 1]} : vector<3x3x128xf32> to vector<1x1x128xf32>
      %1000 = vector.broadcast %999 : vector<1x1x128xf32> to vector<16x16x128xf32>
      %1001 = arith.mulf %998, %1000 : vector<16x16x128xf32>
      %c0_591 = arith.constant 0 : index
      %c8_592 = arith.constant 8 : index
      %c0_593 = arith.constant 0 : index
      %1002 = vector.load %arg11[%c0_591, %c8_592, %c0_593] : memref<18x32x128xf32, #tpu.memory_space<vmem>>, vector<16x16x128xf32>
      %1003 = vector.extract_strided_slice %997 {offsets = [0, 1, 0], sizes = [1, 1, 128], strides = [1, 1, 1]} : vector<3x3x128xf32> to vector<1x1x128xf32>
      %1004 = vector.broadcast %1003 : vector<1x1x128xf32> to vector<16x16x128xf32>
      %1005 = arith.mulf %1002, %1004 : vector<16x16x128xf32>
      %1006 = arith.addf %1001, %1005 : vector<16x16x128xf32>
      %c0_594 = arith.constant 0 : index
      %c9_595 = arith.constant 9 : index
      %c0_596 = arith.constant 0 : index
      %1007 = vector.load %arg11[%c0_594, %c9_595, %c0_596] : memref<18x32x128xf32, #tpu.memory_space<vmem>>, vector<16x16x128xf32>
      %1008 = vector.extract_strided_slice %997 {offsets = [0, 2, 0], sizes = [1, 1, 128], strides = [1, 1, 1]} : vector<3x3x128xf32> to vector<1x1x128xf32>
      %1009 = vector.broadcast %1008 : vector<1x1x128xf32> to vector<16x16x128xf32>
      %1010 = arith.mulf %1007, %1009 : vector<16x16x128xf32>
      %1011 = arith.addf %1006, %1010 : vector<16x16x128xf32>
      %c1_597 = arith.constant 1 : index
      %c7_598 = arith.constant 7 : index
      %c0_599 = arith.constant 0 : index
      %1012 = vector.load %arg11[%c1_597, %c7_598, %c0_599] : memref<18x32x128xf32, #tpu.memory_space<vmem>>, vector<16x16x128xf32>
      %1013 = vector.extract_strided_slice %997 {offsets = [1, 0, 0], sizes = [1, 1, 128], strides = [1, 1, 1]} : vector<3x3x128xf32> to vector<1x1x128xf32>
      %1014 = vector.broadcast %1013 : vector<1x1x128xf32> to vector<16x16x128xf32>
      %1015 = arith.mulf %1012, %1014 : vector<16x16x128xf32>
      %1016 = arith.addf %1011, %1015 : vector<16x16x128xf32>
      %c1_600 = arith.constant 1 : index
      %c8_601 = arith.constant 8 : index
      %c0_602 = arith.constant 0 : index
      %1017 = vector.load %arg11[%c1_600, %c8_601, %c0_602] : memref<18x32x128xf32, #tpu.memory_space<vmem>>, vector<16x16x128xf32>
      %1018 = vector.extract_strided_slice %997 {offsets = [1, 1, 0], sizes = [1, 1, 128], strides = [1, 1, 1]} : vector<3x3x128xf32> to vector<1x1x128xf32>
      %1019 = vector.broadcast %1018 : vector<1x1x128xf32> to vector<16x16x128xf32>
      %1020 = arith.mulf %1017, %1019 : vector<16x16x128xf32>
      %1021 = arith.addf %1016, %1020 : vector<16x16x128xf32>
      %c1_603 = arith.constant 1 : index
      %c9_604 = arith.constant 9 : index
      %c0_605 = arith.constant 0 : index
      %1022 = vector.load %arg11[%c1_603, %c9_604, %c0_605] : memref<18x32x128xf32, #tpu.memory_space<vmem>>, vector<16x16x128xf32>
      %1023 = vector.extract_strided_slice %997 {offsets = [1, 2, 0], sizes = [1, 1, 128], strides = [1, 1, 1]} : vector<3x3x128xf32> to vector<1x1x128xf32>
      %1024 = vector.broadcast %1023 : vector<1x1x128xf32> to vector<16x16x128xf32>
      %1025 = arith.mulf %1022, %1024 : vector<16x16x128xf32>
      %1026 = arith.addf %1021, %1025 : vector<16x16x128xf32>
      %c2_606 = arith.constant 2 : index
      %c7_607 = arith.constant 7 : index
      %c0_608 = arith.constant 0 : index
      %1027 = vector.load %arg11[%c2_606, %c7_607, %c0_608] : memref<18x32x128xf32, #tpu.memory_space<vmem>>, vector<16x16x128xf32>
      %1028 = vector.extract_strided_slice %997 {offsets = [2, 0, 0], sizes = [1, 1, 128], strides = [1, 1, 1]} : vector<3x3x128xf32> to vector<1x1x128xf32>
      %1029 = vector.broadcast %1028 : vector<1x1x128xf32> to vector<16x16x128xf32>
      %1030 = arith.mulf %1027, %1029 : vector<16x16x128xf32>
      %1031 = arith.addf %1026, %1030 : vector<16x16x128xf32>
      %c2_609 = arith.constant 2 : index
      %c8_610 = arith.constant 8 : index
      %c0_611 = arith.constant 0 : index
      %1032 = vector.load %arg11[%c2_609, %c8_610, %c0_611] : memref<18x32x128xf32, #tpu.memory_space<vmem>>, vector<16x16x128xf32>
      %1033 = vector.extract_strided_slice %997 {offsets = [2, 1, 0], sizes = [1, 1, 128], strides = [1, 1, 1]} : vector<3x3x128xf32> to vector<1x1x128xf32>
      %1034 = vector.broadcast %1033 : vector<1x1x128xf32> to vector<16x16x128xf32>
      %1035 = arith.mulf %1032, %1034 : vector<16x16x128xf32>
      %1036 = arith.addf %1031, %1035 : vector<16x16x128xf32>
      %c2_612 = arith.constant 2 : index
      %c9_613 = arith.constant 9 : index
      %c0_614 = arith.constant 0 : index
      %1037 = vector.load %arg11[%c2_612, %c9_613, %c0_614] : memref<18x32x128xf32, #tpu.memory_space<vmem>>, vector<16x16x128xf32>
      %1038 = vector.extract_strided_slice %997 {offsets = [2, 2, 0], sizes = [1, 1, 128], strides = [1, 1, 1]} : vector<3x3x128xf32> to vector<1x1x128xf32>
      %1039 = vector.broadcast %1038 : vector<1x1x128xf32> to vector<16x16x128xf32>
      %1040 = arith.mulf %1037, %1039 : vector<16x16x128xf32>
      %1041 = arith.addf %1036, %1040 : vector<16x16x128xf32>
      %1042 = vector.broadcast %4 : vector<1x1x128xf32> to vector<16x16x128xf32>
      %1043 = arith.addf %1041, %1042 : vector<16x16x128xf32>
      %cst_615 = arith.constant 0.000000e+00 : f32
      %1044 = vector.broadcast %cst_615 : f32 to vector<16x16x128xf32>
      %1045 = arith.maximumf %1043, %1044 : vector<16x16x128xf32>
      %c3_616 = arith.constant 3 : index
      %c8_617 = arith.constant 8 : index
      %c0_618 = arith.constant 0 : index
      %1046 = vector.load %arg12[%c3_616, %c8_617, %c0_618] : memref<22x32x128xf32, #tpu.memory_space<vmem>>, vector<16x16x128xf32>
      tpu.vector_store %arg12[%c3_616, %c8_617, %c0_618], %1045 {strides = array<i32>} : memref<22x32x128xf32, #tpu.memory_space<vmem>>, vector<16x16x128xf32>,
    } else {
    }
    %c2_i32 = arith.constant 2 : i32
    %14 = arith.cmpi eq, %arg1, %c2_i32 : i32
    %15 = arith.extui %14 : i1 to i32
    %c0_i32_9 = arith.constant 0 : i32
    %16 = arith.cmpi ne, %15, %c0_i32_9 : i32
    scf.if %16 {
      %c0_584 = arith.constant 0 : index
      %c0_585 = arith.constant 0 : index
      %c0_586 = arith.constant 0 : index
      %c0_587 = arith.constant 0 : index
      %996 = vector.load %arg3[%c0_584, %c0_585, %c0_586, %c0_587] : memref<1x3x3x128xf32, #tpu.memory_space<vmem>>, vector<1x3x3x128xf32>
      %997 = vector.shape_cast %996 : vector<1x3x3x128xf32> to vector<3x3x128xf32>
      %c1_588 = arith.constant 1 : index
      %c7_589 = arith.constant 7 : index
      %c0_590 = arith.constant 0 : index
      %998 = vector.load %arg11[%c1_588, %c7_589, %c0_590] : memref<18x32x128xf32, #tpu.memory_space<vmem>>, vector<16x16x128xf32>
      %999 = vector.extract_strided_slice %997 {offsets = [1, 0, 0], sizes = [1, 1, 128], strides = [1, 1, 1]} : vector<3x3x128xf32> to vector<1x1x128xf32>
      %1000 = vector.broadcast %999 : vector<1x1x128xf32> to vector<16x16x128xf32>
      %1001 = arith.mulf %998, %1000 : vector<16x16x128xf32>
      %c1_591 = arith.constant 1 : index
      %c8_592 = arith.constant 8 : index
      %c0_593 = arith.constant 0 : index
      %1002 = vector.load %arg11[%c1_591, %c8_592, %c0_593] : memref<18x32x128xf32, #tpu.memory_space<vmem>>, vector<16x16x128xf32>
      %1003 = vector.extract_strided_slice %997 {offsets = [1, 1, 0], sizes = [1, 1, 128], strides = [1, 1, 1]} : vector<3x3x128xf32> to vector<1x1x128xf32>
      %1004 = vector.broadcast %1003 : vector<1x1x128xf32> to vector<16x16x128xf32>
      %1005 = arith.mulf %1002, %1004 : vector<16x16x128xf32>
      %1006 = arith.addf %1001, %1005 : vector<16x16x128xf32>
      %c1_594 = arith.constant 1 : index
      %c9_595 = arith.constant 9 : index
      %c0_596 = arith.constant 0 : index
      %1007 = vector.load %arg11[%c1_594, %c9_595, %c0_596] : memref<18x32x128xf32, #tpu.memory_space<vmem>>, vector<16x16x128xf32>
      %1008 = vector.extract_strided_slice %997 {offsets = [1, 2, 0], sizes = [1, 1, 128], strides = [1, 1, 1]} : vector<3x3x128xf32> to vector<1x1x128xf32>
      %1009 = vector.broadcast %1008 : vector<1x1x128xf32> to vector<16x16x128xf32>
      %1010 = arith.mulf %1007, %1009 : vector<16x16x128xf32>
      %1011 = arith.addf %1006, %1010 : vector<16x16x128xf32>
      %1012 = vector.broadcast %4 : vector<1x1x128xf32> to vector<16x16x128xf32>
      %1013 = arith.addf %1011, %1012 : vector<16x16x128xf32>
      %cst_597 = arith.constant 0.000000e+00 : f32
      %1014 = vector.broadcast %cst_597 : f32 to vector<16x16x128xf32>
      %1015 = arith.maximumf %1013, %1014 : vector<16x16x128xf32>
      %c3_598 = arith.constant 3 : index
      %c8_599 = arith.constant 8 : index
      %c0_600 = arith.constant 0 : index
      %1016 = vector.load %arg12[%c3_598, %c8_599, %c0_600] : memref<22x32x128xf32, #tpu.memory_space<vmem>>, vector<16x16x128xf32>
      tpu.vector_store %arg12[%c3_598, %c8_599, %c0_600], %1015 {strides = array<i32>} : memref<22x32x128xf32, #tpu.memory_space<vmem>>, vector<16x16x128xf32>,
    } else {
    }
    %c3_i32 = arith.constant 3 : i32
    %17 = arith.cmpi eq, %arg1, %c3_i32 : i32
    %18 = arith.extui %17 : i1 to i32
    %c0_i32_10 = arith.constant 0 : i32
    %19 = arith.cmpi ne, %18, %c0_i32_10 : i32
    scf.if %19 {
      %c0_584 = arith.constant 0 : index
      %c0_585 = arith.constant 0 : index
      %c0_586 = arith.constant 0 : index
      %c0_587 = arith.constant 0 : index
      %996 = vector.load %arg3[%c0_584, %c0_585, %c0_586, %c0_587] : memref<1x3x3x128xf32, #tpu.memory_space<vmem>>, vector<1x3x3x128xf32>
      %997 = vector.shape_cast %996 : vector<1x3x3x128xf32> to vector<3x3x128xf32>
      %c0_588 = arith.constant 0 : index
      %c8_589 = arith.constant 8 : index
      %c0_590 = arith.constant 0 : index
      %998 = vector.load %arg11[%c0_588, %c8_589, %c0_590] : memref<18x32x128xf32, #tpu.memory_space<vmem>>, vector<16x16x128xf32>
      %999 = vector.extract_strided_slice %997 {offsets = [0, 1, 0], sizes = [1, 1, 128], strides = [1, 1, 1]} : vector<3x3x128xf32> to vector<1x1x128xf32>
      %1000 = vector.broadcast %999 : vector<1x1x128xf32> to vector<16x16x128xf32>
      %1001 = arith.mulf %998, %1000 : vector<16x16x128xf32>
      %c1_591 = arith.constant 1 : index
      %c8_592 = arith.constant 8 : index
      %c0_593 = arith.constant 0 : index
      %1002 = vector.load %arg11[%c1_591, %c8_592, %c0_593] : memref<18x32x128xf32, #tpu.memory_space<vmem>>, vector<16x16x128xf32>
      %1003 = vector.extract_strided_slice %997 {offsets = [1, 1, 0], sizes = [1, 1, 128], strides = [1, 1, 1]} : vector<3x3x128xf32> to vector<1x1x128xf32>
      %1004 = vector.broadcast %1003 : vector<1x1x128xf32> to vector<16x16x128xf32>
      %1005 = arith.mulf %1002, %1004 : vector<16x16x128xf32>
      %1006 = arith.addf %1001, %1005 : vector<16x16x128xf32>
      %c2_594 = arith.constant 2 : index
      %c8_595 = arith.constant 8 : index
      %c0_596 = arith.constant 0 : index
      %1007 = vector.load %arg11[%c2_594, %c8_595, %c0_596] : memref<18x32x128xf32, #tpu.memory_space<vmem>>, vector<16x16x128xf32>
      %1008 = vector.extract_strided_slice %997 {offsets = [2, 1, 0], sizes = [1, 1, 128], strides = [1, 1, 1]} : vector<3x3x128xf32> to vector<1x1x128xf32>
      %1009 = vector.broadcast %1008 : vector<1x1x128xf32> to vector<16x16x128xf32>
      %1010 = arith.mulf %1007, %1009 : vector<16x16x128xf32>
      %1011 = arith.addf %1006, %1010 : vector<16x16x128xf32>
      %1012 = vector.broadcast %4 : vector<1x1x128xf32> to vector<16x16x128xf32>
      %1013 = arith.addf %1011, %1012 : vector<16x16x128xf32>
      %cst_597 = arith.constant 0.000000e+00 : f32
      %1014 = vector.broadcast %cst_597 : f32 to vector<16x16x128xf32>
      %1015 = arith.maximumf %1013, %1014 : vector<16x16x128xf32>
      %c3_598 = arith.constant 3 : index
      %c8_599 = arith.constant 8 : index
      %c0_600 = arith.constant 0 : index
      %1016 = vector.load %arg12[%c3_598, %c8_599, %c0_600] : memref<22x32x128xf32, #tpu.memory_space<vmem>>, vector<16x16x128xf32>
      tpu.vector_store %arg12[%c3_598, %c8_599, %c0_600], %1015 {strides = array<i32>} : memref<22x32x128xf32, #tpu.memory_space<vmem>>, vector<16x16x128xf32>,
    } else {
    }
    %c0_11 = arith.constant 0 : index
    %c0_12 = arith.constant 0 : index
    %c0_13 = arith.constant 0 : index
    %20 = vector.load %arg5[%c0_11, %c0_12, %c0_13] : memref<3x3x128xf32, #tpu.memory_space<vmem>>, vector<3x3x128xf32>
    %c0_14 = arith.constant 0 : index
    %c5 = arith.constant 5 : index
    %c0_15 = arith.constant 0 : index
    %21 = vector.load %arg12[%c0_14, %c5, %c0_15] : memref<22x32x128xf32, #tpu.memory_space<vmem>>, vector<16x16x128xf32>
    %22 = vector.extract_strided_slice %20 {offsets = [0, 0, 0], sizes = [1, 1, 128], strides = [1, 1, 1]} : vector<3x3x128xf32> to vector<1x1x128xf32>
    %23 = vector.broadcast %22 : vector<1x1x128xf32> to vector<16x16x128xf32>
    %24 = arith.mulf %21, %23 : vector<16x16x128xf32>
    %c0_16 = arith.constant 0 : index
    %c8 = arith.constant 8 : index
    %c0_17 = arith.constant 0 : index
    %25 = vector.load %arg12[%c0_16, %c8, %c0_17] : memref<22x32x128xf32, #tpu.memory_space<vmem>>, vector<16x16x128xf32>
    %26 = vector.extract_strided_slice %20 {offsets = [0, 1, 0], sizes = [1, 1, 128], strides = [1, 1, 1]} : vector<3x3x128xf32> to vector<1x1x128xf32>
    %27 = vector.broadcast %26 : vector<1x1x128xf32> to vector<16x16x128xf32>
    %28 = arith.mulf %25, %27 : vector<16x16x128xf32>
    %29 = arith.addf %24, %28 : vector<16x16x128xf32>
    %c0_18 = arith.constant 0 : index
    %c11 = arith.constant 11 : index
    %c0_19 = arith.constant 0 : index
    %30 = vector.load %arg12[%c0_18, %c11, %c0_19] : memref<22x32x128xf32, #tpu.memory_space<vmem>>, vector<16x16x128xf32>
    %31 = vector.extract_strided_slice %20 {offsets = [0, 2, 0], sizes = [1, 1, 128], strides = [1, 1, 1]} : vector<3x3x128xf32> to vector<1x1x128xf32>
    %32 = vector.broadcast %31 : vector<1x1x128xf32> to vector<16x16x128xf32>
    %33 = arith.mulf %30, %32 : vector<16x16x128xf32>
    %34 = arith.addf %29, %33 : vector<16x16x128xf32>
    %c3 = arith.constant 3 : index
    %c5_20 = arith.constant 5 : index
    %c0_21 = arith.constant 0 : index
    %35 = vector.load %arg12[%c3, %c5_20, %c0_21] : memref<22x32x128xf32, #tpu.memory_space<vmem>>, vector<16x16x128xf32>
    %36 = vector.extract_strided_slice %20 {offsets = [1, 0, 0], sizes = [1, 1, 128], strides = [1, 1, 1]} : vector<3x3x128xf32> to vector<1x1x128xf32>
    %37 = vector.broadcast %36 : vector<1x1x128xf32> to vector<16x16x128xf32>
    %38 = arith.mulf %35, %37 : vector<16x16x128xf32>
    %39 = arith.addf %34, %38 : vector<16x16x128xf32>
    %c3_22 = arith.constant 3 : index
    %c8_23 = arith.constant 8 : index
    %c0_24 = arith.constant 0 : index
    %40 = vector.load %arg12[%c3_22, %c8_23, %c0_24] : memref<22x32x128xf32, #tpu.memory_space<vmem>>, vector<16x16x128xf32>
    %41 = vector.extract_strided_slice %20 {offsets = [1, 1, 0], sizes = [1, 1, 128], strides = [1, 1, 1]} : vector<3x3x128xf32> to vector<1x1x128xf32>
    %42 = vector.broadcast %41 : vector<1x1x128xf32> to vector<16x16x128xf32>
    %43 = arith.mulf %40, %42 : vector<16x16x128xf32>
    %44 = arith.addf %39, %43 : vector<16x16x128xf32>
    %c3_25 = arith.constant 3 : index
    %c11_26 = arith.constant 11 : index
    %c0_27 = arith.constant 0 : index
    %45 = vector.load %arg12[%c3_25, %c11_26, %c0_27] : memref<22x32x128xf32, #tpu.memory_space<vmem>>, vector<16x16x128xf32>
    %46 = vector.extract_strided_slice %20 {offsets = [1, 2, 0], sizes = [1, 1, 128], strides = [1, 1, 1]} : vector<3x3x128xf32> to vector<1x1x128xf32>
    %47 = vector.broadcast %46 : vector<1x1x128xf32> to vector<16x16x128xf32>
    %48 = arith.mulf %45, %47 : vector<16x16x128xf32>
    %49 = arith.addf %44, %48 : vector<16x16x128xf32>
    %c6 = arith.constant 6 : index
    %c5_28 = arith.constant 5 : index
    %c0_29 = arith.constant 0 : index
    %50 = vector.load %arg12[%c6, %c5_28, %c0_29] : memref<22x32x128xf32, #tpu.memory_space<vmem>>, vector<16x16x128xf32>
    %51 = vector.extract_strided_slice %20 {offsets = [2, 0, 0], sizes = [1, 1, 128], strides = [1, 1, 1]} : vector<3x3x128xf32> to vector<1x1x128xf32>
    %52 = vector.broadcast %51 : vector<1x1x128xf32> to vector<16x16x128xf32>
    %53 = arith.mulf %50, %52 : vector<16x16x128xf32>
    %54 = arith.addf %49, %53 : vector<16x16x128xf32>
    %c6_30 = arith.constant 6 : index
    %c8_31 = arith.constant 8 : index
    %c0_32 = arith.constant 0 : index
    %55 = vector.load %arg12[%c6_30, %c8_31, %c0_32] : memref<22x32x128xf32, #tpu.memory_space<vmem>>, vector<16x16x128xf32>
    %56 = vector.extract_strided_slice %20 {offsets = [2, 1, 0], sizes = [1, 1, 128], strides = [1, 1, 1]} : vector<3x3x128xf32> to vector<1x1x128xf32>
    %57 = vector.broadcast %56 : vector<1x1x128xf32> to vector<16x16x128xf32>
    %58 = arith.mulf %55, %57 : vector<16x16x128xf32>
    %59 = arith.addf %54, %58 : vector<16x16x128xf32>
    %c6_33 = arith.constant 6 : index
    %c11_34 = arith.constant 11 : index
    %c0_35 = arith.constant 0 : index
    %60 = vector.load %arg12[%c6_33, %c11_34, %c0_35] : memref<22x32x128xf32, #tpu.memory_space<vmem>>, vector<16x16x128xf32>
    %61 = vector.extract_strided_slice %20 {offsets = [2, 2, 0], sizes = [1, 1, 128], strides = [1, 1, 1]} : vector<3x3x128xf32> to vector<1x1x128xf32>
    %62 = vector.broadcast %61 : vector<1x1x128xf32> to vector<16x16x128xf32>
    %63 = arith.mulf %60, %62 : vector<16x16x128xf32>
    %64 = arith.addf %59, %63 : vector<16x16x128xf32>
    %c0_36 = arith.constant 0 : index
    %c0_37 = arith.constant 0 : index
    %c0_38 = arith.constant 0 : index
    %65 = vector.load %arg6[%c0_36, %c0_37, %c0_38] : memref<1x1x128xf32, #tpu.memory_space<vmem>>, vector<1x1x128xf32>
    %66 = vector.broadcast %65 : vector<1x1x128xf32> to vector<16x16x128xf32>
    %67 = arith.addf %64, %66 : vector<16x16x128xf32>
    %c0_39 = arith.constant 0 : index
    %c0_40 = arith.constant 0 : index
    %c0_41 = arith.constant 0 : index
    %68 = vector.load %arg13[%c0_39, %c0_40, %c0_41] : memref<16x16x128xf32, #tpu.memory_space<vmem>>, vector<16x16x128xf32>
    tpu.vector_store %arg13[%c0_39, %c0_40, %c0_41], %67 {strides = array<i32>} : memref<16x16x128xf32, #tpu.memory_space<vmem>>, vector<16x16x128xf32>,
    %cst = arith.constant 0.000000e+00 : f32
    %69 = vector.broadcast %cst : f32 to vector<16x128xf32>
    %cst_42 = arith.constant 0.000000e+00 : f32
    %70 = vector.broadcast %cst_42 : f32 to vector<16x128xf32>
    %cst_43 = arith.constant 0.000000e+00 : f32
    %71 = vector.broadcast %cst_43 : f32 to vector<16x16xf32>
    %cst_44 = arith.constant 0.000000e+00 : f32
    %72 = vector.broadcast %cst_44 : f32 to vector<16x16xf32>
    %73 = tpu.iota {dimensions = array<i32: 0>} : vector<16x128xi32>
    %74 = tpu.iota {dimensions = array<i32: 1>} : vector<16x16xi32>
    %c0_45 = arith.constant 0 : index
    %c0_46 = arith.constant 0 : index
    %c0_47 = arith.constant 0 : index
    %75 = vector.load %arg13[%c0_45, %c0_46, %c0_47] : memref<16x16x128xf32, #tpu.memory_space<vmem>>, vector<1x16x128xf32>
    %76 = vector.shape_cast %75 : vector<1x16x128xf32> to vector<16x128xf32>
    %cst_48 = arith.constant dense<0xFF800000> : vector<128xf32>
    %77 = vector.multi_reduction <maximumf>, %76, %cst_48 [0] : vector<16x128xf32> to vector<128xf32>
    %78 = vector.shape_cast %77 : vector<128xf32> to vector<1x128xf32>
    %cst_49 = arith.constant dense<0.000000e+00> : vector<128xf32>
    %79 = vector.multi_reduction <add>, %76, %cst_49 [0] : vector<16x128xf32> to vector<128xf32>
    %80 = vector.shape_cast %79 : vector<128xf32> to vector<1x128xf32>
    %c0_i32_50 = arith.constant 0 : i32
    %81 = vector.broadcast %c0_i32_50 : i32 to vector<16x128xi32>
    %82 = arith.cmpi eq, %73, %81 : vector<16x128xi32>
    %83 = vector.shape_cast %78 : vector<1x128xf32> to vector<1x128xf32>
    %84 = vector.broadcast %83 : vector<1x128xf32> to vector<16x128xf32>
    %85 = arith.select %82, %84, %69 : vector<16x128xi1>, vector<16x128xf32>
    %c0_i32_51 = arith.constant 0 : i32
    %86 = vector.broadcast %c0_i32_51 : i32 to vector<16x128xi32>
    %87 = arith.cmpi eq, %73, %86 : vector<16x128xi32>
    %88 = vector.shape_cast %80 : vector<1x128xf32> to vector<1x128xf32>
    %89 = vector.broadcast %88 : vector<1x128xf32> to vector<16x128xf32>
    %90 = arith.select %87, %89, %70 : vector<16x128xi1>, vector<16x128xf32>
    %cst_52 = arith.constant dense<0xFF800000> : vector<16xf32>
    %91 = vector.multi_reduction <maximumf>, %76, %cst_52 [1] : vector<16x128xf32> to vector<16xf32>
    %92 = vector.shape_cast %91 : vector<16xf32> to vector<16x1xf32>
    %cst_53 = arith.constant dense<0.000000e+00> : vector<16xf32>
    %93 = vector.multi_reduction <add>, %76, %cst_53 [1] : vector<16x128xf32> to vector<16xf32>
    %94 = vector.shape_cast %93 : vector<16xf32> to vector<16x1xf32>
    %c0_i32_54 = arith.constant 0 : i32
    %95 = vector.broadcast %c0_i32_54 : i32 to vector<16x16xi32>
    %96 = arith.cmpi eq, %74, %95 : vector<16x16xi32>
    %97 = vector.shape_cast %92 : vector<16x1xf32> to vector<16x1xf32>
    %98 = vector.broadcast %97 : vector<16x1xf32> to vector<16x16xf32>
    %99 = arith.select %96, %98, %71 : vector<16x16xi1>, vector<16x16xf32>
    %c0_i32_55 = arith.constant 0 : i32
    %100 = vector.broadcast %c0_i32_55 : i32 to vector<16x16xi32>
    %101 = arith.cmpi eq, %74, %100 : vector<16x16xi32>
    %102 = vector.shape_cast %94 : vector<16x1xf32> to vector<16x1xf32>
    %103 = vector.broadcast %102 : vector<16x1xf32> to vector<16x16xf32>
    %104 = arith.select %101, %103, %72 : vector<16x16xi1>, vector<16x16xf32>
    %c1 = arith.constant 1 : index
    %c0_56 = arith.constant 0 : index
    %c0_57 = arith.constant 0 : index
    %105 = vector.load %arg13[%c1, %c0_56, %c0_57] : memref<16x16x128xf32, #tpu.memory_space<vmem>>, vector<1x16x128xf32>
    %106 = vector.shape_cast %105 : vector<1x16x128xf32> to vector<16x128xf32>
    %107 = arith.maximumf %76, %106 : vector<16x128xf32>
    %108 = arith.addf %76, %106 : vector<16x128xf32>
    %cst_58 = arith.constant dense<0xFF800000> : vector<128xf32>
    %109 = vector.multi_reduction <maximumf>, %106, %cst_58 [0] : vector<16x128xf32> to vector<128xf32>
    %110 = vector.shape_cast %109 : vector<128xf32> to vector<1x128xf32>
    %cst_59 = arith.constant dense<0.000000e+00> : vector<128xf32>
    %111 = vector.multi_reduction <add>, %106, %cst_59 [0] : vector<16x128xf32> to vector<128xf32>
    %112 = vector.shape_cast %111 : vector<128xf32> to vector<1x128xf32>
    %c1_i32_60 = arith.constant 1 : i32
    %113 = vector.broadcast %c1_i32_60 : i32 to vector<16x128xi32>
    %114 = arith.cmpi eq, %73, %113 : vector<16x128xi32>
    %115 = vector.shape_cast %110 : vector<1x128xf32> to vector<1x128xf32>
    %116 = vector.broadcast %115 : vector<1x128xf32> to vector<16x128xf32>
    %117 = arith.select %114, %116, %85 : vector<16x128xi1>, vector<16x128xf32>
    %c1_i32_61 = arith.constant 1 : i32
    %118 = vector.broadcast %c1_i32_61 : i32 to vector<16x128xi32>
    %119 = arith.cmpi eq, %73, %118 : vector<16x128xi32>
    %120 = vector.shape_cast %112 : vector<1x128xf32> to vector<1x128xf32>
    %121 = vector.broadcast %120 : vector<1x128xf32> to vector<16x128xf32>
    %122 = arith.select %119, %121, %90 : vector<16x128xi1>, vector<16x128xf32>
    %cst_62 = arith.constant dense<0xFF800000> : vector<16xf32>
    %123 = vector.multi_reduction <maximumf>, %106, %cst_62 [1] : vector<16x128xf32> to vector<16xf32>
    %124 = vector.shape_cast %123 : vector<16xf32> to vector<16x1xf32>
    %cst_63 = arith.constant dense<0.000000e+00> : vector<16xf32>
    %125 = vector.multi_reduction <add>, %106, %cst_63 [1] : vector<16x128xf32> to vector<16xf32>
    %126 = vector.shape_cast %125 : vector<16xf32> to vector<16x1xf32>
    %c1_i32_64 = arith.constant 1 : i32
    %127 = vector.broadcast %c1_i32_64 : i32 to vector<16x16xi32>
    %128 = arith.cmpi eq, %74, %127 : vector<16x16xi32>
    %129 = vector.shape_cast %124 : vector<16x1xf32> to vector<16x1xf32>
    %130 = vector.broadcast %129 : vector<16x1xf32> to vector<16x16xf32>
    %131 = arith.select %128, %130, %99 : vector<16x16xi1>, vector<16x16xf32>
    %c1_i32_65 = arith.constant 1 : i32
    %132 = vector.broadcast %c1_i32_65 : i32 to vector<16x16xi32>
    %133 = arith.cmpi eq, %74, %132 : vector<16x16xi32>
    %134 = vector.shape_cast %126 : vector<16x1xf32> to vector<16x1xf32>
    %135 = vector.broadcast %134 : vector<16x1xf32> to vector<16x16xf32>
    %136 = arith.select %133, %135, %104 : vector<16x16xi1>, vector<16x16xf32>
    %c2 = arith.constant 2 : index
    %c0_66 = arith.constant 0 : index
    %c0_67 = arith.constant 0 : index
    %137 = vector.load %arg13[%c2, %c0_66, %c0_67] : memref<16x16x128xf32, #tpu.memory_space<vmem>>, vector<1x16x128xf32>
    %138 = vector.shape_cast %137 : vector<1x16x128xf32> to vector<16x128xf32>
    %139 = arith.maximumf %107, %138 : vector<16x128xf32>
    %140 = arith.addf %108, %138 : vector<16x128xf32>
    %cst_68 = arith.constant dense<0xFF800000> : vector<128xf32>
    %141 = vector.multi_reduction <maximumf>, %138, %cst_68 [0] : vector<16x128xf32> to vector<128xf32>
    %142 = vector.shape_cast %141 : vector<128xf32> to vector<1x128xf32>
    %cst_69 = arith.constant dense<0.000000e+00> : vector<128xf32>
    %143 = vector.multi_reduction <add>, %138, %cst_69 [0] : vector<16x128xf32> to vector<128xf32>
    %144 = vector.shape_cast %143 : vector<128xf32> to vector<1x128xf32>
    %c2_i32_70 = arith.constant 2 : i32
    %145 = vector.broadcast %c2_i32_70 : i32 to vector<16x128xi32>
    %146 = arith.cmpi eq, %73, %145 : vector<16x128xi32>
    %147 = vector.shape_cast %142 : vector<1x128xf32> to vector<1x128xf32>
    %148 = vector.broadcast %147 : vector<1x128xf32> to vector<16x128xf32>
    %149 = arith.select %146, %148, %117 : vector<16x128xi1>, vector<16x128xf32>
    %c2_i32_71 = arith.constant 2 : i32
    %150 = vector.broadcast %c2_i32_71 : i32 to vector<16x128xi32>
    %151 = arith.cmpi eq, %73, %150 : vector<16x128xi32>
    %152 = vector.shape_cast %144 : vector<1x128xf32> to vector<1x128xf32>
    %153 = vector.broadcast %152 : vector<1x128xf32> to vector<16x128xf32>
    %154 = arith.select %151, %153, %122 : vector<16x128xi1>, vector<16x128xf32>
    %cst_72 = arith.constant dense<0xFF800000> : vector<16xf32>
    %155 = vector.multi_reduction <maximumf>, %138, %cst_72 [1] : vector<16x128xf32> to vector<16xf32>
    %156 = vector.shape_cast %155 : vector<16xf32> to vector<16x1xf32>
    %cst_73 = arith.constant dense<0.000000e+00> : vector<16xf32>
    %157 = vector.multi_reduction <add>, %138, %cst_73 [1] : vector<16x128xf32> to vector<16xf32>
    %158 = vector.shape_cast %157 : vector<16xf32> to vector<16x1xf32>
    %c2_i32_74 = arith.constant 2 : i32
    %159 = vector.broadcast %c2_i32_74 : i32 to vector<16x16xi32>
    %160 = arith.cmpi eq, %74, %159 : vector<16x16xi32>
    %161 = vector.shape_cast %156 : vector<16x1xf32> to vector<16x1xf32>
    %162 = vector.broadcast %161 : vector<16x1xf32> to vector<16x16xf32>
    %163 = arith.select %160, %162, %131 : vector<16x16xi1>, vector<16x16xf32>
    %c2_i32_75 = arith.constant 2 : i32
    %164 = vector.broadcast %c2_i32_75 : i32 to vector<16x16xi32>
    %165 = arith.cmpi eq, %74, %164 : vector<16x16xi32>
    %166 = vector.shape_cast %158 : vector<16x1xf32> to vector<16x1xf32>
    %167 = vector.broadcast %166 : vector<16x1xf32> to vector<16x16xf32>
    %168 = arith.select %165, %167, %136 : vector<16x16xi1>, vector<16x16xf32>
    %c3_76 = arith.constant 3 : index
    %c0_77 = arith.constant 0 : index
    %c0_78 = arith.constant 0 : index
    %169 = vector.load %arg13[%c3_76, %c0_77, %c0_78] : memref<16x16x128xf32, #tpu.memory_space<vmem>>, vector<1x16x128xf32>
    %170 = vector.shape_cast %169 : vector<1x16x128xf32> to vector<16x128xf32>
    %171 = arith.maximumf %139, %170 : vector<16x128xf32>
    %172 = arith.addf %140, %170 : vector<16x128xf32>
    %cst_79 = arith.constant dense<0xFF800000> : vector<128xf32>
    %173 = vector.multi_reduction <maximumf>, %170, %cst_79 [0] : vector<16x128xf32> to vector<128xf32>
    %174 = vector.shape_cast %173 : vector<128xf32> to vector<1x128xf32>
    %cst_80 = arith.constant dense<0.000000e+00> : vector<128xf32>
    %175 = vector.multi_reduction <add>, %170, %cst_80 [0] : vector<16x128xf32> to vector<128xf32>
    %176 = vector.shape_cast %175 : vector<128xf32> to vector<1x128xf32>
    %c3_i32_81 = arith.constant 3 : i32
    %177 = vector.broadcast %c3_i32_81 : i32 to vector<16x128xi32>
    %178 = arith.cmpi eq, %73, %177 : vector<16x128xi32>
    %179 = vector.shape_cast %174 : vector<1x128xf32> to vector<1x128xf32>
    %180 = vector.broadcast %179 : vector<1x128xf32> to vector<16x128xf32>
    %181 = arith.select %178, %180, %149 : vector<16x128xi1>, vector<16x128xf32>
    %c3_i32_82 = arith.constant 3 : i32
    %182 = vector.broadcast %c3_i32_82 : i32 to vector<16x128xi32>
    %183 = arith.cmpi eq, %73, %182 : vector<16x128xi32>
    %184 = vector.shape_cast %176 : vector<1x128xf32> to vector<1x128xf32>
    %185 = vector.broadcast %184 : vector<1x128xf32> to vector<16x128xf32>
    %186 = arith.select %183, %185, %154 : vector<16x128xi1>, vector<16x128xf32>
    %cst_83 = arith.constant dense<0xFF800000> : vector<16xf32>
    %187 = vector.multi_reduction <maximumf>, %170, %cst_83 [1] : vector<16x128xf32> to vector<16xf32>
    %188 = vector.shape_cast %187 : vector<16xf32> to vector<16x1xf32>
    %cst_84 = arith.constant dense<0.000000e+00> : vector<16xf32>
    %189 = vector.multi_reduction <add>, %170, %cst_84 [1] : vector<16x128xf32> to vector<16xf32>
    %190 = vector.shape_cast %189 : vector<16xf32> to vector<16x1xf32>
    %c3_i32_85 = arith.constant 3 : i32
    %191 = vector.broadcast %c3_i32_85 : i32 to vector<16x16xi32>
    %192 = arith.cmpi eq, %74, %191 : vector<16x16xi32>
    %193 = vector.shape_cast %188 : vector<16x1xf32> to vector<16x1xf32>
    %194 = vector.broadcast %193 : vector<16x1xf32> to vector<16x16xf32>
    %195 = arith.select %192, %194, %163 : vector<16x16xi1>, vector<16x16xf32>
    %c3_i32_86 = arith.constant 3 : i32
    %196 = vector.broadcast %c3_i32_86 : i32 to vector<16x16xi32>
    %197 = arith.cmpi eq, %74, %196 : vector<16x16xi32>
    %198 = vector.shape_cast %190 : vector<16x1xf32> to vector<16x1xf32>
    %199 = vector.broadcast %198 : vector<16x1xf32> to vector<16x16xf32>
    %200 = arith.select %197, %199, %168 : vector<16x16xi1>, vector<16x16xf32>
    %c4 = arith.constant 4 : index
    %c0_87 = arith.constant 0 : index
    %c0_88 = arith.constant 0 : index
    %201 = vector.load %arg13[%c4, %c0_87, %c0_88] : memref<16x16x128xf32, #tpu.memory_space<vmem>>, vector<1x16x128xf32>
    %202 = vector.shape_cast %201 : vector<1x16x128xf32> to vector<16x128xf32>
    %203 = arith.maximumf %171, %202 : vector<16x128xf32>
    %204 = arith.addf %172, %202 : vector<16x128xf32>
    %cst_89 = arith.constant dense<0xFF800000> : vector<128xf32>
    %205 = vector.multi_reduction <maximumf>, %202, %cst_89 [0] : vector<16x128xf32> to vector<128xf32>
    %206 = vector.shape_cast %205 : vector<128xf32> to vector<1x128xf32>
    %cst_90 = arith.constant dense<0.000000e+00> : vector<128xf32>
    %207 = vector.multi_reduction <add>, %202, %cst_90 [0] : vector<16x128xf32> to vector<128xf32>
    %208 = vector.shape_cast %207 : vector<128xf32> to vector<1x128xf32>
    %c4_i32 = arith.constant 4 : i32
    %209 = vector.broadcast %c4_i32 : i32 to vector<16x128xi32>
    %210 = arith.cmpi eq, %73, %209 : vector<16x128xi32>
    %211 = vector.shape_cast %206 : vector<1x128xf32> to vector<1x128xf32>
    %212 = vector.broadcast %211 : vector<1x128xf32> to vector<16x128xf32>
    %213 = arith.select %210, %212, %181 : vector<16x128xi1>, vector<16x128xf32>
    %c4_i32_91 = arith.constant 4 : i32
    %214 = vector.broadcast %c4_i32_91 : i32 to vector<16x128xi32>
    %215 = arith.cmpi eq, %73, %214 : vector<16x128xi32>
    %216 = vector.shape_cast %208 : vector<1x128xf32> to vector<1x128xf32>
    %217 = vector.broadcast %216 : vector<1x128xf32> to vector<16x128xf32>
    %218 = arith.select %215, %217, %186 : vector<16x128xi1>, vector<16x128xf32>
    %cst_92 = arith.constant dense<0xFF800000> : vector<16xf32>
    %219 = vector.multi_reduction <maximumf>, %202, %cst_92 [1] : vector<16x128xf32> to vector<16xf32>
    %220 = vector.shape_cast %219 : vector<16xf32> to vector<16x1xf32>
    %cst_93 = arith.constant dense<0.000000e+00> : vector<16xf32>
    %221 = vector.multi_reduction <add>, %202, %cst_93 [1] : vector<16x128xf32> to vector<16xf32>
    %222 = vector.shape_cast %221 : vector<16xf32> to vector<16x1xf32>
    %c4_i32_94 = arith.constant 4 : i32
    %223 = vector.broadcast %c4_i32_94 : i32 to vector<16x16xi32>
    %224 = arith.cmpi eq, %74, %223 : vector<16x16xi32>
    %225 = vector.shape_cast %220 : vector<16x1xf32> to vector<16x1xf32>
    %226 = vector.broadcast %225 : vector<16x1xf32> to vector<16x16xf32>
    %227 = arith.select %224, %226, %195 : vector<16x16xi1>, vector<16x16xf32>
    %c4_i32_95 = arith.constant 4 : i32
    %228 = vector.broadcast %c4_i32_95 : i32 to vector<16x16xi32>
    %229 = arith.cmpi eq, %74, %228 : vector<16x16xi32>
    %230 = vector.shape_cast %222 : vector<16x1xf32> to vector<16x1xf32>
    %231 = vector.broadcast %230 : vector<16x1xf32> to vector<16x16xf32>
    %232 = arith.select %229, %231, %200 : vector<16x16xi1>, vector<16x16xf32>
    %c5_96 = arith.constant 5 : index
    %c0_97 = arith.constant 0 : index
    %c0_98 = arith.constant 0 : index
    %233 = vector.load %arg13[%c5_96, %c0_97, %c0_98] : memref<16x16x128xf32, #tpu.memory_space<vmem>>, vector<1x16x128xf32>
    %234 = vector.shape_cast %233 : vector<1x16x128xf32> to vector<16x128xf32>
    %235 = arith.maximumf %203, %234 : vector<16x128xf32>
    %236 = arith.addf %204, %234 : vector<16x128xf32>
    %cst_99 = arith.constant dense<0xFF800000> : vector<128xf32>
    %237 = vector.multi_reduction <maximumf>, %234, %cst_99 [0] : vector<16x128xf32> to vector<128xf32>
    %238 = vector.shape_cast %237 : vector<128xf32> to vector<1x128xf32>
    %cst_100 = arith.constant dense<0.000000e+00> : vector<128xf32>
    %239 = vector.multi_reduction <add>, %234, %cst_100 [0] : vector<16x128xf32> to vector<128xf32>
    %240 = vector.shape_cast %239 : vector<128xf32> to vector<1x128xf32>
    %c5_i32 = arith.constant 5 : i32
    %241 = vector.broadcast %c5_i32 : i32 to vector<16x128xi32>
    %242 = arith.cmpi eq, %73, %241 : vector<16x128xi32>
    %243 = vector.shape_cast %238 : vector<1x128xf32> to vector<1x128xf32>
    %244 = vector.broadcast %243 : vector<1x128xf32> to vector<16x128xf32>
    %245 = arith.select %242, %244, %213 : vector<16x128xi1>, vector<16x128xf32>
    %c5_i32_101 = arith.constant 5 : i32
    %246 = vector.broadcast %c5_i32_101 : i32 to vector<16x128xi32>
    %247 = arith.cmpi eq, %73, %246 : vector<16x128xi32>
    %248 = vector.shape_cast %240 : vector<1x128xf32> to vector<1x128xf32>
    %249 = vector.broadcast %248 : vector<1x128xf32> to vector<16x128xf32>
    %250 = arith.select %247, %249, %218 : vector<16x128xi1>, vector<16x128xf32>
    %cst_102 = arith.constant dense<0xFF800000> : vector<16xf32>
    %251 = vector.multi_reduction <maximumf>, %234, %cst_102 [1] : vector<16x128xf32> to vector<16xf32>
    %252 = vector.shape_cast %251 : vector<16xf32> to vector<16x1xf32>
    %cst_103 = arith.constant dense<0.000000e+00> : vector<16xf32>
    %253 = vector.multi_reduction <add>, %234, %cst_103 [1] : vector<16x128xf32> to vector<16xf32>
    %254 = vector.shape_cast %253 : vector<16xf32> to vector<16x1xf32>
    %c5_i32_104 = arith.constant 5 : i32
    %255 = vector.broadcast %c5_i32_104 : i32 to vector<16x16xi32>
    %256 = arith.cmpi eq, %74, %255 : vector<16x16xi32>
    %257 = vector.shape_cast %252 : vector<16x1xf32> to vector<16x1xf32>
    %258 = vector.broadcast %257 : vector<16x1xf32> to vector<16x16xf32>
    %259 = arith.select %256, %258, %227 : vector<16x16xi1>, vector<16x16xf32>
    %c5_i32_105 = arith.constant 5 : i32
    %260 = vector.broadcast %c5_i32_105 : i32 to vector<16x16xi32>
    %261 = arith.cmpi eq, %74, %260 : vector<16x16xi32>
    %262 = vector.shape_cast %254 : vector<16x1xf32> to vector<16x1xf32>
    %263 = vector.broadcast %262 : vector<16x1xf32> to vector<16x16xf32>
    %264 = arith.select %261, %263, %232 : vector<16x16xi1>, vector<16x16xf32>
    %c6_106 = arith.constant 6 : index
    %c0_107 = arith.constant 0 : index
    %c0_108 = arith.constant 0 : index
    %265 = vector.load %arg13[%c6_106, %c0_107, %c0_108] : memref<16x16x128xf32, #tpu.memory_space<vmem>>, vector<1x16x128xf32>
    %266 = vector.shape_cast %265 : vector<1x16x128xf32> to vector<16x128xf32>
    %267 = arith.maximumf %235, %266 : vector<16x128xf32>
    %268 = arith.addf %236, %266 : vector<16x128xf32>
    %cst_109 = arith.constant dense<0xFF800000> : vector<128xf32>
    %269 = vector.multi_reduction <maximumf>, %266, %cst_109 [0] : vector<16x128xf32> to vector<128xf32>
    %270 = vector.shape_cast %269 : vector<128xf32> to vector<1x128xf32>
    %cst_110 = arith.constant dense<0.000000e+00> : vector<128xf32>
    %271 = vector.multi_reduction <add>, %266, %cst_110 [0] : vector<16x128xf32> to vector<128xf32>
    %272 = vector.shape_cast %271 : vector<128xf32> to vector<1x128xf32>
    %c6_i32 = arith.constant 6 : i32
    %273 = vector.broadcast %c6_i32 : i32 to vector<16x128xi32>
    %274 = arith.cmpi eq, %73, %273 : vector<16x128xi32>
    %275 = vector.shape_cast %270 : vector<1x128xf32> to vector<1x128xf32>
    %276 = vector.broadcast %275 : vector<1x128xf32> to vector<16x128xf32>
    %277 = arith.select %274, %276, %245 : vector<16x128xi1>, vector<16x128xf32>
    %c6_i32_111 = arith.constant 6 : i32
    %278 = vector.broadcast %c6_i32_111 : i32 to vector<16x128xi32>
    %279 = arith.cmpi eq, %73, %278 : vector<16x128xi32>
    %280 = vector.shape_cast %272 : vector<1x128xf32> to vector<1x128xf32>
    %281 = vector.broadcast %280 : vector<1x128xf32> to vector<16x128xf32>
    %282 = arith.select %279, %281, %250 : vector<16x128xi1>, vector<16x128xf32>
    %cst_112 = arith.constant dense<0xFF800000> : vector<16xf32>
    %283 = vector.multi_reduction <maximumf>, %266, %cst_112 [1] : vector<16x128xf32> to vector<16xf32>
    %284 = vector.shape_cast %283 : vector<16xf32> to vector<16x1xf32>
    %cst_113 = arith.constant dense<0.000000e+00> : vector<16xf32>
    %285 = vector.multi_reduction <add>, %266, %cst_113 [1] : vector<16x128xf32> to vector<16xf32>
    %286 = vector.shape_cast %285 : vector<16xf32> to vector<16x1xf32>
    %c6_i32_114 = arith.constant 6 : i32
    %287 = vector.broadcast %c6_i32_114 : i32 to vector<16x16xi32>
    %288 = arith.cmpi eq, %74, %287 : vector<16x16xi32>
    %289 = vector.shape_cast %284 : vector<16x1xf32> to vector<16x1xf32>
    %290 = vector.broadcast %289 : vector<16x1xf32> to vector<16x16xf32>
    %291 = arith.select %288, %290, %259 : vector<16x16xi1>, vector<16x16xf32>
    %c6_i32_115 = arith.constant 6 : i32
    %292 = vector.broadcast %c6_i32_115 : i32 to vector<16x16xi32>
    %293 = arith.cmpi eq, %74, %292 : vector<16x16xi32>
    %294 = vector.shape_cast %286 : vector<16x1xf32> to vector<16x1xf32>
    %295 = vector.broadcast %294 : vector<16x1xf32> to vector<16x16xf32>
    %296 = arith.select %293, %295, %264 : vector<16x16xi1>, vector<16x16xf32>
    %c7 = arith.constant 7 : index
    %c0_116 = arith.constant 0 : index
    %c0_117 = arith.constant 0 : index
    %297 = vector.load %arg13[%c7, %c0_116, %c0_117] : memref<16x16x128xf32, #tpu.memory_space<vmem>>, vector<1x16x128xf32>
    %298 = vector.shape_cast %297 : vector<1x16x128xf32> to vector<16x128xf32>
    %299 = arith.maximumf %267, %298 : vector<16x128xf32>
    %300 = arith.addf %268, %298 : vector<16x128xf32>
    %cst_118 = arith.constant dense<0xFF800000> : vector<128xf32>
    %301 = vector.multi_reduction <maximumf>, %298, %cst_118 [0] : vector<16x128xf32> to vector<128xf32>
    %302 = vector.shape_cast %301 : vector<128xf32> to vector<1x128xf32>
    %cst_119 = arith.constant dense<0.000000e+00> : vector<128xf32>
    %303 = vector.multi_reduction <add>, %298, %cst_119 [0] : vector<16x128xf32> to vector<128xf32>
    %304 = vector.shape_cast %303 : vector<128xf32> to vector<1x128xf32>
    %c7_i32 = arith.constant 7 : i32
    %305 = vector.broadcast %c7_i32 : i32 to vector<16x128xi32>
    %306 = arith.cmpi eq, %73, %305 : vector<16x128xi32>
    %307 = vector.shape_cast %302 : vector<1x128xf32> to vector<1x128xf32>
    %308 = vector.broadcast %307 : vector<1x128xf32> to vector<16x128xf32>
    %309 = arith.select %306, %308, %277 : vector<16x128xi1>, vector<16x128xf32>
    %c7_i32_120 = arith.constant 7 : i32
    %310 = vector.broadcast %c7_i32_120 : i32 to vector<16x128xi32>
    %311 = arith.cmpi eq, %73, %310 : vector<16x128xi32>
    %312 = vector.shape_cast %304 : vector<1x128xf32> to vector<1x128xf32>
    %313 = vector.broadcast %312 : vector<1x128xf32> to vector<16x128xf32>
    %314 = arith.select %311, %313, %282 : vector<16x128xi1>, vector<16x128xf32>
    %cst_121 = arith.constant dense<0xFF800000> : vector<16xf32>
    %315 = vector.multi_reduction <maximumf>, %298, %cst_121 [1] : vector<16x128xf32> to vector<16xf32>
    %316 = vector.shape_cast %315 : vector<16xf32> to vector<16x1xf32>
    %cst_122 = arith.constant dense<0.000000e+00> : vector<16xf32>
    %317 = vector.multi_reduction <add>, %298, %cst_122 [1] : vector<16x128xf32> to vector<16xf32>
    %318 = vector.shape_cast %317 : vector<16xf32> to vector<16x1xf32>
    %c7_i32_123 = arith.constant 7 : i32
    %319 = vector.broadcast %c7_i32_123 : i32 to vector<16x16xi32>
    %320 = arith.cmpi eq, %74, %319 : vector<16x16xi32>
    %321 = vector.shape_cast %316 : vector<16x1xf32> to vector<16x1xf32>
    %322 = vector.broadcast %321 : vector<16x1xf32> to vector<16x16xf32>
    %323 = arith.select %320, %322, %291 : vector<16x16xi1>, vector<16x16xf32>
    %c7_i32_124 = arith.constant 7 : i32
    %324 = vector.broadcast %c7_i32_124 : i32 to vector<16x16xi32>
    %325 = arith.cmpi eq, %74, %324 : vector<16x16xi32>
    %326 = vector.shape_cast %318 : vector<16x1xf32> to vector<16x1xf32>
    %327 = vector.broadcast %326 : vector<16x1xf32> to vector<16x16xf32>
    %328 = arith.select %325, %327, %296 : vector<16x16xi1>, vector<16x16xf32>
    %c8_125 = arith.constant 8 : index
    %c0_126 = arith.constant 0 : index
    %c0_127 = arith.constant 0 : index
    %329 = vector.load %arg13[%c8_125, %c0_126, %c0_127] : memref<16x16x128xf32, #tpu.memory_space<vmem>>, vector<1x16x128xf32>
    %330 = vector.shape_cast %329 : vector<1x16x128xf32> to vector<16x128xf32>
    %331 = arith.maximumf %299, %330 : vector<16x128xf32>
    %332 = arith.addf %300, %330 : vector<16x128xf32>
    %cst_128 = arith.constant dense<0xFF800000> : vector<128xf32>
    %333 = vector.multi_reduction <maximumf>, %330, %cst_128 [0] : vector<16x128xf32> to vector<128xf32>
    %334 = vector.shape_cast %333 : vector<128xf32> to vector<1x128xf32>
    %cst_129 = arith.constant dense<0.000000e+00> : vector<128xf32>
    %335 = vector.multi_reduction <add>, %330, %cst_129 [0] : vector<16x128xf32> to vector<128xf32>
    %336 = vector.shape_cast %335 : vector<128xf32> to vector<1x128xf32>
    %c8_i32 = arith.constant 8 : i32
    %337 = vector.broadcast %c8_i32 : i32 to vector<16x128xi32>
    %338 = arith.cmpi eq, %73, %337 : vector<16x128xi32>
    %339 = vector.shape_cast %334 : vector<1x128xf32> to vector<1x128xf32>
    %340 = vector.broadcast %339 : vector<1x128xf32> to vector<16x128xf32>
    %341 = arith.select %338, %340, %309 : vector<16x128xi1>, vector<16x128xf32>
    %c8_i32_130 = arith.constant 8 : i32
    %342 = vector.broadcast %c8_i32_130 : i32 to vector<16x128xi32>
    %343 = arith.cmpi eq, %73, %342 : vector<16x128xi32>
    %344 = vector.shape_cast %336 : vector<1x128xf32> to vector<1x128xf32>
    %345 = vector.broadcast %344 : vector<1x128xf32> to vector<16x128xf32>
    %346 = arith.select %343, %345, %314 : vector<16x128xi1>, vector<16x128xf32>
    %cst_131 = arith.constant dense<0xFF800000> : vector<16xf32>
    %347 = vector.multi_reduction <maximumf>, %330, %cst_131 [1] : vector<16x128xf32> to vector<16xf32>
    %348 = vector.shape_cast %347 : vector<16xf32> to vector<16x1xf32>
    %cst_132 = arith.constant dense<0.000000e+00> : vector<16xf32>
    %349 = vector.multi_reduction <add>, %330, %cst_132 [1] : vector<16x128xf32> to vector<16xf32>
    %350 = vector.shape_cast %349 : vector<16xf32> to vector<16x1xf32>
    %c8_i32_133 = arith.constant 8 : i32
    %351 = vector.broadcast %c8_i32_133 : i32 to vector<16x16xi32>
    %352 = arith.cmpi eq, %74, %351 : vector<16x16xi32>
    %353 = vector.shape_cast %348 : vector<16x1xf32> to vector<16x1xf32>
    %354 = vector.broadcast %353 : vector<16x1xf32> to vector<16x16xf32>
    %355 = arith.select %352, %354, %323 : vector<16x16xi1>, vector<16x16xf32>
    %c8_i32_134 = arith.constant 8 : i32
    %356 = vector.broadcast %c8_i32_134 : i32 to vector<16x16xi32>
    %357 = arith.cmpi eq, %74, %356 : vector<16x16xi32>
    %358 = vector.shape_cast %350 : vector<16x1xf32> to vector<16x1xf32>
    %359 = vector.broadcast %358 : vector<16x1xf32> to vector<16x16xf32>
    %360 = arith.select %357, %359, %328 : vector<16x16xi1>, vector<16x16xf32>
    %c9 = arith.constant 9 : index
    %c0_135 = arith.constant 0 : index
    %c0_136 = arith.constant 0 : index
    %361 = vector.load %arg13[%c9, %c0_135, %c0_136] : memref<16x16x128xf32, #tpu.memory_space<vmem>>, vector<1x16x128xf32>
    %362 = vector.shape_cast %361 : vector<1x16x128xf32> to vector<16x128xf32>
    %363 = arith.maximumf %331, %362 : vector<16x128xf32>
    %364 = arith.addf %332, %362 : vector<16x128xf32>
    %cst_137 = arith.constant dense<0xFF800000> : vector<128xf32>
    %365 = vector.multi_reduction <maximumf>, %362, %cst_137 [0] : vector<16x128xf32> to vector<128xf32>
    %366 = vector.shape_cast %365 : vector<128xf32> to vector<1x128xf32>
    %cst_138 = arith.constant dense<0.000000e+00> : vector<128xf32>
    %367 = vector.multi_reduction <add>, %362, %cst_138 [0] : vector<16x128xf32> to vector<128xf32>
    %368 = vector.shape_cast %367 : vector<128xf32> to vector<1x128xf32>
    %c9_i32 = arith.constant 9 : i32
    %369 = vector.broadcast %c9_i32 : i32 to vector<16x128xi32>
    %370 = arith.cmpi eq, %73, %369 : vector<16x128xi32>
    %371 = vector.shape_cast %366 : vector<1x128xf32> to vector<1x128xf32>
    %372 = vector.broadcast %371 : vector<1x128xf32> to vector<16x128xf32>
    %373 = arith.select %370, %372, %341 : vector<16x128xi1>, vector<16x128xf32>
    %c9_i32_139 = arith.constant 9 : i32
    %374 = vector.broadcast %c9_i32_139 : i32 to vector<16x128xi32>
    %375 = arith.cmpi eq, %73, %374 : vector<16x128xi32>
    %376 = vector.shape_cast %368 : vector<1x128xf32> to vector<1x128xf32>
    %377 = vector.broadcast %376 : vector<1x128xf32> to vector<16x128xf32>
    %378 = arith.select %375, %377, %346 : vector<16x128xi1>, vector<16x128xf32>
    %cst_140 = arith.constant dense<0xFF800000> : vector<16xf32>
    %379 = vector.multi_reduction <maximumf>, %362, %cst_140 [1] : vector<16x128xf32> to vector<16xf32>
    %380 = vector.shape_cast %379 : vector<16xf32> to vector<16x1xf32>
    %cst_141 = arith.constant dense<0.000000e+00> : vector<16xf32>
    %381 = vector.multi_reduction <add>, %362, %cst_141 [1] : vector<16x128xf32> to vector<16xf32>
    %382 = vector.shape_cast %381 : vector<16xf32> to vector<16x1xf32>
    %c9_i32_142 = arith.constant 9 : i32
    %383 = vector.broadcast %c9_i32_142 : i32 to vector<16x16xi32>
    %384 = arith.cmpi eq, %74, %383 : vector<16x16xi32>
    %385 = vector.shape_cast %380 : vector<16x1xf32> to vector<16x1xf32>
    %386 = vector.broadcast %385 : vector<16x1xf32> to vector<16x16xf32>
    %387 = arith.select %384, %386, %355 : vector<16x16xi1>, vector<16x16xf32>
    %c9_i32_143 = arith.constant 9 : i32
    %388 = vector.broadcast %c9_i32_143 : i32 to vector<16x16xi32>
    %389 = arith.cmpi eq, %74, %388 : vector<16x16xi32>
    %390 = vector.shape_cast %382 : vector<16x1xf32> to vector<16x1xf32>
    %391 = vector.broadcast %390 : vector<16x1xf32> to vector<16x16xf32>
    %392 = arith.select %389, %391, %360 : vector<16x16xi1>, vector<16x16xf32>
    %c10 = arith.constant 10 : index
    %c0_144 = arith.constant 0 : index
    %c0_145 = arith.constant 0 : index
    %393 = vector.load %arg13[%c10, %c0_144, %c0_145] : memref<16x16x128xf32, #tpu.memory_space<vmem>>, vector<1x16x128xf32>
    %394 = vector.shape_cast %393 : vector<1x16x128xf32> to vector<16x128xf32>
    %395 = arith.maximumf %363, %394 : vector<16x128xf32>
    %396 = arith.addf %364, %394 : vector<16x128xf32>
    %cst_146 = arith.constant dense<0xFF800000> : vector<128xf32>
    %397 = vector.multi_reduction <maximumf>, %394, %cst_146 [0] : vector<16x128xf32> to vector<128xf32>
    %398 = vector.shape_cast %397 : vector<128xf32> to vector<1x128xf32>
    %cst_147 = arith.constant dense<0.000000e+00> : vector<128xf32>
    %399 = vector.multi_reduction <add>, %394, %cst_147 [0] : vector<16x128xf32> to vector<128xf32>
    %400 = vector.shape_cast %399 : vector<128xf32> to vector<1x128xf32>
    %c10_i32 = arith.constant 10 : i32
    %401 = vector.broadcast %c10_i32 : i32 to vector<16x128xi32>
    %402 = arith.cmpi eq, %73, %401 : vector<16x128xi32>
    %403 = vector.shape_cast %398 : vector<1x128xf32> to vector<1x128xf32>
    %404 = vector.broadcast %403 : vector<1x128xf32> to vector<16x128xf32>
    %405 = arith.select %402, %404, %373 : vector<16x128xi1>, vector<16x128xf32>
    %c10_i32_148 = arith.constant 10 : i32
    %406 = vector.broadcast %c10_i32_148 : i32 to vector<16x128xi32>
    %407 = arith.cmpi eq, %73, %406 : vector<16x128xi32>
    %408 = vector.shape_cast %400 : vector<1x128xf32> to vector<1x128xf32>
    %409 = vector.broadcast %408 : vector<1x128xf32> to vector<16x128xf32>
    %410 = arith.select %407, %409, %378 : vector<16x128xi1>, vector<16x128xf32>
    %cst_149 = arith.constant dense<0xFF800000> : vector<16xf32>
    %411 = vector.multi_reduction <maximumf>, %394, %cst_149 [1] : vector<16x128xf32> to vector<16xf32>
    %412 = vector.shape_cast %411 : vector<16xf32> to vector<16x1xf32>
    %cst_150 = arith.constant dense<0.000000e+00> : vector<16xf32>
    %413 = vector.multi_reduction <add>, %394, %cst_150 [1] : vector<16x128xf32> to vector<16xf32>
    %414 = vector.shape_cast %413 : vector<16xf32> to vector<16x1xf32>
    %c10_i32_151 = arith.constant 10 : i32
    %415 = vector.broadcast %c10_i32_151 : i32 to vector<16x16xi32>
    %416 = arith.cmpi eq, %74, %415 : vector<16x16xi32>
    %417 = vector.shape_cast %412 : vector<16x1xf32> to vector<16x1xf32>
    %418 = vector.broadcast %417 : vector<16x1xf32> to vector<16x16xf32>
    %419 = arith.select %416, %418, %387 : vector<16x16xi1>, vector<16x16xf32>
    %c10_i32_152 = arith.constant 10 : i32
    %420 = vector.broadcast %c10_i32_152 : i32 to vector<16x16xi32>
    %421 = arith.cmpi eq, %74, %420 : vector<16x16xi32>
    %422 = vector.shape_cast %414 : vector<16x1xf32> to vector<16x1xf32>
    %423 = vector.broadcast %422 : vector<16x1xf32> to vector<16x16xf32>
    %424 = arith.select %421, %423, %392 : vector<16x16xi1>, vector<16x16xf32>
    %c11_153 = arith.constant 11 : index
    %c0_154 = arith.constant 0 : index
    %c0_155 = arith.constant 0 : index
    %425 = vector.load %arg13[%c11_153, %c0_154, %c0_155] : memref<16x16x128xf32, #tpu.memory_space<vmem>>, vector<1x16x128xf32>
    %426 = vector.shape_cast %425 : vector<1x16x128xf32> to vector<16x128xf32>
    %427 = arith.maximumf %395, %426 : vector<16x128xf32>
    %428 = arith.addf %396, %426 : vector<16x128xf32>
    %cst_156 = arith.constant dense<0xFF800000> : vector<128xf32>
    %429 = vector.multi_reduction <maximumf>, %426, %cst_156 [0] : vector<16x128xf32> to vector<128xf32>
    %430 = vector.shape_cast %429 : vector<128xf32> to vector<1x128xf32>
    %cst_157 = arith.constant dense<0.000000e+00> : vector<128xf32>
    %431 = vector.multi_reduction <add>, %426, %cst_157 [0] : vector<16x128xf32> to vector<128xf32>
    %432 = vector.shape_cast %431 : vector<128xf32> to vector<1x128xf32>
    %c11_i32 = arith.constant 11 : i32
    %433 = vector.broadcast %c11_i32 : i32 to vector<16x128xi32>
    %434 = arith.cmpi eq, %73, %433 : vector<16x128xi32>
    %435 = vector.shape_cast %430 : vector<1x128xf32> to vector<1x128xf32>
    %436 = vector.broadcast %435 : vector<1x128xf32> to vector<16x128xf32>
    %437 = arith.select %434, %436, %405 : vector<16x128xi1>, vector<16x128xf32>
    %c11_i32_158 = arith.constant 11 : i32
    %438 = vector.broadcast %c11_i32_158 : i32 to vector<16x128xi32>
    %439 = arith.cmpi eq, %73, %438 : vector<16x128xi32>
    %440 = vector.shape_cast %432 : vector<1x128xf32> to vector<1x128xf32>
    %441 = vector.broadcast %440 : vector<1x128xf32> to vector<16x128xf32>
    %442 = arith.select %439, %441, %410 : vector<16x128xi1>, vector<16x128xf32>
    %cst_159 = arith.constant dense<0xFF800000> : vector<16xf32>
    %443 = vector.multi_reduction <maximumf>, %426, %cst_159 [1] : vector<16x128xf32> to vector<16xf32>
    %444 = vector.shape_cast %443 : vector<16xf32> to vector<16x1xf32>
    %cst_160 = arith.constant dense<0.000000e+00> : vector<16xf32>
    %445 = vector.multi_reduction <add>, %426, %cst_160 [1] : vector<16x128xf32> to vector<16xf32>
    %446 = vector.shape_cast %445 : vector<16xf32> to vector<16x1xf32>
    %c11_i32_161 = arith.constant 11 : i32
    %447 = vector.broadcast %c11_i32_161 : i32 to vector<16x16xi32>
    %448 = arith.cmpi eq, %74, %447 : vector<16x16xi32>
    %449 = vector.shape_cast %444 : vector<16x1xf32> to vector<16x1xf32>
    %450 = vector.broadcast %449 : vector<16x1xf32> to vector<16x16xf32>
    %451 = arith.select %448, %450, %419 : vector<16x16xi1>, vector<16x16xf32>
    %c11_i32_162 = arith.constant 11 : i32
    %452 = vector.broadcast %c11_i32_162 : i32 to vector<16x16xi32>
    %453 = arith.cmpi eq, %74, %452 : vector<16x16xi32>
    %454 = vector.shape_cast %446 : vector<16x1xf32> to vector<16x1xf32>
    %455 = vector.broadcast %454 : vector<16x1xf32> to vector<16x16xf32>
    %456 = arith.select %453, %455, %424 : vector<16x16xi1>, vector<16x16xf32>
    %c12 = arith.constant 12 : index
    %c0_163 = arith.constant 0 : index
    %c0_164 = arith.constant 0 : index
    %457 = vector.load %arg13[%c12, %c0_163, %c0_164] : memref<16x16x128xf32, #tpu.memory_space<vmem>>, vector<1x16x128xf32>
    %458 = vector.shape_cast %457 : vector<1x16x128xf32> to vector<16x128xf32>
    %459 = arith.maximumf %427, %458 : vector<16x128xf32>
    %460 = arith.addf %428, %458 : vector<16x128xf32>
    %cst_165 = arith.constant dense<0xFF800000> : vector<128xf32>
    %461 = vector.multi_reduction <maximumf>, %458, %cst_165 [0] : vector<16x128xf32> to vector<128xf32>
    %462 = vector.shape_cast %461 : vector<128xf32> to vector<1x128xf32>
    %cst_166 = arith.constant dense<0.000000e+00> : vector<128xf32>
    %463 = vector.multi_reduction <add>, %458, %cst_166 [0] : vector<16x128xf32> to vector<128xf32>
    %464 = vector.shape_cast %463 : vector<128xf32> to vector<1x128xf32>
    %c12_i32 = arith.constant 12 : i32
    %465 = vector.broadcast %c12_i32 : i32 to vector<16x128xi32>
    %466 = arith.cmpi eq, %73, %465 : vector<16x128xi32>
    %467 = vector.shape_cast %462 : vector<1x128xf32> to vector<1x128xf32>
    %468 = vector.broadcast %467 : vector<1x128xf32> to vector<16x128xf32>
    %469 = arith.select %466, %468, %437 : vector<16x128xi1>, vector<16x128xf32>
    %c12_i32_167 = arith.constant 12 : i32
    %470 = vector.broadcast %c12_i32_167 : i32 to vector<16x128xi32>
    %471 = arith.cmpi eq, %73, %470 : vector<16x128xi32>
    %472 = vector.shape_cast %464 : vector<1x128xf32> to vector<1x128xf32>
    %473 = vector.broadcast %472 : vector<1x128xf32> to vector<16x128xf32>
    %474 = arith.select %471, %473, %442 : vector<16x128xi1>, vector<16x128xf32>
    %cst_168 = arith.constant dense<0xFF800000> : vector<16xf32>
    %475 = vector.multi_reduction <maximumf>, %458, %cst_168 [1] : vector<16x128xf32> to vector<16xf32>
    %476 = vector.shape_cast %475 : vector<16xf32> to vector<16x1xf32>
    %cst_169 = arith.constant dense<0.000000e+00> : vector<16xf32>
    %477 = vector.multi_reduction <add>, %458, %cst_169 [1] : vector<16x128xf32> to vector<16xf32>
    %478 = vector.shape_cast %477 : vector<16xf32> to vector<16x1xf32>
    %c12_i32_170 = arith.constant 12 : i32
    %479 = vector.broadcast %c12_i32_170 : i32 to vector<16x16xi32>
    %480 = arith.cmpi eq, %74, %479 : vector<16x16xi32>
    %481 = vector.shape_cast %476 : vector<16x1xf32> to vector<16x1xf32>
    %482 = vector.broadcast %481 : vector<16x1xf32> to vector<16x16xf32>
    %483 = arith.select %480, %482, %451 : vector<16x16xi1>, vector<16x16xf32>
    %c12_i32_171 = arith.constant 12 : i32
    %484 = vector.broadcast %c12_i32_171 : i32 to vector<16x16xi32>
    %485 = arith.cmpi eq, %74, %484 : vector<16x16xi32>
    %486 = vector.shape_cast %478 : vector<16x1xf32> to vector<16x1xf32>
    %487 = vector.broadcast %486 : vector<16x1xf32> to vector<16x16xf32>
    %488 = arith.select %485, %487, %456 : vector<16x16xi1>, vector<16x16xf32>
    %c13 = arith.constant 13 : index
    %c0_172 = arith.constant 0 : index
    %c0_173 = arith.constant 0 : index
    %489 = vector.load %arg13[%c13, %c0_172, %c0_173] : memref<16x16x128xf32, #tpu.memory_space<vmem>>, vector<1x16x128xf32>
    %490 = vector.shape_cast %489 : vector<1x16x128xf32> to vector<16x128xf32>
    %491 = arith.maximumf %459, %490 : vector<16x128xf32>
    %492 = arith.addf %460, %490 : vector<16x128xf32>
    %cst_174 = arith.constant dense<0xFF800000> : vector<128xf32>
    %493 = vector.multi_reduction <maximumf>, %490, %cst_174 [0] : vector<16x128xf32> to vector<128xf32>
    %494 = vector.shape_cast %493 : vector<128xf32> to vector<1x128xf32>
    %cst_175 = arith.constant dense<0.000000e+00> : vector<128xf32>
    %495 = vector.multi_reduction <add>, %490, %cst_175 [0] : vector<16x128xf32> to vector<128xf32>
    %496 = vector.shape_cast %495 : vector<128xf32> to vector<1x128xf32>
    %c13_i32 = arith.constant 13 : i32
    %497 = vector.broadcast %c13_i32 : i32 to vector<16x128xi32>
    %498 = arith.cmpi eq, %73, %497 : vector<16x128xi32>
    %499 = vector.shape_cast %494 : vector<1x128xf32> to vector<1x128xf32>
    %500 = vector.broadcast %499 : vector<1x128xf32> to vector<16x128xf32>
    %501 = arith.select %498, %500, %469 : vector<16x128xi1>, vector<16x128xf32>
    %c13_i32_176 = arith.constant 13 : i32
    %502 = vector.broadcast %c13_i32_176 : i32 to vector<16x128xi32>
    %503 = arith.cmpi eq, %73, %502 : vector<16x128xi32>
    %504 = vector.shape_cast %496 : vector<1x128xf32> to vector<1x128xf32>
    %505 = vector.broadcast %504 : vector<1x128xf32> to vector<16x128xf32>
    %506 = arith.select %503, %505, %474 : vector<16x128xi1>, vector<16x128xf32>
    %cst_177 = arith.constant dense<0xFF800000> : vector<16xf32>
    %507 = vector.multi_reduction <maximumf>, %490, %cst_177 [1] : vector<16x128xf32> to vector<16xf32>
    %508 = vector.shape_cast %507 : vector<16xf32> to vector<16x1xf32>
    %cst_178 = arith.constant dense<0.000000e+00> : vector<16xf32>
    %509 = vector.multi_reduction <add>, %490, %cst_178 [1] : vector<16x128xf32> to vector<16xf32>
    %510 = vector.shape_cast %509 : vector<16xf32> to vector<16x1xf32>
    %c13_i32_179 = arith.constant 13 : i32
    %511 = vector.broadcast %c13_i32_179 : i32 to vector<16x16xi32>
    %512 = arith.cmpi eq, %74, %511 : vector<16x16xi32>
    %513 = vector.shape_cast %508 : vector<16x1xf32> to vector<16x1xf32>
    %514 = vector.broadcast %513 : vector<16x1xf32> to vector<16x16xf32>
    %515 = arith.select %512, %514, %483 : vector<16x16xi1>, vector<16x16xf32>
    %c13_i32_180 = arith.constant 13 : i32
    %516 = vector.broadcast %c13_i32_180 : i32 to vector<16x16xi32>
    %517 = arith.cmpi eq, %74, %516 : vector<16x16xi32>
    %518 = vector.shape_cast %510 : vector<16x1xf32> to vector<16x1xf32>
    %519 = vector.broadcast %518 : vector<16x1xf32> to vector<16x16xf32>
    %520 = arith.select %517, %519, %488 : vector<16x16xi1>, vector<16x16xf32>
    %c14 = arith.constant 14 : index
    %c0_181 = arith.constant 0 : index
    %c0_182 = arith.constant 0 : index
    %521 = vector.load %arg13[%c14, %c0_181, %c0_182] : memref<16x16x128xf32, #tpu.memory_space<vmem>>, vector<1x16x128xf32>
    %522 = vector.shape_cast %521 : vector<1x16x128xf32> to vector<16x128xf32>
    %523 = arith.maximumf %491, %522 : vector<16x128xf32>
    %524 = arith.addf %492, %522 : vector<16x128xf32>
    %cst_183 = arith.constant dense<0xFF800000> : vector<128xf32>
    %525 = vector.multi_reduction <maximumf>, %522, %cst_183 [0] : vector<16x128xf32> to vector<128xf32>
    %526 = vector.shape_cast %525 : vector<128xf32> to vector<1x128xf32>
    %cst_184 = arith.constant dense<0.000000e+00> : vector<128xf32>
    %527 = vector.multi_reduction <add>, %522, %cst_184 [0] : vector<16x128xf32> to vector<128xf32>
    %528 = vector.shape_cast %527 : vector<128xf32> to vector<1x128xf32>
    %c14_i32 = arith.constant 14 : i32
    %529 = vector.broadcast %c14_i32 : i32 to vector<16x128xi32>
    %530 = arith.cmpi eq, %73, %529 : vector<16x128xi32>
    %531 = vector.shape_cast %526 : vector<1x128xf32> to vector<1x128xf32>
    %532 = vector.broadcast %531 : vector<1x128xf32> to vector<16x128xf32>
    %533 = arith.select %530, %532, %501 : vector<16x128xi1>, vector<16x128xf32>
    %c14_i32_185 = arith.constant 14 : i32
    %534 = vector.broadcast %c14_i32_185 : i32 to vector<16x128xi32>
    %535 = arith.cmpi eq, %73, %534 : vector<16x128xi32>
    %536 = vector.shape_cast %528 : vector<1x128xf32> to vector<1x128xf32>
    %537 = vector.broadcast %536 : vector<1x128xf32> to vector<16x128xf32>
    %538 = arith.select %535, %537, %506 : vector<16x128xi1>, vector<16x128xf32>
    %cst_186 = arith.constant dense<0xFF800000> : vector<16xf32>
    %539 = vector.multi_reduction <maximumf>, %522, %cst_186 [1] : vector<16x128xf32> to vector<16xf32>
    %540 = vector.shape_cast %539 : vector<16xf32> to vector<16x1xf32>
    %cst_187 = arith.constant dense<0.000000e+00> : vector<16xf32>
    %541 = vector.multi_reduction <add>, %522, %cst_187 [1] : vector<16x128xf32> to vector<16xf32>
    %542 = vector.shape_cast %541 : vector<16xf32> to vector<16x1xf32>
    %c14_i32_188 = arith.constant 14 : i32
    %543 = vector.broadcast %c14_i32_188 : i32 to vector<16x16xi32>
    %544 = arith.cmpi eq, %74, %543 : vector<16x16xi32>
    %545 = vector.shape_cast %540 : vector<16x1xf32> to vector<16x1xf32>
    %546 = vector.broadcast %545 : vector<16x1xf32> to vector<16x16xf32>
    %547 = arith.select %544, %546, %515 : vector<16x16xi1>, vector<16x16xf32>
    %c14_i32_189 = arith.constant 14 : i32
    %548 = vector.broadcast %c14_i32_189 : i32 to vector<16x16xi32>
    %549 = arith.cmpi eq, %74, %548 : vector<16x16xi32>
    %550 = vector.shape_cast %542 : vector<16x1xf32> to vector<16x1xf32>
    %551 = vector.broadcast %550 : vector<16x1xf32> to vector<16x16xf32>
    %552 = arith.select %549, %551, %520 : vector<16x16xi1>, vector<16x16xf32>
    %c15 = arith.constant 15 : index
    %c0_190 = arith.constant 0 : index
    %c0_191 = arith.constant 0 : index
    %553 = vector.load %arg13[%c15, %c0_190, %c0_191] : memref<16x16x128xf32, #tpu.memory_space<vmem>>, vector<1x16x128xf32>
    %554 = vector.shape_cast %553 : vector<1x16x128xf32> to vector<16x128xf32>
    %555 = arith.maximumf %523, %554 : vector<16x128xf32>
    %556 = arith.addf %524, %554 : vector<16x128xf32>
    %cst_192 = arith.constant dense<0xFF800000> : vector<128xf32>
    %557 = vector.multi_reduction <maximumf>, %554, %cst_192 [0] : vector<16x128xf32> to vector<128xf32>
    %558 = vector.shape_cast %557 : vector<128xf32> to vector<1x128xf32>
    %cst_193 = arith.constant dense<0.000000e+00> : vector<128xf32>
    %559 = vector.multi_reduction <add>, %554, %cst_193 [0] : vector<16x128xf32> to vector<128xf32>
    %560 = vector.shape_cast %559 : vector<128xf32> to vector<1x128xf32>
    %c15_i32 = arith.constant 15 : i32
    %561 = vector.broadcast %c15_i32 : i32 to vector<16x128xi32>
    %562 = arith.cmpi eq, %73, %561 : vector<16x128xi32>
    %563 = vector.shape_cast %558 : vector<1x128xf32> to vector<1x128xf32>
    %564 = vector.broadcast %563 : vector<1x128xf32> to vector<16x128xf32>
    %565 = arith.select %562, %564, %533 : vector<16x128xi1>, vector<16x128xf32>
    %c15_i32_194 = arith.constant 15 : i32
    %566 = vector.broadcast %c15_i32_194 : i32 to vector<16x128xi32>
    %567 = arith.cmpi eq, %73, %566 : vector<16x128xi32>
    %568 = vector.shape_cast %560 : vector<1x128xf32> to vector<1x128xf32>
    %569 = vector.broadcast %568 : vector<1x128xf32> to vector<16x128xf32>
    %570 = arith.select %567, %569, %538 : vector<16x128xi1>, vector<16x128xf32>
    %cst_195 = arith.constant dense<0xFF800000> : vector<16xf32>
    %571 = vector.multi_reduction <maximumf>, %554, %cst_195 [1] : vector<16x128xf32> to vector<16xf32>
    %572 = vector.shape_cast %571 : vector<16xf32> to vector<16x1xf32>
    %cst_196 = arith.constant dense<0.000000e+00> : vector<16xf32>
    %573 = vector.multi_reduction <add>, %554, %cst_196 [1] : vector<16x128xf32> to vector<16xf32>
    %574 = vector.shape_cast %573 : vector<16xf32> to vector<16x1xf32>
    %c15_i32_197 = arith.constant 15 : i32
    %575 = vector.broadcast %c15_i32_197 : i32 to vector<16x16xi32>
    %576 = arith.cmpi eq, %74, %575 : vector<16x16xi32>
    %577 = vector.shape_cast %572 : vector<16x1xf32> to vector<16x1xf32>
    %578 = vector.broadcast %577 : vector<16x1xf32> to vector<16x16xf32>
    %579 = arith.select %576, %578, %547 : vector<16x16xi1>, vector<16x16xf32>
    %c15_i32_198 = arith.constant 15 : i32
    %580 = vector.broadcast %c15_i32_198 : i32 to vector<16x16xi32>
    %581 = arith.cmpi eq, %74, %580 : vector<16x16xi32>
    %582 = vector.shape_cast %574 : vector<16x1xf32> to vector<16x1xf32>
    %583 = vector.broadcast %582 : vector<16x1xf32> to vector<16x16xf32>
    %584 = arith.select %581, %583, %552 : vector<16x16xi1>, vector<16x16xf32>
    %c3_199 = arith.constant 3 : index
    %c0_200 = arith.constant 0 : index
    %585 = vector.load %arg14[%c3_199, %c0_200] : memref<22x256xf32, #tpu.memory_space<vmem>>, vector<16x128xf32>
    tpu.vector_store %arg14[%c3_199, %c0_200], %555 {strides = array<i32>} : memref<22x256xf32, #tpu.memory_space<vmem>>, vector<16x128xf32>,
    %cst_201 = arith.constant 6.250000e-02 : f32
    %586 = vector.broadcast %cst_201 : f32 to vector<16x128xf32>
    %587 = arith.mulf %556, %586 : vector<16x128xf32>
    %c3_202 = arith.constant 3 : index
    %c128 = arith.constant 128 : index
    %588 = vector.load %arg14[%c3_202, %c128] : memref<22x256xf32, #tpu.memory_space<vmem>>, vector<16x128xf32>
    tpu.vector_store %arg14[%c3_202, %c128], %587 {strides = array<i32>} : memref<22x256xf32, #tpu.memory_space<vmem>>, vector<16x128xf32>,
    %c3_203 = arith.constant 3 : index
    %c0_204 = arith.constant 0 : index
    %589 = vector.load %arg15[%c3_203, %c0_204] : memref<22x256xf32, #tpu.memory_space<vmem>>, vector<16x128xf32>
    tpu.vector_store %arg15[%c3_203, %c0_204], %565 {strides = array<i32>} : memref<22x256xf32, #tpu.memory_space<vmem>>, vector<16x128xf32>,
    %cst_205 = arith.constant 6.250000e-02 : f32
    %590 = vector.broadcast %cst_205 : f32 to vector<16x128xf32>
    %591 = arith.mulf %570, %590 : vector<16x128xf32>
    %c3_206 = arith.constant 3 : index
    %c128_207 = arith.constant 128 : index
    %592 = vector.load %arg15[%c3_206, %c128_207] : memref<22x256xf32, #tpu.memory_space<vmem>>, vector<16x128xf32>
    tpu.vector_store %arg15[%c3_206, %c128_207], %591 {strides = array<i32>} : memref<22x256xf32, #tpu.memory_space<vmem>>, vector<16x128xf32>,
    %c3_208 = arith.constant 3 : index
    %c0_209 = arith.constant 0 : index
    %593 = vector.load %arg16[%c3_208, %c0_209] : memref<22x32xf32, #tpu.memory_space<vmem>>, vector<16x16xf32>
    tpu.vector_store %arg16[%c3_208, %c0_209], %579 {strides = array<i32>} : memref<22x32xf32, #tpu.memory_space<vmem>>, vector<16x16xf32>,
    %cst_210 = arith.constant 7.812500e-03 : f32
    %594 = vector.broadcast %cst_210 : f32 to vector<16x16xf32>
    %595 = arith.mulf %584, %594 : vector<16x16xf32>
    %c3_211 = arith.constant 3 : index
    %c16 = arith.constant 16 : index
    %596 = vector.load %arg16[%c3_211, %c16] : memref<22x32xf32, #tpu.memory_space<vmem>>, vector<16x16xf32>
    tpu.vector_store %arg16[%c3_211, %c16], %595 {strides = array<i32>} : memref<22x32xf32, #tpu.memory_space<vmem>>, vector<16x16xf32>,
    %c0_212 = arith.constant 0 : index
    %c0_213 = arith.constant 0 : index
    %597 = vector.load %arg14[%c0_212, %c0_213] : memref<22x256xf32, #tpu.memory_space<vmem>>, vector<16x256xf32>
    %c0_214 = arith.constant 0 : index
    %c0_215 = arith.constant 0 : index
    %c0_216 = arith.constant 0 : index
    %c0_217 = arith.constant 0 : index
    %598 = vector.load %arg7[%c0_214, %c0_215, %c0_216, %c0_217] : memref<2x7x256x128xf32, #tpu.memory_space<vmem>>, vector<1x1x256x128xf32>
    %599 = vector.shape_cast %598 : vector<1x1x256x128xf32> to vector<256x128xf32>
    %cst_218 = arith.constant dense<0.000000e+00> : vector<16x128xf32>
    %600 = tpu.matmul %597, %599, %cst_218 {dimension_numbers = #tpu.dot_dimension_numbers<[1], [0], [0], [1], [0, 0, 1, 1], [], []>} : vector<16x256xf32>, vector<256x128xf32>, vector<16x128xf32> -> vector<16x128xf32>
    %c1_219 = arith.constant 1 : index
    %c0_220 = arith.constant 0 : index
    %601 = vector.load %arg14[%c1_219, %c0_220] : memref<22x256xf32, #tpu.memory_space<vmem>>, vector<16x256xf32>
    %c0_221 = arith.constant 0 : index
    %c1_222 = arith.constant 1 : index
    %c0_223 = arith.constant 0 : index
    %c0_224 = arith.constant 0 : index
    %602 = vector.load %arg7[%c0_221, %c1_222, %c0_223, %c0_224] : memref<2x7x256x128xf32, #tpu.memory_space<vmem>>, vector<1x1x256x128xf32>
    %603 = vector.shape_cast %602 : vector<1x1x256x128xf32> to vector<256x128xf32>
    %cst_225 = arith.constant dense<0.000000e+00> : vector<16x128xf32>
    %604 = tpu.matmul %601, %603, %cst_225 {dimension_numbers = #tpu.dot_dimension_numbers<[1], [0], [0], [1], [0, 0, 1, 1], [], []>} : vector<16x256xf32>, vector<256x128xf32>, vector<16x128xf32> -> vector<16x128xf32>
    %605 = arith.addf %600, %604 : vector<16x128xf32>
    %c2_226 = arith.constant 2 : index
    %c0_227 = arith.constant 0 : index
    %606 = vector.load %arg14[%c2_226, %c0_227] : memref<22x256xf32, #tpu.memory_space<vmem>>, vector<16x256xf32>
    %c0_228 = arith.constant 0 : index
    %c2_229 = arith.constant 2 : index
    %c0_230 = arith.constant 0 : index
    %c0_231 = arith.constant 0 : index
    %607 = vector.load %arg7[%c0_228, %c2_229, %c0_230, %c0_231] : memref<2x7x256x128xf32, #tpu.memory_space<vmem>>, vector<1x1x256x128xf32>
    %608 = vector.shape_cast %607 : vector<1x1x256x128xf32> to vector<256x128xf32>
    %cst_232 = arith.constant dense<0.000000e+00> : vector<16x128xf32>
    %609 = tpu.matmul %606, %608, %cst_232 {dimension_numbers = #tpu.dot_dimension_numbers<[1], [0], [0], [1], [0, 0, 1, 1], [], []>} : vector<16x256xf32>, vector<256x128xf32>, vector<16x128xf32> -> vector<16x128xf32>
    %610 = arith.addf %605, %609 : vector<16x128xf32>
    %c3_233 = arith.constant 3 : index
    %c0_234 = arith.constant 0 : index
    %611 = vector.load %arg14[%c3_233, %c0_234] : memref<22x256xf32, #tpu.memory_space<vmem>>, vector<16x256xf32>
    %c0_235 = arith.constant 0 : index
    %c3_236 = arith.constant 3 : index
    %c0_237 = arith.constant 0 : index
    %c0_238 = arith.constant 0 : index
    %612 = vector.load %arg7[%c0_235, %c3_236, %c0_237, %c0_238] : memref<2x7x256x128xf32, #tpu.memory_space<vmem>>, vector<1x1x256x128xf32>
    %613 = vector.shape_cast %612 : vector<1x1x256x128xf32> to vector<256x128xf32>
    %cst_239 = arith.constant dense<0.000000e+00> : vector<16x128xf32>
    %614 = tpu.matmul %611, %613, %cst_239 {dimension_numbers = #tpu.dot_dimension_numbers<[1], [0], [0], [1], [0, 0, 1, 1], [], []>} : vector<16x256xf32>, vector<256x128xf32>, vector<16x128xf32> -> vector<16x128xf32>
    %615 = arith.addf %610, %614 : vector<16x128xf32>
    %c4_240 = arith.constant 4 : index
    %c0_241 = arith.constant 0 : index
    %616 = vector.load %arg14[%c4_240, %c0_241] : memref<22x256xf32, #tpu.memory_space<vmem>>, vector<16x256xf32>
    %c0_242 = arith.constant 0 : index
    %c4_243 = arith.constant 4 : index
    %c0_244 = arith.constant 0 : index
    %c0_245 = arith.constant 0 : index
    %617 = vector.load %arg7[%c0_242, %c4_243, %c0_244, %c0_245] : memref<2x7x256x128xf32, #tpu.memory_space<vmem>>, vector<1x1x256x128xf32>
    %618 = vector.shape_cast %617 : vector<1x1x256x128xf32> to vector<256x128xf32>
    %cst_246 = arith.constant dense<0.000000e+00> : vector<16x128xf32>
    %619 = tpu.matmul %616, %618, %cst_246 {dimension_numbers = #tpu.dot_dimension_numbers<[1], [0], [0], [1], [0, 0, 1, 1], [], []>} : vector<16x256xf32>, vector<256x128xf32>, vector<16x128xf32> -> vector<16x128xf32>
    %620 = arith.addf %615, %619 : vector<16x128xf32>
    %c5_247 = arith.constant 5 : index
    %c0_248 = arith.constant 0 : index
    %621 = vector.load %arg14[%c5_247, %c0_248] : memref<22x256xf32, #tpu.memory_space<vmem>>, vector<16x256xf32>
    %c0_249 = arith.constant 0 : index
    %c5_250 = arith.constant 5 : index
    %c0_251 = arith.constant 0 : index
    %c0_252 = arith.constant 0 : index
    %622 = vector.load %arg7[%c0_249, %c5_250, %c0_251, %c0_252] : memref<2x7x256x128xf32, #tpu.memory_space<vmem>>, vector<1x1x256x128xf32>
    %623 = vector.shape_cast %622 : vector<1x1x256x128xf32> to vector<256x128xf32>
    %cst_253 = arith.constant dense<0.000000e+00> : vector<16x128xf32>
    %624 = tpu.matmul %621, %623, %cst_253 {dimension_numbers = #tpu.dot_dimension_numbers<[1], [0], [0], [1], [0, 0, 1, 1], [], []>} : vector<16x256xf32>, vector<256x128xf32>, vector<16x128xf32> -> vector<16x128xf32>
    %625 = arith.addf %620, %624 : vector<16x128xf32>
    %c6_254 = arith.constant 6 : index
    %c0_255 = arith.constant 0 : index
    %626 = vector.load %arg14[%c6_254, %c0_255] : memref<22x256xf32, #tpu.memory_space<vmem>>, vector<16x256xf32>
    %c0_256 = arith.constant 0 : index
    %c6_257 = arith.constant 6 : index
    %c0_258 = arith.constant 0 : index
    %c0_259 = arith.constant 0 : index
    %627 = vector.load %arg7[%c0_256, %c6_257, %c0_258, %c0_259] : memref<2x7x256x128xf32, #tpu.memory_space<vmem>>, vector<1x1x256x128xf32>
    %628 = vector.shape_cast %627 : vector<1x1x256x128xf32> to vector<256x128xf32>
    %cst_260 = arith.constant dense<0.000000e+00> : vector<16x128xf32>
    %629 = tpu.matmul %626, %628, %cst_260 {dimension_numbers = #tpu.dot_dimension_numbers<[1], [0], [0], [1], [0, 0, 1, 1], [], []>} : vector<16x256xf32>, vector<256x128xf32>, vector<16x128xf32> -> vector<16x128xf32>
    %630 = arith.addf %625, %629 : vector<16x128xf32>
    %c0_261 = arith.constant 0 : index
    %631 = memref.load %arg9[%c0_261] : memref<3xf32, #tpu.memory_space<smem>>
    %632 = vector.broadcast %631 : f32 to vector<16x128xf32>
    %633 = arith.addf %630, %632 : vector<16x128xf32>
    %634 = arith.negf %633 : vector<16x128xf32>
    %635 = math.exp %634 : vector<16x128xf32>
    %cst_262 = arith.constant 1.000000e+00 : f32
    %636 = vector.broadcast %cst_262 : f32 to vector<16x128xf32>
    %637 = arith.addf %636, %635 : vector<16x128xf32>
    %638 = arith.divf %636, %637 : vector<16x128xf32>
    %c0_263 = arith.constant 0 : index
    %c0_264 = arith.constant 0 : index
    %639 = vector.load %arg15[%c0_263, %c0_264] : memref<22x256xf32, #tpu.memory_space<vmem>>, vector<16x256xf32>
    %c1_265 = arith.constant 1 : index
    %c0_266 = arith.constant 0 : index
    %c0_267 = arith.constant 0 : index
    %c0_268 = arith.constant 0 : index
    %640 = vector.load %arg7[%c1_265, %c0_266, %c0_267, %c0_268] : memref<2x7x256x128xf32, #tpu.memory_space<vmem>>, vector<1x1x256x128xf32>
    %641 = vector.shape_cast %640 : vector<1x1x256x128xf32> to vector<256x128xf32>
    %cst_269 = arith.constant dense<0.000000e+00> : vector<16x128xf32>
    %642 = tpu.matmul %639, %641, %cst_269 {dimension_numbers = #tpu.dot_dimension_numbers<[1], [0], [0], [1], [0, 0, 1, 1], [], []>} : vector<16x256xf32>, vector<256x128xf32>, vector<16x128xf32> -> vector<16x128xf32>
    %c1_270 = arith.constant 1 : index
    %c0_271 = arith.constant 0 : index
    %643 = vector.load %arg15[%c1_270, %c0_271] : memref<22x256xf32, #tpu.memory_space<vmem>>, vector<16x256xf32>
    %c1_272 = arith.constant 1 : index
    %c1_273 = arith.constant 1 : index
    %c0_274 = arith.constant 0 : index
    %c0_275 = arith.constant 0 : index
    %644 = vector.load %arg7[%c1_272, %c1_273, %c0_274, %c0_275] : memref<2x7x256x128xf32, #tpu.memory_space<vmem>>, vector<1x1x256x128xf32>
    %645 = vector.shape_cast %644 : vector<1x1x256x128xf32> to vector<256x128xf32>
    %cst_276 = arith.constant dense<0.000000e+00> : vector<16x128xf32>
    %646 = tpu.matmul %643, %645, %cst_276 {dimension_numbers = #tpu.dot_dimension_numbers<[1], [0], [0], [1], [0, 0, 1, 1], [], []>} : vector<16x256xf32>, vector<256x128xf32>, vector<16x128xf32> -> vector<16x128xf32>
    %647 = arith.addf %642, %646 : vector<16x128xf32>
    %c2_277 = arith.constant 2 : index
    %c0_278 = arith.constant 0 : index
    %648 = vector.load %arg15[%c2_277, %c0_278] : memref<22x256xf32, #tpu.memory_space<vmem>>, vector<16x256xf32>
    %c1_279 = arith.constant 1 : index
    %c2_280 = arith.constant 2 : index
    %c0_281 = arith.constant 0 : index
    %c0_282 = arith.constant 0 : index
    %649 = vector.load %arg7[%c1_279, %c2_280, %c0_281, %c0_282] : memref<2x7x256x128xf32, #tpu.memory_space<vmem>>, vector<1x1x256x128xf32>
    %650 = vector.shape_cast %649 : vector<1x1x256x128xf32> to vector<256x128xf32>
    %cst_283 = arith.constant dense<0.000000e+00> : vector<16x128xf32>
    %651 = tpu.matmul %648, %650, %cst_283 {dimension_numbers = #tpu.dot_dimension_numbers<[1], [0], [0], [1], [0, 0, 1, 1], [], []>} : vector<16x256xf32>, vector<256x128xf32>, vector<16x128xf32> -> vector<16x128xf32>
    %652 = arith.addf %647, %651 : vector<16x128xf32>
    %c3_284 = arith.constant 3 : index
    %c0_285 = arith.constant 0 : index
    %653 = vector.load %arg15[%c3_284, %c0_285] : memref<22x256xf32, #tpu.memory_space<vmem>>, vector<16x256xf32>
    %c1_286 = arith.constant 1 : index
    %c3_287 = arith.constant 3 : index
    %c0_288 = arith.constant 0 : index
    %c0_289 = arith.constant 0 : index
    %654 = vector.load %arg7[%c1_286, %c3_287, %c0_288, %c0_289] : memref<2x7x256x128xf32, #tpu.memory_space<vmem>>, vector<1x1x256x128xf32>
    %655 = vector.shape_cast %654 : vector<1x1x256x128xf32> to vector<256x128xf32>
    %cst_290 = arith.constant dense<0.000000e+00> : vector<16x128xf32>
    %656 = tpu.matmul %653, %655, %cst_290 {dimension_numbers = #tpu.dot_dimension_numbers<[1], [0], [0], [1], [0, 0, 1, 1], [], []>} : vector<16x256xf32>, vector<256x128xf32>, vector<16x128xf32> -> vector<16x128xf32>
    %657 = arith.addf %652, %656 : vector<16x128xf32>
    %c4_291 = arith.constant 4 : index
    %c0_292 = arith.constant 0 : index
    %658 = vector.load %arg15[%c4_291, %c0_292] : memref<22x256xf32, #tpu.memory_space<vmem>>, vector<16x256xf32>
    %c1_293 = arith.constant 1 : index
    %c4_294 = arith.constant 4 : index
    %c0_295 = arith.constant 0 : index
    %c0_296 = arith.constant 0 : index
    %659 = vector.load %arg7[%c1_293, %c4_294, %c0_295, %c0_296] : memref<2x7x256x128xf32, #tpu.memory_space<vmem>>, vector<1x1x256x128xf32>
    %660 = vector.shape_cast %659 : vector<1x1x256x128xf32> to vector<256x128xf32>
    %cst_297 = arith.constant dense<0.000000e+00> : vector<16x128xf32>
    %661 = tpu.matmul %658, %660, %cst_297 {dimension_numbers = #tpu.dot_dimension_numbers<[1], [0], [0], [1], [0, 0, 1, 1], [], []>} : vector<16x256xf32>, vector<256x128xf32>, vector<16x128xf32> -> vector<16x128xf32>
    %662 = arith.addf %657, %661 : vector<16x128xf32>
    %c5_298 = arith.constant 5 : index
    %c0_299 = arith.constant 0 : index
    %663 = vector.load %arg15[%c5_298, %c0_299] : memref<22x256xf32, #tpu.memory_space<vmem>>, vector<16x256xf32>
    %c1_300 = arith.constant 1 : index
    %c5_301 = arith.constant 5 : index
    %c0_302 = arith.constant 0 : index
    %c0_303 = arith.constant 0 : index
    %664 = vector.load %arg7[%c1_300, %c5_301, %c0_302, %c0_303] : memref<2x7x256x128xf32, #tpu.memory_space<vmem>>, vector<1x1x256x128xf32>
    %665 = vector.shape_cast %664 : vector<1x1x256x128xf32> to vector<256x128xf32>
    %cst_304 = arith.constant dense<0.000000e+00> : vector<16x128xf32>
    %666 = tpu.matmul %663, %665, %cst_304 {dimension_numbers = #tpu.dot_dimension_numbers<[1], [0], [0], [1], [0, 0, 1, 1], [], []>} : vector<16x256xf32>, vector<256x128xf32>, vector<16x128xf32> -> vector<16x128xf32>
    %667 = arith.addf %662, %666 : vector<16x128xf32>
    %c6_305 = arith.constant 6 : index
    %c0_306 = arith.constant 0 : index
    %668 = vector.load %arg15[%c6_305, %c0_306] : memref<22x256xf32, #tpu.memory_space<vmem>>, vector<16x256xf32>
    %c1_307 = arith.constant 1 : index
    %c6_308 = arith.constant 6 : index
    %c0_309 = arith.constant 0 : index
    %c0_310 = arith.constant 0 : index
    %669 = vector.load %arg7[%c1_307, %c6_308, %c0_309, %c0_310] : memref<2x7x256x128xf32, #tpu.memory_space<vmem>>, vector<1x1x256x128xf32>
    %670 = vector.shape_cast %669 : vector<1x1x256x128xf32> to vector<256x128xf32>
    %cst_311 = arith.constant dense<0.000000e+00> : vector<16x128xf32>
    %671 = tpu.matmul %668, %670, %cst_311 {dimension_numbers = #tpu.dot_dimension_numbers<[1], [0], [0], [1], [0, 0, 1, 1], [], []>} : vector<16x256xf32>, vector<256x128xf32>, vector<16x128xf32> -> vector<16x128xf32>
    %672 = arith.addf %667, %671 : vector<16x128xf32>
    %c1_312 = arith.constant 1 : index
    %673 = memref.load %arg9[%c1_312] : memref<3xf32, #tpu.memory_space<smem>>
    %674 = vector.broadcast %673 : f32 to vector<16x128xf32>
    %675 = arith.addf %672, %674 : vector<16x128xf32>
    %676 = arith.negf %675 : vector<16x128xf32>
    %677 = math.exp %676 : vector<16x128xf32>
    %cst_313 = arith.constant 1.000000e+00 : f32
    %678 = vector.broadcast %cst_313 : f32 to vector<16x128xf32>
    %679 = arith.addf %678, %677 : vector<16x128xf32>
    %680 = arith.divf %678, %679 : vector<16x128xf32>
    %c0_314 = arith.constant 0 : index
    %c0_315 = arith.constant 0 : index
    %681 = vector.load %arg16[%c0_314, %c0_315] : memref<22x32xf32, #tpu.memory_space<vmem>>, vector<16x32xf32>
    %c0_316 = arith.constant 0 : index
    %c0_317 = arith.constant 0 : index
    %c0_318 = arith.constant 0 : index
    %682 = vector.load %arg8[%c0_316, %c0_317, %c0_318] : memref<7x32x16xf32, #tpu.memory_space<vmem>>, vector<1x32x16xf32>
    %683 = vector.shape_cast %682 : vector<1x32x16xf32> to vector<32x16xf32>
    %cst_319 = arith.constant dense<0.000000e+00> : vector<16x16xf32>
    %684 = tpu.matmul %681, %683, %cst_319 {dimension_numbers = #tpu.dot_dimension_numbers<[1], [0], [0], [1], [0, 0, 1, 1], [], []>} : vector<16x32xf32>, vector<32x16xf32>, vector<16x16xf32> -> vector<16x16xf32>
    %c1_320 = arith.constant 1 : index
    %c0_321 = arith.constant 0 : index
    %685 = vector.load %arg16[%c1_320, %c0_321] : memref<22x32xf32, #tpu.memory_space<vmem>>, vector<16x32xf32>
    %c1_322 = arith.constant 1 : index
    %c0_323 = arith.constant 0 : index
    %c0_324 = arith.constant 0 : index
    %686 = vector.load %arg8[%c1_322, %c0_323, %c0_324] : memref<7x32x16xf32, #tpu.memory_space<vmem>>, vector<1x32x16xf32>
    %687 = vector.shape_cast %686 : vector<1x32x16xf32> to vector<32x16xf32>
    %cst_325 = arith.constant dense<0.000000e+00> : vector<16x16xf32>
    %688 = tpu.matmul %685, %687, %cst_325 {dimension_numbers = #tpu.dot_dimension_numbers<[1], [0], [0], [1], [0, 0, 1, 1], [], []>} : vector<16x32xf32>, vector<32x16xf32>, vector<16x16xf32> -> vector<16x16xf32>
    %689 = arith.addf %684, %688 : vector<16x16xf32>
    %c2_326 = arith.constant 2 : index
    %c0_327 = arith.constant 0 : index
    %690 = vector.load %arg16[%c2_326, %c0_327] : memref<22x32xf32, #tpu.memory_space<vmem>>, vector<16x32xf32>
    %c2_328 = arith.constant 2 : index
    %c0_329 = arith.constant 0 : index
    %c0_330 = arith.constant 0 : index
    %691 = vector.load %arg8[%c2_328, %c0_329, %c0_330] : memref<7x32x16xf32, #tpu.memory_space<vmem>>, vector<1x32x16xf32>
    %692 = vector.shape_cast %691 : vector<1x32x16xf32> to vector<32x16xf32>
    %cst_331 = arith.constant dense<0.000000e+00> : vector<16x16xf32>
    %693 = tpu.matmul %690, %692, %cst_331 {dimension_numbers = #tpu.dot_dimension_numbers<[1], [0], [0], [1], [0, 0, 1, 1], [], []>} : vector<16x32xf32>, vector<32x16xf32>, vector<16x16xf32> -> vector<16x16xf32>
    %694 = arith.addf %689, %693 : vector<16x16xf32>
    %c3_332 = arith.constant 3 : index
    %c0_333 = arith.constant 0 : index
    %695 = vector.load %arg16[%c3_332, %c0_333] : memref<22x32xf32, #tpu.memory_space<vmem>>, vector<16x32xf32>
    %c3_334 = arith.constant 3 : index
    %c0_335 = arith.constant 0 : index
    %c0_336 = arith.constant 0 : index
    %696 = vector.load %arg8[%c3_334, %c0_335, %c0_336] : memref<7x32x16xf32, #tpu.memory_space<vmem>>, vector<1x32x16xf32>
    %697 = vector.shape_cast %696 : vector<1x32x16xf32> to vector<32x16xf32>
    %cst_337 = arith.constant dense<0.000000e+00> : vector<16x16xf32>
    %698 = tpu.matmul %695, %697, %cst_337 {dimension_numbers = #tpu.dot_dimension_numbers<[1], [0], [0], [1], [0, 0, 1, 1], [], []>} : vector<16x32xf32>, vector<32x16xf32>, vector<16x16xf32> -> vector<16x16xf32>
    %699 = arith.addf %694, %698 : vector<16x16xf32>
    %c4_338 = arith.constant 4 : index
    %c0_339 = arith.constant 0 : index
    %700 = vector.load %arg16[%c4_338, %c0_339] : memref<22x32xf32, #tpu.memory_space<vmem>>, vector<16x32xf32>
    %c4_340 = arith.constant 4 : index
    %c0_341 = arith.constant 0 : index
    %c0_342 = arith.constant 0 : index
    %701 = vector.load %arg8[%c4_340, %c0_341, %c0_342] : memref<7x32x16xf32, #tpu.memory_space<vmem>>, vector<1x32x16xf32>
    %702 = vector.shape_cast %701 : vector<1x32x16xf32> to vector<32x16xf32>
    %cst_343 = arith.constant dense<0.000000e+00> : vector<16x16xf32>
    %703 = tpu.matmul %700, %702, %cst_343 {dimension_numbers = #tpu.dot_dimension_numbers<[1], [0], [0], [1], [0, 0, 1, 1], [], []>} : vector<16x32xf32>, vector<32x16xf32>, vector<16x16xf32> -> vector<16x16xf32>
    %704 = arith.addf %699, %703 : vector<16x16xf32>
    %c5_344 = arith.constant 5 : index
    %c0_345 = arith.constant 0 : index
    %705 = vector.load %arg16[%c5_344, %c0_345] : memref<22x32xf32, #tpu.memory_space<vmem>>, vector<16x32xf32>
    %c5_346 = arith.constant 5 : index
    %c0_347 = arith.constant 0 : index
    %c0_348 = arith.constant 0 : index
    %706 = vector.load %arg8[%c5_346, %c0_347, %c0_348] : memref<7x32x16xf32, #tpu.memory_space<vmem>>, vector<1x32x16xf32>
    %707 = vector.shape_cast %706 : vector<1x32x16xf32> to vector<32x16xf32>
    %cst_349 = arith.constant dense<0.000000e+00> : vector<16x16xf32>
    %708 = tpu.matmul %705, %707, %cst_349 {dimension_numbers = #tpu.dot_dimension_numbers<[1], [0], [0], [1], [0, 0, 1, 1], [], []>} : vector<16x32xf32>, vector<32x16xf32>, vector<16x16xf32> -> vector<16x16xf32>
    %709 = arith.addf %704, %708 : vector<16x16xf32>
    %c6_350 = arith.constant 6 : index
    %c0_351 = arith.constant 0 : index
    %710 = vector.load %arg16[%c6_350, %c0_351] : memref<22x32xf32, #tpu.memory_space<vmem>>, vector<16x32xf32>
    %c6_352 = arith.constant 6 : index
    %c0_353 = arith.constant 0 : index
    %c0_354 = arith.constant 0 : index
    %711 = vector.load %arg8[%c6_352, %c0_353, %c0_354] : memref<7x32x16xf32, #tpu.memory_space<vmem>>, vector<1x32x16xf32>
    %712 = vector.shape_cast %711 : vector<1x32x16xf32> to vector<32x16xf32>
    %cst_355 = arith.constant dense<0.000000e+00> : vector<16x16xf32>
    %713 = tpu.matmul %710, %712, %cst_355 {dimension_numbers = #tpu.dot_dimension_numbers<[1], [0], [0], [1], [0, 0, 1, 1], [], []>} : vector<16x32xf32>, vector<32x16xf32>, vector<16x16xf32> -> vector<16x16xf32>
    %714 = arith.addf %709, %713 : vector<16x16xf32>
    %c2_356 = arith.constant 2 : index
    %715 = memref.load %arg9[%c2_356] : memref<3xf32, #tpu.memory_space<smem>>
    %716 = vector.broadcast %715 : f32 to vector<16x16xf32>
    %717 = arith.addf %714, %716 : vector<16x16xf32>
    %718 = arith.negf %717 : vector<16x16xf32>
    %719 = math.exp %718 : vector<16x16xf32>
    %cst_357 = arith.constant 1.000000e+00 : f32
    %720 = vector.broadcast %cst_357 : f32 to vector<16x16xf32>
    %721 = arith.addf %720, %719 : vector<16x16xf32>
    %722 = arith.divf %720, %721 : vector<16x16xf32>
    %c0_358 = arith.constant 0 : index
    %c0_359 = arith.constant 0 : index
    %723 = vector.load %arg17[%c0_358, %c0_359] : memref<16x16xf32, #tpu.memory_space<vmem>>, vector<16x16xf32>
    tpu.vector_store %arg17[%c0_358, %c0_359], %722 {strides = array<i32>} : memref<16x16xf32, #tpu.memory_space<vmem>>, vector<16x16xf32>,
    %c0_360 = arith.constant 0 : index
    %c0_361 = arith.constant 0 : index
    %724 = vector.load %arg17[%c0_360, %c0_361] : memref<16x16xf32, #tpu.memory_space<vmem>>, vector<16x1xf32>
    %725 = vector.extract_strided_slice %680 {offsets = [0, 0], sizes = [1, 128], strides = [1, 1]} : vector<16x128xf32> to vector<1x128xf32>
    %726 = vector.broadcast %725 : vector<1x128xf32> to vector<16x128xf32>
    %727 = arith.addf %638, %726 : vector<16x128xf32>
    %728 = vector.broadcast %724 : vector<16x1xf32> to vector<16x128xf32>
    %729 = arith.addf %727, %728 : vector<16x128xf32>
    %cst_362 = arith.constant 0.333333343 : f32
    %730 = vector.broadcast %cst_362 : f32 to vector<16x128xf32>
    %731 = arith.mulf %729, %730 : vector<16x128xf32>
    %c0_363 = arith.constant 0 : index
    %c0_364 = arith.constant 0 : index
    %c0_365 = arith.constant 0 : index
    %c0_366 = arith.constant 0 : index
    %732 = vector.load %arg2[%c0_363, %c0_364, %c0_365, %c0_366] : memref<1x16x16x128xf32, #tpu.memory_space<vmem>>, vector<1x1x16x128xf32>
    %733 = vector.shape_cast %732 : vector<1x1x16x128xf32> to vector<16x128xf32>
    %c0_367 = arith.constant 0 : index
    %c0_368 = arith.constant 0 : index
    %c0_369 = arith.constant 0 : index
    %734 = vector.load %arg13[%c0_367, %c0_368, %c0_369] : memref<16x16x128xf32, #tpu.memory_space<vmem>>, vector<1x16x128xf32>
    %735 = vector.shape_cast %734 : vector<1x16x128xf32> to vector<16x128xf32>
    %736 = arith.mulf %735, %731 : vector<16x128xf32>
    %737 = arith.addf %733, %736 : vector<16x128xf32>
    %c0_370 = arith.constant 0 : index
    %c0_371 = arith.constant 0 : index
    %c0_372 = arith.constant 0 : index
    %c0_373 = arith.constant 0 : index
    %738 = vector.load %arg10[%c0_370, %c0_371, %c0_372, %c0_373] : memref<1x16x16x128xf32, #tpu.memory_space<vmem>>, vector<1x1x16x128xf32>
    %739 = vector.shape_cast %738 : vector<1x1x16x128xf32> to vector<16x128xf32>
    %740 = vector.shape_cast %737 : vector<16x128xf32> to vector<1x1x16x128xf32>
    tpu.vector_store %arg10[%c0_370, %c0_371, %c0_372, %c0_373], %740 {strides = array<i32>} : memref<1x16x16x128xf32, #tpu.memory_space<vmem>>, vector<1x1x16x128xf32>,
    %c0_374 = arith.constant 0 : index
    %c1_375 = arith.constant 1 : index
    %741 = vector.load %arg17[%c0_374, %c1_375] : memref<16x16xf32, #tpu.memory_space<vmem>>, vector<16x1xf32>
    %742 = vector.extract_strided_slice %680 {offsets = [1, 0], sizes = [1, 128], strides = [1, 1]} : vector<16x128xf32> to vector<1x128xf32>
    %743 = vector.broadcast %742 : vector<1x128xf32> to vector<16x128xf32>
    %744 = arith.addf %638, %743 : vector<16x128xf32>
    %745 = vector.broadcast %741 : vector<16x1xf32> to vector<16x128xf32>
    %746 = arith.addf %744, %745 : vector<16x128xf32>
    %cst_376 = arith.constant 0.333333343 : f32
    %747 = vector.broadcast %cst_376 : f32 to vector<16x128xf32>
    %748 = arith.mulf %746, %747 : vector<16x128xf32>
    %c0_377 = arith.constant 0 : index
    %c1_378 = arith.constant 1 : index
    %c0_379 = arith.constant 0 : index
    %c0_380 = arith.constant 0 : index
    %749 = vector.load %arg2[%c0_377, %c1_378, %c0_379, %c0_380] : memref<1x16x16x128xf32, #tpu.memory_space<vmem>>, vector<1x1x16x128xf32>
    %750 = vector.shape_cast %749 : vector<1x1x16x128xf32> to vector<16x128xf32>
    %c1_381 = arith.constant 1 : index
    %c0_382 = arith.constant 0 : index
    %c0_383 = arith.constant 0 : index
    %751 = vector.load %arg13[%c1_381, %c0_382, %c0_383] : memref<16x16x128xf32, #tpu.memory_space<vmem>>, vector<1x16x128xf32>
    %752 = vector.shape_cast %751 : vector<1x16x128xf32> to vector<16x128xf32>
    %753 = arith.mulf %752, %748 : vector<16x128xf32>
    %754 = arith.addf %750, %753 : vector<16x128xf32>
    %c0_384 = arith.constant 0 : index
    %c1_385 = arith.constant 1 : index
    %c0_386 = arith.constant 0 : index
    %c0_387 = arith.constant 0 : index
    %755 = vector.load %arg10[%c0_384, %c1_385, %c0_386, %c0_387] : memref<1x16x16x128xf32, #tpu.memory_space<vmem>>, vector<1x1x16x128xf32>
    %756 = vector.shape_cast %755 : vector<1x1x16x128xf32> to vector<16x128xf32>
    %757 = vector.shape_cast %754 : vector<16x128xf32> to vector<1x1x16x128xf32>
    tpu.vector_store %arg10[%c0_384, %c1_385, %c0_386, %c0_387], %757 {strides = array<i32>} : memref<1x16x16x128xf32, #tpu.memory_space<vmem>>, vector<1x1x16x128xf32>,
    %c0_388 = arith.constant 0 : index
    %c2_389 = arith.constant 2 : index
    %758 = vector.load %arg17[%c0_388, %c2_389] : memref<16x16xf32, #tpu.memory_space<vmem>>, vector<16x1xf32>
    %759 = vector.extract_strided_slice %680 {offsets = [2, 0], sizes = [1, 128], strides = [1, 1]} : vector<16x128xf32> to vector<1x128xf32>
    %760 = vector.broadcast %759 : vector<1x128xf32> to vector<16x128xf32>
    %761 = arith.addf %638, %760 : vector<16x128xf32>
    %762 = vector.broadcast %758 : vector<16x1xf32> to vector<16x128xf32>
    %763 = arith.addf %761, %762 : vector<16x128xf32>
    %cst_390 = arith.constant 0.333333343 : f32
    %764 = vector.broadcast %cst_390 : f32 to vector<16x128xf32>
    %765 = arith.mulf %763, %764 : vector<16x128xf32>
    %c0_391 = arith.constant 0 : index
    %c2_392 = arith.constant 2 : index
    %c0_393 = arith.constant 0 : index
    %c0_394 = arith.constant 0 : index
    %766 = vector.load %arg2[%c0_391, %c2_392, %c0_393, %c0_394] : memref<1x16x16x128xf32, #tpu.memory_space<vmem>>, vector<1x1x16x128xf32>
    %767 = vector.shape_cast %766 : vector<1x1x16x128xf32> to vector<16x128xf32>
    %c2_395 = arith.constant 2 : index
    %c0_396 = arith.constant 0 : index
    %c0_397 = arith.constant 0 : index
    %768 = vector.load %arg13[%c2_395, %c0_396, %c0_397] : memref<16x16x128xf32, #tpu.memory_space<vmem>>, vector<1x16x128xf32>
    %769 = vector.shape_cast %768 : vector<1x16x128xf32> to vector<16x128xf32>
    %770 = arith.mulf %769, %765 : vector<16x128xf32>
    %771 = arith.addf %767, %770 : vector<16x128xf32>
    %c0_398 = arith.constant 0 : index
    %c2_399 = arith.constant 2 : index
    %c0_400 = arith.constant 0 : index
    %c0_401 = arith.constant 0 : index
    %772 = vector.load %arg10[%c0_398, %c2_399, %c0_400, %c0_401] : memref<1x16x16x128xf32, #tpu.memory_space<vmem>>, vector<1x1x16x128xf32>
    %773 = vector.shape_cast %772 : vector<1x1x16x128xf32> to vector<16x128xf32>
    %774 = vector.shape_cast %771 : vector<16x128xf32> to vector<1x1x16x128xf32>
    tpu.vector_store %arg10[%c0_398, %c2_399, %c0_400, %c0_401], %774 {strides = array<i32>} : memref<1x16x16x128xf32, #tpu.memory_space<vmem>>, vector<1x1x16x128xf32>,
    %c0_402 = arith.constant 0 : index
    %c3_403 = arith.constant 3 : index
    %775 = vector.load %arg17[%c0_402, %c3_403] : memref<16x16xf32, #tpu.memory_space<vmem>>, vector<16x1xf32>
    %776 = vector.extract_strided_slice %680 {offsets = [3, 0], sizes = [1, 128], strides = [1, 1]} : vector<16x128xf32> to vector<1x128xf32>
    %777 = vector.broadcast %776 : vector<1x128xf32> to vector<16x128xf32>
    %778 = arith.addf %638, %777 : vector<16x128xf32>
    %779 = vector.broadcast %775 : vector<16x1xf32> to vector<16x128xf32>
    %780 = arith.addf %778, %779 : vector<16x128xf32>
    %cst_404 = arith.constant 0.333333343 : f32
    %781 = vector.broadcast %cst_404 : f32 to vector<16x128xf32>
    %782 = arith.mulf %780, %781 : vector<16x128xf32>
    %c0_405 = arith.constant 0 : index
    %c3_406 = arith.constant 3 : index
    %c0_407 = arith.constant 0 : index
    %c0_408 = arith.constant 0 : index
    %783 = vector.load %arg2[%c0_405, %c3_406, %c0_407, %c0_408] : memref<1x16x16x128xf32, #tpu.memory_space<vmem>>, vector<1x1x16x128xf32>
    %784 = vector.shape_cast %783 : vector<1x1x16x128xf32> to vector<16x128xf32>
    %c3_409 = arith.constant 3 : index
    %c0_410 = arith.constant 0 : index
    %c0_411 = arith.constant 0 : index
    %785 = vector.load %arg13[%c3_409, %c0_410, %c0_411] : memref<16x16x128xf32, #tpu.memory_space<vmem>>, vector<1x16x128xf32>
    %786 = vector.shape_cast %785 : vector<1x16x128xf32> to vector<16x128xf32>
    %787 = arith.mulf %786, %782 : vector<16x128xf32>
    %788 = arith.addf %784, %787 : vector<16x128xf32>
    %c0_412 = arith.constant 0 : index
    %c3_413 = arith.constant 3 : index
    %c0_414 = arith.constant 0 : index
    %c0_415 = arith.constant 0 : index
    %789 = vector.load %arg10[%c0_412, %c3_413, %c0_414, %c0_415] : memref<1x16x16x128xf32, #tpu.memory_space<vmem>>, vector<1x1x16x128xf32>
    %790 = vector.shape_cast %789 : vector<1x1x16x128xf32> to vector<16x128xf32>
    %791 = vector.shape_cast %788 : vector<16x128xf32> to vector<1x1x16x128xf32>
    tpu.vector_store %arg10[%c0_412, %c3_413, %c0_414, %c0_415], %791 {strides = array<i32>} : memref<1x16x16x128xf32, #tpu.memory_space<vmem>>, vector<1x1x16x128xf32>,
    %c0_416 = arith.constant 0 : index
    %c4_417 = arith.constant 4 : index
    %792 = vector.load %arg17[%c0_416, %c4_417] : memref<16x16xf32, #tpu.memory_space<vmem>>, vector<16x1xf32>
    %793 = vector.extract_strided_slice %680 {offsets = [4, 0], sizes = [1, 128], strides = [1, 1]} : vector<16x128xf32> to vector<1x128xf32>
    %794 = vector.broadcast %793 : vector<1x128xf32> to vector<16x128xf32>
    %795 = arith.addf %638, %794 : vector<16x128xf32>
    %796 = vector.broadcast %792 : vector<16x1xf32> to vector<16x128xf32>
    %797 = arith.addf %795, %796 : vector<16x128xf32>
    %cst_418 = arith.constant 0.333333343 : f32
    %798 = vector.broadcast %cst_418 : f32 to vector<16x128xf32>
    %799 = arith.mulf %797, %798 : vector<16x128xf32>
    %c0_419 = arith.constant 0 : index
    %c4_420 = arith.constant 4 : index
    %c0_421 = arith.constant 0 : index
    %c0_422 = arith.constant 0 : index
    %800 = vector.load %arg2[%c0_419, %c4_420, %c0_421, %c0_422] : memref<1x16x16x128xf32, #tpu.memory_space<vmem>>, vector<1x1x16x128xf32>
    %801 = vector.shape_cast %800 : vector<1x1x16x128xf32> to vector<16x128xf32>
    %c4_423 = arith.constant 4 : index
    %c0_424 = arith.constant 0 : index
    %c0_425 = arith.constant 0 : index
    %802 = vector.load %arg13[%c4_423, %c0_424, %c0_425] : memref<16x16x128xf32, #tpu.memory_space<vmem>>, vector<1x16x128xf32>
    %803 = vector.shape_cast %802 : vector<1x16x128xf32> to vector<16x128xf32>
    %804 = arith.mulf %803, %799 : vector<16x128xf32>
    %805 = arith.addf %801, %804 : vector<16x128xf32>
    %c0_426 = arith.constant 0 : index
    %c4_427 = arith.constant 4 : index
    %c0_428 = arith.constant 0 : index
    %c0_429 = arith.constant 0 : index
    %806 = vector.load %arg10[%c0_426, %c4_427, %c0_428, %c0_429] : memref<1x16x16x128xf32, #tpu.memory_space<vmem>>, vector<1x1x16x128xf32>
    %807 = vector.shape_cast %806 : vector<1x1x16x128xf32> to vector<16x128xf32>
    %808 = vector.shape_cast %805 : vector<16x128xf32> to vector<1x1x16x128xf32>
    tpu.vector_store %arg10[%c0_426, %c4_427, %c0_428, %c0_429], %808 {strides = array<i32>} : memref<1x16x16x128xf32, #tpu.memory_space<vmem>>, vector<1x1x16x128xf32>,
    %c0_430 = arith.constant 0 : index
    %c5_431 = arith.constant 5 : index
    %809 = vector.load %arg17[%c0_430, %c5_431] : memref<16x16xf32, #tpu.memory_space<vmem>>, vector<16x1xf32>
    %810 = vector.extract_strided_slice %680 {offsets = [5, 0], sizes = [1, 128], strides = [1, 1]} : vector<16x128xf32> to vector<1x128xf32>
    %811 = vector.broadcast %810 : vector<1x128xf32> to vector<16x128xf32>
    %812 = arith.addf %638, %811 : vector<16x128xf32>
    %813 = vector.broadcast %809 : vector<16x1xf32> to vector<16x128xf32>
    %814 = arith.addf %812, %813 : vector<16x128xf32>
    %cst_432 = arith.constant 0.333333343 : f32
    %815 = vector.broadcast %cst_432 : f32 to vector<16x128xf32>
    %816 = arith.mulf %814, %815 : vector<16x128xf32>
    %c0_433 = arith.constant 0 : index
    %c5_434 = arith.constant 5 : index
    %c0_435 = arith.constant 0 : index
    %c0_436 = arith.constant 0 : index
    %817 = vector.load %arg2[%c0_433, %c5_434, %c0_435, %c0_436] : memref<1x16x16x128xf32, #tpu.memory_space<vmem>>, vector<1x1x16x128xf32>
    %818 = vector.shape_cast %817 : vector<1x1x16x128xf32> to vector<16x128xf32>
    %c5_437 = arith.constant 5 : index
    %c0_438 = arith.constant 0 : index
    %c0_439 = arith.constant 0 : index
    %819 = vector.load %arg13[%c5_437, %c0_438, %c0_439] : memref<16x16x128xf32, #tpu.memory_space<vmem>>, vector<1x16x128xf32>
    %820 = vector.shape_cast %819 : vector<1x16x128xf32> to vector<16x128xf32>
    %821 = arith.mulf %820, %816 : vector<16x128xf32>
    %822 = arith.addf %818, %821 : vector<16x128xf32>
    %c0_440 = arith.constant 0 : index
    %c5_441 = arith.constant 5 : index
    %c0_442 = arith.constant 0 : index
    %c0_443 = arith.constant 0 : index
    %823 = vector.load %arg10[%c0_440, %c5_441, %c0_442, %c0_443] : memref<1x16x16x128xf32, #tpu.memory_space<vmem>>, vector<1x1x16x128xf32>
    %824 = vector.shape_cast %823 : vector<1x1x16x128xf32> to vector<16x128xf32>
    %825 = vector.shape_cast %822 : vector<16x128xf32> to vector<1x1x16x128xf32>
    tpu.vector_store %arg10[%c0_440, %c5_441, %c0_442, %c0_443], %825 {strides = array<i32>} : memref<1x16x16x128xf32, #tpu.memory_space<vmem>>, vector<1x1x16x128xf32>,
    %c0_444 = arith.constant 0 : index
    %c6_445 = arith.constant 6 : index
    %826 = vector.load %arg17[%c0_444, %c6_445] : memref<16x16xf32, #tpu.memory_space<vmem>>, vector<16x1xf32>
    %827 = vector.extract_strided_slice %680 {offsets = [6, 0], sizes = [1, 128], strides = [1, 1]} : vector<16x128xf32> to vector<1x128xf32>
    %828 = vector.broadcast %827 : vector<1x128xf32> to vector<16x128xf32>
    %829 = arith.addf %638, %828 : vector<16x128xf32>
    %830 = vector.broadcast %826 : vector<16x1xf32> to vector<16x128xf32>
    %831 = arith.addf %829, %830 : vector<16x128xf32>
    %cst_446 = arith.constant 0.333333343 : f32
    %832 = vector.broadcast %cst_446 : f32 to vector<16x128xf32>
    %833 = arith.mulf %831, %832 : vector<16x128xf32>
    %c0_447 = arith.constant 0 : index
    %c6_448 = arith.constant 6 : index
    %c0_449 = arith.constant 0 : index
    %c0_450 = arith.constant 0 : index
    %834 = vector.load %arg2[%c0_447, %c6_448, %c0_449, %c0_450] : memref<1x16x16x128xf32, #tpu.memory_space<vmem>>, vector<1x1x16x128xf32>
    %835 = vector.shape_cast %834 : vector<1x1x16x128xf32> to vector<16x128xf32>
    %c6_451 = arith.constant 6 : index
    %c0_452 = arith.constant 0 : index
    %c0_453 = arith.constant 0 : index
    %836 = vector.load %arg13[%c6_451, %c0_452, %c0_453] : memref<16x16x128xf32, #tpu.memory_space<vmem>>, vector<1x16x128xf32>
    %837 = vector.shape_cast %836 : vector<1x16x128xf32> to vector<16x128xf32>
    %838 = arith.mulf %837, %833 : vector<16x128xf32>
    %839 = arith.addf %835, %838 : vector<16x128xf32>
    %c0_454 = arith.constant 0 : index
    %c6_455 = arith.constant 6 : index
    %c0_456 = arith.constant 0 : index
    %c0_457 = arith.constant 0 : index
    %840 = vector.load %arg10[%c0_454, %c6_455, %c0_456, %c0_457] : memref<1x16x16x128xf32, #tpu.memory_space<vmem>>, vector<1x1x16x128xf32>
    %841 = vector.shape_cast %840 : vector<1x1x16x128xf32> to vector<16x128xf32>
    %842 = vector.shape_cast %839 : vector<16x128xf32> to vector<1x1x16x128xf32>
    tpu.vector_store %arg10[%c0_454, %c6_455, %c0_456, %c0_457], %842 {strides = array<i32>} : memref<1x16x16x128xf32, #tpu.memory_space<vmem>>, vector<1x1x16x128xf32>,
    %c0_458 = arith.constant 0 : index
    %c7_459 = arith.constant 7 : index
    %843 = vector.load %arg17[%c0_458, %c7_459] : memref<16x16xf32, #tpu.memory_space<vmem>>, vector<16x1xf32>
    %844 = vector.extract_strided_slice %680 {offsets = [7, 0], sizes = [1, 128], strides = [1, 1]} : vector<16x128xf32> to vector<1x128xf32>
    %845 = vector.broadcast %844 : vector<1x128xf32> to vector<16x128xf32>
    %846 = arith.addf %638, %845 : vector<16x128xf32>
    %847 = vector.broadcast %843 : vector<16x1xf32> to vector<16x128xf32>
    %848 = arith.addf %846, %847 : vector<16x128xf32>
    %cst_460 = arith.constant 0.333333343 : f32
    %849 = vector.broadcast %cst_460 : f32 to vector<16x128xf32>
    %850 = arith.mulf %848, %849 : vector<16x128xf32>
    %c0_461 = arith.constant 0 : index
    %c7_462 = arith.constant 7 : index
    %c0_463 = arith.constant 0 : index
    %c0_464 = arith.constant 0 : index
    %851 = vector.load %arg2[%c0_461, %c7_462, %c0_463, %c0_464] : memref<1x16x16x128xf32, #tpu.memory_space<vmem>>, vector<1x1x16x128xf32>
    %852 = vector.shape_cast %851 : vector<1x1x16x128xf32> to vector<16x128xf32>
    %c7_465 = arith.constant 7 : index
    %c0_466 = arith.constant 0 : index
    %c0_467 = arith.constant 0 : index
    %853 = vector.load %arg13[%c7_465, %c0_466, %c0_467] : memref<16x16x128xf32, #tpu.memory_space<vmem>>, vector<1x16x128xf32>
    %854 = vector.shape_cast %853 : vector<1x16x128xf32> to vector<16x128xf32>
    %855 = arith.mulf %854, %850 : vector<16x128xf32>
    %856 = arith.addf %852, %855 : vector<16x128xf32>
    %c0_468 = arith.constant 0 : index
    %c7_469 = arith.constant 7 : index
    %c0_470 = arith.constant 0 : index
    %c0_471 = arith.constant 0 : index
    %857 = vector.load %arg10[%c0_468, %c7_469, %c0_470, %c0_471] : memref<1x16x16x128xf32, #tpu.memory_space<vmem>>, vector<1x1x16x128xf32>
    %858 = vector.shape_cast %857 : vector<1x1x16x128xf32> to vector<16x128xf32>
    %859 = vector.shape_cast %856 : vector<16x128xf32> to vector<1x1x16x128xf32>
    tpu.vector_store %arg10[%c0_468, %c7_469, %c0_470, %c0_471], %859 {strides = array<i32>} : memref<1x16x16x128xf32, #tpu.memory_space<vmem>>, vector<1x1x16x128xf32>,
    %c0_472 = arith.constant 0 : index
    %c8_473 = arith.constant 8 : index
    %860 = vector.load %arg17[%c0_472, %c8_473] : memref<16x16xf32, #tpu.memory_space<vmem>>, vector<16x1xf32>
    %861 = vector.extract_strided_slice %680 {offsets = [8, 0], sizes = [1, 128], strides = [1, 1]} : vector<16x128xf32> to vector<1x128xf32>
    %862 = vector.broadcast %861 : vector<1x128xf32> to vector<16x128xf32>
    %863 = arith.addf %638, %862 : vector<16x128xf32>
    %864 = vector.broadcast %860 : vector<16x1xf32> to vector<16x128xf32>
    %865 = arith.addf %863, %864 : vector<16x128xf32>
    %cst_474 = arith.constant 0.333333343 : f32
    %866 = vector.broadcast %cst_474 : f32 to vector<16x128xf32>
    %867 = arith.mulf %865, %866 : vector<16x128xf32>
    %c0_475 = arith.constant 0 : index
    %c8_476 = arith.constant 8 : index
    %c0_477 = arith.constant 0 : index
    %c0_478 = arith.constant 0 : index
    %868 = vector.load %arg2[%c0_475, %c8_476, %c0_477, %c0_478] : memref<1x16x16x128xf32, #tpu.memory_space<vmem>>, vector<1x1x16x128xf32>
    %869 = vector.shape_cast %868 : vector<1x1x16x128xf32> to vector<16x128xf32>
    %c8_479 = arith.constant 8 : index
    %c0_480 = arith.constant 0 : index
    %c0_481 = arith.constant 0 : index
    %870 = vector.load %arg13[%c8_479, %c0_480, %c0_481] : memref<16x16x128xf32, #tpu.memory_space<vmem>>, vector<1x16x128xf32>
    %871 = vector.shape_cast %870 : vector<1x16x128xf32> to vector<16x128xf32>
    %872 = arith.mulf %871, %867 : vector<16x128xf32>
    %873 = arith.addf %869, %872 : vector<16x128xf32>
    %c0_482 = arith.constant 0 : index
    %c8_483 = arith.constant 8 : index
    %c0_484 = arith.constant 0 : index
    %c0_485 = arith.constant 0 : index
    %874 = vector.load %arg10[%c0_482, %c8_483, %c0_484, %c0_485] : memref<1x16x16x128xf32, #tpu.memory_space<vmem>>, vector<1x1x16x128xf32>
    %875 = vector.shape_cast %874 : vector<1x1x16x128xf32> to vector<16x128xf32>
    %876 = vector.shape_cast %873 : vector<16x128xf32> to vector<1x1x16x128xf32>
    tpu.vector_store %arg10[%c0_482, %c8_483, %c0_484, %c0_485], %876 {strides = array<i32>} : memref<1x16x16x128xf32, #tpu.memory_space<vmem>>, vector<1x1x16x128xf32>,
    %c0_486 = arith.constant 0 : index
    %c9_487 = arith.constant 9 : index
    %877 = vector.load %arg17[%c0_486, %c9_487] : memref<16x16xf32, #tpu.memory_space<vmem>>, vector<16x1xf32>
    %878 = vector.extract_strided_slice %680 {offsets = [9, 0], sizes = [1, 128], strides = [1, 1]} : vector<16x128xf32> to vector<1x128xf32>
    %879 = vector.broadcast %878 : vector<1x128xf32> to vector<16x128xf32>
    %880 = arith.addf %638, %879 : vector<16x128xf32>
    %881 = vector.broadcast %877 : vector<16x1xf32> to vector<16x128xf32>
    %882 = arith.addf %880, %881 : vector<16x128xf32>
    %cst_488 = arith.constant 0.333333343 : f32
    %883 = vector.broadcast %cst_488 : f32 to vector<16x128xf32>
    %884 = arith.mulf %882, %883 : vector<16x128xf32>
    %c0_489 = arith.constant 0 : index
    %c9_490 = arith.constant 9 : index
    %c0_491 = arith.constant 0 : index
    %c0_492 = arith.constant 0 : index
    %885 = vector.load %arg2[%c0_489, %c9_490, %c0_491, %c0_492] : memref<1x16x16x128xf32, #tpu.memory_space<vmem>>, vector<1x1x16x128xf32>
    %886 = vector.shape_cast %885 : vector<1x1x16x128xf32> to vector<16x128xf32>
    %c9_493 = arith.constant 9 : index
    %c0_494 = arith.constant 0 : index
    %c0_495 = arith.constant 0 : index
    %887 = vector.load %arg13[%c9_493, %c0_494, %c0_495] : memref<16x16x128xf32, #tpu.memory_space<vmem>>, vector<1x16x128xf32>
    %888 = vector.shape_cast %887 : vector<1x16x128xf32> to vector<16x128xf32>
    %889 = arith.mulf %888, %884 : vector<16x128xf32>
    %890 = arith.addf %886, %889 : vector<16x128xf32>
    %c0_496 = arith.constant 0 : index
    %c9_497 = arith.constant 9 : index
    %c0_498 = arith.constant 0 : index
    %c0_499 = arith.constant 0 : index
    %891 = vector.load %arg10[%c0_496, %c9_497, %c0_498, %c0_499] : memref<1x16x16x128xf32, #tpu.memory_space<vmem>>, vector<1x1x16x128xf32>
    %892 = vector.shape_cast %891 : vector<1x1x16x128xf32> to vector<16x128xf32>
    %893 = vector.shape_cast %890 : vector<16x128xf32> to vector<1x1x16x128xf32>
    tpu.vector_store %arg10[%c0_496, %c9_497, %c0_498, %c0_499], %893 {strides = array<i32>} : memref<1x16x16x128xf32, #tpu.memory_space<vmem>>, vector<1x1x16x128xf32>,
    %c0_500 = arith.constant 0 : index
    %c10_501 = arith.constant 10 : index
    %894 = vector.load %arg17[%c0_500, %c10_501] : memref<16x16xf32, #tpu.memory_space<vmem>>, vector<16x1xf32>
    %895 = vector.extract_strided_slice %680 {offsets = [10, 0], sizes = [1, 128], strides = [1, 1]} : vector<16x128xf32> to vector<1x128xf32>
    %896 = vector.broadcast %895 : vector<1x128xf32> to vector<16x128xf32>
    %897 = arith.addf %638, %896 : vector<16x128xf32>
    %898 = vector.broadcast %894 : vector<16x1xf32> to vector<16x128xf32>
    %899 = arith.addf %897, %898 : vector<16x128xf32>
    %cst_502 = arith.constant 0.333333343 : f32
    %900 = vector.broadcast %cst_502 : f32 to vector<16x128xf32>
    %901 = arith.mulf %899, %900 : vector<16x128xf32>
    %c0_503 = arith.constant 0 : index
    %c10_504 = arith.constant 10 : index
    %c0_505 = arith.constant 0 : index
    %c0_506 = arith.constant 0 : index
    %902 = vector.load %arg2[%c0_503, %c10_504, %c0_505, %c0_506] : memref<1x16x16x128xf32, #tpu.memory_space<vmem>>, vector<1x1x16x128xf32>
    %903 = vector.shape_cast %902 : vector<1x1x16x128xf32> to vector<16x128xf32>
    %c10_507 = arith.constant 10 : index
    %c0_508 = arith.constant 0 : index
    %c0_509 = arith.constant 0 : index
    %904 = vector.load %arg13[%c10_507, %c0_508, %c0_509] : memref<16x16x128xf32, #tpu.memory_space<vmem>>, vector<1x16x128xf32>
    %905 = vector.shape_cast %904 : vector<1x16x128xf32> to vector<16x128xf32>
    %906 = arith.mulf %905, %901 : vector<16x128xf32>
    %907 = arith.addf %903, %906 : vector<16x128xf32>
    %c0_510 = arith.constant 0 : index
    %c10_511 = arith.constant 10 : index
    %c0_512 = arith.constant 0 : index
    %c0_513 = arith.constant 0 : index
    %908 = vector.load %arg10[%c0_510, %c10_511, %c0_512, %c0_513] : memref<1x16x16x128xf32, #tpu.memory_space<vmem>>, vector<1x1x16x128xf32>
    %909 = vector.shape_cast %908 : vector<1x1x16x128xf32> to vector<16x128xf32>
    %910 = vector.shape_cast %907 : vector<16x128xf32> to vector<1x1x16x128xf32>
    tpu.vector_store %arg10[%c0_510, %c10_511, %c0_512, %c0_513], %910 {strides = array<i32>} : memref<1x16x16x128xf32, #tpu.memory_space<vmem>>, vector<1x1x16x128xf32>,
    %c0_514 = arith.constant 0 : index
    %c11_515 = arith.constant 11 : index
    %911 = vector.load %arg17[%c0_514, %c11_515] : memref<16x16xf32, #tpu.memory_space<vmem>>, vector<16x1xf32>
    %912 = vector.extract_strided_slice %680 {offsets = [11, 0], sizes = [1, 128], strides = [1, 1]} : vector<16x128xf32> to vector<1x128xf32>
    %913 = vector.broadcast %912 : vector<1x128xf32> to vector<16x128xf32>
    %914 = arith.addf %638, %913 : vector<16x128xf32>
    %915 = vector.broadcast %911 : vector<16x1xf32> to vector<16x128xf32>
    %916 = arith.addf %914, %915 : vector<16x128xf32>
    %cst_516 = arith.constant 0.333333343 : f32
    %917 = vector.broadcast %cst_516 : f32 to vector<16x128xf32>
    %918 = arith.mulf %916, %917 : vector<16x128xf32>
    %c0_517 = arith.constant 0 : index
    %c11_518 = arith.constant 11 : index
    %c0_519 = arith.constant 0 : index
    %c0_520 = arith.constant 0 : index
    %919 = vector.load %arg2[%c0_517, %c11_518, %c0_519, %c0_520] : memref<1x16x16x128xf32, #tpu.memory_space<vmem>>, vector<1x1x16x128xf32>
    %920 = vector.shape_cast %919 : vector<1x1x16x128xf32> to vector<16x128xf32>
    %c11_521 = arith.constant 11 : index
    %c0_522 = arith.constant 0 : index
    %c0_523 = arith.constant 0 : index
    %921 = vector.load %arg13[%c11_521, %c0_522, %c0_523] : memref<16x16x128xf32, #tpu.memory_space<vmem>>, vector<1x16x128xf32>
    %922 = vector.shape_cast %921 : vector<1x16x128xf32> to vector<16x128xf32>
    %923 = arith.mulf %922, %918 : vector<16x128xf32>
    %924 = arith.addf %920, %923 : vector<16x128xf32>
    %c0_524 = arith.constant 0 : index
    %c11_525 = arith.constant 11 : index
    %c0_526 = arith.constant 0 : index
    %c0_527 = arith.constant 0 : index
    %925 = vector.load %arg10[%c0_524, %c11_525, %c0_526, %c0_527] : memref<1x16x16x128xf32, #tpu.memory_space<vmem>>, vector<1x1x16x128xf32>
    %926 = vector.shape_cast %925 : vector<1x1x16x128xf32> to vector<16x128xf32>
    %927 = vector.shape_cast %924 : vector<16x128xf32> to vector<1x1x16x128xf32>
    tpu.vector_store %arg10[%c0_524, %c11_525, %c0_526, %c0_527], %927 {strides = array<i32>} : memref<1x16x16x128xf32, #tpu.memory_space<vmem>>, vector<1x1x16x128xf32>,
    %c0_528 = arith.constant 0 : index
    %c12_529 = arith.constant 12 : index
    %928 = vector.load %arg17[%c0_528, %c12_529] : memref<16x16xf32, #tpu.memory_space<vmem>>, vector<16x1xf32>
    %929 = vector.extract_strided_slice %680 {offsets = [12, 0], sizes = [1, 128], strides = [1, 1]} : vector<16x128xf32> to vector<1x128xf32>
    %930 = vector.broadcast %929 : vector<1x128xf32> to vector<16x128xf32>
    %931 = arith.addf %638, %930 : vector<16x128xf32>
    %932 = vector.broadcast %928 : vector<16x1xf32> to vector<16x128xf32>
    %933 = arith.addf %931, %932 : vector<16x128xf32>
    %cst_530 = arith.constant 0.333333343 : f32
    %934 = vector.broadcast %cst_530 : f32 to vector<16x128xf32>
    %935 = arith.mulf %933, %934 : vector<16x128xf32>
    %c0_531 = arith.constant 0 : index
    %c12_532 = arith.constant 12 : index
    %c0_533 = arith.constant 0 : index
    %c0_534 = arith.constant 0 : index
    %936 = vector.load %arg2[%c0_531, %c12_532, %c0_533, %c0_534] : memref<1x16x16x128xf32, #tpu.memory_space<vmem>>, vector<1x1x16x128xf32>
    %937 = vector.shape_cast %936 : vector<1x1x16x128xf32> to vector<16x128xf32>
    %c12_535 = arith.constant 12 : index
    %c0_536 = arith.constant 0 : index
    %c0_537 = arith.constant 0 : index
    %938 = vector.load %arg13[%c12_535, %c0_536, %c0_537] : memref<16x16x128xf32, #tpu.memory_space<vmem>>, vector<1x16x128xf32>
    %939 = vector.shape_cast %938 : vector<1x16x128xf32> to vector<16x128xf32>
    %940 = arith.mulf %939, %935 : vector<16x128xf32>
    %941 = arith.addf %937, %940 : vector<16x128xf32>
    %c0_538 = arith.constant 0 : index
    %c12_539 = arith.constant 12 : index
    %c0_540 = arith.constant 0 : index
    %c0_541 = arith.constant 0 : index
    %942 = vector.load %arg10[%c0_538, %c12_539, %c0_540, %c0_541] : memref<1x16x16x128xf32, #tpu.memory_space<vmem>>, vector<1x1x16x128xf32>
    %943 = vector.shape_cast %942 : vector<1x1x16x128xf32> to vector<16x128xf32>
    %944 = vector.shape_cast %941 : vector<16x128xf32> to vector<1x1x16x128xf32>
    tpu.vector_store %arg10[%c0_538, %c12_539, %c0_540, %c0_541], %944 {strides = array<i32>} : memref<1x16x16x128xf32, #tpu.memory_space<vmem>>, vector<1x1x16x128xf32>,
    %c0_542 = arith.constant 0 : index
    %c13_543 = arith.constant 13 : index
    %945 = vector.load %arg17[%c0_542, %c13_543] : memref<16x16xf32, #tpu.memory_space<vmem>>, vector<16x1xf32>
    %946 = vector.extract_strided_slice %680 {offsets = [13, 0], sizes = [1, 128], strides = [1, 1]} : vector<16x128xf32> to vector<1x128xf32>
    %947 = vector.broadcast %946 : vector<1x128xf32> to vector<16x128xf32>
    %948 = arith.addf %638, %947 : vector<16x128xf32>
    %949 = vector.broadcast %945 : vector<16x1xf32> to vector<16x128xf32>
    %950 = arith.addf %948, %949 : vector<16x128xf32>
    %cst_544 = arith.constant 0.333333343 : f32
    %951 = vector.broadcast %cst_544 : f32 to vector<16x128xf32>
    %952 = arith.mulf %950, %951 : vector<16x128xf32>
    %c0_545 = arith.constant 0 : index
    %c13_546 = arith.constant 13 : index
    %c0_547 = arith.constant 0 : index
    %c0_548 = arith.constant 0 : index
    %953 = vector.load %arg2[%c0_545, %c13_546, %c0_547, %c0_548] : memref<1x16x16x128xf32, #tpu.memory_space<vmem>>, vector<1x1x16x128xf32>
    %954 = vector.shape_cast %953 : vector<1x1x16x128xf32> to vector<16x128xf32>
    %c13_549 = arith.constant 13 : index
    %c0_550 = arith.constant 0 : index
    %c0_551 = arith.constant 0 : index
    %955 = vector.load %arg13[%c13_549, %c0_550, %c0_551] : memref<16x16x128xf32, #tpu.memory_space<vmem>>, vector<1x16x128xf32>
    %956 = vector.shape_cast %955 : vector<1x16x128xf32> to vector<16x128xf32>
    %957 = arith.mulf %956, %952 : vector<16x128xf32>
    %958 = arith.addf %954, %957 : vector<16x128xf32>
    %c0_552 = arith.constant 0 : index
    %c13_553 = arith.constant 13 : index
    %c0_554 = arith.constant 0 : index
    %c0_555 = arith.constant 0 : index
    %959 = vector.load %arg10[%c0_552, %c13_553, %c0_554, %c0_555] : memref<1x16x16x128xf32, #tpu.memory_space<vmem>>, vector<1x1x16x128xf32>
    %960 = vector.shape_cast %959 : vector<1x1x16x128xf32> to vector<16x128xf32>
    %961 = vector.shape_cast %958 : vector<16x128xf32> to vector<1x1x16x128xf32>
    tpu.vector_store %arg10[%c0_552, %c13_553, %c0_554, %c0_555], %961 {strides = array<i32>} : memref<1x16x16x128xf32, #tpu.memory_space<vmem>>, vector<1x1x16x128xf32>,
    %c0_556 = arith.constant 0 : index
    %c14_557 = arith.constant 14 : index
    %962 = vector.load %arg17[%c0_556, %c14_557] : memref<16x16xf32, #tpu.memory_space<vmem>>, vector<16x1xf32>
    %963 = vector.extract_strided_slice %680 {offsets = [14, 0], sizes = [1, 128], strides = [1, 1]} : vector<16x128xf32> to vector<1x128xf32>
    %964 = vector.broadcast %963 : vector<1x128xf32> to vector<16x128xf32>
    %965 = arith.addf %638, %964 : vector<16x128xf32>
    %966 = vector.broadcast %962 : vector<16x1xf32> to vector<16x128xf32>
    %967 = arith.addf %965, %966 : vector<16x128xf32>
    %cst_558 = arith.constant 0.333333343 : f32
    %968 = vector.broadcast %cst_558 : f32 to vector<16x128xf32>
    %969 = arith.mulf %967, %968 : vector<16x128xf32>
    %c0_559 = arith.constant 0 : index
    %c14_560 = arith.constant 14 : index
    %c0_561 = arith.constant 0 : index
    %c0_562 = arith.constant 0 : index
    %970 = vector.load %arg2[%c0_559, %c14_560, %c0_561, %c0_562] : memref<1x16x16x128xf32, #tpu.memory_space<vmem>>, vector<1x1x16x128xf32>
    %971 = vector.shape_cast %970 : vector<1x1x16x128xf32> to vector<16x128xf32>
    %c14_563 = arith.constant 14 : index
    %c0_564 = arith.constant 0 : index
    %c0_565 = arith.constant 0 : index
    %972 = vector.load %arg13[%c14_563, %c0_564, %c0_565] : memref<16x16x128xf32, #tpu.memory_space<vmem>>, vector<1x16x128xf32>
    %973 = vector.shape_cast %972 : vector<1x16x128xf32> to vector<16x128xf32>
    %974 = arith.mulf %973, %969 : vector<16x128xf32>
    %975 = arith.addf %971, %974 : vector<16x128xf32>
    %c0_566 = arith.constant 0 : index
    %c14_567 = arith.constant 14 : index
    %c0_568 = arith.constant 0 : index
    %c0_569 = arith.constant 0 : index
    %976 = vector.load %arg10[%c0_566, %c14_567, %c0_568, %c0_569] : memref<1x16x16x128xf32, #tpu.memory_space<vmem>>, vector<1x1x16x128xf32>
    %977 = vector.shape_cast %976 : vector<1x1x16x128xf32> to vector<16x128xf32>
    %978 = vector.shape_cast %975 : vector<16x128xf32> to vector<1x1x16x128xf32>
    tpu.vector_store %arg10[%c0_566, %c14_567, %c0_568, %c0_569], %978 {strides = array<i32>} : memref<1x16x16x128xf32, #tpu.memory_space<vmem>>, vector<1x1x16x128xf32>,
    %c0_570 = arith.constant 0 : index
    %c15_571 = arith.constant 15 : index
    %979 = vector.load %arg17[%c0_570, %c15_571] : memref<16x16xf32, #tpu.memory_space<vmem>>, vector<16x1xf32>
    %980 = vector.extract_strided_slice %680 {offsets = [15, 0], sizes = [1, 128], strides = [1, 1]} : vector<16x128xf32> to vector<1x128xf32>
    %981 = vector.broadcast %980 : vector<1x128xf32> to vector<16x128xf32>
    %982 = arith.addf %638, %981 : vector<16x128xf32>
    %983 = vector.broadcast %979 : vector<16x1xf32> to vector<16x128xf32>
    %984 = arith.addf %982, %983 : vector<16x128xf32>
    %cst_572 = arith.constant 0.333333343 : f32
    %985 = vector.broadcast %cst_572 : f32 to vector<16x128xf32>
    %986 = arith.mulf %984, %985 : vector<16x128xf32>
    %c0_573 = arith.constant 0 : index
    %c15_574 = arith.constant 15 : index
    %c0_575 = arith.constant 0 : index
    %c0_576 = arith.constant 0 : index
    %987 = vector.load %arg2[%c0_573, %c15_574, %c0_575, %c0_576] : memref<1x16x16x128xf32, #tpu.memory_space<vmem>>, vector<1x1x16x128xf32>
    %988 = vector.shape_cast %987 : vector<1x1x16x128xf32> to vector<16x128xf32>
    %c15_577 = arith.constant 15 : index
    %c0_578 = arith.constant 0 : index
    %c0_579 = arith.constant 0 : index
    %989 = vector.load %arg13[%c15_577, %c0_578, %c0_579] : memref<16x16x128xf32, #tpu.memory_space<vmem>>, vector<1x16x128xf32>
    %990 = vector.shape_cast %989 : vector<1x16x128xf32> to vector<16x128xf32>
    %991 = arith.mulf %990, %986 : vector<16x128xf32>
    %992 = arith.addf %988, %991 : vector<16x128xf32>
    %c0_580 = arith.constant 0 : index
    %c15_581 = arith.constant 15 : index
    %c0_582 = arith.constant 0 : index
    %c0_583 = arith.constant 0 : index
    %993 = vector.load %arg10[%c0_580, %c15_581, %c0_582, %c0_583] : memref<1x16x16x128xf32, #tpu.memory_space<vmem>>, vector<1x1x16x128xf32>
    %994 = vector.shape_cast %993 : vector<1x1x16x128xf32> to vector<16x128xf32>
    %995 = vector.shape_cast %992 : vector<16x128xf32> to vector<1x1x16x128xf32>
    tpu.vector_store %arg10[%c0_580, %c15_581, %c0_582, %c0_583], %995 {strides = array<i32>} : memref<1x16x16x128xf32, #tpu.memory_space<vmem>>, vector<1x1x16x128xf32>,
    return
  }
  func.func @transform_0(%arg0: i32, %arg1: i32) -> (i32, i32, i32, i32) {
    %c0_i32 = arith.constant 0 : i32
    %c0_i32_0 = arith.constant 0 : i32
    %c0_i32_1 = arith.constant 0 : i32
    return %arg0, %c0_i32, %c0_i32_0, %arg1 : i32, i32, i32, i32
  }
  func.func @transform_1(%arg0: i32, %arg1: i32) -> (i32, i32, i32, i32) {
    %c0_i32 = arith.constant 0 : i32
    %c0_i32_0 = arith.constant 0 : i32
    %c0_i32_1 = arith.constant 0 : i32
    %c0_i32_2 = arith.constant 0 : i32
    return %arg1, %c0_i32, %c0_i32_0, %c0_i32_1 : i32, i32, i32, i32
  }
  func.func @transform_2(%arg0: i32, %arg1: i32) -> (i32, i32, i32, i32) {
    %c0_i32 = arith.constant 0 : i32
    %c0_i32_0 = arith.constant 0 : i32
    %c0_i32_1 = arith.constant 0 : i32
    %c0_i32_2 = arith.constant 0 : i32
    return %arg1, %c0_i32, %c0_i32_0, %c0_i32_1 : i32, i32, i32, i32
  }
  func.func @transform_3(%arg0: i32, %arg1: i32) -> (i32, i32, i32) {
    %c0_i32 = arith.constant 0 : i32
    %c0_i32_0 = arith.constant 0 : i32
    %c0_i32_1 = arith.constant 0 : i32
    %c0_i32_2 = arith.constant 0 : i32
    return %c0_i32, %c0_i32_0, %c0_i32_1 : i32, i32, i32
  }
  func.func @transform_4(%arg0: i32, %arg1: i32) -> (i32, i32, i32) {
    %c0_i32 = arith.constant 0 : i32
    %c0_i32_0 = arith.constant 0 : i32
    %c0_i32_1 = arith.constant 0 : i32
    %c0_i32_2 = arith.constant 0 : i32
    return %c0_i32, %c0_i32_0, %c0_i32_1 : i32, i32, i32
  }
  func.func @transform_5(%arg0: i32, %arg1: i32) -> (i32, i32, i32, i32) {
    %c0_i32 = arith.constant 0 : i32
    %c0_i32_0 = arith.constant 0 : i32
    %c0_i32_1 = arith.constant 0 : i32
    %c0_i32_2 = arith.constant 0 : i32
    %c0_i32_3 = arith.constant 0 : i32
    return %c0_i32, %c0_i32_0, %c0_i32_1, %c0_i32_2 : i32, i32, i32, i32
  }
  func.func @transform_6(%arg0: i32, %arg1: i32) -> (i32, i32, i32) {
    %c0_i32 = arith.constant 0 : i32
    %c0_i32_0 = arith.constant 0 : i32
    %c0_i32_1 = arith.constant 0 : i32
    %c0_i32_2 = arith.constant 0 : i32
    return %c0_i32, %c0_i32_0, %c0_i32_1 : i32, i32, i32
  }
  func.func @transform_7(%arg0: i32, %arg1: i32) -> i32 {
    %c0_i32 = arith.constant 0 : i32
    %c0_i32_0 = arith.constant 0 : i32
    return %c0_i32 : i32
  }
  func.func @transform_8(%arg0: i32, %arg1: i32) -> (i32, i32, i32, i32) {
    %c0_i32 = arith.constant 0 : i32
    %c0_i32_0 = arith.constant 0 : i32
    %c0_i32_1 = arith.constant 0 : i32
    return %arg0, %c0_i32, %c0_i32_0, %arg1 : i32, i32, i32, i32
  }
}

</mosaic_0001>

<llo_original>
// kernel: fem_forward.1
$region0: #{fem_forward.1}
  #allocation0 [shape = 'u32[]', space=smem, size = 0x4, offset = 0x4, fixed_abs, tag = 'smem constant byte address 0x4 - core index']
  #allocation1 [shape = 'u32[72,128]{1,0:T(1,128)}', space=vmem, size = 0x9000, scoped, tag = 'internal scratch']
  #allocation2 [shape = 'f32[18,32,128]{2,1,0:T(8,128)}', space=vmem, size = 0x48000, scoped, tag = 'scratch operand']
  #allocation3 [shape = 'f32[22,32,128]{2,1,0:T(8,128)}', space=vmem, size = 0x58000, scoped, tag = 'scratch operand']
  #allocation4 [shape = 'f32[16,16,128]{2,1,0:T(8,128)}', space=vmem, size = 0x20000, scoped, tag = 'scratch operand']
  #allocation5 [shape = 'f32[22,256]{1,0:T(8,128)}', space=vmem, size = 0x6000, scoped, tag = 'scratch operand']
  #allocation6 [shape = 'f32[22,256]{1,0:T(8,128)}', space=vmem, size = 0x6000, scoped, tag = 'scratch operand']
  #allocation7 [shape = 'f32[22,32]{1,0:T(8,128)}', space=vmem, size = 0x3000, scoped, tag = 'scratch operand']
  #allocation8 [shape = 'f32[16,16]{1,0:T(8,128)}', space=vmem, size = 0x2000, scoped, tag = 'scratch operand']
  %s0 = inlined_call_operand.vmem [shape: f32[2,16,16,512], index: 0, kind: input, shape index: {}]
  %s1 = inlined_call_operand.vmem [shape: f32[4,3,3,128], index: 1, kind: input, shape index: {}]
  %s2 = inlined_call_operand.vmem [shape: f32[4,1,1,128], index: 2, kind: input, shape index: {}]
  %s3 = inlined_call_operand.vmem [shape: f32[3,3,128], index: 3, kind: input, shape index: {}]
  %s4 = inlined_call_operand.vmem [shape: f32[1,1,128], index: 4, kind: input, shape index: {}]
  %s5 = inlined_call_operand.vmem [shape: f32[2,7,256,128], index: 5, kind: input, shape index: {}]
  %s6 = inlined_call_operand.vmem [shape: f32[7,32,16], index: 6, kind: input, shape index: {}]
  %s7 = inlined_call_operand.vmem [shape: f32[3], index: 7, kind: input, shape index: {}]
  %s8 = inlined_call_operand.hbm [shape: f32[2,16,16,512], index: 8, kind: output, shape index: {}]
  %s9 = sld [smem:[#allocation0]]
  $region131: #{fem_forward.1} parent=0
    _
  %s11 = ssub.s32 1, %s9
  %s12 = scalar_select 0, %s11, %s9
  $region1: #{fem_forward.1} parent=0
    #allocation9 [shape = 'u8[262144]{0}', space=vmem, size = 0x40000, scoped, tag = 'input window, operand 0']
    #allocation10 [shape = 'u8[512]{0}', space=smem, size = 0x200, scoped, tag = 'input window, operand 7, single buffered']
    #allocation11 [shape = 's32[2]{0}', space=sflag, size = 0x8, scoped, tag = 'scoped memory for fem_forward.1']
    #allocation12 [shape = 's32[2]{0}', space=sflag, size = 0x8, scoped, tag = 'scoped memory for fem_forward.1']
    #allocation13 [shape = 'u8[262144]{0}', space=vmem, size = 0x40000, scoped, tag = 'output window, operand 0']
    %13 = vsyncpa [#allocation12], 0
    %14 = vsyncpa [#allocation11], 0
    %s15 = scalar_lea.sflag [#allocation11], 1
    %16 = vsyncpa %s15, 0
    loop: start=0, step=1, limit=10
    $region2: #{fem_forward.1} parent=1 // loop_pre_header
      _
    $region3: #{fem_forward.1} parent=1 // loop_header
      %s18 = sphi 0, %s22
      %p19 = scmp.ge.s32.totalorder %s18, 10
      %s25 = sphi 0, %s37
      %s26 = sphi 0, %s33
      %s27 = sphi 0, %s25
      %s28 = sphi 0, %s26
      %s29 = sphi 0, %s27
      %s30 = sphi 0, %s28
      %s42 = sphi 0, %s44
      %s45 = sphi 0, %s42
      %s46 = sphi 0, %s45
      %s62 = sphi 0, %s46
      %s68 = sphi 0, %s70
      %s71 = sphi 0, %s68
      %s72 = sphi 0, %s71
      %s88 = sphi 0, %s72
      %s94 = sphi 0, %s96
      %s97 = sphi 0, %s94
      %s98 = sphi 0, %s97
      %s114 = sphi 0, %s98
      %s118 = sphi 0, %s118
      %s120 = sphi 0, %s118
      %s121 = sphi 0, %s120
      %s135 = sphi 0, %s121
      %s139 = sphi 0, %s139
      %s141 = sphi 0, %s139
      %s142 = sphi 0, %s141
      %s156 = sphi 0, %s142
      %s160 = sphi 0, %s160
      %s162 = sphi 0, %s160
      %s163 = sphi 0, %s162
      %s177 = sphi 0, %s163
      %s181 = sphi 0, %s181
      %s183 = sphi 0, %s181
      %s184 = sphi 0, %s183
      %s198 = sphi 0, %s184
      %s202 = sphi 0, %s202
      %s204 = sphi 0, %s202
      %s205 = sphi 0, %s204
      %s219 = sphi 0, %s205
      %s227 = sphi 0, %s229
      %s230 = sphi 0, %s227
      %s231 = sphi 0, %s230
      %s247 = sphi 0, %s231
    $region4: #{fem_forward.1} parent=1 // loop_header_branch
      %21 = sbr.rel (%p19) target = $region8
    $region5: #{fem_forward.1} parent=1 // loop_body
      %s23 = ssub.s32 %s18, 1
      %s24 = ssub.s32 %s18, 2
      %s31 = sadd.s32 1, %s26
      %p32 = scmp.ge.s32.totalorder %s31, 4
      %s33 = scalar_select %p32, 0, %s31
      %s34 = sadd.s32 1, %s25
      %s35 = scalar_select %p32, %s34, %s25
      %p36 = scmp.ge.s32.totalorder %s35, 2
      %s37 = scalar_select %p36, 0, %s35
      %s38 = ssub.s32 %s25, %s37
      %s39 = ssub.s32 %s26, %s33
      %s40 = sor.u32 %s38, %s39
      %p41 = scmp.eq.s32.totalorder %s40, 0
      %s43 = sadd.s32 %s42, 1
      %s44 = scalar_select %p41, %s42, %s43
      %p47 = pneg %p41
      %p48 = scmp.eq.s32.totalorder %s18, 7
      %p49 = por %p47, %p48
      %p50 = scmp.ne.s32.totalorder %s42, %s45
      %p51 = scmp.eq.s32.totalorder %s18, 0
      %p52 = por %p50, %p51
      %p53 = scmp.ne.s32.totalorder %s42, %s45
      %p54 = scmp.eq.s32.totalorder %s23, 7
      %p55 = por %p53, %p54
      %p56 = scmp.ne.s32.totalorder %s45, %s46
      %p57 = scmp.eq.s32.totalorder %s23, 0
      %p58 = por %p56, %p57
      %p59 = scmp.ne.s32.totalorder %s45, %s46
      %p60 = scmp.eq.s32.totalorder %s24, 7
      %p61 = por %p59, %p60
      %p63 = scmp.ne.s32.totalorder %s46, %s62
      %p64 = scmp.eq.s32.totalorder %s24, 0
      %p65 = por %p63, %p64
      %s66 = ssub.s32 %s26, %s33
      %p67 = scmp.eq.s32.totalorder %s66, 0
      %s69 = sadd.s32 %s68, 1
      %s70 = scalar_select %p67, %s68, %s69
      %p73 = pneg %p67
      %p74 = scmp.eq.s32.totalorder %s18, 7
      %p75 = por %p73, %p74
      %p76 = scmp.ne.s32.totalorder %s68, %s71
      %p77 = scmp.eq.s32.totalorder %s18, 0
      %p78 = por %p76, %p77
      %p79 = scmp.ne.s32.totalorder %s68, %s71
      %p80 = scmp.eq.s32.totalorder %s23, 7
      %p81 = por %p79, %p80
      %p82 = scmp.ne.s32.totalorder %s71, %s72
      %p83 = scmp.eq.s32.totalorder %s23, 0
      %p84 = por %p82, %p83
      %p85 = scmp.ne.s32.totalorder %s71, %s72
      %p86 = scmp.eq.s32.totalorder %s24, 7
      %p87 = por %p85, %p86
      %p89 = scmp.ne.s32.totalorder %s72, %s88
      %p90 = scmp.eq.s32.totalorder %s24, 0
      %p91 = por %p89, %p90
      %s92 = ssub.s32 %s26, %s33
      %p93 = scmp.eq.s32.totalorder %s92, 0
      %s95 = sadd.s32 %s94, 1
      %s96 = scalar_select %p93, %s94, %s95
      %p99 = pneg %p93
      %p100 = scmp.eq.s32.totalorder %s18, 7
      %p101 = por %p99, %p100
      %p102 = scmp.ne.s32.totalorder %s94, %s97
      %p103 = scmp.eq.s32.totalorder %s18, 0
      %p104 = por %p102, %p103
      %p105 = scmp.ne.s32.totalorder %s94, %s97
      %p106 = scmp.eq.s32.totalorder %s23, 7
      %p107 = por %p105, %p106
      %p108 = scmp.ne.s32.totalorder %s97, %s98
      %p109 = scmp.eq.s32.totalorder %s23, 0
      %p110 = por %p108, %p109
      %p111 = scmp.ne.s32.totalorder %s97, %s98
      %p112 = scmp.eq.s32.totalorder %s24, 7
      %p113 = por %p111, %p112
      %p115 = scmp.ne.s32.totalorder %s98, %s114
      %p116 = scmp.eq.s32.totalorder %s24, 0
      %p117 = por %p115, %p116
      %s119 = sadd.s32 %s118, 1
      %p122 = scmp.eq.s32.totalorder %s18, 7
      %p123 = scmp.ne.s32.totalorder %s118, %s120
      %p124 = scmp.eq.s32.totalorder %s18, 0
      %p125 = por %p123, %p124
      %p126 = scmp.ne.s32.totalorder %s118, %s120
      %p127 = scmp.eq.s32.totalorder %s23, 7
      %p128 = por %p126, %p127
      %p129 = scmp.ne.s32.totalorder %s120, %s121
      %p130 = scmp.eq.s32.totalorder %s23, 0
      %p131 = por %p129, %p130
      %p132 = scmp.ne.s32.totalorder %s120, %s121
      %p133 = scmp.eq.s32.totalorder %s24, 7
      %p134 = por %p132, %p133
      %p136 = scmp.ne.s32.totalorder %s121, %s135
      %p137 = scmp.eq.s32.totalorder %s24, 0
      %p138 = por %p136, %p137
      %s140 = sadd.s32 %s139, 1
      %p143 = scmp.eq.s32.totalorder %s18, 7
      %p144 = scmp.ne.s32.totalorder %s139, %s141
      %p145 = scmp.eq.s32.totalorder %s18, 0
      %p146 = por %p144, %p145
      %p147 = scmp.ne.s32.totalorder %s139, %s141
      %p148 = scmp.eq.s32.totalorder %s23, 7
      %p149 = por %p147, %p148
      %p150 = scmp.ne.s32.totalorder %s141, %s142
      %p151 = scmp.eq.s32.totalorder %s23, 0
      %p152 = por %p150, %p151
      %p153 = scmp.ne.s32.totalorder %s141, %s142
      %p154 = scmp.eq.s32.totalorder %s24, 7
      %p155 = por %p153, %p154
      %p157 = scmp.ne.s32.totalorder %s142, %s156
      %p158 = scmp.eq.s32.totalorder %s24, 0
      %p159 = por %p157, %p158
      %s161 = sadd.s32 %s160, 1
      %p164 = scmp.eq.s32.totalorder %s18, 7
      %p165 = scmp.ne.s32.totalorder %s160, %s162
      %p166 = scmp.eq.s32.totalorder %s18, 0
      %p167 = por %p165, %p166
      %p168 = scmp.ne.s32.totalorder %s160, %s162
      %p169 = scmp.eq.s32.totalorder %s23, 7
      %p170 = por %p168, %p169
      %p171 = scmp.ne.s32.totalorder %s162, %s163
      %p172 = scmp.eq.s32.totalorder %s23, 0
      %p173 = por %p171, %p172
      %p174 = scmp.ne.s32.totalorder %s162, %s163
      %p175 = scmp.eq.s32.totalorder %s24, 7
      %p176 = por %p174, %p175
      %p178 = scmp.ne.s32.totalorder %s163, %s177
      %p179 = scmp.eq.s32.totalorder %s24, 0
      %p180 = por %p178, %p179
      %s182 = sadd.s32 %s181, 1
      %p185 = scmp.eq.s32.totalorder %s18, 7
      %p186 = scmp.ne.s32.totalorder %s181, %s183
      %p187 = scmp.eq.s32.totalorder %s18, 0
      %p188 = por %p186, %p187
      %p189 = scmp.ne.s32.totalorder %s181, %s183
      %p190 = scmp.eq.s32.totalorder %s23, 7
      %p191 = por %p189, %p190
      %p192 = scmp.ne.s32.totalorder %s183, %s184
      %p193 = scmp.eq.s32.totalorder %s23, 0
      %p194 = por %p192, %p193
      %p195 = scmp.ne.s32.totalorder %s183, %s184
      %p196 = scmp.eq.s32.totalorder %s24, 7
      %p197 = por %p195, %p196
      %p199 = scmp.ne.s32.totalorder %s184, %s198
      %p200 = scmp.eq.s32.totalorder %s24, 0
      %p201 = por %p199, %p200
      %s203 = sadd.s32 %s202, 1
      %p206 = scmp.eq.s32.totalorder %s18, 7
      %p207 = scmp.ne.s32.totalorder %s202, %s204
      %p208 = scmp.eq.s32.totalorder %s18, 0
      %p209 = por %p207, %p208
      %p210 = scmp.ne.s32.totalorder %s202, %s204
      %p211 = scmp.eq.s32.totalorder %s23, 7
      %p212 = por %p210, %p211
      %p213 = scmp.ne.s32.totalorder %s204, %s205
      %p214 = scmp.eq.s32.totalorder %s23, 0
      %p215 = por %p213, %p214
      %p216 = scmp.ne.s32.totalorder %s204, %s205
      %p217 = scmp.eq.s32.totalorder %s24, 7
      %p218 = por %p216, %p217
      %p220 = scmp.ne.s32.totalorder %s205, %s219
      %p221 = scmp.eq.s32.totalorder %s24, 0
      %p222 = por %p220, %p221
      %s223 = ssub.s32 %s25, %s37
      %s224 = ssub.s32 %s26, %s33
      %s225 = sor.u32 %s223, %s224
      %p226 = scmp.eq.s32.totalorder %s225, 0
      %s228 = sadd.s32 %s227, 1
      %s229 = scalar_select %p226, %s227, %s228
      %p232 = pneg %p226
      %p233 = scmp.eq.s32.totalorder %s18, 7
      %p234 = por %p232, %p233
      %p235 = scmp.ne.s32.totalorder %s227, %s230
      %p236 = scmp.eq.s32.totalorder %s18, 0
      %p237 = por %p235, %p236
      %p238 = scmp.ne.s32.totalorder %s227, %s230
      %p239 = scmp.eq.s32.totalorder %s23, 7
      %p240 = por %p238, %p239
      %p241 = scmp.ne.s32.totalorder %s230, %s231
      %p242 = scmp.eq.s32.totalorder %s23, 0
      %p243 = por %p241, %p242
      %p244 = scmp.ne.s32.totalorder %s230, %s231
      %p245 = scmp.eq.s32.totalorder %s24, 7
      %p246 = por %p244, %p245
      %p248 = scmp.ne.s32.totalorder %s231, %s247
      %p249 = scmp.eq.s32.totalorder %s24, 0
      %p250 = por %p248, %p249
      %p251 = scmp.le.s32.totalorder 1, %s18
      %p252 = scmp.lt.s32.totalorder %s18, 9
      %p253 = pnand %p251, %p252
      %p254 = pneg %p253
      // Predicated region
      $region9: #{fem_forward.1} parent=5 // pred_check
        _
      $region10: #{fem_forward.1} parent=5 // pred_check_branch
        %256 = sbr.rel (%p253) target = $region12
      $region11: #{fem_forward.1} parent=5 // pred_region
        %s257 = ssub.s32 %s18, 1
        // Predicated region
        $region13: #{fem_forward.1} parent=11 // pred_check
          %p258 = pneg %p131
        $region14: #{fem_forward.1} parent=11 // pred_check_branch
          %260 = sbr.rel (%p258) target = $region16
        $region15: #{fem_forward.1} parent=11 // pred_region
          _
        $region16: #{fem_forward.1} parent=11 // pred_fallthru
          _
        // Predicated region
        $region17: #{fem_forward.1} parent=11 // pred_check
          %p261 = pneg %p152
        $region18: #{fem_forward.1} parent=11 // pred_check_branch
          %263 = sbr.rel (%p261) target = $region20
        $region19: #{fem_forward.1} parent=11 // pred_region
          _
        $region20: #{fem_forward.1} parent=11 // pred_fallthru
          _
        // Predicated region
        $region21: #{fem_forward.1} parent=11 // pred_check
          %p264 = pneg %p173
        $region22: #{fem_forward.1} parent=11 // pred_check_branch
          %266 = sbr.rel (%p264) target = $region24
        $region23: #{fem_forward.1} parent=11 // pred_region
          _
        $region24: #{fem_forward.1} parent=11 // pred_fallthru
          _
        // Predicated region
        $region25: #{fem_forward.1} parent=11 // pred_check
          %p267 = pneg %p194
        $region26: #{fem_forward.1} parent=11 // pred_check_branch
          %269 = sbr.rel (%p267) target = $region28
        $region27: #{fem_forward.1} parent=11 // pred_region
          _
        $region28: #{fem_forward.1} parent=11 // pred_fallthru
          _
        // Predicated region
        $region29: #{fem_forward.1} parent=11 // pred_check
          %p270 = pneg %p215
        $region30: #{fem_forward.1} parent=11 // pred_check_branch
          %272 = sbr.rel (%p270) target = $region32
        $region31: #{fem_forward.1} parent=11 // pred_region
          %274 = vsyncadd [#allocation12], 0
          %s276 = sshll.u32 %s7, 4
          %s277 = int_to_ptr.vmem [resolvable:$true] %s276
          %279 = dma.vmem_to_smem %s277, 16, [#allocation10], [#allocation12]
        $region32: #{fem_forward.1} parent=11 // pred_fallthru
          _
      $region12: #{fem_forward.1} parent=5 // pred_fallthru
        _
      %p280 = scmp.lt.s32.totalorder %s18, 8
      // Predicated region
      $region33: #{fem_forward.1} parent=5 // pred_check
        %p281 = pneg %p280
      $region34: #{fem_forward.1} parent=5 // pred_check_branch
        %283 = sbr.rel (%p281) target = $region36
      $region35: #{fem_forward.1} parent=5 // pred_region
        // Predicated region
        $region37: #{fem_forward.1} parent=35 // pred_check
          %p284 = pneg %p52
        $region38: #{fem_forward.1} parent=35 // pred_check_branch
          %286 = sbr.rel (%p284) target = $region40
        $region39: #{fem_forward.1} parent=35 // pred_region
          %s287 = sand.u32 %s42, 1
          %s288 = sand.u32 %s42, 1
          %s289 = smul.addr %s288, 256
          %s290 = scalar_lea.vmem [#allocation9], %s289
          %s291 = smul.addr %s25, 128
          %s292 = sadd.s32 %s26, %s291
          %s293 = smul.addr %s292, 8
          %s294 = scalar_lea.vmem %s0, %s293
          // Predicated region
          $region41: #{fem_forward.1} parent=39 // pred_check
            _
          $region42: #{fem_forward.1} parent=39 // pred_check_branch
            %296 = sbr.rel (0) target = $region44
          $region43: #{fem_forward.1} parent=39 // pred_region
            // Predicated region
            $region45: #{fem_forward.1} parent=43 // pred_check
              _
            $region46: #{fem_forward.1} parent=43 // pred_check_branch
              %298 = sbr.rel (0) target = $region48
            $region47: #{fem_forward.1} parent=43 // pred_region
              // Predicated region
              $region60: #{fem_forward.1} parent=47 // pred_check
                _
              $region61: #{fem_forward.1} parent=47 // pred_check_branch
                %376 = sbr.rel (0) target = $region63
              $region62: #{fem_forward.1} parent=47 // pred_region
                loop: start=0, step=1, limit=1
                $region64: #{fem_forward.1} parent=62 // loop_pre_header
                  _
                $region65: #{fem_forward.1} parent=62 // loop_header
                  %s378 = sphi 0, %s382
                  %p379 = scmp.ge.s32.totalorder %s378, 1
                  %s383 = sphi %s294, %s294
                  %s384 = sphi %s290, %s290
                $region66: #{fem_forward.1} parent=62 // loop_header_branch
                  %381 = sbr.rel (%p379) target = $region70
                $region67: #{fem_forward.1} parent=62 // loop_body
                  %v385 = vld [vmem:[%s383] sm:$0xff]
                  %386 = vst [vmem:[%s384] sm:$0xff] %v385
                  %v387 = vld [vmem:[%s383 + $0x20] sm:$0xff]
                  %388 = vst [vmem:[%s384 + $0x8] sm:$0xff] %v387
                  %v389 = vld [vmem:[%s383 + $0x40] sm:$0xff]
                  %390 = vst [vmem:[%s384 + $0x10] sm:$0xff] %v389
                  %v391 = vld [vmem:[%s383 + $0x60] sm:$0xff]
                  %392 = vst [vmem:[%s384 + $0x18] sm:$0xff] %v391
                  %v393 = vld [vmem:[%s383 + $0x80] sm:$0xff]
                  %394 = vst [vmem:[%s384 + $0x20] sm:$0xff] %v393
                  %v395 = vld [vmem:[%s383 + $0xa0] sm:$0xff]
                  %396 = vst [vmem:[%s384 + $0x28] sm:$0xff] %v395
                  %v397 = vld [vmem:[%s383 + $0xc0] sm:$0xff]
                  %398 = vst [vmem:[%s384 + $0x30] sm:$0xff] %v397
                  %v399 = vld [vmem:[%s383 + $0xe0] sm:$0xff]
                  %400 = vst [vmem:[%s384 + $0x38] sm:$0xff] %v399
                  %v401 = vld [vmem:[%s383 + $0x100] sm:$0xff]
                  %402 = vst [vmem:[%s384 + $0x40] sm:$0xff] %v401
                  %v403 = vld [vmem:[%s383 + $0x120] sm:$0xff]
                  %404 = vst [vmem:[%s384 + $0x48] sm:$0xff] %v403
                  %v405 = vld [vmem:[%s383 + $0x140] sm:$0xff]
                  %406 = vst [vmem:[%s384 + $0x50] sm:$0xff] %v405
                  %v407 = vld [vmem:[%s383 + $0x160] sm:$0xff]
                  %408 = vst [vmem:[%s384 + $0x58] sm:$0xff] %v407
                  %v409 = vld [vmem:[%s383 + $0x180] sm:$0xff]
                  %410 = vst [vmem:[%s384 + $0x60] sm:$0xff] %v409
                  %v411 = vld [vmem:[%s383 + $0x1a0] sm:$0xff]
                  %412 = vst [vmem:[%s384 + $0x68] sm:$0xff] %v411
                  %v413 = vld [vmem:[%s383 + $0x1c0] sm:$0xff]
                  %414 = vst [vmem:[%s384 + $0x70] sm:$0xff] %v413
                  %v415 = vld [vmem:[%s383 + $0x1e0] sm:$0xff]
                  %416 = vst [vmem:[%s384 + $0x78] sm:$0xff] %v415
                  %v417 = vld [vmem:[%s383 + $0x200] sm:$0xff]
                  %418 = vst [vmem:[%s384 + $0x80] sm:$0xff] %v417
                  %v419 = vld [vmem:[%s383 + $0x220] sm:$0xff]
                  %420 = vst [vmem:[%s384 + $0x88] sm:$0xff] %v419
                  %v421 = vld [vmem:[%s383 + $0x240] sm:$0xff]
                  %422 = vst [vmem:[%s384 + $0x90] sm:$0xff] %v421
                  %v423 = vld [vmem:[%s383 + $0x260] sm:$0xff]
                  %424 = vst [vmem:[%s384 + $0x98] sm:$0xff] %v423
                  %v425 = vld [vmem:[%s383 + $0x280] sm:$0xff]
                  %426 = vst [vmem:[%s384 + $0xa0] sm:$0xff] %v425
                  %v427 = vld [vmem:[%s383 + $0x2a0] sm:$0xff]
                  %428 = vst [vmem:[%s384 + $0xa8] sm:$0xff] %v427
                  %v429 = vld [vmem:[%s383 + $0x2c0] sm:$0xff]
                  %430 = vst [vmem:[%s384 + $0xb0] sm:$0xff] %v429
                  %v431 = vld [vmem:[%s383 + $0x2e0] sm:$0xff]
                  %432 = vst [vmem:[%s384 + $0xb8] sm:$0xff] %v431
                  %v433 = vld [vmem:[%s383 + $0x300] sm:$0xff]
                  %434 = vst [vmem:[%s384 + $0xc0] sm:$0xff] %v433
                  %v435 = vld [vmem:[%s383 + $0x320] sm:$0xff]
                  %436 = vst [vmem:[%s384 + $0xc8] sm:$0xff] %v435
                  %v437 = vld [vmem:[%s383 + $0x340] sm:$0xff]
                  %438 = vst [vmem:[%s384 + $0xd0] sm:$0xff] %v437
                  %v439 = vld [vmem:[%s383 + $0x360] sm:$0xff]
                  %440 = vst [vmem:[%s384 + $0xd8] sm:$0xff] %v439
                  %v441 = vld [vmem:[%s383 + $0x380] sm:$0xff]
                  %442 = vst [vmem:[%s384 + $0xe0] sm:$0xff] %v441
                  %v443 = vld [vmem:[%s383 + $0x3a0] sm:$0xff]
                  %444 = vst [vmem:[%s384 + $0xe8] sm:$0xff] %v443
                  %v445 = vld [vmem:[%s383 + $0x3c0] sm:$0xff]
                  %446 = vst [vmem:[%s384 + $0xf0] sm:$0xff] %v445
                  %v447 = vld [vmem:[%s383 + $0x3e0] sm:$0xff]
                  %448 = vst [vmem:[%s384 + $0xf8] sm:$0xff] %v447
                $region68: #{fem_forward.1} parent=62 // loop_footer
                  %s382 = sadd.s32 1, %s378
                $region69: #{fem_forward.1} parent=62 // loop_footer_branch
                  %377 = sbr.rel target = $region65
                $region70: #{fem_forward.1} parent=62 // loop_exit
                  _
              $region63: #{fem_forward.1} parent=47 // pred_fallthru
                _
              // Predicated region
              $region71: #{fem_forward.1} parent=47 // pred_check
                _
              $region72: #{fem_forward.1} parent=47 // pred_check_branch
                %450 = sbr.rel target = $region74
              $region73: #{fem_forward.1} parent=47 // pred_region
                _
              $region74: #{fem_forward.1} parent=47 // pred_fallthru
                _
            $region48: #{fem_forward.1} parent=43 // pred_fallthru
              _
            // Predicated region
            $region49: #{fem_forward.1} parent=43 // pred_check
              _
            $region50: #{fem_forward.1} parent=43 // pred_check_branch
              %300 = sbr.rel target = $region52
            $region51: #{fem_forward.1} parent=43 // pred_region
              %s302 = ssub.s32 256, 1
              loop: start=0, step=1, limit=1
              $region53: #{fem_forward.1} parent=51 // loop_pre_header
                _
              $region54: #{fem_forward.1} parent=51 // loop_header
                %s304 = sphi 0, %s308
                %p305 = scmp.ge.s32.totalorder %s304, 1
                %s309 = sphi %s294, %s294
                %s310 = sphi %s290, %s290
              $region55: #{fem_forward.1} parent=51 // loop_header_branch
                %307 = sbr.rel (%p305) target = $region59
              $region56: #{fem_forward.1} parent=51 // loop_body
                %v311 = vld [vmem:[%s309] sm:%s302]
                %312 = vst [vmem:[%s310] sm:%s302] %v311
                %v313 = vld [vmem:[%s309 + $0x20] sm:%s302]
                %314 = vst [vmem:[%s310 + $0x8] sm:%s302] %v313
                %v315 = vld [vmem:[%s309 + $0x40] sm:%s302]
                %316 = vst [vmem:[%s310 + $0x10] sm:%s302] %v315
                %v317 = vld [vmem:[%s309 + $0x60] sm:%s302]
                %318 = vst [vmem:[%s310 + $0x18] sm:%s302] %v317
                %v319 = vld [vmem:[%s309 + $0x80] sm:%s302]
                %320 = vst [vmem:[%s310 + $0x20] sm:%s302] %v319
                %v321 = vld [vmem:[%s309 + $0xa0] sm:%s302]
                %322 = vst [vmem:[%s310 + $0x28] sm:%s302] %v321
                %v323 = vld [vmem:[%s309 + $0xc0] sm:%s302]
                %324 = vst [vmem:[%s310 + $0x30] sm:%s302] %v323
                %v325 = vld [vmem:[%s309 + $0xe0] sm:%s302]
                %326 = vst [vmem:[%s310 + $0x38] sm:%s302] %v325
                %v327 = vld [vmem:[%s309 + $0x100] sm:%s302]
                %328 = vst [vmem:[%s310 + $0x40] sm:%s302] %v327
                %v329 = vld [vmem:[%s309 + $0x120] sm:%s302]
                %330 = vst [vmem:[%s310 + $0x48] sm:%s302] %v329
                %v331 = vld [vmem:[%s309 + $0x140] sm:%s302]
                %332 = vst [vmem:[%s310 + $0x50] sm:%s302] %v331
                %v333 = vld [vmem:[%s309 + $0x160] sm:%s302]
                %334 = vst [vmem:[%s310 + $0x58] sm:%s302] %v333
                %v335 = vld [vmem:[%s309 + $0x180] sm:%s302]
                %336 = vst [vmem:[%s310 + $0x60] sm:%s302] %v335
                %v337 = vld [vmem:[%s309 + $0x1a0] sm:%s302]
                %338 = vst [vmem:[%s310 + $0x68] sm:%s302] %v337
                %v339 = vld [vmem:[%s309 + $0x1c0] sm:%s302]
                %340 = vst [vmem:[%s310 + $0x70] sm:%s302] %v339
                %v341 = vld [vmem:[%s309 + $0x1e0] sm:%s302]
                %342 = vst [vmem:[%s310 + $0x78] sm:%s302] %v341
                %v343 = vld [vmem:[%s309 + $0x200] sm:%s302]
                %344 = vst [vmem:[%s310 + $0x80] sm:%s302] %v343
                %v345 = vld [vmem:[%s309 + $0x220] sm:%s302]
                %346 = vst [vmem:[%s310 + $0x88] sm:%s302] %v345
                %v347 = vld [vmem:[%s309 + $0x240] sm:%s302]
                %348 = vst [vmem:[%s310 + $0x90] sm:%s302] %v347
                %v349 = vld [vmem:[%s309 + $0x260] sm:%s302]
                %350 = vst [vmem:[%s310 + $0x98] sm:%s302] %v349
                %v351 = vld [vmem:[%s309 + $0x280] sm:%s302]
                %352 = vst [vmem:[%s310 + $0xa0] sm:%s302] %v351
                %v353 = vld [vmem:[%s309 + $0x2a0] sm:%s302]
                %354 = vst [vmem:[%s310 + $0xa8] sm:%s302] %v353
                %v355 = vld [vmem:[%s309 + $0x2c0] sm:%s302]
                %356 = vst [vmem:[%s310 + $0xb0] sm:%s302] %v355
                %v357 = vld [vmem:[%s309 + $0x2e0] sm:%s302]
                %358 = vst [vmem:[%s310 + $0xb8] sm:%s302] %v357
                %v359 = vld [vmem:[%s309 + $0x300] sm:%s302]
                %360 = vst [vmem:[%s310 + $0xc0] sm:%s302] %v359
                %v361 = vld [vmem:[%s309 + $0x320] sm:%s302]
                %362 = vst [vmem:[%s310 + $0xc8] sm:%s302] %v361
                %v363 = vld [vmem:[%s309 + $0x340] sm:%s302]
                %364 = vst [vmem:[%s310 + $0xd0] sm:%s302] %v363
                %v365 = vld [vmem:[%s309 + $0x360] sm:%s302]
                %366 = vst [vmem:[%s310 + $0xd8] sm:%s302] %v365
                %v367 = vld [vmem:[%s309 + $0x380] sm:%s302]
                %368 = vst [vmem:[%s310 + $0xe0] sm:%s302] %v367
                %v369 = vld [vmem:[%s309 + $0x3a0] sm:%s302]
                %370 = vst [vmem:[%s310 + $0xe8] sm:%s302] %v369
                %v371 = vld [vmem:[%s309 + $0x3c0] sm:%s302]
                %372 = vst [vmem:[%s310 + $0xf0] sm:%s302] %v371
                %v373 = vld [vmem:[%s309 + $0x3e0] sm:%s302]
                %374 = vst [vmem:[%s310 + $0xf8] sm:%s302] %v373
              $region57: #{fem_forward.1} parent=51 // loop_footer
                %s308 = sadd.s32 1, %s304
              $region58: #{fem_forward.1} parent=51 // loop_footer_branch
                %303 = sbr.rel target = $region54
              $region59: #{fem_forward.1} parent=51 // loop_exit
                _
            $region52: #{fem_forward.1} parent=43 // pred_fallthru
              _
          $region44: #{fem_forward.1} parent=39 // pred_fallthru
            _
          %451 = vnop
        $region40: #{fem_forward.1} parent=35 // pred_fallthru
          _
        // Predicated region
        $region75: #{fem_forward.1} parent=35 // pred_check
          %p452 = pneg %p78
        $region76: #{fem_forward.1} parent=35 // pred_check_branch
          %454 = sbr.rel (%p452) target = $region78
        $region77: #{fem_forward.1} parent=35 // pred_region
          %p455 = scmp.lt.s32.totalorder %s26, 3
          %s456 = scalar_select %p455, %s26, 3
          %s457 = smul.addr %s456, 3
          %s458 = smul.addr %s457, 4
          %s459 = scalar_lea.vmem %s1, %s458
        $region78: #{fem_forward.1} parent=35 // pred_fallthru
          _
        // Predicated region
        $region79: #{fem_forward.1} parent=35 // pred_check
          %p460 = pneg %p104
        $region80: #{fem_forward.1} parent=35 // pred_check_branch
          %462 = sbr.rel (%p460) target = $region82
        $region81: #{fem_forward.1} parent=35 // pred_region
          %p463 = scmp.lt.s32.totalorder %s26, 3
          %s464 = scalar_select %p463, %s26, 3
          %s465 = scalar_lea.vmem %s2, %s464
        $region82: #{fem_forward.1} parent=35 // pred_fallthru
          _
      $region36: #{fem_forward.1} parent=5 // pred_fallthru
        _
      %p466 = scmp.le.s32.totalorder 1, %s18
      %p467 = scmp.lt.s32.totalorder %s18, 9
      %p468 = pnand %p466, %p467
      %p469 = pneg %p468
      // Predicated region
      $region83: #{fem_forward.1} parent=5 // pred_check
        _
      $region84: #{fem_forward.1} parent=5 // pred_check_branch
        %471 = sbr.rel (%p468) target = $region86
      $region85: #{fem_forward.1} parent=5 // pred_region
        %s472 = ssub.s32 %s18, 1
        %s473 = sand.u32 %s45, 1
        %s474 = sand.u32 %s45, 1
        %s475 = smul.addr %s474, 256
        %s476 = scalar_lea.vmem [#allocation9], %s475
        // Predicated region
        $region87: #{fem_forward.1} parent=85 // pred_check
          %p477 = pneg %p58
        $region88: #{fem_forward.1} parent=85 // pred_check_branch
          %479 = sbr.rel (%p477) target = $region90
        $region89: #{fem_forward.1} parent=85 // pred_region
          _
        $region90: #{fem_forward.1} parent=85 // pred_fallthru
          _
        // Predicated region
        $region91: #{fem_forward.1} parent=85 // pred_check
          %p480 = pneg %p215
        $region92: #{fem_forward.1} parent=85 // pred_check_branch
          %482 = sbr.rel (%p480) target = $region94
        $region93: #{fem_forward.1} parent=85 // pred_region
          %484 = dma.done [#allocation12], 16
        $region94: #{fem_forward.1} parent=85 // pred_fallthru
          _
        %485 = sfence
        %s486 = sand.u32 %s45, 1
        %s487 = sand.u32 %s45, 1
        %s488 = smul.addr %s487, 256
        %s489 = scalar_lea.vmem [#allocation9], %s488
        %p490 = pneg %p58
        %p491 = pneg %p55
        %p492 = scmp.lt.s32.totalorder %s28, 3
        %s493 = scalar_select %p492, %s28, 3
        %s494 = smul.addr %s493, 3
        %s495 = smul.addr %s494, 4
        %s496 = scalar_lea.vmem %s1, %s495
        %p497 = pneg %p84
        %p498 = pneg %p81
        %p499 = scmp.lt.s32.totalorder %s28, 3
        %s500 = scalar_select %p499, %s28, 3
        %s501 = scalar_lea.vmem %s2, %s500
        %p502 = pneg %p110
        %p503 = pneg %p107
        %p504 = pneg %p131
        %p505 = pneg %p128
        %p506 = pneg %p152
        %p507 = pneg %p149
        %p508 = pneg %p173
        %p509 = pneg %p170
        %p510 = pneg %p194
        %p511 = pneg %p191
        %p512 = pneg %p215
        %p513 = pneg %p212
        %p514 = pneg %p243
        %p515 = pneg %p240
        %s516 = sand.u32 %s230, 1
        %s517 = scalar_lea.sflag [#allocation11], %s516
        %s518 = sand.u32 %s230, 1
        %s519 = smul.addr %s518, 256
        %s520 = scalar_lea.vmem [#allocation13], %s519
        %p521 = scmp.lt.s32.totalorder %s28, 3
        %s522 = scalar_select %p521, %s28, 3
        %s523 = smul.addr %s522, 3
        %s524 = smul.addr %s523, 4
        %s525 = scalar_lea.vmem %s1, %s524
        %p526 = scmp.lt.s32.totalorder %s28, 3
        %s527 = scalar_select %p526, %s28, 3
        %s528 = scalar_lea.vmem %s2, %s527
        %p529 = scmp.eq.s32.totalorder %s28, 0
        // Predicated region
        $region95: #{fem_forward.1} parent=85 // pred_check
          %p530 = pneg %p529
        $region96: #{fem_forward.1} parent=85 // pred_check_branch
          %532 = sbr.rel (%p530) target = $region98
        $region97: #{fem_forward.1} parent=85 // pred_region
          %533 = vst [vmem:[#allocation2] sm:$0xff] 0.0
          %534 = vst [vmem:[#allocation2 + $0x8] sm:$0xff] 0.0
          %535 = vst [vmem:[#allocation2 + $0x10] sm:$0xff] 0.0
          %536 = vst [vmem:[#allocation2 + $0x18] sm:$0xff] 0.0
          %537 = vst [vmem:[#allocation2 + $0x20] sm:$0xff] 0.0
          %538 = vst [vmem:[#allocation2 + $0x28] sm:$0xff] 0.0
          %539 = vst [vmem:[#allocation2 + $0x30] sm:$0xff] 0.0
          %540 = vst [vmem:[#allocation2 + $0x38] sm:$0xff] 0.0
          %541 = vst [vmem:[#allocation2 + $0x40] sm:$0xff] 0.0
          %542 = vst [vmem:[#allocation2 + $0x48] sm:$0xff] 0.0
          %543 = vst [vmem:[#allocation2 + $0x50] sm:$0xff] 0.0
          %544 = vst [vmem:[#allocation2 + $0x58] sm:$0xff] 0.0
          %545 = vst [vmem:[#allocation2 + $0x60] sm:$0xff] 0.0
          %546 = vst [vmem:[#allocation2 + $0x68] sm:$0xff] 0.0
          %547 = vst [vmem:[#allocation2 + $0x70] sm:$0xff] 0.0
          %548 = vst [vmem:[#allocation2 + $0x78] sm:$0xff] 0.0
          %549 = vst [vmem:[#allocation2 + $0x80] sm:$0xff] 0.0
          %550 = vst [vmem:[#allocation2 + $0x88] sm:$0xff] 0.0
          %551 = vst [vmem:[#allocation2 + $0x90] sm:$0xff] 0.0
          %552 = vst [vmem:[#allocation2 + $0x98] sm:$0xff] 0.0
          %553 = vst [vmem:[#allocation2 + $0xa0] sm:$0xff] 0.0
          %554 = vst [vmem:[#allocation2 + $0xa8] sm:$0xff] 0.0
          %555 = vst [vmem:[#allocation2 + $0xb0] sm:$0xff] 0.0
          %556 = vst [vmem:[#allocation2 + $0xb8] sm:$0xff] 0.0
          %557 = vst [vmem:[#allocation2 + $0xc0] sm:$0xff] 0.0
          %558 = vst [vmem:[#allocation2 + $0xc8] sm:$0xff] 0.0
          %559 = vst [vmem:[#allocation2 + $0xd0] sm:$0xff] 0.0
          %560 = vst [vmem:[#allocation2 + $0xd8] sm:$0xff] 0.0
          %561 = vst [vmem:[#allocation2 + $0xe0] sm:$0xff] 0.0
          %562 = vst [vmem:[#allocation2 + $0xe8] sm:$0xff] 0.0
          %563 = vst [vmem:[#allocation2 + $0xf0] sm:$0xff] 0.0
          %564 = vst [vmem:[#allocation2 + $0xf8] sm:$0xff] 0.0
          %565 = vst [vmem:[#allocation2 + $0x100] sm:$0xff] 0.0
          %566 = vst [vmem:[#allocation2 + $0x108] sm:$0xff] 0.0
          %567 = vst [vmem:[#allocation2 + $0x110] sm:$0xff] 0.0
          %568 = vst [vmem:[#allocation2 + $0x118] sm:$0xff] 0.0
          %569 = vst [vmem:[#allocation2 + $0x120] sm:$0xff] 0.0
          %570 = vst [vmem:[#allocation2 + $0x128] sm:$0xff] 0.0
          %571 = vst [vmem:[#allocation2 + $0x130] sm:$0xff] 0.0
          %572 = vst [vmem:[#allocation2 + $0x138] sm:$0xff] 0.0
          %573 = vst [vmem:[#allocation2 + $0x140] sm:$0xff] 0.0
          %574 = vst [vmem:[#allocation2 + $0x148] sm:$0xff] 0.0
          %575 = vst [vmem:[#allocation2 + $0x150] sm:$0xff] 0.0
          %576 = vst [vmem:[#allocation2 + $0x158] sm:$0xff] 0.0
          %577 = vst [vmem:[#allocation2 + $0x160] sm:$0xff] 0.0
          %578 = vst [vmem:[#allocation2 + $0x168] sm:$0xff] 0.0
          %579 = vst [vmem:[#allocation2 + $0x170] sm:$0xff] 0.0
          %580 = vst [vmem:[#allocation2 + $0x178] sm:$0xff] 0.0
          %581 = vst [vmem:[#allocation2 + $0x180] sm:$0xff] 0.0
          %582 = vst [vmem:[#allocation2 + $0x188] sm:$0xff] 0.0
          %583 = vst [vmem:[#allocation2 + $0x190] sm:$0xff] 0.0
          %584 = vst [vmem:[#allocation2 + $0x198] sm:$0xff] 0.0
          %585 = vst [vmem:[#allocation2 + $0x1a0] sm:$0xff] 0.0
          %586 = vst [vmem:[#allocation2 + $0x1a8] sm:$0xff] 0.0
          %587 = vst [vmem:[#allocation2 + $0x1b0] sm:$0xff] 0.0
          %588 = vst [vmem:[#allocation2 + $0x1b8] sm:$0xff] 0.0
          %589 = vst [vmem:[#allocation2 + $0x1c0] sm:$0xff] 0.0
          %590 = vst [vmem:[#allocation2 + $0x1c8] sm:$0xff] 0.0
          %591 = vst [vmem:[#allocation2 + $0x1d0] sm:$0xff] 0.0
          %592 = vst [vmem:[#allocation2 + $0x1d8] sm:$0xff] 0.0
          %593 = vst [vmem:[#allocation2 + $0x1e0] sm:$0xff] 0.0
          %594 = vst [vmem:[#allocation2 + $0x1e8] sm:$0xff] 0.0
          %595 = vst [vmem:[#allocation2 + $0x1f0] sm:$0xff] 0.0
          %596 = vst [vmem:[#allocation2 + $0x1f8] sm:$0xff] 0.0
          %597 = vst [vmem:[#allocation2 + $0x200] sm:$0xff] 0.0
          %598 = vst [vmem:[#allocation2 + $0x208] sm:$0xff] 0.0
          %599 = vst [vmem:[#allocation2 + $0x210] sm:$0xff] 0.0
          %600 = vst [vmem:[#allocation2 + $0x218] sm:$0xff] 0.0
          %601 = vst [vmem:[#allocation2 + $0x220] sm:$0xff] 0.0
          %602 = vst [vmem:[#allocation2 + $0x228] sm:$0xff] 0.0
          %603 = vst [vmem:[#allocation2 + $0x230] sm:$0xff] 0.0
          %604 = vst [vmem:[#allocation2 + $0x238] sm:$0xff] 0.0
          %605 = vst [vmem:[#allocation3] sm:$0xff] 0.0
          %606 = vst [vmem:[#allocation3 + $0x8] sm:$0xff] 0.0
          %607 = vst [vmem:[#allocation3 + $0x10] sm:$0xff] 0.0
          %608 = vst [vmem:[#allocation3 + $0x18] sm:$0xff] 0.0
          %609 = vst [vmem:[#allocation3 + $0x20] sm:$0xff] 0.0
          %610 = vst [vmem:[#allocation3 + $0x28] sm:$0xff] 0.0
          %611 = vst [vmem:[#allocation3 + $0x30] sm:$0xff] 0.0
          %612 = vst [vmem:[#allocation3 + $0x38] sm:$0xff] 0.0
          %613 = vst [vmem:[#allocation3 + $0x40] sm:$0xff] 0.0
          %614 = vst [vmem:[#allocation3 + $0x48] sm:$0xff] 0.0
          %615 = vst [vmem:[#allocation3 + $0x50] sm:$0xff] 0.0
          %616 = vst [vmem:[#allocation3 + $0x58] sm:$0xff] 0.0
          %617 = vst [vmem:[#allocation3 + $0x60] sm:$0xff] 0.0
          %618 = vst [vmem:[#allocation3 + $0x68] sm:$0xff] 0.0
          %619 = vst [vmem:[#allocation3 + $0x70] sm:$0xff] 0.0
          %620 = vst [vmem:[#allocation3 + $0x78] sm:$0xff] 0.0
          %621 = vst [vmem:[#allocation3 + $0x80] sm:$0xff] 0.0
          %622 = vst [vmem:[#allocation3 + $0x88] sm:$0xff] 0.0
          %623 = vst [vmem:[#allocation3 + $0x90] sm:$0xff] 0.0
          %624 = vst [vmem:[#allocation3 + $0x98] sm:$0xff] 0.0
          %625 = vst [vmem:[#allocation3 + $0xa0] sm:$0xff] 0.0
          %626 = vst [vmem:[#allocation3 + $0xa8] sm:$0xff] 0.0
          %627 = vst [vmem:[#allocation3 + $0xb0] sm:$0xff] 0.0
          %628 = vst [vmem:[#allocation3 + $0xb8] sm:$0xff] 0.0
          %629 = vst [vmem:[#allocation3 + $0xc0] sm:$0xff] 0.0
          %630 = vst [vmem:[#allocation3 + $0xc8] sm:$0xff] 0.0
          %631 = vst [vmem:[#allocation3 + $0xd0] sm:$0xff] 0.0
          %632 = vst [vmem:[#allocation3 + $0xd8] sm:$0xff] 0.0
          %633 = vst [vmem:[#allocation3 + $0xe0] sm:$0xff] 0.0
          %634 = vst [vmem:[#allocation3 + $0xe8] sm:$0xff] 0.0
          %635 = vst [vmem:[#allocation3 + $0xf0] sm:$0xff] 0.0
          %636 = vst [vmem:[#allocation3 + $0xf8] sm:$0xff] 0.0
          %637 = vst [vmem:[#allocation3 + $0x100] sm:$0xff] 0.0
          %638 = vst [vmem:[#allocation3 + $0x108] sm:$0xff] 0.0
          %639 = vst [vmem:[#allocation3 + $0x110] sm:$0xff] 0.0
          %640 = vst [vmem:[#allocation3 + $0x118] sm:$0xff] 0.0
          %641 = vst [vmem:[#allocation3 + $0x120] sm:$0xff] 0.0
          %642 = vst [vmem:[#allocation3 + $0x128] sm:$0xff] 0.0
          %643 = vst [vmem:[#allocation3 + $0x130] sm:$0xff] 0.0
          %644 = vst [vmem:[#allocation3 + $0x138] sm:$0xff] 0.0
          %645 = vst [vmem:[#allocation3 + $0x140] sm:$0xff] 0.0
          %646 = vst [vmem:[#allocation3 + $0x148] sm:$0xff] 0.0
          %647 = vst [vmem:[#allocation3 + $0x150] sm:$0xff] 0.0
          %648 = vst [vmem:[#allocation3 + $0x158] sm:$0xff] 0.0
          %649 = vst [vmem:[#allocation3 + $0x160] sm:$0xff] 0.0
          %650 = vst [vmem:[#allocation3 + $0x168] sm:$0xff] 0.0
          %651 = vst [vmem:[#allocation3 + $0x170] sm:$0xff] 0.0
          %652 = vst [vmem:[#allocation3 + $0x178] sm:$0xff] 0.0
          %653 = vst [vmem:[#allocation3 + $0x180] sm:$0xff] 0.0
          %654 = vst [vmem:[#allocation3 + $0x188] sm:$0xff] 0.0
          %655 = vst [vmem:[#allocation3 + $0x190] sm:$0xff] 0.0
          %656 = vst [vmem:[#allocation3 + $0x198] sm:$0xff] 0.0
          %657 = vst [vmem:[#allocation3 + $0x1a0] sm:$0xff] 0.0
          %658 = vst [vmem:[#allocation3 + $0x1a8] sm:$0xff] 0.0
          %659 = vst [vmem:[#allocation3 + $0x1b0] sm:$0xff] 0.0
          %660 = vst [vmem:[#allocation3 + $0x1b8] sm:$0xff] 0.0
          %661 = vst [vmem:[#allocation3 + $0x1c0] sm:$0xff] 0.0
          %662 = vst [vmem:[#allocation3 + $0x1c8] sm:$0xff] 0.0
          %663 = vst [vmem:[#allocation3 + $0x1d0] sm:$0xff] 0.0
          %664 = vst [vmem:[#allocation3 + $0x1d8] sm:$0xff] 0.0
          %665 = vst [vmem:[#allocation3 + $0x1e0] sm:$0xff] 0.0
          %666 = vst [vmem:[#allocation3 + $0x1e8] sm:$0xff] 0.0
          %667 = vst [vmem:[#allocation3 + $0x1f0] sm:$0xff] 0.0
          %668 = vst [vmem:[#allocation3 + $0x1f8] sm:$0xff] 0.0
          %669 = vst [vmem:[#allocation3 + $0x200] sm:$0xff] 0.0
          %670 = vst [vmem:[#allocation3 + $0x208] sm:$0xff] 0.0
          %671 = vst [vmem:[#allocation3 + $0x210] sm:$0xff] 0.0
          %672 = vst [vmem:[#allocation3 + $0x218] sm:$0xff] 0.0
          %673 = vst [vmem:[#allocation3 + $0x220] sm:$0xff] 0.0
          %674 = vst [vmem:[#allocation3 + $0x228] sm:$0xff] 0.0
          %675 = vst [vmem:[#allocation3 + $0x230] sm:$0xff] 0.0
          %676 = vst [vmem:[#allocation3 + $0x238] sm:$0xff] 0.0
          %677 = vst [vmem:[#allocation3 + $0x240] sm:$0xff] 0.0
          %678 = vst [vmem:[#allocation3 + $0x248] sm:$0xff] 0.0
          %679 = vst [vmem:[#allocation3 + $0x250] sm:$0xff] 0.0
          %680 = vst [vmem:[#allocation3 + $0x258] sm:$0xff] 0.0
          %681 = vst [vmem:[#allocation3 + $0x260] sm:$0xff] 0.0
          %682 = vst [vmem:[#allocation3 + $0x268] sm:$0xff] 0.0
          %683 = vst [vmem:[#allocation3 + $0x270] sm:$0xff] 0.0
          %684 = vst [vmem:[#allocation3 + $0x278] sm:$0xff] 0.0
          %685 = vst [vmem:[#allocation3 + $0x280] sm:$0xff] 0.0
          %686 = vst [vmem:[#allocation3 + $0x288] sm:$0xff] 0.0
          %687 = vst [vmem:[#allocation3 + $0x290] sm:$0xff] 0.0
          %688 = vst [vmem:[#allocation3 + $0x298] sm:$0xff] 0.0
          %689 = vst [vmem:[#allocation3 + $0x2a0] sm:$0xff] 0.0
          %690 = vst [vmem:[#allocation3 + $0x2a8] sm:$0xff] 0.0
          %691 = vst [vmem:[#allocation3 + $0x2b0] sm:$0xff] 0.0
          %692 = vst [vmem:[#allocation3 + $0x2b8] sm:$0xff] 0.0
          %693 = vst [vmem:[#allocation5] sm:$0xff] 0.0
          %694 = vst [vmem:[#allocation5 + $0x8] sm:$0xff] 0.0
          %695 = vst [vmem:[#allocation5 + $0x10] sm:$0xff] 0.0
          %696 = vst [vmem:[#allocation5 + $0x18] sm:$0xff] 0.0
          %697 = vst [vmem:[#allocation5 + $0x20] sm:$0x3f] 0.0
          %698 = vst [vmem:[#allocation5 + $0x28] sm:$0x3f] 0.0
          %699 = vst [vmem:[#allocation6] sm:$0xff] 0.0
          %700 = vst [vmem:[#allocation6 + $0x8] sm:$0xff] 0.0
          %701 = vst [vmem:[#allocation6 + $0x10] sm:$0xff] 0.0
          %702 = vst [vmem:[#allocation6 + $0x18] sm:$0xff] 0.0
          %703 = vst [vmem:[#allocation6 + $0x20] sm:$0x3f] 0.0
          %704 = vst [vmem:[#allocation6 + $0x28] sm:$0x3f] 0.0
          %vm705 = vcmask 261120
          %706 = vst.msk [vmem:[#allocation7] sm:$0xff] %vm705, 0.0
          %707 = vst.msk [vmem:[#allocation7 + $0x8] sm:$0xff] %vm705, 0.0
          %vm708 = vcmask 259072
          %709 = vst.msk [vmem:[#allocation7 + $0x10] sm:$0x3f] %vm708, 0.0
        $region98: #{fem_forward.1} parent=85 // pred_fallthru
          _
        %v710 = vld [vmem:[%s528] sm:$0x1]
        %p711 = scmp.ne.s32.totalorder %s28, 0
        // Predicated region
        $region99: #{fem_forward.1} parent=85 // pred_check
          %p712 = pneg %p711
        $region100: #{fem_forward.1} parent=85 // pred_check_branch
          %714 = sbr.rel (%p712) target = $region102
        $region101: #{fem_forward.1} parent=85 // pred_region
          %v715 = vld [vmem:[%s476] sm:$0xff]
          %v716 = vld [vmem:[%s476 + $0x8] sm:$0xff]
          %v717 = vld [vmem:[%s476 + $0x10] sm:$0xff]
          %v718 = vld [vmem:[%s476 + $0x18] sm:$0xff]
          %v719 = vld [vmem:[%s476 + $0x20] sm:$0xff]
          %v720 = vld [vmem:[%s476 + $0x28] sm:$0xff]
          %v721 = vld [vmem:[%s476 + $0x30] sm:$0xff]
          %v722 = vld [vmem:[%s476 + $0x38] sm:$0xff]
          %v723 = vld [vmem:[%s476 + $0x40] sm:$0xff]
          %v724 = vld [vmem:[%s476 + $0x48] sm:$0xff]
          %v725 = vld [vmem:[%s476 + $0x50] sm:$0xff]
          %v726 = vld [vmem:[%s476 + $0x58] sm:$0xff]
          %v727 = vld [vmem:[%s476 + $0x60] sm:$0xff]
          %v728 = vld [vmem:[%s476 + $0x68] sm:$0xff]
          %v729 = vld [vmem:[%s476 + $0x70] sm:$0xff]
          %v730 = vld [vmem:[%s476 + $0x78] sm:$0xff]
          %v731 = vld [vmem:[%s476 + $0x80] sm:$0xff]
          %v732 = vld [vmem:[%s476 + $0x88] sm:$0xff]
          %v733 = vld [vmem:[%s476 + $0x90] sm:$0xff]
          %v734 = vld [vmem:[%s476 + $0x98] sm:$0xff]
          %v735 = vld [vmem:[%s476 + $0xa0] sm:$0xff]
          %v736 = vld [vmem:[%s476 + $0xa8] sm:$0xff]
          %v737 = vld [vmem:[%s476 + $0xb0] sm:$0xff]
          %v738 = vld [vmem:[%s476 + $0xb8] sm:$0xff]
          %v739 = vld [vmem:[%s476 + $0xc0] sm:$0xff]
          %v740 = vld [vmem:[%s476 + $0xc8] sm:$0xff]
          %v741 = vld [vmem:[%s476 + $0xd0] sm:$0xff]
          %v742 = vld [vmem:[%s476 + $0xd8] sm:$0xff]
          %v743 = vld [vmem:[%s476 + $0xe0] sm:$0xff]
          %v744 = vld [vmem:[%s476 + $0xe8] sm:$0xff]
          %v745 = vld [vmem:[%s476 + $0xf0] sm:$0xff]
          %v746 = vld [vmem:[%s476 + $0xf8] sm:$0xff]
          %s747 = scalar_lea.vmem [#allocation2], 32
          %748 = vst [vmem:[%s747 + $0x8] sm:$0xff] %v715
          %749 = vst [vmem:[%s747 + $0x10] sm:$0xff] %v716
          %750 = vst [vmem:[%s747 + $0x28] sm:$0xff] %v717
          %751 = vst [vmem:[%s747 + $0x30] sm:$0xff] %v718
          %752 = vst [vmem:[%s747 + $0x48] sm:$0xff] %v719
          %753 = vst [vmem:[%s747 + $0x50] sm:$0xff] %v720
          %754 = vst [vmem:[%s747 + $0x68] sm:$0xff] %v721
          %755 = vst [vmem:[%s747 + $0x70] sm:$0xff] %v722
          %756 = vst [vmem:[%s747 + $0x88] sm:$0xff] %v723
          %757 = vst [vmem:[%s747 + $0x90] sm:$0xff] %v724
          %758 = vst [vmem:[%s747 + $0xa8] sm:$0xff] %v725
          %759 = vst [vmem:[%s747 + $0xb0] sm:$0xff] %v726
          %760 = vst [vmem:[%s747 + $0xc8] sm:$0xff] %v727
          %761 = vst [vmem:[%s747 + $0xd0] sm:$0xff] %v728
          %762 = vst [vmem:[%s747 + $0xe8] sm:$0xff] %v729
          %763 = vst [vmem:[%s747 + $0xf0] sm:$0xff] %v730
          %764 = vst [vmem:[%s747 + $0x108] sm:$0xff] %v731
          %765 = vst [vmem:[%s747 + $0x110] sm:$0xff] %v732
          %766 = vst [vmem:[%s747 + $0x128] sm:$0xff] %v733
          %767 = vst [vmem:[%s747 + $0x130] sm:$0xff] %v734
          %768 = vst [vmem:[%s747 + $0x148] sm:$0xff] %v735
          %769 = vst [vmem:[%s747 + $0x150] sm:$0xff] %v736
          %770 = vst [vmem:[%s747 + $0x168] sm:$0xff] %v737
          %771 = vst [vmem:[%s747 + $0x170] sm:$0xff] %v738
          %772 = vst [vmem:[%s747 + $0x188] sm:$0xff] %v739
          %773 = vst [vmem:[%s747 + $0x190] sm:$0xff] %v740
          %774 = vst [vmem:[%s747 + $0x1a8] sm:$0xff] %v741
          %775 = vst [vmem:[%s747 + $0x1b0] sm:$0xff] %v742
          %776 = vst [vmem:[%s747 + $0x1c8] sm:$0xff] %v743
          %777 = vst [vmem:[%s747 + $0x1d0] sm:$0xff] %v744
          %778 = vst [vmem:[%s747 + $0x1e8] sm:$0xff] %v745
          %779 = vst [vmem:[%s747 + $0x1f0] sm:$0xff] %v746
        $region102: #{fem_forward.1} parent=85 // pred_fallthru
          _
        // Predicated region
        $region103: #{fem_forward.1} parent=85 // pred_check
          %p780 = pneg %p529
        $region104: #{fem_forward.1} parent=85 // pred_check_branch
          %782 = sbr.rel (%p780) target = $region106
        $region105: #{fem_forward.1} parent=85 // pred_region
          %v783 = vld [vmem:[%s525 + $0x4] sm:$0x7]
          %v784 = vld [vmem:[%s476] sm:$0xff]
          %v785 = vld [vmem:[%s476 + $0x8] sm:$0xff]
          %v786 = vld [vmem:[%s476 + $0x10] sm:$0xff]
          %v787 = vld [vmem:[%s476 + $0x18] sm:$0xff]
          %v788 = vld [vmem:[%s476 + $0x20] sm:$0xff]
          %v789 = vld [vmem:[%s476 + $0x28] sm:$0xff]
          %v790 = vld [vmem:[%s476 + $0x30] sm:$0xff]
          %v791 = vld [vmem:[%s476 + $0x38] sm:$0xff]
          %v792 = vld [vmem:[%s476 + $0x40] sm:$0xff]
          %v793 = vld [vmem:[%s476 + $0x48] sm:$0xff]
          %v794 = vld [vmem:[%s476 + $0x50] sm:$0xff]
          %v795 = vld [vmem:[%s476 + $0x58] sm:$0xff]
          %v796 = vld [vmem:[%s476 + $0x60] sm:$0xff]
          %v797 = vld [vmem:[%s476 + $0x68] sm:$0xff]
          %v798 = vld [vmem:[%s476 + $0x70] sm:$0xff]
          %v799 = vld [vmem:[%s476 + $0x78] sm:$0xff]
          %v800 = vld [vmem:[%s476 + $0x80] sm:$0xff]
          %v801 = vld [vmem:[%s476 + $0x88] sm:$0xff]
          %v802 = vld [vmem:[%s476 + $0x90] sm:$0xff]
          %v803 = vld [vmem:[%s476 + $0x98] sm:$0xff]
          %v804 = vld [vmem:[%s476 + $0xa0] sm:$0xff]
          %v805 = vld [vmem:[%s476 + $0xa8] sm:$0xff]
          %v806 = vld [vmem:[%s476 + $0xb0] sm:$0xff]
          %v807 = vld [vmem:[%s476 + $0xb8] sm:$0xff]
          %v808 = vld [vmem:[%s476 + $0xc0] sm:$0xff]
          %v809 = vld [vmem:[%s476 + $0xc8] sm:$0xff]
          %v810 = vld [vmem:[%s476 + $0xd0] sm:$0xff]
          %v811 = vld [vmem:[%s476 + $0xd8] sm:$0xff]
          %v812 = vld [vmem:[%s476 + $0xe0] sm:$0xff]
          %v813 = vld [vmem:[%s476 + $0xe8] sm:$0xff]
          %v814 = vld [vmem:[%s476 + $0xf0] sm:$0xff]
          %v815 = vld [vmem:[%s476 + $0xf8] sm:$0xff]
          %v816 = vperm.slane %v783, 1
          %v817 = vmul.f32 %v784, %v816
          %v818 = vmul.f32 %v785, %v816
          %v819 = vmul.f32 %v786, %v816
          %v820 = vmul.f32 %v787, %v816
          %v821 = vmul.f32 %v788, %v816
          %v822 = vmul.f32 %v789, %v816
          %v823 = vmul.f32 %v790, %v816
          %v824 = vmul.f32 %v791, %v816
          %v825 = vmul.f32 %v792, %v816
          %v826 = vmul.f32 %v793, %v816
          %v827 = vmul.f32 %v794, %v816
          %v828 = vmul.f32 %v795, %v816
          %v829 = vmul.f32 %v796, %v816
          %v830 = vmul.f32 %v797, %v816
          %v831 = vmul.f32 %v798, %v816
          %v832 = vmul.f32 %v799, %v816
          %v833 = vmul.f32 %v800, %v816
          %v834 = vmul.f32 %v801, %v816
          %v835 = vmul.f32 %v802, %v816
          %v836 = vmul.f32 %v803, %v816
          %v837 = vmul.f32 %v804, %v816
          %v838 = vmul.f32 %v805, %v816
          %v839 = vmul.f32 %v806, %v816
          %v840 = vmul.f32 %v807, %v816
          %v841 = vmul.f32 %v808, %v816
          %v842 = vmul.f32 %v809, %v816
          %v843 = vmul.f32 %v810, %v816
          %v844 = vmul.f32 %v811, %v816
          %v845 = vmul.f32 %v812, %v816
          %v846 = vmul.f32 %v813, %v816
          %v847 = vmul.f32 %v814, %v816
          %v848 = vmul.f32 %v815, %v816
          %v850 = vperm.slane %v710, 0
          %v852 = vadd.f32 %v817, %v850
          %v853 = vadd.f32 %v818, %v850
          %v854 = vadd.f32 %v819, %v850
          %v855 = vadd.f32 %v820, %v850
          %v856 = vadd.f32 %v821, %v850
          %v857 = vadd.f32 %v822, %v850
          %v858 = vadd.f32 %v823, %v850
          %v859 = vadd.f32 %v824, %v850
          %v860 = vadd.f32 %v825, %v850
          %v861 = vadd.f32 %v826, %v850
          %v862 = vadd.f32 %v827, %v850
          %v863 = vadd.f32 %v828, %v850
          %v864 = vadd.f32 %v829, %v850
          %v865 = vadd.f32 %v830, %v850
          %v866 = vadd.f32 %v831, %v850
          %v867 = vadd.f32 %v832, %v850
          %v868 = vadd.f32 %v833, %v850
          %v869 = vadd.f32 %v834, %v850
          %v870 = vadd.f32 %v835, %v850
          %v871 = vadd.f32 %v836, %v850
          %v872 = vadd.f32 %v837, %v850
          %v873 = vadd.f32 %v838, %v850
          %v874 = vadd.f32 %v839, %v850
          %v875 = vadd.f32 %v840, %v850
          %v876 = vadd.f32 %v841, %v850
          %v877 = vadd.f32 %v842, %v850
          %v878 = vadd.f32 %v843, %v850
          %v879 = vadd.f32 %v844, %v850
          %v880 = vadd.f32 %v845, %v850
          %v881 = vadd.f32 %v846, %v850
          %v882 = vadd.f32 %v847, %v850
          %v883 = vadd.f32 %v848, %v850
          %v884 = vmax.f32 %v852, 0.0
          %v885 = vmax.f32 %v853, 0.0
          %v886 = vmax.f32 %v854, 0.0
          %v887 = vmax.f32 %v855, 0.0
          %v888 = vmax.f32 %v856, 0.0
          %v889 = vmax.f32 %v857, 0.0
          %v890 = vmax.f32 %v858, 0.0
          %v891 = vmax.f32 %v859, 0.0
          %v892 = vmax.f32 %v860, 0.0
          %v893 = vmax.f32 %v861, 0.0
          %v894 = vmax.f32 %v862, 0.0
          %v895 = vmax.f32 %v863, 0.0
          %v896 = vmax.f32 %v864, 0.0
          %v897 = vmax.f32 %v865, 0.0
          %v898 = vmax.f32 %v866, 0.0
          %v899 = vmax.f32 %v867, 0.0
          %v900 = vmax.f32 %v868, 0.0
          %v901 = vmax.f32 %v869, 0.0
          %v902 = vmax.f32 %v870, 0.0
          %v903 = vmax.f32 %v871, 0.0
          %v904 = vmax.f32 %v872, 0.0
          %v905 = vmax.f32 %v873, 0.0
          %v906 = vmax.f32 %v874, 0.0
          %v907 = vmax.f32 %v875, 0.0
          %v908 = vmax.f32 %v876, 0.0
          %v909 = vmax.f32 %v877, 0.0
          %v910 = vmax.f32 %v878, 0.0
          %v911 = vmax.f32 %v879, 0.0
          %v912 = vmax.f32 %v880, 0.0
          %v913 = vmax.f32 %v881, 0.0
          %v914 = vmax.f32 %v882, 0.0
          %v915 = vmax.f32 %v883, 0.0
          %s916 = scalar_lea.vmem [#allocation3], 96
          %917 = vst [vmem:[%s916 + $0x8] sm:$0xff] %v884
          %918 = vst [vmem:[%s916 + $0x10] sm:$0xff] %v885
          %919 = vst [vmem:[%s916 + $0x28] sm:$0xff] %v886
          %920 = vst [vmem:[%s916 + $0x30] sm:$0xff] %v887
          %921 = vst [vmem:[%s916 + $0x48] sm:$0xff] %v888
          %922 = vst [vmem:[%s916 + $0x50] sm:$0xff] %v889
          %923 = vst [vmem:[%s916 + $0x68] sm:$0xff] %v890
          %924 = vst [vmem:[%s916 + $0x70] sm:$0xff] %v891
          %925 = vst [vmem:[%s916 + $0x88] sm:$0xff] %v892
          %926 = vst [vmem:[%s916 + $0x90] sm:$0xff] %v893
          %927 = vst [vmem:[%s916 + $0xa8] sm:$0xff] %v894
          %928 = vst [vmem:[%s916 + $0xb0] sm:$0xff] %v895
          %929 = vst [vmem:[%s916 + $0xc8] sm:$0xff] %v896
          %930 = vst [vmem:[%s916 + $0xd0] sm:$0xff] %v897
          %931 = vst [vmem:[%s916 + $0xe8] sm:$0xff] %v898
          %932 = vst [vmem:[%s916 + $0xf0] sm:$0xff] %v899
          %933 = vst [vmem:[%s916 + $0x108] sm:$0xff] %v900
          %934 = vst [vmem:[%s916 + $0x110] sm:$0xff] %v901
          %935 = vst [vmem:[%s916 + $0x128] sm:$0xff] %v902
          %936 = vst [vmem:[%s916 + $0x130] sm:$0xff] %v903
          %937 = vst [vmem:[%s916 + $0x148] sm:$0xff] %v904
          %938 = vst [vmem:[%s916 + $0x150] sm:$0xff] %v905
          %939 = vst [vmem:[%s916 + $0x168] sm:$0xff] %v906
          %940 = vst [vmem:[%s916 + $0x170] sm:$0xff] %v907
          %941 = vst [vmem:[%s916 + $0x188] sm:$0xff] %v908
          %942 = vst [vmem:[%s916 + $0x190] sm:$0xff] %v909
          %943 = vst [vmem:[%s916 + $0x1a8] sm:$0xff] %v910
          %944 = vst [vmem:[%s916 + $0x1b0] sm:$0xff] %v911
          %945 = vst [vmem:[%s916 + $0x1c8] sm:$0xff] %v912
          %946 = vst [vmem:[%s916 + $0x1d0] sm:$0xff] %v913
          %947 = vst [vmem:[%s916 + $0x1e8] sm:$0xff] %v914
          %948 = vst [vmem:[%s916 + $0x1f0] sm:$0xff] %v915
        $region106: #{fem_forward.1} parent=85 // pred_fallthru
          _
        %p949 = scmp.eq.s32.totalorder %s28, 1
        // Predicated region
        $region107: #{fem_forward.1} parent=85 // pred_check
          %p950 = pneg %p949
        $region108: #{fem_forward.1} parent=85 // pred_check_branch
          %952 = sbr.rel (%p950) target = $region110
        $region109: #{fem_forward.1} parent=85 // pred_region
          %v953 = vld [vmem:[%s525] sm:$0x7]
          %v954 = vld [vmem:[%s525 + $0x4] sm:$0x7]
          %v955 = vld [vmem:[%s525 + $0x8] sm:$0x7]
          %v956 = vld [vmem:[#allocation2 + $0x7] sm:$0xff]
          %v957 = vld [vmem:[#allocation2 + $0xf] sm:$0xff]
          %v958 = vld [vmem:[#allocation2 + $0x27] sm:$0xff]
          %v959 = vld [vmem:[#allocation2 + $0x2f] sm:$0xff]
          %v960 = vld [vmem:[#allocation2 + $0x47] sm:$0xff]
          %v961 = vld [vmem:[#allocation2 + $0x4f] sm:$0xff]
          %v962 = vld [vmem:[#allocation2 + $0x67] sm:$0xff]
          %v963 = vld [vmem:[#allocation2 + $0x6f] sm:$0xff]
          %v964 = vld [vmem:[#allocation2 + $0x87] sm:$0xff]
          %v965 = vld [vmem:[#allocation2 + $0x8f] sm:$0xff]
          %v966 = vld [vmem:[#allocation2 + $0xa7] sm:$0xff]
          %v967 = vld [vmem:[#allocation2 + $0xaf] sm:$0xff]
          %v968 = vld [vmem:[#allocation2 + $0xc7] sm:$0xff]
          %v969 = vld [vmem:[#allocation2 + $0xcf] sm:$0xff]
          %v970 = vld [vmem:[#allocation2 + $0xe7] sm:$0xff]
          %v971 = vld [vmem:[#allocation2 + $0xef] sm:$0xff]
          %v972 = vld [vmem:[#allocation2 + $0x107] sm:$0xff]
          %v973 = vld [vmem:[#allocation2 + $0x10f] sm:$0xff]
          %v974 = vld [vmem:[#allocation2 + $0x127] sm:$0xff]
          %v975 = vld [vmem:[#allocation2 + $0x12f] sm:$0xff]
          %v976 = vld [vmem:[#allocation2 + $0x147] sm:$0xff]
          %v977 = vld [vmem:[#allocation2 + $0x14f] sm:$0xff]
          %v978 = vld [vmem:[#allocation2 + $0x167] sm:$0xff]
          %v979 = vld [vmem:[#allocation2 + $0x16f] sm:$0xff]
          %v980 = vld [vmem:[#allocation2 + $0x187] sm:$0xff]
          %v981 = vld [vmem:[#allocation2 + $0x18f] sm:$0xff]
          %v982 = vld [vmem:[#allocation2 + $0x1a7] sm:$0xff]
          %v983 = vld [vmem:[#allocation2 + $0x1af] sm:$0xff]
          %v984 = vld [vmem:[#allocation2 + $0x1c7] sm:$0xff]
          %v985 = vld [vmem:[#allocation2 + $0x1cf] sm:$0xff]
          %v986 = vld [vmem:[#allocation2 + $0x1e7] sm:$0xff]
          %v987 = vld [vmem:[#allocation2 + $0x1ef] sm:$0xff]
          %v988 = vperm.slane %v953, 0
          %v989 = vmul.f32 %v956, %v988
          %v990 = vmul.f32 %v957, %v988
          %v991 = vmul.f32 %v958, %v988
          %v992 = vmul.f32 %v959, %v988
          %v993 = vmul.f32 %v960, %v988
          %v994 = vmul.f32 %v961, %v988
          %v995 = vmul.f32 %v962, %v988
          %v996 = vmul.f32 %v963, %v988
          %v997 = vmul.f32 %v964, %v988
          %v998 = vmul.f32 %v965, %v988
          %v999 = vmul.f32 %v966, %v988
          %v1000 = vmul.f32 %v967, %v988
          %v1001 = vmul.f32 %v968, %v988
          %v1002 = vmul.f32 %v969, %v988
          %v1003 = vmul.f32 %v970, %v988
          %v1004 = vmul.f32 %v971, %v988
          %v1005 = vmul.f32 %v972, %v988
          %v1006 = vmul.f32 %v973, %v988
          %v1007 = vmul.f32 %v974, %v988
          %v1008 = vmul.f32 %v975, %v988
          %v1009 = vmul.f32 %v976, %v988
          %v1010 = vmul.f32 %v977, %v988
          %v1011 = vmul.f32 %v978, %v988
          %v1012 = vmul.f32 %v979, %v988
          %v1013 = vmul.f32 %v980, %v988
          %v1014 = vmul.f32 %v981, %v988
          %v1015 = vmul.f32 %v982, %v988
          %v1016 = vmul.f32 %v983, %v988
          %v1017 = vmul.f32 %v984, %v988
          %v1018 = vmul.f32 %v985, %v988
          %v1019 = vmul.f32 %v986, %v988
          %v1020 = vmul.f32 %v987, %v988
          %v1021 = vld [vmem:[#allocation2 + $0x8] sm:$0xff]
          %v1022 = vld [vmem:[#allocation2 + $0x10] sm:$0xff]
          %v1023 = vld [vmem:[#allocation2 + $0x28] sm:$0xff]
          %v1024 = vld [vmem:[#allocation2 + $0x30] sm:$0xff]
          %v1025 = vld [vmem:[#allocation2 + $0x48] sm:$0xff]
          %v1026 = vld [vmem:[#allocation2 + $0x50] sm:$0xff]
          %v1027 = vld [vmem:[#allocation2 + $0x68] sm:$0xff]
          %v1028 = vld [vmem:[#allocation2 + $0x70] sm:$0xff]
          %v1029 = vld [vmem:[#allocation2 + $0x88] sm:$0xff]
          %v1030 = vld [vmem:[#allocation2 + $0x90] sm:$0xff]
          %v1031 = vld [vmem:[#allocation2 + $0xa8] sm:$0xff]
          %v1032 = vld [vmem:[#allocation2 + $0xb0] sm:$0xff]
          %v1033 = vld [vmem:[#allocation2 + $0xc8] sm:$0xff]
          %v1034 = vld [vmem:[#allocation2 + $0xd0] sm:$0xff]
          %v1035 = vld [vmem:[#allocation2 + $0xe8] sm:$0xff]
          %v1036 = vld [vmem:[#allocation2 + $0xf0] sm:$0xff]
          %v1037 = vld [vmem:[#allocation2 + $0x108] sm:$0xff]
          %v1038 = vld [vmem:[#allocation2 + $0x110] sm:$0xff]
          %v1039 = vld [vmem:[#allocation2 + $0x128] sm:$0xff]
          %v1040 = vld [vmem:[#allocation2 + $0x130] sm:$0xff]
          %v1041 = vld [vmem:[#allocation2 + $0x148] sm:$0xff]
          %v1042 = vld [vmem:[#allocation2 + $0x150] sm:$0xff]
          %v1043 = vld [vmem:[#allocation2 + $0x168] sm:$0xff]
          %v1044 = vld [vmem:[#allocation2 + $0x170] sm:$0xff]
          %v1045 = vld [vmem:[#allocation2 + $0x188] sm:$0xff]
          %v1046 = vld [vmem:[#allocation2 + $0x190] sm:$0xff]
          %v1047 = vld [vmem:[#allocation2 + $0x1a8] sm:$0xff]
          %v1048 = vld [vmem:[#allocation2 + $0x1b0] sm:$0xff]
          %v1049 = vld [vmem:[#allocation2 + $0x1c8] sm:$0xff]
          %v1050 = vld [vmem:[#allocation2 + $0x1d0] sm:$0xff]
          %v1051 = vld [vmem:[#allocation2 + $0x1e8] sm:$0xff]
          %v1052 = vld [vmem:[#allocation2 + $0x1f0] sm:$0xff]
          %v1053 = vperm.slane %v953, 1
          %v1054 = vmul.f32 %v1021, %v1053
          %v1055 = vmul.f32 %v1022, %v1053
          %v1056 = vmul.f32 %v1023, %v1053
          %v1057 = vmul.f32 %v1024, %v1053
          %v1058 = vmul.f32 %v1025, %v1053
          %v1059 = vmul.f32 %v1026, %v1053
          %v1060 = vmul.f32 %v1027, %v1053
          %v1061 = vmul.f32 %v1028, %v1053
          %v1062 = vmul.f32 %v1029, %v1053
          %v1063 = vmul.f32 %v1030, %v1053
          %v1064 = vmul.f32 %v1031, %v1053
          %v1065 = vmul.f32 %v1032, %v1053
          %v1066 = vmul.f32 %v1033, %v1053
          %v1067 = vmul.f32 %v1034, %v1053
          %v1068 = vmul.f32 %v1035, %v1053
          %v1069 = vmul.f32 %v1036, %v1053
          %v1070 = vmul.f32 %v1037, %v1053
          %v1071 = vmul.f32 %v1038, %v1053
          %v1072 = vmul.f32 %v1039, %v1053
          %v1073 = vmul.f32 %v1040, %v1053
          %v1074 = vmul.f32 %v1041, %v1053
          %v1075 = vmul.f32 %v1042, %v1053
          %v1076 = vmul.f32 %v1043, %v1053
          %v1077 = vmul.f32 %v1044, %v1053
          %v1078 = vmul.f32 %v1045, %v1053
          %v1079 = vmul.f32 %v1046, %v1053
          %v1080 = vmul.f32 %v1047, %v1053
          %v1081 = vmul.f32 %v1048, %v1053
          %v1082 = vmul.f32 %v1049, %v1053
          %v1083 = vmul.f32 %v1050, %v1053
          %v1084 = vmul.f32 %v1051, %v1053
          %v1085 = vmul.f32 %v1052, %v1053
          %v1086 = vadd.f32 %v989, %v1054
          %v1087 = vadd.f32 %v990, %v1055
          %v1088 = vadd.f32 %v991, %v1056
          %v1089 = vadd.f32 %v992, %v1057
          %v1090 = vadd.f32 %v993, %v1058
          %v1091 = vadd.f32 %v994, %v1059
          %v1092 = vadd.f32 %v995, %v1060
          %v1093 = vadd.f32 %v996, %v1061
          %v1094 = vadd.f32 %v997, %v1062
          %v1095 = vadd.f32 %v998, %v1063
          %v1096 = vadd.f32 %v999, %v1064
          %v1097 = vadd.f32 %v1000, %v1065
          %v1098 = vadd.f32 %v1001, %v1066
          %v1099 = vadd.f32 %v1002, %v1067
          %v1100 = vadd.f32 %v1003, %v1068
          %v1101 = vadd.f32 %v1004, %v1069
          %v1102 = vadd.f32 %v1005, %v1070
          %v1103 = vadd.f32 %v1006, %v1071
          %v1104 = vadd.f32 %v1007, %v1072
          %v1105 = vadd.f32 %v1008, %v1073
          %v1106 = vadd.f32 %v1009, %v1074
          %v1107 = vadd.f32 %v1010, %v1075
          %v1108 = vadd.f32 %v1011, %v1076
          %v1109 = vadd.f32 %v1012, %v1077
          %v1110 = vadd.f32 %v1013, %v1078
          %v1111 = vadd.f32 %v1014, %v1079
          %v1112 = vadd.f32 %v1015, %v1080
          %v1113 = vadd.f32 %v1016, %v1081
          %v1114 = vadd.f32 %v1017, %v1082
          %v1115 = vadd.f32 %v1018, %v1083
          %v1116 = vadd.f32 %v1019, %v1084
          %v1117 = vadd.f32 %v1020, %v1085
          %v1118 = vld [vmem:[#allocation2 + $0x9] sm:$0xff]
          %v1119 = vld [vmem:[#allocation2 + $0x11] sm:$0xff]
          %v1120 = vld [vmem:[#allocation2 + $0x29] sm:$0xff]
          %v1121 = vld [vmem:[#allocation2 + $0x31] sm:$0xff]
          %v1122 = vld [vmem:[#allocation2 + $0x49] sm:$0xff]
          %v1123 = vld [vmem:[#allocation2 + $0x51] sm:$0xff]
          %v1124 = vld [vmem:[#allocation2 + $0x69] sm:$0xff]
          %v1125 = vld [vmem:[#allocation2 + $0x71] sm:$0xff]
          %v1126 = vld [vmem:[#allocation2 + $0x89] sm:$0xff]
          %v1127 = vld [vmem:[#allocation2 + $0x91] sm:$0xff]
          %v1128 = vld [vmem:[#allocation2 + $0xa9] sm:$0xff]
          %v1129 = vld [vmem:[#allocation2 + $0xb1] sm:$0xff]
          %v1130 = vld [vmem:[#allocation2 + $0xc9] sm:$0xff]
          %v1131 = vld [vmem:[#allocation2 + $0xd1] sm:$0xff]
          %v1132 = vld [vmem:[#allocation2 + $0xe9] sm:$0xff]
          %v1133 = vld [vmem:[#allocation2 + $0xf1] sm:$0xff]
          %v1134 = vld [vmem:[#allocation2 + $0x109] sm:$0xff]
          %v1135 = vld [vmem:[#allocation2 + $0x111] sm:$0xff]
          %v1136 = vld [vmem:[#allocation2 + $0x129] sm:$0xff]
          %v1137 = vld [vmem:[#allocation2 + $0x131] sm:$0xff]
          %v1138 = vld [vmem:[#allocation2 + $0x149] sm:$0xff]
          %v1139 = vld [vmem:[#allocation2 + $0x151] sm:$0xff]
          %v1140 = vld [vmem:[#allocation2 + $0x169] sm:$0xff]
          %v1141 = vld [vmem:[#allocation2 + $0x171] sm:$0xff]
          %v1142 = vld [vmem:[#allocation2 + $0x189] sm:$0xff]
          %v1143 = vld [vmem:[#allocation2 + $0x191] sm:$0xff]
          %v1144 = vld [vmem:[#allocation2 + $0x1a9] sm:$0xff]
          %v1145 = vld [vmem:[#allocation2 + $0x1b1] sm:$0xff]
          %v1146 = vld [vmem:[#allocation2 + $0x1c9] sm:$0xff]
          %v1147 = vld [vmem:[#allocation2 + $0x1d1] sm:$0xff]
          %v1148 = vld [vmem:[#allocation2 + $0x1e9] sm:$0xff]
          %v1149 = vld [vmem:[#allocation2 + $0x1f1] sm:$0xff]
          %v1150 = vperm.slane %v953, 2
          %v1151 = vmul.f32 %v1118, %v1150
          %v1152 = vmul.f32 %v1119, %v1150
          %v1153 = vmul.f32 %v1120, %v1150
          %v1154 = vmul.f32 %v1121, %v1150
          %v1155 = vmul.f32 %v1122, %v1150
          %v1156 = vmul.f32 %v1123, %v1150
          %v1157 = vmul.f32 %v1124, %v1150
          %v1158 = vmul.f32 %v1125, %v1150
          %v1159 = vmul.f32 %v1126, %v1150
          %v1160 = vmul.f32 %v1127, %v1150
          %v1161 = vmul.f32 %v1128, %v1150
          %v1162 = vmul.f32 %v1129, %v1150
          %v1163 = vmul.f32 %v1130, %v1150
          %v1164 = vmul.f32 %v1131, %v1150
          %v1165 = vmul.f32 %v1132, %v1150
          %v1166 = vmul.f32 %v1133, %v1150
          %v1167 = vmul.f32 %v1134, %v1150
          %v1168 = vmul.f32 %v1135, %v1150
          %v1169 = vmul.f32 %v1136, %v1150
          %v1170 = vmul.f32 %v1137, %v1150
          %v1171 = vmul.f32 %v1138, %v1150
          %v1172 = vmul.f32 %v1139, %v1150
          %v1173 = vmul.f32 %v1140, %v1150
          %v1174 = vmul.f32 %v1141, %v1150
          %v1175 = vmul.f32 %v1142, %v1150
          %v1176 = vmul.f32 %v1143, %v1150
          %v1177 = vmul.f32 %v1144, %v1150
          %v1178 = vmul.f32 %v1145, %v1150
          %v1179 = vmul.f32 %v1146, %v1150
          %v1180 = vmul.f32 %v1147, %v1150
          %v1181 = vmul.f32 %v1148, %v1150
          %v1182 = vmul.f32 %v1149, %v1150
          %v1183 = vadd.f32 %v1086, %v1151
          %v1184 = vadd.f32 %v1087, %v1152
          %v1185 = vadd.f32 %v1088, %v1153
          %v1186 = vadd.f32 %v1089, %v1154
          %v1187 = vadd.f32 %v1090, %v1155
          %v1188 = vadd.f32 %v1091, %v1156
          %v1189 = vadd.f32 %v1092, %v1157
          %v1190 = vadd.f32 %v1093, %v1158
          %v1191 = vadd.f32 %v1094, %v1159
          %v1192 = vadd.f32 %v1095, %v1160
          %v1193 = vadd.f32 %v1096, %v1161
          %v1194 = vadd.f32 %v1097, %v1162
          %v1195 = vadd.f32 %v1098, %v1163
          %v1196 = vadd.f32 %v1099, %v1164
          %v1197 = vadd.f32 %v1100, %v1165
          %v1198 = vadd.f32 %v1101, %v1166
          %v1199 = vadd.f32 %v1102, %v1167
          %v1200 = vadd.f32 %v1103, %v1168
          %v1201 = vadd.f32 %v1104, %v1169
          %v1202 = vadd.f32 %v1105, %v1170
          %v1203 = vadd.f32 %v1106, %v1171
          %v1204 = vadd.f32 %v1107, %v1172
          %v1205 = vadd.f32 %v1108, %v1173
          %v1206 = vadd.f32 %v1109, %v1174
          %v1207 = vadd.f32 %v1110, %v1175
          %v1208 = vadd.f32 %v1111, %v1176
          %v1209 = vadd.f32 %v1112, %v1177
          %v1210 = vadd.f32 %v1113, %v1178
          %v1211 = vadd.f32 %v1114, %v1179
          %v1212 = vadd.f32 %v1115, %v1180
          %v1213 = vadd.f32 %v1116, %v1181
          %v1214 = vadd.f32 %v1117, %v1182
          %s1215 = scalar_lea.vmem [#allocation2], 32
          %v1216 = vld [vmem:[%s1215 + $0x7] sm:$0xff]
          %v1217 = vld [vmem:[%s1215 + $0xf] sm:$0xff]
          %v1218 = vld [vmem:[%s1215 + $0x27] sm:$0xff]
          %v1219 = vld [vmem:[%s1215 + $0x2f] sm:$0xff]
          %v1220 = vld [vmem:[%s1215 + $0x47] sm:$0xff]
          %v1221 = vld [vmem:[%s1215 + $0x4f] sm:$0xff]
          %v1222 = vld [vmem:[%s1215 + $0x67] sm:$0xff]
          %v1223 = vld [vmem:[%s1215 + $0x6f] sm:$0xff]
          %v1224 = vld [vmem:[%s1215 + $0x87] sm:$0xff]
          %v1225 = vld [vmem:[%s1215 + $0x8f] sm:$0xff]
          %v1226 = vld [vmem:[%s1215 + $0xa7] sm:$0xff]
          %v1227 = vld [vmem:[%s1215 + $0xaf] sm:$0xff]
          %v1228 = vld [vmem:[%s1215 + $0xc7] sm:$0xff]
          %v1229 = vld [vmem:[%s1215 + $0xcf] sm:$0xff]
          %v1230 = vld [vmem:[%s1215 + $0xe7] sm:$0xff]
          %v1231 = vld [vmem:[%s1215 + $0xef] sm:$0xff]
          %v1232 = vld [vmem:[%s1215 + $0x107] sm:$0xff]
          %v1233 = vld [vmem:[%s1215 + $0x10f] sm:$0xff]
          %v1234 = vld [vmem:[%s1215 + $0x127] sm:$0xff]
          %v1235 = vld [vmem:[%s1215 + $0x12f] sm:$0xff]
          %v1236 = vld [vmem:[%s1215 + $0x147] sm:$0xff]
          %v1237 = vld [vmem:[%s1215 + $0x14f] sm:$0xff]
          %v1238 = vld [vmem:[%s1215 + $0x167] sm:$0xff]
          %v1239 = vld [vmem:[%s1215 + $0x16f] sm:$0xff]
          %v1240 = vld [vmem:[%s1215 + $0x187] sm:$0xff]
          %v1241 = vld [vmem:[%s1215 + $0x18f] sm:$0xff]
          %v1242 = vld [vmem:[%s1215 + $0x1a7] sm:$0xff]
          %v1243 = vld [vmem:[%s1215 + $0x1af] sm:$0xff]
          %v1244 = vld [vmem:[%s1215 + $0x1c7] sm:$0xff]
          %v1245 = vld [vmem:[%s1215 + $0x1cf] sm:$0xff]
          %v1246 = vld [vmem:[%s1215 + $0x1e7] sm:$0xff]
          %v1247 = vld [vmem:[%s1215 + $0x1ef] sm:$0xff]
          %v1248 = vperm.slane %v954, 0
          %v1249 = vmul.f32 %v1216, %v1248
          %v1250 = vmul.f32 %v1217, %v1248
          %v1251 = vmul.f32 %v1218, %v1248
          %v1252 = vmul.f32 %v1219, %v1248
          %v1253 = vmul.f32 %v1220, %v1248
          %v1254 = vmul.f32 %v1221, %v1248
          %v1255 = vmul.f32 %v1222, %v1248
          %v1256 = vmul.f32 %v1223, %v1248
          %v1257 = vmul.f32 %v1224, %v1248
          %v1258 = vmul.f32 %v1225, %v1248
          %v1259 = vmul.f32 %v1226, %v1248
          %v1260 = vmul.f32 %v1227, %v1248
          %v1261 = vmul.f32 %v1228, %v1248
          %v1262 = vmul.f32 %v1229, %v1248
          %v1263 = vmul.f32 %v1230, %v1248
          %v1264 = vmul.f32 %v1231, %v1248
          %v1265 = vmul.f32 %v1232, %v1248
          %v1266 = vmul.f32 %v1233, %v1248
          %v1267 = vmul.f32 %v1234, %v1248
          %v1268 = vmul.f32 %v1235, %v1248
          %v1269 = vmul.f32 %v1236, %v1248
          %v1270 = vmul.f32 %v1237, %v1248
          %v1271 = vmul.f32 %v1238, %v1248
          %v1272 = vmul.f32 %v1239, %v1248
          %v1273 = vmul.f32 %v1240, %v1248
          %v1274 = vmul.f32 %v1241, %v1248
          %v1275 = vmul.f32 %v1242, %v1248
          %v1276 = vmul.f32 %v1243, %v1248
          %v1277 = vmul.f32 %v1244, %v1248
          %v1278 = vmul.f32 %v1245, %v1248
          %v1279 = vmul.f32 %v1246, %v1248
          %v1280 = vmul.f32 %v1247, %v1248
          %v1281 = vadd.f32 %v1183, %v1249
          %v1282 = vadd.f32 %v1184, %v1250
          %v1283 = vadd.f32 %v1185, %v1251
          %v1284 = vadd.f32 %v1186, %v1252
          %v1285 = vadd.f32 %v1187, %v1253
          %v1286 = vadd.f32 %v1188, %v1254
          %v1287 = vadd.f32 %v1189, %v1255
          %v1288 = vadd.f32 %v1190, %v1256
          %v1289 = vadd.f32 %v1191, %v1257
          %v1290 = vadd.f32 %v1192, %v1258
          %v1291 = vadd.f32 %v1193, %v1259
          %v1292 = vadd.f32 %v1194, %v1260
          %v1293 = vadd.f32 %v1195, %v1261
          %v1294 = vadd.f32 %v1196, %v1262
          %v1295 = vadd.f32 %v1197, %v1263
          %v1296 = vadd.f32 %v1198, %v1264
          %v1297 = vadd.f32 %v1199, %v1265
          %v1298 = vadd.f32 %v1200, %v1266
          %v1299 = vadd.f32 %v1201, %v1267
          %v1300 = vadd.f32 %v1202, %v1268
          %v1301 = vadd.f32 %v1203, %v1269
          %v1302 = vadd.f32 %v1204, %v1270
          %v1303 = vadd.f32 %v1205, %v1271
          %v1304 = vadd.f32 %v1206, %v1272
          %v1305 = vadd.f32 %v1207, %v1273
          %v1306 = vadd.f32 %v1208, %v1274
          %v1307 = vadd.f32 %v1209, %v1275
          %v1308 = vadd.f32 %v1210, %v1276
          %v1309 = vadd.f32 %v1211, %v1277
          %v1310 = vadd.f32 %v1212, %v1278
          %v1311 = vadd.f32 %v1213, %v1279
          %v1312 = vadd.f32 %v1214, %v1280
          %v1313 = vld [vmem:[%s1215 + $0x8] sm:$0xff]
          %v1314 = vld [vmem:[%s1215 + $0x10] sm:$0xff]
          %v1315 = vld [vmem:[%s1215 + $0x28] sm:$0xff]
          %v1316 = vld [vmem:[%s1215 + $0x30] sm:$0xff]
          %v1317 = vld [vmem:[%s1215 + $0x48] sm:$0xff]
          %v1318 = vld [vmem:[%s1215 + $0x50] sm:$0xff]
          %v1319 = vld [vmem:[%s1215 + $0x68] sm:$0xff]
          %v1320 = vld [vmem:[%s1215 + $0x70] sm:$0xff]
          %v1321 = vld [vmem:[%s1215 + $0x88] sm:$0xff]
          %v1322 = vld [vmem:[%s1215 + $0x90] sm:$0xff]
          %v1323 = vld [vmem:[%s1215 + $0xa8] sm:$0xff]
          %v1324 = vld [vmem:[%s1215 + $0xb0] sm:$0xff]
          %v1325 = vld [vmem:[%s1215 + $0xc8] sm:$0xff]
          %v1326 = vld [vmem:[%s1215 + $0xd0] sm:$0xff]
          %v1327 = vld [vmem:[%s1215 + $0xe8] sm:$0xff]
          %v1328 = vld [vmem:[%s1215 + $0xf0] sm:$0xff]
          %v1329 = vld [vmem:[%s1215 + $0x108] sm:$0xff]
          %v1330 = vld [vmem:[%s1215 + $0x110] sm:$0xff]
          %v1331 = vld [vmem:[%s1215 + $0x128] sm:$0xff]
          %v1332 = vld [vmem:[%s1215 + $0x130] sm:$0xff]
          %v1333 = vld [vmem:[%s1215 + $0x148] sm:$0xff]
          %v1334 = vld [vmem:[%s1215 + $0x150] sm:$0xff]
          %v1335 = vld [vmem:[%s1215 + $0x168] sm:$0xff]
          %v1336 = vld [vmem:[%s1215 + $0x170] sm:$0xff]
          %v1337 = vld [vmem:[%s1215 + $0x188] sm:$0xff]
          %v1338 = vld [vmem:[%s1215 + $0x190] sm:$0xff]
          %v1339 = vld [vmem:[%s1215 + $0x1a8] sm:$0xff]
          %v1340 = vld [vmem:[%s1215 + $0x1b0] sm:$0xff]
          %v1341 = vld [vmem:[%s1215 + $0x1c8] sm:$0xff]
          %v1342 = vld [vmem:[%s1215 + $0x1d0] sm:$0xff]
          %v1343 = vld [vmem:[%s1215 + $0x1e8] sm:$0xff]
          %v1344 = vld [vmem:[%s1215 + $0x1f0] sm:$0xff]
          %v1345 = vperm.slane %v954, 1
          %v1346 = vmul.f32 %v1313, %v1345
          %v1347 = vmul.f32 %v1314, %v1345
          %v1348 = vmul.f32 %v1315, %v1345
          %v1349 = vmul.f32 %v1316, %v1345
          %v1350 = vmul.f32 %v1317, %v1345
          %v1351 = vmul.f32 %v1318, %v1345
          %v1352 = vmul.f32 %v1319, %v1345
          %v1353 = vmul.f32 %v1320, %v1345
          %v1354 = vmul.f32 %v1321, %v1345
          %v1355 = vmul.f32 %v1322, %v1345
          %v1356 = vmul.f32 %v1323, %v1345
          %v1357 = vmul.f32 %v1324, %v1345
          %v1358 = vmul.f32 %v1325, %v1345
          %v1359 = vmul.f32 %v1326, %v1345
          %v1360 = vmul.f32 %v1327, %v1345
          %v1361 = vmul.f32 %v1328, %v1345
          %v1362 = vmul.f32 %v1329, %v1345
          %v1363 = vmul.f32 %v1330, %v1345
          %v1364 = vmul.f32 %v1331, %v1345
          %v1365 = vmul.f32 %v1332, %v1345
          %v1366 = vmul.f32 %v1333, %v1345
          %v1367 = vmul.f32 %v1334, %v1345
          %v1368 = vmul.f32 %v1335, %v1345
          %v1369 = vmul.f32 %v1336, %v1345
          %v1370 = vmul.f32 %v1337, %v1345
          %v1371 = vmul.f32 %v1338, %v1345
          %v1372 = vmul.f32 %v1339, %v1345
          %v1373 = vmul.f32 %v1340, %v1345
          %v1374 = vmul.f32 %v1341, %v1345
          %v1375 = vmul.f32 %v1342, %v1345
          %v1376 = vmul.f32 %v1343, %v1345
          %v1377 = vmul.f32 %v1344, %v1345
          %v1378 = vadd.f32 %v1281, %v1346
          %v1379 = vadd.f32 %v1282, %v1347
          %v1380 = vadd.f32 %v1283, %v1348
          %v1381 = vadd.f32 %v1284, %v1349
          %v1382 = vadd.f32 %v1285, %v1350
          %v1383 = vadd.f32 %v1286, %v1351
          %v1384 = vadd.f32 %v1287, %v1352
          %v1385 = vadd.f32 %v1288, %v1353
          %v1386 = vadd.f32 %v1289, %v1354
          %v1387 = vadd.f32 %v1290, %v1355
          %v1388 = vadd.f32 %v1291, %v1356
          %v1389 = vadd.f32 %v1292, %v1357
          %v1390 = vadd.f32 %v1293, %v1358
          %v1391 = vadd.f32 %v1294, %v1359
          %v1392 = vadd.f32 %v1295, %v1360
          %v1393 = vadd.f32 %v1296, %v1361
          %v1394 = vadd.f32 %v1297, %v1362
          %v1395 = vadd.f32 %v1298, %v1363
          %v1396 = vadd.f32 %v1299, %v1364
          %v1397 = vadd.f32 %v1300, %v1365
          %v1398 = vadd.f32 %v1301, %v1366
          %v1399 = vadd.f32 %v1302, %v1367
          %v1400 = vadd.f32 %v1303, %v1368
          %v1401 = vadd.f32 %v1304, %v1369
          %v1402 = vadd.f32 %v1305, %v1370
          %v1403 = vadd.f32 %v1306, %v1371
          %v1404 = vadd.f32 %v1307, %v1372
          %v1405 = vadd.f32 %v1308, %v1373
          %v1406 = vadd.f32 %v1309, %v1374
          %v1407 = vadd.f32 %v1310, %v1375
          %v1408 = vadd.f32 %v1311, %v1376
          %v1409 = vadd.f32 %v1312, %v1377
          %v1410 = vld [vmem:[%s1215 + $0x9] sm:$0xff]
          %v1411 = vld [vmem:[%s1215 + $0x11] sm:$0xff]
          %v1412 = vld [vmem:[%s1215 + $0x29] sm:$0xff]
          %v1413 = vld [vmem:[%s1215 + $0x31] sm:$0xff]
          %v1414 = vld [vmem:[%s1215 + $0x49] sm:$0xff]
          %v1415 = vld [vmem:[%s1215 + $0x51] sm:$0xff]
          %v1416 = vld [vmem:[%s1215 + $0x69] sm:$0xff]
          %v1417 = vld [vmem:[%s1215 + $0x71] sm:$0xff]
          %v1418 = vld [vmem:[%s1215 + $0x89] sm:$0xff]
          %v1419 = vld [vmem:[%s1215 + $0x91] sm:$0xff]
          %v1420 = vld [vmem:[%s1215 + $0xa9] sm:$0xff]
          %v1421 = vld [vmem:[%s1215 + $0xb1] sm:$0xff]
          %v1422 = vld [vmem:[%s1215 + $0xc9] sm:$0xff]
          %v1423 = vld [vmem:[%s1215 + $0xd1] sm:$0xff]
          %v1424 = vld [vmem:[%s1215 + $0xe9] sm:$0xff]
          %v1425 = vld [vmem:[%s1215 + $0xf1] sm:$0xff]
          %v1426 = vld [vmem:[%s1215 + $0x109] sm:$0xff]
          %v1427 = vld [vmem:[%s1215 + $0x111] sm:$0xff]
          %v1428 = vld [vmem:[%s1215 + $0x129] sm:$0xff]
          %v1429 = vld [vmem:[%s1215 + $0x131] sm:$0xff]
          %v1430 = vld [vmem:[%s1215 + $0x149] sm:$0xff]
          %v1431 = vld [vmem:[%s1215 + $0x151] sm:$0xff]
          %v1432 = vld [vmem:[%s1215 + $0x169] sm:$0xff]
          %v1433 = vld [vmem:[%s1215 + $0x171] sm:$0xff]
          %v1434 = vld [vmem:[%s1215 + $0x189] sm:$0xff]
          %v1435 = vld [vmem:[%s1215 + $0x191] sm:$0xff]
          %v1436 = vld [vmem:[%s1215 + $0x1a9] sm:$0xff]
          %v1437 = vld [vmem:[%s1215 + $0x1b1] sm:$0xff]
          %v1438 = vld [vmem:[%s1215 + $0x1c9] sm:$0xff]
          %v1439 = vld [vmem:[%s1215 + $0x1d1] sm:$0xff]
          %v1440 = vld [vmem:[%s1215 + $0x1e9] sm:$0xff]
          %v1441 = vld [vmem:[%s1215 + $0x1f1] sm:$0xff]
          %v1442 = vperm.slane %v954, 2
          %v1443 = vmul.f32 %v1410, %v1442
          %v1444 = vmul.f32 %v1411, %v1442
          %v1445 = vmul.f32 %v1412, %v1442
          %v1446 = vmul.f32 %v1413, %v1442
          %v1447 = vmul.f32 %v1414, %v1442
          %v1448 = vmul.f32 %v1415, %v1442
          %v1449 = vmul.f32 %v1416, %v1442
          %v1450 = vmul.f32 %v1417, %v1442
          %v1451 = vmul.f32 %v1418, %v1442
          %v1452 = vmul.f32 %v1419, %v1442
          %v1453 = vmul.f32 %v1420, %v1442
          %v1454 = vmul.f32 %v1421, %v1442
          %v1455 = vmul.f32 %v1422, %v1442
          %v1456 = vmul.f32 %v1423, %v1442
          %v1457 = vmul.f32 %v1424, %v1442
          %v1458 = vmul.f32 %v1425, %v1442
          %v1459 = vmul.f32 %v1426, %v1442
          %v1460 = vmul.f32 %v1427, %v1442
          %v1461 = vmul.f32 %v1428, %v1442
          %v1462 = vmul.f32 %v1429, %v1442
          %v1463 = vmul.f32 %v1430, %v1442
          %v1464 = vmul.f32 %v1431, %v1442
          %v1465 = vmul.f32 %v1432, %v1442
          %v1466 = vmul.f32 %v1433, %v1442
          %v1467 = vmul.f32 %v1434, %v1442
          %v1468 = vmul.f32 %v1435, %v1442
          %v1469 = vmul.f32 %v1436, %v1442
          %v1470 = vmul.f32 %v1437, %v1442
          %v1471 = vmul.f32 %v1438, %v1442
          %v1472 = vmul.f32 %v1439, %v1442
          %v1473 = vmul.f32 %v1440, %v1442
          %v1474 = vmul.f32 %v1441, %v1442
          %v1475 = vadd.f32 %v1378, %v1443
          %v1476 = vadd.f32 %v1379, %v1444
          %v1477 = vadd.f32 %v1380, %v1445
          %v1478 = vadd.f32 %v1381, %v1446
          %v1479 = vadd.f32 %v1382, %v1447
          %v1480 = vadd.f32 %v1383, %v1448
          %v1481 = vadd.f32 %v1384, %v1449
          %v1482 = vadd.f32 %v1385, %v1450
          %v1483 = vadd.f32 %v1386, %v1451
          %v1484 = vadd.f32 %v1387, %v1452
          %v1485 = vadd.f32 %v1388, %v1453
          %v1486 = vadd.f32 %v1389, %v1454
          %v1487 = vadd.f32 %v1390, %v1455
          %v1488 = vadd.f32 %v1391, %v1456
          %v1489 = vadd.f32 %v1392, %v1457
          %v1490 = vadd.f32 %v1393, %v1458
          %v1491 = vadd.f32 %v1394, %v1459
          %v1492 = vadd.f32 %v1395, %v1460
          %v1493 = vadd.f32 %v1396, %v1461
          %v1494 = vadd.f32 %v1397, %v1462
          %v1495 = vadd.f32 %v1398, %v1463
          %v1496 = vadd.f32 %v1399, %v1464
          %v1497 = vadd.f32 %v1400, %v1465
          %v1498 = vadd.f32 %v1401, %v1466
          %v1499 = vadd.f32 %v1402, %v1467
          %v1500 = vadd.f32 %v1403, %v1468
          %v1501 = vadd.f32 %v1404, %v1469
          %v1502 = vadd.f32 %v1405, %v1470
          %v1503 = vadd.f32 %v1406, %v1471
          %v1504 = vadd.f32 %v1407, %v1472
          %v1505 = vadd.f32 %v1408, %v1473
          %v1506 = vadd.f32 %v1409, %v1474
          %s1507 = scalar_lea.vmem [#allocation2], 64
          %v1508 = vld [vmem:[%s1507 + $0x7] sm:$0xff]
          %v1509 = vld [vmem:[%s1507 + $0xf] sm:$0xff]
          %v1510 = vld [vmem:[%s1507 + $0x27] sm:$0xff]
          %v1511 = vld [vmem:[%s1507 + $0x2f] sm:$0xff]
          %v1512 = vld [vmem:[%s1507 + $0x47] sm:$0xff]
          %v1513 = vld [vmem:[%s1507 + $0x4f] sm:$0xff]
          %v1514 = vld [vmem:[%s1507 + $0x67] sm:$0xff]
          %v1515 = vld [vmem:[%s1507 + $0x6f] sm:$0xff]
          %v1516 = vld [vmem:[%s1507 + $0x87] sm:$0xff]
          %v1517 = vld [vmem:[%s1507 + $0x8f] sm:$0xff]
          %v1518 = vld [vmem:[%s1507 + $0xa7] sm:$0xff]
          %v1519 = vld [vmem:[%s1507 + $0xaf] sm:$0xff]
          %v1520 = vld [vmem:[%s1507 + $0xc7] sm:$0xff]
          %v1521 = vld [vmem:[%s1507 + $0xcf] sm:$0xff]
          %v1522 = vld [vmem:[%s1507 + $0xe7] sm:$0xff]
          %v1523 = vld [vmem:[%s1507 + $0xef] sm:$0xff]
          %v1524 = vld [vmem:[%s1507 + $0x107] sm:$0xff]
          %v1525 = vld [vmem:[%s1507 + $0x10f] sm:$0xff]
          %v1526 = vld [vmem:[%s1507 + $0x127] sm:$0xff]
          %v1527 = vld [vmem:[%s1507 + $0x12f] sm:$0xff]
          %v1528 = vld [vmem:[%s1507 + $0x147] sm:$0xff]
          %v1529 = vld [vmem:[%s1507 + $0x14f] sm:$0xff]
          %v1530 = vld [vmem:[%s1507 + $0x167] sm:$0xff]
          %v1531 = vld [vmem:[%s1507 + $0x16f] sm:$0xff]
          %v1532 = vld [vmem:[%s1507 + $0x187] sm:$0xff]
          %v1533 = vld [vmem:[%s1507 + $0x18f] sm:$0xff]
          %v1534 = vld [vmem:[%s1507 + $0x1a7] sm:$0xff]
          %v1535 = vld [vmem:[%s1507 + $0x1af] sm:$0xff]
          %v1536 = vld [vmem:[%s1507 + $0x1c7] sm:$0xff]
          %v1537 = vld [vmem:[%s1507 + $0x1cf] sm:$0xff]
          %v1538 = vld [vmem:[%s1507 + $0x1e7] sm:$0xff]
          %v1539 = vld [vmem:[%s1507 + $0x1ef] sm:$0xff]
          %v1540 = vperm.slane %v955, 0
          %v1541 = vmul.f32 %v1508, %v1540
          %v1542 = vmul.f32 %v1509, %v1540
          %v1543 = vmul.f32 %v1510, %v1540
          %v1544 = vmul.f32 %v1511, %v1540
          %v1545 = vmul.f32 %v1512, %v1540
          %v1546 = vmul.f32 %v1513, %v1540
          %v1547 = vmul.f32 %v1514, %v1540
          %v1548 = vmul.f32 %v1515, %v1540
          %v1549 = vmul.f32 %v1516, %v1540
          %v1550 = vmul.f32 %v1517, %v1540
          %v1551 = vmul.f32 %v1518, %v1540
          %v1552 = vmul.f32 %v1519, %v1540
          %v1553 = vmul.f32 %v1520, %v1540
          %v1554 = vmul.f32 %v1521, %v1540
          %v1555 = vmul.f32 %v1522, %v1540
          %v1556 = vmul.f32 %v1523, %v1540
          %v1557 = vmul.f32 %v1524, %v1540
          %v1558 = vmul.f32 %v1525, %v1540
          %v1559 = vmul.f32 %v1526, %v1540
          %v1560 = vmul.f32 %v1527, %v1540
          %v1561 = vmul.f32 %v1528, %v1540
          %v1562 = vmul.f32 %v1529, %v1540
          %v1563 = vmul.f32 %v1530, %v1540
          %v1564 = vmul.f32 %v1531, %v1540
          %v1565 = vmul.f32 %v1532, %v1540
          %v1566 = vmul.f32 %v1533, %v1540
          %v1567 = vmul.f32 %v1534, %v1540
          %v1568 = vmul.f32 %v1535, %v1540
          %v1569 = vmul.f32 %v1536, %v1540
          %v1570 = vmul.f32 %v1537, %v1540
          %v1571 = vmul.f32 %v1538, %v1540
          %v1572 = vmul.f32 %v1539, %v1540
          %v1573 = vadd.f32 %v1475, %v1541
          %v1574 = vadd.f32 %v1476, %v1542
          %v1575 = vadd.f32 %v1477, %v1543
          %v1576 = vadd.f32 %v1478, %v1544
          %v1577 = vadd.f32 %v1479, %v1545
          %v1578 = vadd.f32 %v1480, %v1546
          %v1579 = vadd.f32 %v1481, %v1547
          %v1580 = vadd.f32 %v1482, %v1548
          %v1581 = vadd.f32 %v1483, %v1549
          %v1582 = vadd.f32 %v1484, %v1550
          %v1583 = vadd.f32 %v1485, %v1551
          %v1584 = vadd.f32 %v1486, %v1552
          %v1585 = vadd.f32 %v1487, %v1553
          %v1586 = vadd.f32 %v1488, %v1554
          %v1587 = vadd.f32 %v1489, %v1555
          %v1588 = vadd.f32 %v1490, %v1556
          %v1589 = vadd.f32 %v1491, %v1557
          %v1590 = vadd.f32 %v1492, %v1558
          %v1591 = vadd.f32 %v1493, %v1559
          %v1592 = vadd.f32 %v1494, %v1560
          %v1593 = vadd.f32 %v1495, %v1561
          %v1594 = vadd.f32 %v1496, %v1562
          %v1595 = vadd.f32 %v1497, %v1563
          %v1596 = vadd.f32 %v1498, %v1564
          %v1597 = vadd.f32 %v1499, %v1565
          %v1598 = vadd.f32 %v1500, %v1566
          %v1599 = vadd.f32 %v1501, %v1567
          %v1600 = vadd.f32 %v1502, %v1568
          %v1601 = vadd.f32 %v1503, %v1569
          %v1602 = vadd.f32 %v1504, %v1570
          %v1603 = vadd.f32 %v1505, %v1571
          %v1604 = vadd.f32 %v1506, %v1572
          %v1605 = vld [vmem:[%s1507 + $0x8] sm:$0xff]
          %v1606 = vld [vmem:[%s1507 + $0x10] sm:$0xff]
          %v1607 = vld [vmem:[%s1507 + $0x28] sm:$0xff]
          %v1608 = vld [vmem:[%s1507 + $0x30] sm:$0xff]
          %v1609 = vld [vmem:[%s1507 + $0x48] sm:$0xff]
          %v1610 = vld [vmem:[%s1507 + $0x50] sm:$0xff]
          %v1611 = vld [vmem:[%s1507 + $0x68] sm:$0xff]
          %v1612 = vld [vmem:[%s1507 + $0x70] sm:$0xff]
          %v1613 = vld [vmem:[%s1507 + $0x88] sm:$0xff]
          %v1614 = vld [vmem:[%s1507 + $0x90] sm:$0xff]
          %v1615 = vld [vmem:[%s1507 + $0xa8] sm:$0xff]
          %v1616 = vld [vmem:[%s1507 + $0xb0] sm:$0xff]
          %v1617 = vld [vmem:[%s1507 + $0xc8] sm:$0xff]
          %v1618 = vld [vmem:[%s1507 + $0xd0] sm:$0xff]
          %v1619 = vld [vmem:[%s1507 + $0xe8] sm:$0xff]
          %v1620 = vld [vmem:[%s1507 + $0xf0] sm:$0xff]
          %v1621 = vld [vmem:[%s1507 + $0x108] sm:$0xff]
          %v1622 = vld [vmem:[%s1507 + $0x110] sm:$0xff]
          %v1623 = vld [vmem:[%s1507 + $0x128] sm:$0xff]
          %v1624 = vld [vmem:[%s1507 + $0x130] sm:$0xff]
          %v1625 = vld [vmem:[%s1507 + $0x148] sm:$0xff]
          %v1626 = vld [vmem:[%s1507 + $0x150] sm:$0xff]
          %v1627 = vld [vmem:[%s1507 + $0x168] sm:$0xff]
          %v1628 = vld [vmem:[%s1507 + $0x170] sm:$0xff]
          %v1629 = vld [vmem:[%s1507 + $0x188] sm:$0xff]
          %v1630 = vld [vmem:[%s1507 + $0x190] sm:$0xff]
          %v1631 = vld [vmem:[%s1507 + $0x1a8] sm:$0xff]
          %v1632 = vld [vmem:[%s1507 + $0x1b0] sm:$0xff]
          %v1633 = vld [vmem:[%s1507 + $0x1c8] sm:$0xff]
          %v1634 = vld [vmem:[%s1507 + $0x1d0] sm:$0xff]
          %v1635 = vld [vmem:[%s1507 + $0x1e8] sm:$0xff]
          %v1636 = vld [vmem:[%s1507 + $0x1f0] sm:$0xff]
          %v1637 = vperm.slane %v955, 1
          %v1638 = vmul.f32 %v1605, %v1637
          %v1639 = vmul.f32 %v1606, %v1637
          %v1640 = vmul.f32 %v1607, %v1637
          %v1641 = vmul.f32 %v1608, %v1637
          %v1642 = vmul.f32 %v1609, %v1637
          %v1643 = vmul.f32 %v1610, %v1637
          %v1644 = vmul.f32 %v1611, %v1637
          %v1645 = vmul.f32 %v1612, %v1637
          %v1646 = vmul.f32 %v1613, %v1637
          %v1647 = vmul.f32 %v1614, %v1637
          %v1648 = vmul.f32 %v1615, %v1637
          %v1649 = vmul.f32 %v1616, %v1637
          %v1650 = vmul.f32 %v1617, %v1637
          %v1651 = vmul.f32 %v1618, %v1637
          %v1652 = vmul.f32 %v1619, %v1637
          %v1653 = vmul.f32 %v1620, %v1637
          %v1654 = vmul.f32 %v1621, %v1637
          %v1655 = vmul.f32 %v1622, %v1637
          %v1656 = vmul.f32 %v1623, %v1637
          %v1657 = vmul.f32 %v1624, %v1637
          %v1658 = vmul.f32 %v1625, %v1637
          %v1659 = vmul.f32 %v1626, %v1637
          %v1660 = vmul.f32 %v1627, %v1637
          %v1661 = vmul.f32 %v1628, %v1637
          %v1662 = vmul.f32 %v1629, %v1637
          %v1663 = vmul.f32 %v1630, %v1637
          %v1664 = vmul.f32 %v1631, %v1637
          %v1665 = vmul.f32 %v1632, %v1637
          %v1666 = vmul.f32 %v1633, %v1637
          %v1667 = vmul.f32 %v1634, %v1637
          %v1668 = vmul.f32 %v1635, %v1637
          %v1669 = vmul.f32 %v1636, %v1637
          %v1670 = vadd.f32 %v1573, %v1638
          %v1671 = vadd.f32 %v1574, %v1639
          %v1672 = vadd.f32 %v1575, %v1640
          %v1673 = vadd.f32 %v1576, %v1641
          %v1674 = vadd.f32 %v1577, %v1642
          %v1675 = vadd.f32 %v1578, %v1643
          %v1676 = vadd.f32 %v1579, %v1644
          %v1677 = vadd.f32 %v1580, %v1645
          %v1678 = vadd.f32 %v1581, %v1646
          %v1679 = vadd.f32 %v1582, %v1647
          %v1680 = vadd.f32 %v1583, %v1648
          %v1681 = vadd.f32 %v1584, %v1649
          %v1682 = vadd.f32 %v1585, %v1650
          %v1683 = vadd.f32 %v1586, %v1651
          %v1684 = vadd.f32 %v1587, %v1652
          %v1685 = vadd.f32 %v1588, %v1653
          %v1686 = vadd.f32 %v1589, %v1654
          %v1687 = vadd.f32 %v1590, %v1655
          %v1688 = vadd.f32 %v1591, %v1656
          %v1689 = vadd.f32 %v1592, %v1657
          %v1690 = vadd.f32 %v1593, %v1658
          %v1691 = vadd.f32 %v1594, %v1659
          %v1692 = vadd.f32 %v1595, %v1660
          %v1693 = vadd.f32 %v1596, %v1661
          %v1694 = vadd.f32 %v1597, %v1662
          %v1695 = vadd.f32 %v1598, %v1663
          %v1696 = vadd.f32 %v1599, %v1664
          %v1697 = vadd.f32 %v1600, %v1665
          %v1698 = vadd.f32 %v1601, %v1666
          %v1699 = vadd.f32 %v1602, %v1667
          %v1700 = vadd.f32 %v1603, %v1668
          %v1701 = vadd.f32 %v1604, %v1669
          %v1702 = vld [vmem:[%s1507 + $0x9] sm:$0xff]
          %v1703 = vld [vmem:[%s1507 + $0x11] sm:$0xff]
          %v1704 = vld [vmem:[%s1507 + $0x29] sm:$0xff]
          %v1705 = vld [vmem:[%s1507 + $0x31] sm:$0xff]
          %v1706 = vld [vmem:[%s1507 + $0x49] sm:$0xff]
          %v1707 = vld [vmem:[%s1507 + $0x51] sm:$0xff]
          %v1708 = vld [vmem:[%s1507 + $0x69] sm:$0xff]
          %v1709 = vld [vmem:[%s1507 + $0x71] sm:$0xff]
          %v1710 = vld [vmem:[%s1507 + $0x89] sm:$0xff]
          %v1711 = vld [vmem:[%s1507 + $0x91] sm:$0xff]
          %v1712 = vld [vmem:[%s1507 + $0xa9] sm:$0xff]
          %v1713 = vld [vmem:[%s1507 + $0xb1] sm:$0xff]
          %v1714 = vld [vmem:[%s1507 + $0xc9] sm:$0xff]
          %v1715 = vld [vmem:[%s1507 + $0xd1] sm:$0xff]
          %v1716 = vld [vmem:[%s1507 + $0xe9] sm:$0xff]
          %v1717 = vld [vmem:[%s1507 + $0xf1] sm:$0xff]
          %v1718 = vld [vmem:[%s1507 + $0x109] sm:$0xff]
          %v1719 = vld [vmem:[%s1507 + $0x111] sm:$0xff]
          %v1720 = vld [vmem:[%s1507 + $0x129] sm:$0xff]
          %v1721 = vld [vmem:[%s1507 + $0x131] sm:$0xff]
          %v1722 = vld [vmem:[%s1507 + $0x149] sm:$0xff]
          %v1723 = vld [vmem:[%s1507 + $0x151] sm:$0xff]
          %v1724 = vld [vmem:[%s1507 + $0x169] sm:$0xff]
          %v1725 = vld [vmem:[%s1507 + $0x171] sm:$0xff]
          %v1726 = vld [vmem:[%s1507 + $0x189] sm:$0xff]
          %v1727 = vld [vmem:[%s1507 + $0x191] sm:$0xff]
          %v1728 = vld [vmem:[%s1507 + $0x1a9] sm:$0xff]
          %v1729 = vld [vmem:[%s1507 + $0x1b1] sm:$0xff]
          %v1730 = vld [vmem:[%s1507 + $0x1c9] sm:$0xff]
          %v1731 = vld [vmem:[%s1507 + $0x1d1] sm:$0xff]
          %v1732 = vld [vmem:[%s1507 + $0x1e9] sm:$0xff]
          %v1733 = vld [vmem:[%s1507 + $0x1f1] sm:$0xff]
          %v1734 = vperm.slane %v955, 2
          %v1735 = vmul.f32 %v1702, %v1734
          %v1736 = vmul.f32 %v1703, %v1734
          %v1737 = vmul.f32 %v1704, %v1734
          %v1738 = vmul.f32 %v1705, %v1734
          %v1739 = vmul.f32 %v1706, %v1734
          %v1740 = vmul.f32 %v1707, %v1734
          %v1741 = vmul.f32 %v1708, %v1734
          %v1742 = vmul.f32 %v1709, %v1734
          %v1743 = vmul.f32 %v1710, %v1734
          %v1744 = vmul.f32 %v1711, %v1734
          %v1745 = vmul.f32 %v1712, %v1734
          %v1746 = vmul.f32 %v1713, %v1734
          %v1747 = vmul.f32 %v1714, %v1734
          %v1748 = vmul.f32 %v1715, %v1734
          %v1749 = vmul.f32 %v1716, %v1734
          %v1750 = vmul.f32 %v1717, %v1734
          %v1751 = vmul.f32 %v1718, %v1734
          %v1752 = vmul.f32 %v1719, %v1734
          %v1753 = vmul.f32 %v1720, %v1734
          %v1754 = vmul.f32 %v1721, %v1734
          %v1755 = vmul.f32 %v1722, %v1734
          %v1756 = vmul.f32 %v1723, %v1734
          %v1757 = vmul.f32 %v1724, %v1734
          %v1758 = vmul.f32 %v1725, %v1734
          %v1759 = vmul.f32 %v1726, %v1734
          %v1760 = vmul.f32 %v1727, %v1734
          %v1761 = vmul.f32 %v1728, %v1734
          %v1762 = vmul.f32 %v1729, %v1734
          %v1763 = vmul.f32 %v1730, %v1734
          %v1764 = vmul.f32 %v1731, %v1734
          %v1765 = vmul.f32 %v1732, %v1734
          %v1766 = vmul.f32 %v1733, %v1734
          %v1767 = vadd.f32 %v1670, %v1735
          %v1768 = vadd.f32 %v1671, %v1736
          %v1769 = vadd.f32 %v1672, %v1737
          %v1770 = vadd.f32 %v1673, %v1738
          %v1771 = vadd.f32 %v1674, %v1739
          %v1772 = vadd.f32 %v1675, %v1740
          %v1773 = vadd.f32 %v1676, %v1741
          %v1774 = vadd.f32 %v1677, %v1742
          %v1775 = vadd.f32 %v1678, %v1743
          %v1776 = vadd.f32 %v1679, %v1744
          %v1777 = vadd.f32 %v1680, %v1745
          %v1778 = vadd.f32 %v1681, %v1746
          %v1779 = vadd.f32 %v1682, %v1747
          %v1780 = vadd.f32 %v1683, %v1748
          %v1781 = vadd.f32 %v1684, %v1749
          %v1782 = vadd.f32 %v1685, %v1750
          %v1783 = vadd.f32 %v1686, %v1751
          %v1784 = vadd.f32 %v1687, %v1752
          %v1785 = vadd.f32 %v1688, %v1753
          %v1786 = vadd.f32 %v1689, %v1754
          %v1787 = vadd.f32 %v1690, %v1755
          %v1788 = vadd.f32 %v1691, %v1756
          %v1789 = vadd.f32 %v1692, %v1757
          %v1790 = vadd.f32 %v1693, %v1758
          %v1791 = vadd.f32 %v1694, %v1759
          %v1792 = vadd.f32 %v1695, %v1760
          %v1793 = vadd.f32 %v1696, %v1761
          %v1794 = vadd.f32 %v1697, %v1762
          %v1795 = vadd.f32 %v1698, %v1763
          %v1796 = vadd.f32 %v1699, %v1764
          %v1797 = vadd.f32 %v1700, %v1765
          %v1798 = vadd.f32 %v1701, %v1766
          %v1800 = vperm.slane %v710, 0
          %v1802 = vadd.f32 %v1767, %v1800
          %v1803 = vadd.f32 %v1768, %v1800
          %v1804 = vadd.f32 %v1769, %v1800
          %v1805 = vadd.f32 %v1770, %v1800
          %v1806 = vadd.f32 %v1771, %v1800
          %v1807 = vadd.f32 %v1772, %v1800
          %v1808 = vadd.f32 %v1773, %v1800
          %v1809 = vadd.f32 %v1774, %v1800
          %v1810 = vadd.f32 %v1775, %v1800
          %v1811 = vadd.f32 %v1776, %v1800
          %v1812 = vadd.f32 %v1777, %v1800
          %v1813 = vadd.f32 %v1778, %v1800
          %v1814 = vadd.f32 %v1779, %v1800
          %v1815 = vadd.f32 %v1780, %v1800
          %v1816 = vadd.f32 %v1781, %v1800
          %v1817 = vadd.f32 %v1782, %v1800
          %v1818 = vadd.f32 %v1783, %v1800
          %v1819 = vadd.f32 %v1784, %v1800
          %v1820 = vadd.f32 %v1785, %v1800
          %v1821 = vadd.f32 %v1786, %v1800
          %v1822 = vadd.f32 %v1787, %v1800
          %v1823 = vadd.f32 %v1788, %v1800
          %v1824 = vadd.f32 %v1789, %v1800
          %v1825 = vadd.f32 %v1790, %v1800
          %v1826 = vadd.f32 %v1791, %v1800
          %v1827 = vadd.f32 %v1792, %v1800
          %v1828 = vadd.f32 %v1793, %v1800
          %v1829 = vadd.f32 %v1794, %v1800
          %v1830 = vadd.f32 %v1795, %v1800
          %v1831 = vadd.f32 %v1796, %v1800
          %v1832 = vadd.f32 %v1797, %v1800
          %v1833 = vadd.f32 %v1798, %v1800
          %v1834 = vmax.f32 %v1802, 0.0
          %v1835 = vmax.f32 %v1803, 0.0
          %v1836 = vmax.f32 %v1804, 0.0
          %v1837 = vmax.f32 %v1805, 0.0
          %v1838 = vmax.f32 %v1806, 0.0
          %v1839 = vmax.f32 %v1807, 0.0
          %v1840 = vmax.f32 %v1808, 0.0
          %v1841 = vmax.f32 %v1809, 0.0
          %v1842 = vmax.f32 %v1810, 0.0
          %v1843 = vmax.f32 %v1811, 0.0
          %v1844 = vmax.f32 %v1812, 0.0
          %v1845 = vmax.f32 %v1813, 0.0
          %v1846 = vmax.f32 %v1814, 0.0
          %v1847 = vmax.f32 %v1815, 0.0
          %v1848 = vmax.f32 %v1816, 0.0
          %v1849 = vmax.f32 %v1817, 0.0
          %v1850 = vmax.f32 %v1818, 0.0
          %v1851 = vmax.f32 %v1819, 0.0
          %v1852 = vmax.f32 %v1820, 0.0
          %v1853 = vmax.f32 %v1821, 0.0
          %v1854 = vmax.f32 %v1822, 0.0
          %v1855 = vmax.f32 %v1823, 0.0
          %v1856 = vmax.f32 %v1824, 0.0
          %v1857 = vmax.f32 %v1825, 0.0
          %v1858 = vmax.f32 %v1826, 0.0
          %v1859 = vmax.f32 %v1827, 0.0
          %v1860 = vmax.f32 %v1828, 0.0
          %v1861 = vmax.f32 %v1829, 0.0
          %v1862 = vmax.f32 %v1830, 0.0
          %v1863 = vmax.f32 %v1831, 0.0
          %v1864 = vmax.f32 %v1832, 0.0
          %v1865 = vmax.f32 %v1833, 0.0
          %s1866 = scalar_lea.vmem [#allocation3], 96
          %1867 = vst [vmem:[%s1866 + $0x8] sm:$0xff] %v1834
          %1868 = vst [vmem:[%s1866 + $0x10] sm:$0xff] %v1835
          %1869 = vst [vmem:[%s1866 + $0x28] sm:$0xff] %v1836
          %1870 = vst [vmem:[%s1866 + $0x30] sm:$0xff] %v1837
          %1871 = vst [vmem:[%s1866 + $0x48] sm:$0xff] %v1838
          %1872 = vst [vmem:[%s1866 + $0x50] sm:$0xff] %v1839
          %1873 = vst [vmem:[%s1866 + $0x68] sm:$0xff] %v1840
          %1874 = vst [vmem:[%s1866 + $0x70] sm:$0xff] %v1841
          %1875 = vst [vmem:[%s1866 + $0x88] sm:$0xff] %v1842
          %1876 = vst [vmem:[%s1866 + $0x90] sm:$0xff] %v1843
          %1877 = vst [vmem:[%s1866 + $0xa8] sm:$0xff] %v1844
          %1878 = vst [vmem:[%s1866 + $0xb0] sm:$0xff] %v1845
          %1879 = vst [vmem:[%s1866 + $0xc8] sm:$0xff] %v1846
          %1880 = vst [vmem:[%s1866 + $0xd0] sm:$0xff] %v1847
          %1881 = vst [vmem:[%s1866 + $0xe8] sm:$0xff] %v1848
          %1882 = vst [vmem:[%s1866 + $0xf0] sm:$0xff] %v1849
          %1883 = vst [vmem:[%s1866 + $0x108] sm:$0xff] %v1850
          %1884 = vst [vmem:[%s1866 + $0x110] sm:$0xff] %v1851
          %1885 = vst [vmem:[%s1866 + $0x128] sm:$0xff] %v1852
          %1886 = vst [vmem:[%s1866 + $0x130] sm:$0xff] %v1853
          %1887 = vst [vmem:[%s1866 + $0x148] sm:$0xff] %v1854
          %1888 = vst [vmem:[%s1866 + $0x150] sm:$0xff] %v1855
          %1889 = vst [vmem:[%s1866 + $0x168] sm:$0xff] %v1856
          %1890 = vst [vmem:[%s1866 + $0x170] sm:$0xff] %v1857
          %1891 = vst [vmem:[%s1866 + $0x188] sm:$0xff] %v1858
          %1892 = vst [vmem:[%s1866 + $0x190] sm:$0xff] %v1859
          %1893 = vst [vmem:[%s1866 + $0x1a8] sm:$0xff] %v1860
          %1894 = vst [vmem:[%s1866 + $0x1b0] sm:$0xff] %v1861
          %1895 = vst [vmem:[%s1866 + $0x1c8] sm:$0xff] %v1862
          %1896 = vst [vmem:[%s1866 + $0x1d0] sm:$0xff] %v1863
          %1897 = vst [vmem:[%s1866 + $0x1e8] sm:$0xff] %v1864
          %1898 = vst [vmem:[%s1866 + $0x1f0] sm:$0xff] %v1865
        $region110: #{fem_forward.1} parent=85 // pred_fallthru
          _
        %p1899 = scmp.eq.s32.totalorder %s28, 2
        // Predicated region
        $region111: #{fem_forward.1} parent=85 // pred_check
          %p1900 = pneg %p1899
        $region112: #{fem_forward.1} parent=85 // pred_check_branch
          %1902 = sbr.rel (%p1900) target = $region114
        $region113: #{fem_forward.1} parent=85 // pred_region
          %v1903 = vld [vmem:[%s525 + $0x4] sm:$0x7]
          %s1904 = scalar_lea.vmem [#allocation2], 32
          %v1905 = vld [vmem:[%s1904 + $0x7] sm:$0xff]
          %v1906 = vld [vmem:[%s1904 + $0xf] sm:$0xff]
          %v1907 = vld [vmem:[%s1904 + $0x27] sm:$0xff]
          %v1908 = vld [vmem:[%s1904 + $0x2f] sm:$0xff]
          %v1909 = vld [vmem:[%s1904 + $0x47] sm:$0xff]
          %v1910 = vld [vmem:[%s1904 + $0x4f] sm:$0xff]
          %v1911 = vld [vmem:[%s1904 + $0x67] sm:$0xff]
          %v1912 = vld [vmem:[%s1904 + $0x6f] sm:$0xff]
          %v1913 = vld [vmem:[%s1904 + $0x87] sm:$0xff]
          %v1914 = vld [vmem:[%s1904 + $0x8f] sm:$0xff]
          %v1915 = vld [vmem:[%s1904 + $0xa7] sm:$0xff]
          %v1916 = vld [vmem:[%s1904 + $0xaf] sm:$0xff]
          %v1917 = vld [vmem:[%s1904 + $0xc7] sm:$0xff]
          %v1918 = vld [vmem:[%s1904 + $0xcf] sm:$0xff]
          %v1919 = vld [vmem:[%s1904 + $0xe7] sm:$0xff]
          %v1920 = vld [vmem:[%s1904 + $0xef] sm:$0xff]
          %v1921 = vld [vmem:[%s1904 + $0x107] sm:$0xff]
          %v1922 = vld [vmem:[%s1904 + $0x10f] sm:$0xff]
          %v1923 = vld [vmem:[%s1904 + $0x127] sm:$0xff]
          %v1924 = vld [vmem:[%s1904 + $0x12f] sm:$0xff]
          %v1925 = vld [vmem:[%s1904 + $0x147] sm:$0xff]
          %v1926 = vld [vmem:[%s1904 + $0x14f] sm:$0xff]
          %v1927 = vld [vmem:[%s1904 + $0x167] sm:$0xff]
          %v1928 = vld [vmem:[%s1904 + $0x16f] sm:$0xff]
          %v1929 = vld [vmem:[%s1904 + $0x187] sm:$0xff]
          %v1930 = vld [vmem:[%s1904 + $0x18f] sm:$0xff]
          %v1931 = vld [vmem:[%s1904 + $0x1a7] sm:$0xff]
          %v1932 = vld [vmem:[%s1904 + $0x1af] sm:$0xff]
          %v1933 = vld [vmem:[%s1904 + $0x1c7] sm:$0xff]
          %v1934 = vld [vmem:[%s1904 + $0x1cf] sm:$0xff]
          %v1935 = vld [vmem:[%s1904 + $0x1e7] sm:$0xff]
          %v1936 = vld [vmem:[%s1904 + $0x1ef] sm:$0xff]
          %v1937 = vperm.slane %v1903, 0
          %v1938 = vmul.f32 %v1905, %v1937
          %v1939 = vmul.f32 %v1906, %v1937
          %v1940 = vmul.f32 %v1907, %v1937
          %v1941 = vmul.f32 %v1908, %v1937
          %v1942 = vmul.f32 %v1909, %v1937
          %v1943 = vmul.f32 %v1910, %v1937
          %v1944 = vmul.f32 %v1911, %v1937
          %v1945 = vmul.f32 %v1912, %v1937
          %v1946 = vmul.f32 %v1913, %v1937
          %v1947 = vmul.f32 %v1914, %v1937
          %v1948 = vmul.f32 %v1915, %v1937
          %v1949 = vmul.f32 %v1916, %v1937
          %v1950 = vmul.f32 %v1917, %v1937
          %v1951 = vmul.f32 %v1918, %v1937
          %v1952 = vmul.f32 %v1919, %v1937
          %v1953 = vmul.f32 %v1920, %v1937
          %v1954 = vmul.f32 %v1921, %v1937
          %v1955 = vmul.f32 %v1922, %v1937
          %v1956 = vmul.f32 %v1923, %v1937
          %v1957 = vmul.f32 %v1924, %v1937
          %v1958 = vmul.f32 %v1925, %v1937
          %v1959 = vmul.f32 %v1926, %v1937
          %v1960 = vmul.f32 %v1927, %v1937
          %v1961 = vmul.f32 %v1928, %v1937
          %v1962 = vmul.f32 %v1929, %v1937
          %v1963 = vmul.f32 %v1930, %v1937
          %v1964 = vmul.f32 %v1931, %v1937
          %v1965 = vmul.f32 %v1932, %v1937
          %v1966 = vmul.f32 %v1933, %v1937
          %v1967 = vmul.f32 %v1934, %v1937
          %v1968 = vmul.f32 %v1935, %v1937
          %v1969 = vmul.f32 %v1936, %v1937
          %v1970 = vld [vmem:[%s1904 + $0x8] sm:$0xff]
          %v1971 = vld [vmem:[%s1904 + $0x10] sm:$0xff]
          %v1972 = vld [vmem:[%s1904 + $0x28] sm:$0xff]
          %v1973 = vld [vmem:[%s1904 + $0x30] sm:$0xff]
          %v1974 = vld [vmem:[%s1904 + $0x48] sm:$0xff]
          %v1975 = vld [vmem:[%s1904 + $0x50] sm:$0xff]
          %v1976 = vld [vmem:[%s1904 + $0x68] sm:$0xff]
          %v1977 = vld [vmem:[%s1904 + $0x70] sm:$0xff]
          %v1978 = vld [vmem:[%s1904 + $0x88] sm:$0xff]
          %v1979 = vld [vmem:[%s1904 + $0x90] sm:$0xff]
          %v1980 = vld [vmem:[%s1904 + $0xa8] sm:$0xff]
          %v1981 = vld [vmem:[%s1904 + $0xb0] sm:$0xff]
          %v1982 = vld [vmem:[%s1904 + $0xc8] sm:$0xff]
          %v1983 = vld [vmem:[%s1904 + $0xd0] sm:$0xff]
          %v1984 = vld [vmem:[%s1904 + $0xe8] sm:$0xff]
          %v1985 = vld [vmem:[%s1904 + $0xf0] sm:$0xff]
          %v1986 = vld [vmem:[%s1904 + $0x108] sm:$0xff]
          %v1987 = vld [vmem:[%s1904 + $0x110] sm:$0xff]
          %v1988 = vld [vmem:[%s1904 + $0x128] sm:$0xff]
          %v1989 = vld [vmem:[%s1904 + $0x130] sm:$0xff]
          %v1990 = vld [vmem:[%s1904 + $0x148] sm:$0xff]
          %v1991 = vld [vmem:[%s1904 + $0x150] sm:$0xff]
          %v1992 = vld [vmem:[%s1904 + $0x168] sm:$0xff]
          %v1993 = vld [vmem:[%s1904 + $0x170] sm:$0xff]
          %v1994 = vld [vmem:[%s1904 + $0x188] sm:$0xff]
          %v1995 = vld [vmem:[%s1904 + $0x190] sm:$0xff]
          %v1996 = vld [vmem:[%s1904 + $0x1a8] sm:$0xff]
          %v1997 = vld [vmem:[%s1904 + $0x1b0] sm:$0xff]
          %v1998 = vld [vmem:[%s1904 + $0x1c8] sm:$0xff]
          %v1999 = vld [vmem:[%s1904 + $0x1d0] sm:$0xff]
          %v2000 = vld [vmem:[%s1904 + $0x1e8] sm:$0xff]
          %v2001 = vld [vmem:[%s1904 + $0x1f0] sm:$0xff]
          %v2002 = vperm.slane %v1903, 1
          %v2003 = vmul.f32 %v1970, %v2002
          %v2004 = vmul.f32 %v1971, %v2002
          %v2005 = vmul.f32 %v1972, %v2002
          %v2006 = vmul.f32 %v1973, %v2002
          %v2007 = vmul.f32 %v1974, %v2002
          %v2008 = vmul.f32 %v1975, %v2002
          %v2009 = vmul.f32 %v1976, %v2002
          %v2010 = vmul.f32 %v1977, %v2002
          %v2011 = vmul.f32 %v1978, %v2002
          %v2012 = vmul.f32 %v1979, %v2002
          %v2013 = vmul.f32 %v1980, %v2002
          %v2014 = vmul.f32 %v1981, %v2002
          %v2015 = vmul.f32 %v1982, %v2002
          %v2016 = vmul.f32 %v1983, %v2002
          %v2017 = vmul.f32 %v1984, %v2002
          %v2018 = vmul.f32 %v1985, %v2002
          %v2019 = vmul.f32 %v1986, %v2002
          %v2020 = vmul.f32 %v1987, %v2002
          %v2021 = vmul.f32 %v1988, %v2002
          %v2022 = vmul.f32 %v1989, %v2002
          %v2023 = vmul.f32 %v1990, %v2002
          %v2024 = vmul.f32 %v1991, %v2002
          %v2025 = vmul.f32 %v1992, %v2002
          %v2026 = vmul.f32 %v1993, %v2002
          %v2027 = vmul.f32 %v1994, %v2002
          %v2028 = vmul.f32 %v1995, %v2002
          %v2029 = vmul.f32 %v1996, %v2002
          %v2030 = vmul.f32 %v1997, %v2002
          %v2031 = vmul.f32 %v1998, %v2002
          %v2032 = vmul.f32 %v1999, %v2002
          %v2033 = vmul.f32 %v2000, %v2002
          %v2034 = vmul.f32 %v2001, %v2002
          %v2035 = vadd.f32 %v1938, %v2003
          %v2036 = vadd.f32 %v1939, %v2004
          %v2037 = vadd.f32 %v1940, %v2005
          %v2038 = vadd.f32 %v1941, %v2006
          %v2039 = vadd.f32 %v1942, %v2007
          %v2040 = vadd.f32 %v1943, %v2008
          %v2041 = vadd.f32 %v1944, %v2009
          %v2042 = vadd.f32 %v1945, %v2010
          %v2043 = vadd.f32 %v1946, %v2011
          %v2044 = vadd.f32 %v1947, %v2012
          %v2045 = vadd.f32 %v1948, %v2013
          %v2046 = vadd.f32 %v1949, %v2014
          %v2047 = vadd.f32 %v1950, %v2015
          %v2048 = vadd.f32 %v1951, %v2016
          %v2049 = vadd.f32 %v1952, %v2017
          %v2050 = vadd.f32 %v1953, %v2018
          %v2051 = vadd.f32 %v1954, %v2019
          %v2052 = vadd.f32 %v1955, %v2020
          %v2053 = vadd.f32 %v1956, %v2021
          %v2054 = vadd.f32 %v1957, %v2022
          %v2055 = vadd.f32 %v1958, %v2023
          %v2056 = vadd.f32 %v1959, %v2024
          %v2057 = vadd.f32 %v1960, %v2025
          %v2058 = vadd.f32 %v1961, %v2026
          %v2059 = vadd.f32 %v1962, %v2027
          %v2060 = vadd.f32 %v1963, %v2028
          %v2061 = vadd.f32 %v1964, %v2029
          %v2062 = vadd.f32 %v1965, %v2030
          %v2063 = vadd.f32 %v1966, %v2031
          %v2064 = vadd.f32 %v1967, %v2032
          %v2065 = vadd.f32 %v1968, %v2033
          %v2066 = vadd.f32 %v1969, %v2034
          %v2067 = vld [vmem:[%s1904 + $0x9] sm:$0xff]
          %v2068 = vld [vmem:[%s1904 + $0x11] sm:$0xff]
          %v2069 = vld [vmem:[%s1904 + $0x29] sm:$0xff]
          %v2070 = vld [vmem:[%s1904 + $0x31] sm:$0xff]
          %v2071 = vld [vmem:[%s1904 + $0x49] sm:$0xff]
          %v2072 = vld [vmem:[%s1904 + $0x51] sm:$0xff]
          %v2073 = vld [vmem:[%s1904 + $0x69] sm:$0xff]
          %v2074 = vld [vmem:[%s1904 + $0x71] sm:$0xff]
          %v2075 = vld [vmem:[%s1904 + $0x89] sm:$0xff]
          %v2076 = vld [vmem:[%s1904 + $0x91] sm:$0xff]
          %v2077 = vld [vmem:[%s1904 + $0xa9] sm:$0xff]
          %v2078 = vld [vmem:[%s1904 + $0xb1] sm:$0xff]
          %v2079 = vld [vmem:[%s1904 + $0xc9] sm:$0xff]
          %v2080 = vld [vmem:[%s1904 + $0xd1] sm:$0xff]
          %v2081 = vld [vmem:[%s1904 + $0xe9] sm:$0xff]
          %v2082 = vld [vmem:[%s1904 + $0xf1] sm:$0xff]
          %v2083 = vld [vmem:[%s1904 + $0x109] sm:$0xff]
          %v2084 = vld [vmem:[%s1904 + $0x111] sm:$0xff]
          %v2085 = vld [vmem:[%s1904 + $0x129] sm:$0xff]
          %v2086 = vld [vmem:[%s1904 + $0x131] sm:$0xff]
          %v2087 = vld [vmem:[%s1904 + $0x149] sm:$0xff]
          %v2088 = vld [vmem:[%s1904 + $0x151] sm:$0xff]
          %v2089 = vld [vmem:[%s1904 + $0x169] sm:$0xff]
          %v2090 = vld [vmem:[%s1904 + $0x171] sm:$0xff]
          %v2091 = vld [vmem:[%s1904 + $0x189] sm:$0xff]
          %v2092 = vld [vmem:[%s1904 + $0x191] sm:$0xff]
          %v2093 = vld [vmem:[%s1904 + $0x1a9] sm:$0xff]
          %v2094 = vld [vmem:[%s1904 + $0x1b1] sm:$0xff]
          %v2095 = vld [vmem:[%s1904 + $0x1c9] sm:$0xff]
          %v2096 = vld [vmem:[%s1904 + $0x1d1] sm:$0xff]
          %v2097 = vld [vmem:[%s1904 + $0x1e9] sm:$0xff]
          %v2098 = vld [vmem:[%s1904 + $0x1f1] sm:$0xff]
          %v2099 = vperm.slane %v1903, 2
          %v2100 = vmul.f32 %v2067, %v2099
          %v2101 = vmul.f32 %v2068, %v2099
          %v2102 = vmul.f32 %v2069, %v2099
          %v2103 = vmul.f32 %v2070, %v2099
          %v2104 = vmul.f32 %v2071, %v2099
          %v2105 = vmul.f32 %v2072, %v2099
          %v2106 = vmul.f32 %v2073, %v2099
          %v2107 = vmul.f32 %v2074, %v2099
          %v2108 = vmul.f32 %v2075, %v2099
          %v2109 = vmul.f32 %v2076, %v2099
          %v2110 = vmul.f32 %v2077, %v2099
          %v2111 = vmul.f32 %v2078, %v2099
          %v2112 = vmul.f32 %v2079, %v2099
          %v2113 = vmul.f32 %v2080, %v2099
          %v2114 = vmul.f32 %v2081, %v2099
          %v2115 = vmul.f32 %v2082, %v2099
          %v2116 = vmul.f32 %v2083, %v2099
          %v2117 = vmul.f32 %v2084, %v2099
          %v2118 = vmul.f32 %v2085, %v2099
          %v2119 = vmul.f32 %v2086, %v2099
          %v2120 = vmul.f32 %v2087, %v2099
          %v2121 = vmul.f32 %v2088, %v2099
          %v2122 = vmul.f32 %v2089, %v2099
          %v2123 = vmul.f32 %v2090, %v2099
          %v2124 = vmul.f32 %v2091, %v2099
          %v2125 = vmul.f32 %v2092, %v2099
          %v2126 = vmul.f32 %v2093, %v2099
          %v2127 = vmul.f32 %v2094, %v2099
          %v2128 = vmul.f32 %v2095, %v2099
          %v2129 = vmul.f32 %v2096, %v2099
          %v2130 = vmul.f32 %v2097, %v2099
          %v2131 = vmul.f32 %v2098, %v2099
          %v2132 = vadd.f32 %v2035, %v2100
          %v2133 = vadd.f32 %v2036, %v2101
          %v2134 = vadd.f32 %v2037, %v2102
          %v2135 = vadd.f32 %v2038, %v2103
          %v2136 = vadd.f32 %v2039, %v2104
          %v2137 = vadd.f32 %v2040, %v2105
          %v2138 = vadd.f32 %v2041, %v2106
          %v2139 = vadd.f32 %v2042, %v2107
          %v2140 = vadd.f32 %v2043, %v2108
          %v2141 = vadd.f32 %v2044, %v2109
          %v2142 = vadd.f32 %v2045, %v2110
          %v2143 = vadd.f32 %v2046, %v2111
          %v2144 = vadd.f32 %v2047, %v2112
          %v2145 = vadd.f32 %v2048, %v2113
          %v2146 = vadd.f32 %v2049, %v2114
          %v2147 = vadd.f32 %v2050, %v2115
          %v2148 = vadd.f32 %v2051, %v2116
          %v2149 = vadd.f32 %v2052, %v2117
          %v2150 = vadd.f32 %v2053, %v2118
          %v2151 = vadd.f32 %v2054, %v2119
          %v2152 = vadd.f32 %v2055, %v2120
          %v2153 = vadd.f32 %v2056, %v2121
          %v2154 = vadd.f32 %v2057, %v2122
          %v2155 = vadd.f32 %v2058, %v2123
          %v2156 = vadd.f32 %v2059, %v2124
          %v2157 = vadd.f32 %v2060, %v2125
          %v2158 = vadd.f32 %v2061, %v2126
          %v2159 = vadd.f32 %v2062, %v2127
          %v2160 = vadd.f32 %v2063, %v2128
          %v2161 = vadd.f32 %v2064, %v2129
          %v2162 = vadd.f32 %v2065, %v2130
          %v2163 = vadd.f32 %v2066, %v2131
          %v2165 = vperm.slane %v710, 0
          %v2167 = vadd.f32 %v2132, %v2165
          %v2168 = vadd.f32 %v2133, %v2165
          %v2169 = vadd.f32 %v2134, %v2165
          %v2170 = vadd.f32 %v2135, %v2165
          %v2171 = vadd.f32 %v2136, %v2165
          %v2172 = vadd.f32 %v2137, %v2165
          %v2173 = vadd.f32 %v2138, %v2165
          %v2174 = vadd.f32 %v2139, %v2165
          %v2175 = vadd.f32 %v2140, %v2165
          %v2176 = vadd.f32 %v2141, %v2165
          %v2177 = vadd.f32 %v2142, %v2165
          %v2178 = vadd.f32 %v2143, %v2165
          %v2179 = vadd.f32 %v2144, %v2165
          %v2180 = vadd.f32 %v2145, %v2165
          %v2181 = vadd.f32 %v2146, %v2165
          %v2182 = vadd.f32 %v2147, %v2165
          %v2183 = vadd.f32 %v2148, %v2165
          %v2184 = vadd.f32 %v2149, %v2165
          %v2185 = vadd.f32 %v2150, %v2165
          %v2186 = vadd.f32 %v2151, %v2165
          %v2187 = vadd.f32 %v2152, %v2165
          %v2188 = vadd.f32 %v2153, %v2165
          %v2189 = vadd.f32 %v2154, %v2165
          %v2190 = vadd.f32 %v2155, %v2165
          %v2191 = vadd.f32 %v2156, %v2165
          %v2192 = vadd.f32 %v2157, %v2165
          %v2193 = vadd.f32 %v2158, %v2165
          %v2194 = vadd.f32 %v2159, %v2165
          %v2195 = vadd.f32 %v2160, %v2165
          %v2196 = vadd.f32 %v2161, %v2165
          %v2197 = vadd.f32 %v2162, %v2165
          %v2198 = vadd.f32 %v2163, %v2165
          %v2199 = vmax.f32 %v2167, 0.0
          %v2200 = vmax.f32 %v2168, 0.0
          %v2201 = vmax.f32 %v2169, 0.0
          %v2202 = vmax.f32 %v2170, 0.0
          %v2203 = vmax.f32 %v2171, 0.0
          %v2204 = vmax.f32 %v2172, 0.0
          %v2205 = vmax.f32 %v2173, 0.0
          %v2206 = vmax.f32 %v2174, 0.0
          %v2207 = vmax.f32 %v2175, 0.0
          %v2208 = vmax.f32 %v2176, 0.0
          %v2209 = vmax.f32 %v2177, 0.0
          %v2210 = vmax.f32 %v2178, 0.0
          %v2211 = vmax.f32 %v2179, 0.0
          %v2212 = vmax.f32 %v2180, 0.0
          %v2213 = vmax.f32 %v2181, 0.0
          %v2214 = vmax.f32 %v2182, 0.0
          %v2215 = vmax.f32 %v2183, 0.0
          %v2216 = vmax.f32 %v2184, 0.0
          %v2217 = vmax.f32 %v2185, 0.0
          %v2218 = vmax.f32 %v2186, 0.0
          %v2219 = vmax.f32 %v2187, 0.0
          %v2220 = vmax.f32 %v2188, 0.0
          %v2221 = vmax.f32 %v2189, 0.0
          %v2222 = vmax.f32 %v2190, 0.0
          %v2223 = vmax.f32 %v2191, 0.0
          %v2224 = vmax.f32 %v2192, 0.0
          %v2225 = vmax.f32 %v2193, 0.0
          %v2226 = vmax.f32 %v2194, 0.0
          %v2227 = vmax.f32 %v2195, 0.0
          %v2228 = vmax.f32 %v2196, 0.0
          %v2229 = vmax.f32 %v2197, 0.0
          %v2230 = vmax.f32 %v2198, 0.0
          %s2231 = scalar_lea.vmem [#allocation3], 96
          %2232 = vst [vmem:[%s2231 + $0x8] sm:$0xff] %v2199
          %2233 = vst [vmem:[%s2231 + $0x10] sm:$0xff] %v2200
          %2234 = vst [vmem:[%s2231 + $0x28] sm:$0xff] %v2201
          %2235 = vst [vmem:[%s2231 + $0x30] sm:$0xff] %v2202
          %2236 = vst [vmem:[%s2231 + $0x48] sm:$0xff] %v2203
          %2237 = vst [vmem:[%s2231 + $0x50] sm:$0xff] %v2204
          %2238 = vst [vmem:[%s2231 + $0x68] sm:$0xff] %v2205
          %2239 = vst [vmem:[%s2231 + $0x70] sm:$0xff] %v2206
          %2240 = vst [vmem:[%s2231 + $0x88] sm:$0xff] %v2207
          %2241 = vst [vmem:[%s2231 + $0x90] sm:$0xff] %v2208
          %2242 = vst [vmem:[%s2231 + $0xa8] sm:$0xff] %v2209
          %2243 = vst [vmem:[%s2231 + $0xb0] sm:$0xff] %v2210
          %2244 = vst [vmem:[%s2231 + $0xc8] sm:$0xff] %v2211
          %2245 = vst [vmem:[%s2231 + $0xd0] sm:$0xff] %v2212
          %2246 = vst [vmem:[%s2231 + $0xe8] sm:$0xff] %v2213
          %2247 = vst [vmem:[%s2231 + $0xf0] sm:$0xff] %v2214
          %2248 = vst [vmem:[%s2231 + $0x108] sm:$0xff] %v2215
          %2249 = vst [vmem:[%s2231 + $0x110] sm:$0xff] %v2216
          %2250 = vst [vmem:[%s2231 + $0x128] sm:$0xff] %v2217
          %2251 = vst [vmem:[%s2231 + $0x130] sm:$0xff] %v2218
          %2252 = vst [vmem:[%s2231 + $0x148] sm:$0xff] %v2219
          %2253 = vst [vmem:[%s2231 + $0x150] sm:$0xff] %v2220
          %2254 = vst [vmem:[%s2231 + $0x168] sm:$0xff] %v2221
          %2255 = vst [vmem:[%s2231 + $0x170] sm:$0xff] %v2222
          %2256 = vst [vmem:[%s2231 + $0x188] sm:$0xff] %v2223
          %2257 = vst [vmem:[%s2231 + $0x190] sm:$0xff] %v2224
          %2258 = vst [vmem:[%s2231 + $0x1a8] sm:$0xff] %v2225
          %2259 = vst [vmem:[%s2231 + $0x1b0] sm:$0xff] %v2226
          %2260 = vst [vmem:[%s2231 + $0x1c8] sm:$0xff] %v2227
          %2261 = vst [vmem:[%s2231 + $0x1d0] sm:$0xff] %v2228
          %2262 = vst [vmem:[%s2231 + $0x1e8] sm:$0xff] %v2229
          %2263 = vst [vmem:[%s2231 + $0x1f0] sm:$0xff] %v2230
        $region114: #{fem_forward.1} parent=85 // pred_fallthru
          _
        %p2264 = scmp.eq.s32.totalorder %s28, 3
        // Predicated region
        $region115: #{fem_forward.1} parent=85 // pred_check
          %p2265 = pneg %p2264
        $region116: #{fem_forward.1} parent=85 // pred_check_branch
          %2267 = sbr.rel (%p2265) target = $region118
        $region117: #{fem_forward.1} parent=85 // pred_region
          %v2268 = vld [vmem:[%s525] sm:$0x7]
          %v2269 = vld [vmem:[%s525 + $0x4] sm:$0x7]
          %v2270 = vld [vmem:[%s525 + $0x8] sm:$0x7]
          %v2271 = vld [vmem:[#allocation2 + $0x8] sm:$0xff]
          %v2272 = vld [vmem:[#allocation2 + $0x10] sm:$0xff]
          %v2273 = vld [vmem:[#allocation2 + $0x28] sm:$0xff]
          %v2274 = vld [vmem:[#allocation2 + $0x30] sm:$0xff]
          %v2275 = vld [vmem:[#allocation2 + $0x48] sm:$0xff]
          %v2276 = vld [vmem:[#allocation2 + $0x50] sm:$0xff]
          %v2277 = vld [vmem:[#allocation2 + $0x68] sm:$0xff]
          %v2278 = vld [vmem:[#allocation2 + $0x70] sm:$0xff]
          %v2279 = vld [vmem:[#allocation2 + $0x88] sm:$0xff]
          %v2280 = vld [vmem:[#allocation2 + $0x90] sm:$0xff]
          %v2281 = vld [vmem:[#allocation2 + $0xa8] sm:$0xff]
          %v2282 = vld [vmem:[#allocation2 + $0xb0] sm:$0xff]
          %v2283 = vld [vmem:[#allocation2 + $0xc8] sm:$0xff]
          %v2284 = vld [vmem:[#allocation2 + $0xd0] sm:$0xff]
          %v2285 = vld [vmem:[#allocation2 + $0xe8] sm:$0xff]
          %v2286 = vld [vmem:[#allocation2 + $0xf0] sm:$0xff]
          %v2287 = vld [vmem:[#allocation2 + $0x108] sm:$0xff]
          %v2288 = vld [vmem:[#allocation2 + $0x110] sm:$0xff]
          %v2289 = vld [vmem:[#allocation2 + $0x128] sm:$0xff]
          %v2290 = vld [vmem:[#allocation2 + $0x130] sm:$0xff]
          %v2291 = vld [vmem:[#allocation2 + $0x148] sm:$0xff]
          %v2292 = vld [vmem:[#allocation2 + $0x150] sm:$0xff]
          %v2293 = vld [vmem:[#allocation2 + $0x168] sm:$0xff]
          %v2294 = vld [vmem:[#allocation2 + $0x170] sm:$0xff]
          %v2295 = vld [vmem:[#allocation2 + $0x188] sm:$0xff]
          %v2296 = vld [vmem:[#allocation2 + $0x190] sm:$0xff]
          %v2297 = vld [vmem:[#allocation2 + $0x1a8] sm:$0xff]
          %v2298 = vld [vmem:[#allocation2 + $0x1b0] sm:$0xff]
          %v2299 = vld [vmem:[#allocation2 + $0x1c8] sm:$0xff]
          %v2300 = vld [vmem:[#allocation2 + $0x1d0] sm:$0xff]
          %v2301 = vld [vmem:[#allocation2 + $0x1e8] sm:$0xff]
          %v2302 = vld [vmem:[#allocation2 + $0x1f0] sm:$0xff]
          %v2303 = vperm.slane %v2268, 1
          %v2304 = vmul.f32 %v2271, %v2303
          %v2305 = vmul.f32 %v2272, %v2303
          %v2306 = vmul.f32 %v2273, %v2303
          %v2307 = vmul.f32 %v2274, %v2303
          %v2308 = vmul.f32 %v2275, %v2303
          %v2309 = vmul.f32 %v2276, %v2303
          %v2310 = vmul.f32 %v2277, %v2303
          %v2311 = vmul.f32 %v2278, %v2303
          %v2312 = vmul.f32 %v2279, %v2303
          %v2313 = vmul.f32 %v2280, %v2303
          %v2314 = vmul.f32 %v2281, %v2303
          %v2315 = vmul.f32 %v2282, %v2303
          %v2316 = vmul.f32 %v2283, %v2303
          %v2317 = vmul.f32 %v2284, %v2303
          %v2318 = vmul.f32 %v2285, %v2303
          %v2319 = vmul.f32 %v2286, %v2303
          %v2320 = vmul.f32 %v2287, %v2303
          %v2321 = vmul.f32 %v2288, %v2303
          %v2322 = vmul.f32 %v2289, %v2303
          %v2323 = vmul.f32 %v2290, %v2303
          %v2324 = vmul.f32 %v2291, %v2303
          %v2325 = vmul.f32 %v2292, %v2303
          %v2326 = vmul.f32 %v2293, %v2303
          %v2327 = vmul.f32 %v2294, %v2303
          %v2328 = vmul.f32 %v2295, %v2303
          %v2329 = vmul.f32 %v2296, %v2303
          %v2330 = vmul.f32 %v2297, %v2303
          %v2331 = vmul.f32 %v2298, %v2303
          %v2332 = vmul.f32 %v2299, %v2303
          %v2333 = vmul.f32 %v2300, %v2303
          %v2334 = vmul.f32 %v2301, %v2303
          %v2335 = vmul.f32 %v2302, %v2303
          %s2336 = scalar_lea.vmem [#allocation2], 32
          %v2337 = vld [vmem:[%s2336 + $0x8] sm:$0xff]
          %v2338 = vld [vmem:[%s2336 + $0x10] sm:$0xff]
          %v2339 = vld [vmem:[%s2336 + $0x28] sm:$0xff]
          %v2340 = vld [vmem:[%s2336 + $0x30] sm:$0xff]
          %v2341 = vld [vmem:[%s2336 + $0x48] sm:$0xff]
          %v2342 = vld [vmem:[%s2336 + $0x50] sm:$0xff]
          %v2343 = vld [vmem:[%s2336 + $0x68] sm:$0xff]
          %v2344 = vld [vmem:[%s2336 + $0x70] sm:$0xff]
          %v2345 = vld [vmem:[%s2336 + $0x88] sm:$0xff]
          %v2346 = vld [vmem:[%s2336 + $0x90] sm:$0xff]
          %v2347 = vld [vmem:[%s2336 + $0xa8] sm:$0xff]
          %v2348 = vld [vmem:[%s2336 + $0xb0] sm:$0xff]
          %v2349 = vld [vmem:[%s2336 + $0xc8] sm:$0xff]
          %v2350 = vld [vmem:[%s2336 + $0xd0] sm:$0xff]
          %v2351 = vld [vmem:[%s2336 + $0xe8] sm:$0xff]
          %v2352 = vld [vmem:[%s2336 + $0xf0] sm:$0xff]
          %v2353 = vld [vmem:[%s2336 + $0x108] sm:$0xff]
          %v2354 = vld [vmem:[%s2336 + $0x110] sm:$0xff]
          %v2355 = vld [vmem:[%s2336 + $0x128] sm:$0xff]
          %v2356 = vld [vmem:[%s2336 + $0x130] sm:$0xff]
          %v2357 = vld [vmem:[%s2336 + $0x148] sm:$0xff]
          %v2358 = vld [vmem:[%s2336 + $0x150] sm:$0xff]
          %v2359 = vld [vmem:[%s2336 + $0x168] sm:$0xff]
          %v2360 = vld [vmem:[%s2336 + $0x170] sm:$0xff]
          %v2361 = vld [vmem:[%s2336 + $0x188] sm:$0xff]
          %v2362 = vld [vmem:[%s2336 + $0x190] sm:$0xff]
          %v2363 = vld [vmem:[%s2336 + $0x1a8] sm:$0xff]
          %v2364 = vld [vmem:[%s2336 + $0x1b0] sm:$0xff]
          %v2365 = vld [vmem:[%s2336 + $0x1c8] sm:$0xff]
          %v2366 = vld [vmem:[%s2336 + $0x1d0] sm:$0xff]
          %v2367 = vld [vmem:[%s2336 + $0x1e8] sm:$0xff]
          %v2368 = vld [vmem:[%s2336 + $0x1f0] sm:$0xff]
          %v2369 = vperm.slane %v2269, 1
          %v2370 = vmul.f32 %v2337, %v2369
          %v2371 = vmul.f32 %v2338, %v2369
          %v2372 = vmul.f32 %v2339, %v2369
          %v2373 = vmul.f32 %v2340, %v2369
          %v2374 = vmul.f32 %v2341, %v2369
          %v2375 = vmul.f32 %v2342, %v2369
          %v2376 = vmul.f32 %v2343, %v2369
          %v2377 = vmul.f32 %v2344, %v2369
          %v2378 = vmul.f32 %v2345, %v2369
          %v2379 = vmul.f32 %v2346, %v2369
          %v2380 = vmul.f32 %v2347, %v2369
          %v2381 = vmul.f32 %v2348, %v2369
          %v2382 = vmul.f32 %v2349, %v2369
          %v2383 = vmul.f32 %v2350, %v2369
          %v2384 = vmul.f32 %v2351, %v2369
          %v2385 = vmul.f32 %v2352, %v2369
          %v2386 = vmul.f32 %v2353, %v2369
          %v2387 = vmul.f32 %v2354, %v2369
          %v2388 = vmul.f32 %v2355, %v2369
          %v2389 = vmul.f32 %v2356, %v2369
          %v2390 = vmul.f32 %v2357, %v2369
          %v2391 = vmul.f32 %v2358, %v2369
          %v2392 = vmul.f32 %v2359, %v2369
          %v2393 = vmul.f32 %v2360, %v2369
          %v2394 = vmul.f32 %v2361, %v2369
          %v2395 = vmul.f32 %v2362, %v2369
          %v2396 = vmul.f32 %v2363, %v2369
          %v2397 = vmul.f32 %v2364, %v2369
          %v2398 = vmul.f32 %v2365, %v2369
          %v2399 = vmul.f32 %v2366, %v2369
          %v2400 = vmul.f32 %v2367, %v2369
          %v2401 = vmul.f32 %v2368, %v2369
          %v2402 = vadd.f32 %v2304, %v2370
          %v2403 = vadd.f32 %v2305, %v2371
          %v2404 = vadd.f32 %v2306, %v2372
          %v2405 = vadd.f32 %v2307, %v2373
          %v2406 = vadd.f32 %v2308, %v2374
          %v2407 = vadd.f32 %v2309, %v2375
          %v2408 = vadd.f32 %v2310, %v2376
          %v2409 = vadd.f32 %v2311, %v2377
          %v2410 = vadd.f32 %v2312, %v2378
          %v2411 = vadd.f32 %v2313, %v2379
          %v2412 = vadd.f32 %v2314, %v2380
          %v2413 = vadd.f32 %v2315, %v2381
          %v2414 = vadd.f32 %v2316, %v2382
          %v2415 = vadd.f32 %v2317, %v2383
          %v2416 = vadd.f32 %v2318, %v2384
          %v2417 = vadd.f32 %v2319, %v2385
          %v2418 = vadd.f32 %v2320, %v2386
          %v2419 = vadd.f32 %v2321, %v2387
          %v2420 = vadd.f32 %v2322, %v2388
          %v2421 = vadd.f32 %v2323, %v2389
          %v2422 = vadd.f32 %v2324, %v2390
          %v2423 = vadd.f32 %v2325, %v2391
          %v2424 = vadd.f32 %v2326, %v2392
          %v2425 = vadd.f32 %v2327, %v2393
          %v2426 = vadd.f32 %v2328, %v2394
          %v2427 = vadd.f32 %v2329, %v2395
          %v2428 = vadd.f32 %v2330, %v2396
          %v2429 = vadd.f32 %v2331, %v2397
          %v2430 = vadd.f32 %v2332, %v2398
          %v2431 = vadd.f32 %v2333, %v2399
          %v2432 = vadd.f32 %v2334, %v2400
          %v2433 = vadd.f32 %v2335, %v2401
          %s2434 = scalar_lea.vmem [#allocation2], 64
          %v2435 = vld [vmem:[%s2434 + $0x8] sm:$0xff]
          %v2436 = vld [vmem:[%s2434 + $0x10] sm:$0xff]
          %v2437 = vld [vmem:[%s2434 + $0x28] sm:$0xff]
          %v2438 = vld [vmem:[%s2434 + $0x30] sm:$0xff]
          %v2439 = vld [vmem:[%s2434 + $0x48] sm:$0xff]
          %v2440 = vld [vmem:[%s2434 + $0x50] sm:$0xff]
          %v2441 = vld [vmem:[%s2434 + $0x68] sm:$0xff]
          %v2442 = vld [vmem:[%s2434 + $0x70] sm:$0xff]
          %v2443 = vld [vmem:[%s2434 + $0x88] sm:$0xff]
          %v2444 = vld [vmem:[%s2434 + $0x90] sm:$0xff]
          %v2445 = vld [vmem:[%s2434 + $0xa8] sm:$0xff]
          %v2446 = vld [vmem:[%s2434 + $0xb0] sm:$0xff]
          %v2447 = vld [vmem:[%s2434 + $0xc8] sm:$0xff]
          %v2448 = vld [vmem:[%s2434 + $0xd0] sm:$0xff]
          %v2449 = vld [vmem:[%s2434 + $0xe8] sm:$0xff]
          %v2450 = vld [vmem:[%s2434 + $0xf0] sm:$0xff]
          %v2451 = vld [vmem:[%s2434 + $0x108] sm:$0xff]
          %v2452 = vld [vmem:[%s2434 + $0x110] sm:$0xff]
          %v2453 = vld [vmem:[%s2434 + $0x128] sm:$0xff]
          %v2454 = vld [vmem:[%s2434 + $0x130] sm:$0xff]
          %v2455 = vld [vmem:[%s2434 + $0x148] sm:$0xff]
          %v2456 = vld [vmem:[%s2434 + $0x150] sm:$0xff]
          %v2457 = vld [vmem:[%s2434 + $0x168] sm:$0xff]
          %v2458 = vld [vmem:[%s2434 + $0x170] sm:$0xff]
          %v2459 = vld [vmem:[%s2434 + $0x188] sm:$0xff]
          %v2460 = vld [vmem:[%s2434 + $0x190] sm:$0xff]
          %v2461 = vld [vmem:[%s2434 + $0x1a8] sm:$0xff]
          %v2462 = vld [vmem:[%s2434 + $0x1b0] sm:$0xff]
          %v2463 = vld [vmem:[%s2434 + $0x1c8] sm:$0xff]
          %v2464 = vld [vmem:[%s2434 + $0x1d0] sm:$0xff]
          %v2465 = vld [vmem:[%s2434 + $0x1e8] sm:$0xff]
          %v2466 = vld [vmem:[%s2434 + $0x1f0] sm:$0xff]
          %v2467 = vperm.slane %v2270, 1
          %v2468 = vmul.f32 %v2435, %v2467
          %v2469 = vmul.f32 %v2436, %v2467
          %v2470 = vmul.f32 %v2437, %v2467
          %v2471 = vmul.f32 %v2438, %v2467
          %v2472 = vmul.f32 %v2439, %v2467
          %v2473 = vmul.f32 %v2440, %v2467
          %v2474 = vmul.f32 %v2441, %v2467
          %v2475 = vmul.f32 %v2442, %v2467
          %v2476 = vmul.f32 %v2443, %v2467
          %v2477 = vmul.f32 %v2444, %v2467
          %v2478 = vmul.f32 %v2445, %v2467
          %v2479 = vmul.f32 %v2446, %v2467
          %v2480 = vmul.f32 %v2447, %v2467
          %v2481 = vmul.f32 %v2448, %v2467
          %v2482 = vmul.f32 %v2449, %v2467
          %v2483 = vmul.f32 %v2450, %v2467
          %v2484 = vmul.f32 %v2451, %v2467
          %v2485 = vmul.f32 %v2452, %v2467
          %v2486 = vmul.f32 %v2453, %v2467
          %v2487 = vmul.f32 %v2454, %v2467
          %v2488 = vmul.f32 %v2455, %v2467
          %v2489 = vmul.f32 %v2456, %v2467
          %v2490 = vmul.f32 %v2457, %v2467
          %v2491 = vmul.f32 %v2458, %v2467
          %v2492 = vmul.f32 %v2459, %v2467
          %v2493 = vmul.f32 %v2460, %v2467
          %v2494 = vmul.f32 %v2461, %v2467
          %v2495 = vmul.f32 %v2462, %v2467
          %v2496 = vmul.f32 %v2463, %v2467
          %v2497 = vmul.f32 %v2464, %v2467
          %v2498 = vmul.f32 %v2465, %v2467
          %v2499 = vmul.f32 %v2466, %v2467
          %v2500 = vadd.f32 %v2402, %v2468
          %v2501 = vadd.f32 %v2403, %v2469
          %v2502 = vadd.f32 %v2404, %v2470
          %v2503 = vadd.f32 %v2405, %v2471
          %v2504 = vadd.f32 %v2406, %v2472
          %v2505 = vadd.f32 %v2407, %v2473
          %v2506 = vadd.f32 %v2408, %v2474
          %v2507 = vadd.f32 %v2409, %v2475
          %v2508 = vadd.f32 %v2410, %v2476
          %v2509 = vadd.f32 %v2411, %v2477
          %v2510 = vadd.f32 %v2412, %v2478
          %v2511 = vadd.f32 %v2413, %v2479
          %v2512 = vadd.f32 %v2414, %v2480
          %v2513 = vadd.f32 %v2415, %v2481
          %v2514 = vadd.f32 %v2416, %v2482
          %v2515 = vadd.f32 %v2417, %v2483
          %v2516 = vadd.f32 %v2418, %v2484
          %v2517 = vadd.f32 %v2419, %v2485
          %v2518 = vadd.f32 %v2420, %v2486
          %v2519 = vadd.f32 %v2421, %v2487
          %v2520 = vadd.f32 %v2422, %v2488
          %v2521 = vadd.f32 %v2423, %v2489
          %v2522 = vadd.f32 %v2424, %v2490
          %v2523 = vadd.f32 %v2425, %v2491
          %v2524 = vadd.f32 %v2426, %v2492
          %v2525 = vadd.f32 %v2427, %v2493
          %v2526 = vadd.f32 %v2428, %v2494
          %v2527 = vadd.f32 %v2429, %v2495
          %v2528 = vadd.f32 %v2430, %v2496
          %v2529 = vadd.f32 %v2431, %v2497
          %v2530 = vadd.f32 %v2432, %v2498
          %v2531 = vadd.f32 %v2433, %v2499
          %v2533 = vperm.slane %v710, 0
          %v2535 = vadd.f32 %v2500, %v2533
          %v2536 = vadd.f32 %v2501, %v2533
          %v2537 = vadd.f32 %v2502, %v2533
          %v2538 = vadd.f32 %v2503, %v2533
          %v2539 = vadd.f32 %v2504, %v2533
          %v2540 = vadd.f32 %v2505, %v2533
          %v2541 = vadd.f32 %v2506, %v2533
          %v2542 = vadd.f32 %v2507, %v2533
          %v2543 = vadd.f32 %v2508, %v2533
          %v2544 = vadd.f32 %v2509, %v2533
          %v2545 = vadd.f32 %v2510, %v2533
          %v2546 = vadd.f32 %v2511, %v2533
          %v2547 = vadd.f32 %v2512, %v2533
          %v2548 = vadd.f32 %v2513, %v2533
          %v2549 = vadd.f32 %v2514, %v2533
          %v2550 = vadd.f32 %v2515, %v2533
          %v2551 = vadd.f32 %v2516, %v2533
          %v2552 = vadd.f32 %v2517, %v2533
          %v2553 = vadd.f32 %v2518, %v2533
          %v2554 = vadd.f32 %v2519, %v2533
          %v2555 = vadd.f32 %v2520, %v2533
          %v2556 = vadd.f32 %v2521, %v2533
          %v2557 = vadd.f32 %v2522, %v2533
          %v2558 = vadd.f32 %v2523, %v2533
          %v2559 = vadd.f32 %v2524, %v2533
          %v2560 = vadd.f32 %v2525, %v2533
          %v2561 = vadd.f32 %v2526, %v2533
          %v2562 = vadd.f32 %v2527, %v2533
          %v2563 = vadd.f32 %v2528, %v2533
          %v2564 = vadd.f32 %v2529, %v2533
          %v2565 = vadd.f32 %v2530, %v2533
          %v2566 = vadd.f32 %v2531, %v2533
          %v2567 = vmax.f32 %v2535, 0.0
          %v2568 = vmax.f32 %v2536, 0.0
          %v2569 = vmax.f32 %v2537, 0.0
          %v2570 = vmax.f32 %v2538, 0.0
          %v2571 = vmax.f32 %v2539, 0.0
          %v2572 = vmax.f32 %v2540, 0.0
          %v2573 = vmax.f32 %v2541, 0.0
          %v2574 = vmax.f32 %v2542, 0.0
          %v2575 = vmax.f32 %v2543, 0.0
          %v2576 = vmax.f32 %v2544, 0.0
          %v2577 = vmax.f32 %v2545, 0.0
          %v2578 = vmax.f32 %v2546, 0.0
          %v2579 = vmax.f32 %v2547, 0.0
          %v2580 = vmax.f32 %v2548, 0.0
          %v2581 = vmax.f32 %v2549, 0.0
          %v2582 = vmax.f32 %v2550, 0.0
          %v2583 = vmax.f32 %v2551, 0.0
          %v2584 = vmax.f32 %v2552, 0.0
          %v2585 = vmax.f32 %v2553, 0.0
          %v2586 = vmax.f32 %v2554, 0.0
          %v2587 = vmax.f32 %v2555, 0.0
          %v2588 = vmax.f32 %v2556, 0.0
          %v2589 = vmax.f32 %v2557, 0.0
          %v2590 = vmax.f32 %v2558, 0.0
          %v2591 = vmax.f32 %v2559, 0.0
          %v2592 = vmax.f32 %v2560, 0.0
          %v2593 = vmax.f32 %v2561, 0.0
          %v2594 = vmax.f32 %v2562, 0.0
          %v2595 = vmax.f32 %v2563, 0.0
          %v2596 = vmax.f32 %v2564, 0.0
          %v2597 = vmax.f32 %v2565, 0.0
          %v2598 = vmax.f32 %v2566, 0.0
          %s2599 = scalar_lea.vmem [#allocation3], 96
          %2600 = vst [vmem:[%s2599 + $0x8] sm:$0xff] %v2567
          %2601 = vst [vmem:[%s2599 + $0x10] sm:$0xff] %v2568
          %2602 = vst [vmem:[%s2599 + $0x28] sm:$0xff] %v2569
          %2603 = vst [vmem:[%s2599 + $0x30] sm:$0xff] %v2570
          %2604 = vst [vmem:[%s2599 + $0x48] sm:$0xff] %v2571
          %2605 = vst [vmem:[%s2599 + $0x50] sm:$0xff] %v2572
          %2606 = vst [vmem:[%s2599 + $0x68] sm:$0xff] %v2573
          %2607 = vst [vmem:[%s2599 + $0x70] sm:$0xff] %v2574
          %2608 = vst [vmem:[%s2599 + $0x88] sm:$0xff] %v2575
          %2609 = vst [vmem:[%s2599 + $0x90] sm:$0xff] %v2576
          %2610 = vst [vmem:[%s2599 + $0xa8] sm:$0xff] %v2577
          %2611 = vst [vmem:[%s2599 + $0xb0] sm:$0xff] %v2578
          %2612 = vst [vmem:[%s2599 + $0xc8] sm:$0xff] %v2579
          %2613 = vst [vmem:[%s2599 + $0xd0] sm:$0xff] %v2580
          %2614 = vst [vmem:[%s2599 + $0xe8] sm:$0xff] %v2581
          %2615 = vst [vmem:[%s2599 + $0xf0] sm:$0xff] %v2582
          %2616 = vst [vmem:[%s2599 + $0x108] sm:$0xff] %v2583
          %2617 = vst [vmem:[%s2599 + $0x110] sm:$0xff] %v2584
          %2618 = vst [vmem:[%s2599 + $0x128] sm:$0xff] %v2585
          %2619 = vst [vmem:[%s2599 + $0x130] sm:$0xff] %v2586
          %2620 = vst [vmem:[%s2599 + $0x148] sm:$0xff] %v2587
          %2621 = vst [vmem:[%s2599 + $0x150] sm:$0xff] %v2588
          %2622 = vst [vmem:[%s2599 + $0x168] sm:$0xff] %v2589
          %2623 = vst [vmem:[%s2599 + $0x170] sm:$0xff] %v2590
          %2624 = vst [vmem:[%s2599 + $0x188] sm:$0xff] %v2591
          %2625 = vst [vmem:[%s2599 + $0x190] sm:$0xff] %v2592
          %2626 = vst [vmem:[%s2599 + $0x1a8] sm:$0xff] %v2593
          %2627 = vst [vmem:[%s2599 + $0x1b0] sm:$0xff] %v2594
          %2628 = vst [vmem:[%s2599 + $0x1c8] sm:$0xff] %v2595
          %2629 = vst [vmem:[%s2599 + $0x1d0] sm:$0xff] %v2596
          %2630 = vst [vmem:[%s2599 + $0x1e8] sm:$0xff] %v2597
          %2631 = vst [vmem:[%s2599 + $0x1f0] sm:$0xff] %v2598
        $region118: #{fem_forward.1} parent=85 // pred_fallthru
          _
        %v2632 = vld [vmem:[%s3] sm:$0x7]
        %v2633 = vld [vmem:[%s3 + $0x4] sm:$0x7]
        %v2634 = vld [vmem:[%s3 + $0x8] sm:$0x7]
        %v2635 = vld [vmem:[#allocation3 + $0x5] sm:$0xff]
        %v2636 = vld [vmem:[#allocation3 + $0xd] sm:$0xff]
        %v2637 = vld [vmem:[#allocation3 + $0x25] sm:$0xff]
        %v2638 = vld [vmem:[#allocation3 + $0x2d] sm:$0xff]
        %v2639 = vld [vmem:[#allocation3 + $0x45] sm:$0xff]
        %v2640 = vld [vmem:[#allocation3 + $0x4d] sm:$0xff]
        %v2641 = vld [vmem:[#allocation3 + $0x65] sm:$0xff]
        %v2642 = vld [vmem:[#allocation3 + $0x6d] sm:$0xff]
        %v2643 = vld [vmem:[#allocation3 + $0x85] sm:$0xff]
        %v2644 = vld [vmem:[#allocation3 + $0x8d] sm:$0xff]
        %v2645 = vld [vmem:[#allocation3 + $0xa5] sm:$0xff]
        %v2646 = vld [vmem:[#allocation3 + $0xad] sm:$0xff]
        %v2647 = vld [vmem:[#allocation3 + $0xc5] sm:$0xff]
        %v2648 = vld [vmem:[#allocation3 + $0xcd] sm:$0xff]
        %v2649 = vld [vmem:[#allocation3 + $0xe5] sm:$0xff]
        %v2650 = vld [vmem:[#allocation3 + $0xed] sm:$0xff]
        %v2651 = vld [vmem:[#allocation3 + $0x105] sm:$0xff]
        %v2652 = vld [vmem:[#allocation3 + $0x10d] sm:$0xff]
        %v2653 = vld [vmem:[#allocation3 + $0x125] sm:$0xff]
        %v2654 = vld [vmem:[#allocation3 + $0x12d] sm:$0xff]
        %v2655 = vld [vmem:[#allocation3 + $0x145] sm:$0xff]
        %v2656 = vld [vmem:[#allocation3 + $0x14d] sm:$0xff]
        %v2657 = vld [vmem:[#allocation3 + $0x165] sm:$0xff]
        %v2658 = vld [vmem:[#allocation3 + $0x16d] sm:$0xff]
        %v2659 = vld [vmem:[#allocation3 + $0x185] sm:$0xff]
        %v2660 = vld [vmem:[#allocation3 + $0x18d] sm:$0xff]
        %v2661 = vld [vmem:[#allocation3 + $0x1a5] sm:$0xff]
        %v2662 = vld [vmem:[#allocation3 + $0x1ad] sm:$0xff]
        %v2663 = vld [vmem:[#allocation3 + $0x1c5] sm:$0xff]
        %v2664 = vld [vmem:[#allocation3 + $0x1cd] sm:$0xff]
        %v2665 = vld [vmem:[#allocation3 + $0x1e5] sm:$0xff]
        %v2666 = vld [vmem:[#allocation3 + $0x1ed] sm:$0xff]
        %v2667 = vperm.slane %v2632, 0
        %v2668 = vmul.f32 %v2635, %v2667
        %v2669 = vmul.f32 %v2636, %v2667
        %v2670 = vmul.f32 %v2637, %v2667
        %v2671 = vmul.f32 %v2638, %v2667
        %v2672 = vmul.f32 %v2639, %v2667
        %v2673 = vmul.f32 %v2640, %v2667
        %v2674 = vmul.f32 %v2641, %v2667
        %v2675 = vmul.f32 %v2642, %v2667
        %v2676 = vmul.f32 %v2643, %v2667
        %v2677 = vmul.f32 %v2644, %v2667
        %v2678 = vmul.f32 %v2645, %v2667
        %v2679 = vmul.f32 %v2646, %v2667
        %v2680 = vmul.f32 %v2647, %v2667
        %v2681 = vmul.f32 %v2648, %v2667
        %v2682 = vmul.f32 %v2649, %v2667
        %v2683 = vmul.f32 %v2650, %v2667
        %v2684 = vmul.f32 %v2651, %v2667
        %v2685 = vmul.f32 %v2652, %v2667
        %v2686 = vmul.f32 %v2653, %v2667
        %v2687 = vmul.f32 %v2654, %v2667
        %v2688 = vmul.f32 %v2655, %v2667
        %v2689 = vmul.f32 %v2656, %v2667
        %v2690 = vmul.f32 %v2657, %v2667
        %v2691 = vmul.f32 %v2658, %v2667
        %v2692 = vmul.f32 %v2659, %v2667
        %v2693 = vmul.f32 %v2660, %v2667
        %v2694 = vmul.f32 %v2661, %v2667
        %v2695 = vmul.f32 %v2662, %v2667
        %v2696 = vmul.f32 %v2663, %v2667
        %v2697 = vmul.f32 %v2664, %v2667
        %v2698 = vmul.f32 %v2665, %v2667
        %v2699 = vmul.f32 %v2666, %v2667
        %v2700 = vld [vmem:[#allocation3 + $0x8] sm:$0xff]
        %v2701 = vld [vmem:[#allocation3 + $0x10] sm:$0xff]
        %v2702 = vld [vmem:[#allocation3 + $0x28] sm:$0xff]
        %v2703 = vld [vmem:[#allocation3 + $0x30] sm:$0xff]
        %v2704 = vld [vmem:[#allocation3 + $0x48] sm:$0xff]
        %v2705 = vld [vmem:[#allocation3 + $0x50] sm:$0xff]
        %v2706 = vld [vmem:[#allocation3 + $0x68] sm:$0xff]
        %v2707 = vld [vmem:[#allocation3 + $0x70] sm:$0xff]
        %v2708 = vld [vmem:[#allocation3 + $0x88] sm:$0xff]
        %v2709 = vld [vmem:[#allocation3 + $0x90] sm:$0xff]
        %v2710 = vld [vmem:[#allocation3 + $0xa8] sm:$0xff]
        %v2711 = vld [vmem:[#allocation3 + $0xb0] sm:$0xff]
        %v2712 = vld [vmem:[#allocation3 + $0xc8] sm:$0xff]
        %v2713 = vld [vmem:[#allocation3 + $0xd0] sm:$0xff]
        %v2714 = vld [vmem:[#allocation3 + $0xe8] sm:$0xff]
        %v2715 = vld [vmem:[#allocation3 + $0xf0] sm:$0xff]
        %v2716 = vld [vmem:[#allocation3 + $0x108] sm:$0xff]
        %v2717 = vld [vmem:[#allocation3 + $0x110] sm:$0xff]
        %v2718 = vld [vmem:[#allocation3 + $0x128] sm:$0xff]
        %v2719 = vld [vmem:[#allocation3 + $0x130] sm:$0xff]
        %v2720 = vld [vmem:[#allocation3 + $0x148] sm:$0xff]
        %v2721 = vld [vmem:[#allocation3 + $0x150] sm:$0xff]
        %v2722 = vld [vmem:[#allocation3 + $0x168] sm:$0xff]
        %v2723 = vld [vmem:[#allocation3 + $0x170] sm:$0xff]
        %v2724 = vld [vmem:[#allocation3 + $0x188] sm:$0xff]
        %v2725 = vld [vmem:[#allocation3 + $0x190] sm:$0xff]
        %v2726 = vld [vmem:[#allocation3 + $0x1a8] sm:$0xff]
        %v2727 = vld [vmem:[#allocation3 + $0x1b0] sm:$0xff]
        %v2728 = vld [vmem:[#allocation3 + $0x1c8] sm:$0xff]
        %v2729 = vld [vmem:[#allocation3 + $0x1d0] sm:$0xff]
        %v2730 = vld [vmem:[#allocation3 + $0x1e8] sm:$0xff]
        %v2731 = vld [vmem:[#allocation3 + $0x1f0] sm:$0xff]
        %v2732 = vperm.slane %v2632, 1
        %v2733 = vmul.f32 %v2700, %v2732
        %v2734 = vmul.f32 %v2701, %v2732
        %v2735 = vmul.f32 %v2702, %v2732
        %v2736 = vmul.f32 %v2703, %v2732
        %v2737 = vmul.f32 %v2704, %v2732
        %v2738 = vmul.f32 %v2705, %v2732
        %v2739 = vmul.f32 %v2706, %v2732
        %v2740 = vmul.f32 %v2707, %v2732
        %v2741 = vmul.f32 %v2708, %v2732
        %v2742 = vmul.f32 %v2709, %v2732
        %v2743 = vmul.f32 %v2710, %v2732
        %v2744 = vmul.f32 %v2711, %v2732
        %v2745 = vmul.f32 %v2712, %v2732
        %v2746 = vmul.f32 %v2713, %v2732
        %v2747 = vmul.f32 %v2714, %v2732
        %v2748 = vmul.f32 %v2715, %v2732
        %v2749 = vmul.f32 %v2716, %v2732
        %v2750 = vmul.f32 %v2717, %v2732
        %v2751 = vmul.f32 %v2718, %v2732
        %v2752 = vmul.f32 %v2719, %v2732
        %v2753 = vmul.f32 %v2720, %v2732
        %v2754 = vmul.f32 %v2721, %v2732
        %v2755 = vmul.f32 %v2722, %v2732
        %v2756 = vmul.f32 %v2723, %v2732
        %v2757 = vmul.f32 %v2724, %v2732
        %v2758 = vmul.f32 %v2725, %v2732
        %v2759 = vmul.f32 %v2726, %v2732
        %v2760 = vmul.f32 %v2727, %v2732
        %v2761 = vmul.f32 %v2728, %v2732
        %v2762 = vmul.f32 %v2729, %v2732
        %v2763 = vmul.f32 %v2730, %v2732
        %v2764 = vmul.f32 %v2731, %v2732
        %v2765 = vadd.f32 %v2668, %v2733
        %v2766 = vadd.f32 %v2669, %v2734
        %v2767 = vadd.f32 %v2670, %v2735
        %v2768 = vadd.f32 %v2671, %v2736
        %v2769 = vadd.f32 %v2672, %v2737
        %v2770 = vadd.f32 %v2673, %v2738
        %v2771 = vadd.f32 %v2674, %v2739
        %v2772 = vadd.f32 %v2675, %v2740
        %v2773 = vadd.f32 %v2676, %v2741
        %v2774 = vadd.f32 %v2677, %v2742
        %v2775 = vadd.f32 %v2678, %v2743
        %v2776 = vadd.f32 %v2679, %v2744
        %v2777 = vadd.f32 %v2680, %v2745
        %v2778 = vadd.f32 %v2681, %v2746
        %v2779 = vadd.f32 %v2682, %v2747
        %v2780 = vadd.f32 %v2683, %v2748
        %v2781 = vadd.f32 %v2684, %v2749
        %v2782 = vadd.f32 %v2685, %v2750
        %v2783 = vadd.f32 %v2686, %v2751
        %v2784 = vadd.f32 %v2687, %v2752
        %v2785 = vadd.f32 %v2688, %v2753
        %v2786 = vadd.f32 %v2689, %v2754
        %v2787 = vadd.f32 %v2690, %v2755
        %v2788 = vadd.f32 %v2691, %v2756
        %v2789 = vadd.f32 %v2692, %v2757
        %v2790 = vadd.f32 %v2693, %v2758
        %v2791 = vadd.f32 %v2694, %v2759
        %v2792 = vadd.f32 %v2695, %v2760
        %v2793 = vadd.f32 %v2696, %v2761
        %v2794 = vadd.f32 %v2697, %v2762
        %v2795 = vadd.f32 %v2698, %v2763
        %v2796 = vadd.f32 %v2699, %v2764
        %v2797 = vld [vmem:[#allocation3 + $0xb] sm:$0xff]
        %v2798 = vld [vmem:[#allocation3 + $0x13] sm:$0xff]
        %v2799 = vld [vmem:[#allocation3 + $0x2b] sm:$0xff]
        %v2800 = vld [vmem:[#allocation3 + $0x33] sm:$0xff]
        %v2801 = vld [vmem:[#allocation3 + $0x4b] sm:$0xff]
        %v2802 = vld [vmem:[#allocation3 + $0x53] sm:$0xff]
        %v2803 = vld [vmem:[#allocation3 + $0x6b] sm:$0xff]
        %v2804 = vld [vmem:[#allocation3 + $0x73] sm:$0xff]
        %v2805 = vld [vmem:[#allocation3 + $0x8b] sm:$0xff]
        %v2806 = vld [vmem:[#allocation3 + $0x93] sm:$0xff]
        %v2807 = vld [vmem:[#allocation3 + $0xab] sm:$0xff]
        %v2808 = vld [vmem:[#allocation3 + $0xb3] sm:$0xff]
        %v2809 = vld [vmem:[#allocation3 + $0xcb] sm:$0xff]
        %v2810 = vld [vmem:[#allocation3 + $0xd3] sm:$0xff]
        %v2811 = vld [vmem:[#allocation3 + $0xeb] sm:$0xff]
        %v2812 = vld [vmem:[#allocation3 + $0xf3] sm:$0xff]
        %v2813 = vld [vmem:[#allocation3 + $0x10b] sm:$0xff]
        %v2814 = vld [vmem:[#allocation3 + $0x113] sm:$0xff]
        %v2815 = vld [vmem:[#allocation3 + $0x12b] sm:$0xff]
        %v2816 = vld [vmem:[#allocation3 + $0x133] sm:$0xff]
        %v2817 = vld [vmem:[#allocation3 + $0x14b] sm:$0xff]
        %v2818 = vld [vmem:[#allocation3 + $0x153] sm:$0xff]
        %v2819 = vld [vmem:[#allocation3 + $0x16b] sm:$0xff]
        %v2820 = vld [vmem:[#allocation3 + $0x173] sm:$0xff]
        %v2821 = vld [vmem:[#allocation3 + $0x18b] sm:$0xff]
        %v2822 = vld [vmem:[#allocation3 + $0x193] sm:$0xff]
        %v2823 = vld [vmem:[#allocation3 + $0x1ab] sm:$0xff]
        %v2824 = vld [vmem:[#allocation3 + $0x1b3] sm:$0xff]
        %v2825 = vld [vmem:[#allocation3 + $0x1cb] sm:$0xff]
        %v2826 = vld [vmem:[#allocation3 + $0x1d3] sm:$0xff]
        %v2827 = vld [vmem:[#allocation3 + $0x1eb] sm:$0xff]
        %v2828 = vld [vmem:[#allocation3 + $0x1f3] sm:$0xff]
        %v2829 = vperm.slane %v2632, 2
        %v2830 = vmul.f32 %v2797, %v2829
        %v2831 = vmul.f32 %v2798, %v2829
        %v2832 = vmul.f32 %v2799, %v2829
        %v2833 = vmul.f32 %v2800, %v2829
        %v2834 = vmul.f32 %v2801, %v2829
        %v2835 = vmul.f32 %v2802, %v2829
        %v2836 = vmul.f32 %v2803, %v2829
        %v2837 = vmul.f32 %v2804, %v2829
        %v2838 = vmul.f32 %v2805, %v2829
        %v2839 = vmul.f32 %v2806, %v2829
        %v2840 = vmul.f32 %v2807, %v2829
        %v2841 = vmul.f32 %v2808, %v2829
        %v2842 = vmul.f32 %v2809, %v2829
        %v2843 = vmul.f32 %v2810, %v2829
        %v2844 = vmul.f32 %v2811, %v2829
        %v2845 = vmul.f32 %v2812, %v2829
        %v2846 = vmul.f32 %v2813, %v2829
        %v2847 = vmul.f32 %v2814, %v2829
        %v2848 = vmul.f32 %v2815, %v2829
        %v2849 = vmul.f32 %v2816, %v2829
        %v2850 = vmul.f32 %v2817, %v2829
        %v2851 = vmul.f32 %v2818, %v2829
        %v2852 = vmul.f32 %v2819, %v2829
        %v2853 = vmul.f32 %v2820, %v2829
        %v2854 = vmul.f32 %v2821, %v2829
        %v2855 = vmul.f32 %v2822, %v2829
        %v2856 = vmul.f32 %v2823, %v2829
        %v2857 = vmul.f32 %v2824, %v2829
        %v2858 = vmul.f32 %v2825, %v2829
        %v2859 = vmul.f32 %v2826, %v2829
        %v2860 = vmul.f32 %v2827, %v2829
        %v2861 = vmul.f32 %v2828, %v2829
        %v2862 = vadd.f32 %v2765, %v2830
        %v2863 = vadd.f32 %v2766, %v2831
        %v2864 = vadd.f32 %v2767, %v2832
        %v2865 = vadd.f32 %v2768, %v2833
        %v2866 = vadd.f32 %v2769, %v2834
        %v2867 = vadd.f32 %v2770, %v2835
        %v2868 = vadd.f32 %v2771, %v2836
        %v2869 = vadd.f32 %v2772, %v2837
        %v2870 = vadd.f32 %v2773, %v2838
        %v2871 = vadd.f32 %v2774, %v2839
        %v2872 = vadd.f32 %v2775, %v2840
        %v2873 = vadd.f32 %v2776, %v2841
        %v2874 = vadd.f32 %v2777, %v2842
        %v2875 = vadd.f32 %v2778, %v2843
        %v2876 = vadd.f32 %v2779, %v2844
        %v2877 = vadd.f32 %v2780, %v2845
        %v2878 = vadd.f32 %v2781, %v2846
        %v2879 = vadd.f32 %v2782, %v2847
        %v2880 = vadd.f32 %v2783, %v2848
        %v2881 = vadd.f32 %v2784, %v2849
        %v2882 = vadd.f32 %v2785, %v2850
        %v2883 = vadd.f32 %v2786, %v2851
        %v2884 = vadd.f32 %v2787, %v2852
        %v2885 = vadd.f32 %v2788, %v2853
        %v2886 = vadd.f32 %v2789, %v2854
        %v2887 = vadd.f32 %v2790, %v2855
        %v2888 = vadd.f32 %v2791, %v2856
        %v2889 = vadd.f32 %v2792, %v2857
        %v2890 = vadd.f32 %v2793, %v2858
        %v2891 = vadd.f32 %v2794, %v2859
        %v2892 = vadd.f32 %v2795, %v2860
        %v2893 = vadd.f32 %v2796, %v2861
        %s2894 = scalar_lea.vmem [#allocation3], 96
        %v2895 = vld [vmem:[%s2894 + $0x5] sm:$0xff]
        %v2896 = vld [vmem:[%s2894 + $0xd] sm:$0xff]
        %v2897 = vld [vmem:[%s2894 + $0x25] sm:$0xff]
        %v2898 = vld [vmem:[%s2894 + $0x2d] sm:$0xff]
        %v2899 = vld [vmem:[%s2894 + $0x45] sm:$0xff]
        %v2900 = vld [vmem:[%s2894 + $0x4d] sm:$0xff]
        %v2901 = vld [vmem:[%s2894 + $0x65] sm:$0xff]
        %v2902 = vld [vmem:[%s2894 + $0x6d] sm:$0xff]
        %v2903 = vld [vmem:[%s2894 + $0x85] sm:$0xff]
        %v2904 = vld [vmem:[%s2894 + $0x8d] sm:$0xff]
        %v2905 = vld [vmem:[%s2894 + $0xa5] sm:$0xff]
        %v2906 = vld [vmem:[%s2894 + $0xad] sm:$0xff]
        %v2907 = vld [vmem:[%s2894 + $0xc5] sm:$0xff]
        %v2908 = vld [vmem:[%s2894 + $0xcd] sm:$0xff]
        %v2909 = vld [vmem:[%s2894 + $0xe5] sm:$0xff]
        %v2910 = vld [vmem:[%s2894 + $0xed] sm:$0xff]
        %v2911 = vld [vmem:[%s2894 + $0x105] sm:$0xff]
        %v2912 = vld [vmem:[%s2894 + $0x10d] sm:$0xff]
        %v2913 = vld [vmem:[%s2894 + $0x125] sm:$0xff]
        %v2914 = vld [vmem:[%s2894 + $0x12d] sm:$0xff]
        %v2915 = vld [vmem:[%s2894 + $0x145] sm:$0xff]
        %v2916 = vld [vmem:[%s2894 + $0x14d] sm:$0xff]
        %v2917 = vld [vmem:[%s2894 + $0x165] sm:$0xff]
        %v2918 = vld [vmem:[%s2894 + $0x16d] sm:$0xff]
        %v2919 = vld [vmem:[%s2894 + $0x185] sm:$0xff]
        %v2920 = vld [vmem:[%s2894 + $0x18d] sm:$0xff]
        %v2921 = vld [vmem:[%s2894 + $0x1a5] sm:$0xff]
        %v2922 = vld [vmem:[%s2894 + $0x1ad] sm:$0xff]
        %v2923 = vld [vmem:[%s2894 + $0x1c5] sm:$0xff]
        %v2924 = vld [vmem:[%s2894 + $0x1cd] sm:$0xff]
        %v2925 = vld [vmem:[%s2894 + $0x1e5] sm:$0xff]
        %v2926 = vld [vmem:[%s2894 + $0x1ed] sm:$0xff]
        %v2927 = vperm.slane %v2633, 0
        %v2928 = vmul.f32 %v2895, %v2927
        %v2929 = vmul.f32 %v2896, %v2927
        %v2930 = vmul.f32 %v2897, %v2927
        %v2931 = vmul.f32 %v2898, %v2927
        %v2932 = vmul.f32 %v2899, %v2927
        %v2933 = vmul.f32 %v2900, %v2927
        %v2934 = vmul.f32 %v2901, %v2927
        %v2935 = vmul.f32 %v2902, %v2927
        %v2936 = vmul.f32 %v2903, %v2927
        %v2937 = vmul.f32 %v2904, %v2927
        %v2938 = vmul.f32 %v2905, %v2927
        %v2939 = vmul.f32 %v2906, %v2927
        %v2940 = vmul.f32 %v2907, %v2927
        %v2941 = vmul.f32 %v2908, %v2927
        %v2942 = vmul.f32 %v2909, %v2927
        %v2943 = vmul.f32 %v2910, %v2927
        %v2944 = vmul.f32 %v2911, %v2927
        %v2945 = vmul.f32 %v2912, %v2927
        %v2946 = vmul.f32 %v2913, %v2927
        %v2947 = vmul.f32 %v2914, %v2927
        %v2948 = vmul.f32 %v2915, %v2927
        %v2949 = vmul.f32 %v2916, %v2927
        %v2950 = vmul.f32 %v2917, %v2927
        %v2951 = vmul.f32 %v2918, %v2927
        %v2952 = vmul.f32 %v2919, %v2927
        %v2953 = vmul.f32 %v2920, %v2927
        %v2954 = vmul.f32 %v2921, %v2927
        %v2955 = vmul.f32 %v2922, %v2927
        %v2956 = vmul.f32 %v2923, %v2927
        %v2957 = vmul.f32 %v2924, %v2927
        %v2958 = vmul.f32 %v2925, %v2927
        %v2959 = vmul.f32 %v2926, %v2927
        %v2960 = vadd.f32 %v2862, %v2928
        %v2961 = vadd.f32 %v2863, %v2929
        %v2962 = vadd.f32 %v2864, %v2930
        %v2963 = vadd.f32 %v2865, %v2931
        %v2964 = vadd.f32 %v2866, %v2932
        %v2965 = vadd.f32 %v2867, %v2933
        %v2966 = vadd.f32 %v2868, %v2934
        %v2967 = vadd.f32 %v2869, %v2935
        %v2968 = vadd.f32 %v2870, %v2936
        %v2969 = vadd.f32 %v2871, %v2937
        %v2970 = vadd.f32 %v2872, %v2938
        %v2971 = vadd.f32 %v2873, %v2939
        %v2972 = vadd.f32 %v2874, %v2940
        %v2973 = vadd.f32 %v2875, %v2941
        %v2974 = vadd.f32 %v2876, %v2942
        %v2975 = vadd.f32 %v2877, %v2943
        %v2976 = vadd.f32 %v2878, %v2944
        %v2977 = vadd.f32 %v2879, %v2945
        %v2978 = vadd.f32 %v2880, %v2946
        %v2979 = vadd.f32 %v2881, %v2947
        %v2980 = vadd.f32 %v2882, %v2948
        %v2981 = vadd.f32 %v2883, %v2949
        %v2982 = vadd.f32 %v2884, %v2950
        %v2983 = vadd.f32 %v2885, %v2951
        %v2984 = vadd.f32 %v2886, %v2952
        %v2985 = vadd.f32 %v2887, %v2953
        %v2986 = vadd.f32 %v2888, %v2954
        %v2987 = vadd.f32 %v2889, %v2955
        %v2988 = vadd.f32 %v2890, %v2956
        %v2989 = vadd.f32 %v2891, %v2957
        %v2990 = vadd.f32 %v2892, %v2958
        %v2991 = vadd.f32 %v2893, %v2959
        %v2992 = vld [vmem:[%s2894 + $0x8] sm:$0xff]
        %v2993 = vld [vmem:[%s2894 + $0x10] sm:$0xff]
        %v2994 = vld [vmem:[%s2894 + $0x28] sm:$0xff]
        %v2995 = vld [vmem:[%s2894 + $0x30] sm:$0xff]
        %v2996 = vld [vmem:[%s2894 + $0x48] sm:$0xff]
        %v2997 = vld [vmem:[%s2894 + $0x50] sm:$0xff]
        %v2998 = vld [vmem:[%s2894 + $0x68] sm:$0xff]
        %v2999 = vld [vmem:[%s2894 + $0x70] sm:$0xff]
        %v3000 = vld [vmem:[%s2894 + $0x88] sm:$0xff]
        %v3001 = vld [vmem:[%s2894 + $0x90] sm:$0xff]
        %v3002 = vld [vmem:[%s2894 + $0xa8] sm:$0xff]
        %v3003 = vld [vmem:[%s2894 + $0xb0] sm:$0xff]
        %v3004 = vld [vmem:[%s2894 + $0xc8] sm:$0xff]
        %v3005 = vld [vmem:[%s2894 + $0xd0] sm:$0xff]
        %v3006 = vld [vmem:[%s2894 + $0xe8] sm:$0xff]
        %v3007 = vld [vmem:[%s2894 + $0xf0] sm:$0xff]
        %v3008 = vld [vmem:[%s2894 + $0x108] sm:$0xff]
        %v3009 = vld [vmem:[%s2894 + $0x110] sm:$0xff]
        %v3010 = vld [vmem:[%s2894 + $0x128] sm:$0xff]
        %v3011 = vld [vmem:[%s2894 + $0x130] sm:$0xff]
        %v3012 = vld [vmem:[%s2894 + $0x148] sm:$0xff]
        %v3013 = vld [vmem:[%s2894 + $0x150] sm:$0xff]
        %v3014 = vld [vmem:[%s2894 + $0x168] sm:$0xff]
        %v3015 = vld [vmem:[%s2894 + $0x170] sm:$0xff]
        %v3016 = vld [vmem:[%s2894 + $0x188] sm:$0xff]
        %v3017 = vld [vmem:[%s2894 + $0x190] sm:$0xff]
        %v3018 = vld [vmem:[%s2894 + $0x1a8] sm:$0xff]
        %v3019 = vld [vmem:[%s2894 + $0x1b0] sm:$0xff]
        %v3020 = vld [vmem:[%s2894 + $0x1c8] sm:$0xff]
        %v3021 = vld [vmem:[%s2894 + $0x1d0] sm:$0xff]
        %v3022 = vld [vmem:[%s2894 + $0x1e8] sm:$0xff]
        %v3023 = vld [vmem:[%s2894 + $0x1f0] sm:$0xff]
        %v3024 = vperm.slane %v2633, 1
        %v3025 = vmul.f32 %v2992, %v3024
        %v3026 = vmul.f32 %v2993, %v3024
        %v3027 = vmul.f32 %v2994, %v3024
        %v3028 = vmul.f32 %v2995, %v3024
        %v3029 = vmul.f32 %v2996, %v3024
        %v3030 = vmul.f32 %v2997, %v3024
        %v3031 = vmul.f32 %v2998, %v3024
        %v3032 = vmul.f32 %v2999, %v3024
        %v3033 = vmul.f32 %v3000, %v3024
        %v3034 = vmul.f32 %v3001, %v3024
        %v3035 = vmul.f32 %v3002, %v3024
        %v3036 = vmul.f32 %v3003, %v3024
        %v3037 = vmul.f32 %v3004, %v3024
        %v3038 = vmul.f32 %v3005, %v3024
        %v3039 = vmul.f32 %v3006, %v3024
        %v3040 = vmul.f32 %v3007, %v3024
        %v3041 = vmul.f32 %v3008, %v3024
        %v3042 = vmul.f32 %v3009, %v3024
        %v3043 = vmul.f32 %v3010, %v3024
        %v3044 = vmul.f32 %v3011, %v3024
        %v3045 = vmul.f32 %v3012, %v3024
        %v3046 = vmul.f32 %v3013, %v3024
        %v3047 = vmul.f32 %v3014, %v3024
        %v3048 = vmul.f32 %v3015, %v3024
        %v3049 = vmul.f32 %v3016, %v3024
        %v3050 = vmul.f32 %v3017, %v3024
        %v3051 = vmul.f32 %v3018, %v3024
        %v3052 = vmul.f32 %v3019, %v3024
        %v3053 = vmul.f32 %v3020, %v3024
        %v3054 = vmul.f32 %v3021, %v3024
        %v3055 = vmul.f32 %v3022, %v3024
        %v3056 = vmul.f32 %v3023, %v3024
        %v3057 = vadd.f32 %v2960, %v3025
        %v3058 = vadd.f32 %v2961, %v3026
        %v3059 = vadd.f32 %v2962, %v3027
        %v3060 = vadd.f32 %v2963, %v3028
        %v3061 = vadd.f32 %v2964, %v3029
        %v3062 = vadd.f32 %v2965, %v3030
        %v3063 = vadd.f32 %v2966, %v3031
        %v3064 = vadd.f32 %v2967, %v3032
        %v3065 = vadd.f32 %v2968, %v3033
        %v3066 = vadd.f32 %v2969, %v3034
        %v3067 = vadd.f32 %v2970, %v3035
        %v3068 = vadd.f32 %v2971, %v3036
        %v3069 = vadd.f32 %v2972, %v3037
        %v3070 = vadd.f32 %v2973, %v3038
        %v3071 = vadd.f32 %v2974, %v3039
        %v3072 = vadd.f32 %v2975, %v3040
        %v3073 = vadd.f32 %v2976, %v3041
        %v3074 = vadd.f32 %v2977, %v3042
        %v3075 = vadd.f32 %v2978, %v3043
        %v3076 = vadd.f32 %v2979, %v3044
        %v3077 = vadd.f32 %v2980, %v3045
        %v3078 = vadd.f32 %v2981, %v3046
        %v3079 = vadd.f32 %v2982, %v3047
        %v3080 = vadd.f32 %v2983, %v3048
        %v3081 = vadd.f32 %v2984, %v3049
        %v3082 = vadd.f32 %v2985, %v3050
        %v3083 = vadd.f32 %v2986, %v3051
        %v3084 = vadd.f32 %v2987, %v3052
        %v3085 = vadd.f32 %v2988, %v3053
        %v3086 = vadd.f32 %v2989, %v3054
        %v3087 = vadd.f32 %v2990, %v3055
        %v3088 = vadd.f32 %v2991, %v3056
        %v3089 = vld [vmem:[%s2894 + $0xb] sm:$0xff]
        %v3090 = vld [vmem:[%s2894 + $0x13] sm:$0xff]
        %v3091 = vld [vmem:[%s2894 + $0x2b] sm:$0xff]
        %v3092 = vld [vmem:[%s2894 + $0x33] sm:$0xff]
        %v3093 = vld [vmem:[%s2894 + $0x4b] sm:$0xff]
        %v3094 = vld [vmem:[%s2894 + $0x53] sm:$0xff]
        %v3095 = vld [vmem:[%s2894 + $0x6b] sm:$0xff]
        %v3096 = vld [vmem:[%s2894 + $0x73] sm:$0xff]
        %v3097 = vld [vmem:[%s2894 + $0x8b] sm:$0xff]
        %v3098 = vld [vmem:[%s2894 + $0x93] sm:$0xff]
        %v3099 = vld [vmem:[%s2894 + $0xab] sm:$0xff]
        %v3100 = vld [vmem:[%s2894 + $0xb3] sm:$0xff]
        %v3101 = vld [vmem:[%s2894 + $0xcb] sm:$0xff]
        %v3102 = vld [vmem:[%s2894 + $0xd3] sm:$0xff]
        %v3103 = vld [vmem:[%s2894 + $0xeb] sm:$0xff]
        %v3104 = vld [vmem:[%s2894 + $0xf3] sm:$0xff]
        %v3105 = vld [vmem:[%s2894 + $0x10b] sm:$0xff]
        %v3106 = vld [vmem:[%s2894 + $0x113] sm:$0xff]
        %v3107 = vld [vmem:[%s2894 + $0x12b] sm:$0xff]
        %v3108 = vld [vmem:[%s2894 + $0x133] sm:$0xff]
        %v3109 = vld [vmem:[%s2894 + $0x14b] sm:$0xff]
        %v3110 = vld [vmem:[%s2894 + $0x153] sm:$0xff]
        %v3111 = vld [vmem:[%s2894 + $0x16b] sm:$0xff]
        %v3112 = vld [vmem:[%s2894 + $0x173] sm:$0xff]
        %v3113 = vld [vmem:[%s2894 + $0x18b] sm:$0xff]
        %v3114 = vld [vmem:[%s2894 + $0x193] sm:$0xff]
        %v3115 = vld [vmem:[%s2894 + $0x1ab] sm:$0xff]
        %v3116 = vld [vmem:[%s2894 + $0x1b3] sm:$0xff]
        %v3117 = vld [vmem:[%s2894 + $0x1cb] sm:$0xff]
        %v3118 = vld [vmem:[%s2894 + $0x1d3] sm:$0xff]
        %v3119 = vld [vmem:[%s2894 + $0x1eb] sm:$0xff]
        %v3120 = vld [vmem:[%s2894 + $0x1f3] sm:$0xff]
        %v3121 = vperm.slane %v2633, 2
        %v3122 = vmul.f32 %v3089, %v3121
        %v3123 = vmul.f32 %v3090, %v3121
        %v3124 = vmul.f32 %v3091, %v3121
        %v3125 = vmul.f32 %v3092, %v3121
        %v3126 = vmul.f32 %v3093, %v3121
        %v3127 = vmul.f32 %v3094, %v3121
        %v3128 = vmul.f32 %v3095, %v3121
        %v3129 = vmul.f32 %v3096, %v3121
        %v3130 = vmul.f32 %v3097, %v3121
        %v3131 = vmul.f32 %v3098, %v3121
        %v3132 = vmul.f32 %v3099, %v3121
        %v3133 = vmul.f32 %v3100, %v3121
        %v3134 = vmul.f32 %v3101, %v3121
        %v3135 = vmul.f32 %v3102, %v3121
        %v3136 = vmul.f32 %v3103, %v3121
        %v3137 = vmul.f32 %v3104, %v3121
        %v3138 = vmul.f32 %v3105, %v3121
        %v3139 = vmul.f32 %v3106, %v3121
        %v3140 = vmul.f32 %v3107, %v3121
        %v3141 = vmul.f32 %v3108, %v3121
        %v3142 = vmul.f32 %v3109, %v3121
        %v3143 = vmul.f32 %v3110, %v3121
        %v3144 = vmul.f32 %v3111, %v3121
        %v3145 = vmul.f32 %v3112, %v3121
        %v3146 = vmul.f32 %v3113, %v3121
        %v3147 = vmul.f32 %v3114, %v3121
        %v3148 = vmul.f32 %v3115, %v3121
        %v3149 = vmul.f32 %v3116, %v3121
        %v3150 = vmul.f32 %v3117, %v3121
        %v3151 = vmul.f32 %v3118, %v3121
        %v3152 = vmul.f32 %v3119, %v3121
        %v3153 = vmul.f32 %v3120, %v3121
        %v3154 = vadd.f32 %v3057, %v3122
        %v3155 = vadd.f32 %v3058, %v3123
        %v3156 = vadd.f32 %v3059, %v3124
        %v3157 = vadd.f32 %v3060, %v3125
        %v3158 = vadd.f32 %v3061, %v3126
        %v3159 = vadd.f32 %v3062, %v3127
        %v3160 = vadd.f32 %v3063, %v3128
        %v3161 = vadd.f32 %v3064, %v3129
        %v3162 = vadd.f32 %v3065, %v3130
        %v3163 = vadd.f32 %v3066, %v3131
        %v3164 = vadd.f32 %v3067, %v3132
        %v3165 = vadd.f32 %v3068, %v3133
        %v3166 = vadd.f32 %v3069, %v3134
        %v3167 = vadd.f32 %v3070, %v3135
        %v3168 = vadd.f32 %v3071, %v3136
        %v3169 = vadd.f32 %v3072, %v3137
        %v3170 = vadd.f32 %v3073, %v3138
        %v3171 = vadd.f32 %v3074, %v3139
        %v3172 = vadd.f32 %v3075, %v3140
        %v3173 = vadd.f32 %v3076, %v3141
        %v3174 = vadd.f32 %v3077, %v3142
        %v3175 = vadd.f32 %v3078, %v3143
        %v3176 = vadd.f32 %v3079, %v3144
        %v3177 = vadd.f32 %v3080, %v3145
        %v3178 = vadd.f32 %v3081, %v3146
        %v3179 = vadd.f32 %v3082, %v3147
        %v3180 = vadd.f32 %v3083, %v3148
        %v3181 = vadd.f32 %v3084, %v3149
        %v3182 = vadd.f32 %v3085, %v3150
        %v3183 = vadd.f32 %v3086, %v3151
        %v3184 = vadd.f32 %v3087, %v3152
        %v3185 = vadd.f32 %v3088, %v3153
        %s3186 = scalar_lea.vmem [#allocation3], 192
        %v3187 = vld [vmem:[%s3186 + $0x5] sm:$0xff]
        %v3188 = vld [vmem:[%s3186 + $0xd] sm:$0xff]
        %v3189 = vld [vmem:[%s3186 + $0x25] sm:$0xff]
        %v3190 = vld [vmem:[%s3186 + $0x2d] sm:$0xff]
        %v3191 = vld [vmem:[%s3186 + $0x45] sm:$0xff]
        %v3192 = vld [vmem:[%s3186 + $0x4d] sm:$0xff]
        %v3193 = vld [vmem:[%s3186 + $0x65] sm:$0xff]
        %v3194 = vld [vmem:[%s3186 + $0x6d] sm:$0xff]
        %v3195 = vld [vmem:[%s3186 + $0x85] sm:$0xff]
        %v3196 = vld [vmem:[%s3186 + $0x8d] sm:$0xff]
        %v3197 = vld [vmem:[%s3186 + $0xa5] sm:$0xff]
        %v3198 = vld [vmem:[%s3186 + $0xad] sm:$0xff]
        %v3199 = vld [vmem:[%s3186 + $0xc5] sm:$0xff]
        %v3200 = vld [vmem:[%s3186 + $0xcd] sm:$0xff]
        %v3201 = vld [vmem:[%s3186 + $0xe5] sm:$0xff]
        %v3202 = vld [vmem:[%s3186 + $0xed] sm:$0xff]
        %v3203 = vld [vmem:[%s3186 + $0x105] sm:$0xff]
        %v3204 = vld [vmem:[%s3186 + $0x10d] sm:$0xff]
        %v3205 = vld [vmem:[%s3186 + $0x125] sm:$0xff]
        %v3206 = vld [vmem:[%s3186 + $0x12d] sm:$0xff]
        %v3207 = vld [vmem:[%s3186 + $0x145] sm:$0xff]
        %v3208 = vld [vmem:[%s3186 + $0x14d] sm:$0xff]
        %v3209 = vld [vmem:[%s3186 + $0x165] sm:$0xff]
        %v3210 = vld [vmem:[%s3186 + $0x16d] sm:$0xff]
        %v3211 = vld [vmem:[%s3186 + $0x185] sm:$0xff]
        %v3212 = vld [vmem:[%s3186 + $0x18d] sm:$0xff]
        %v3213 = vld [vmem:[%s3186 + $0x1a5] sm:$0xff]
        %v3214 = vld [vmem:[%s3186 + $0x1ad] sm:$0xff]
        %v3215 = vld [vmem:[%s3186 + $0x1c5] sm:$0xff]
        %v3216 = vld [vmem:[%s3186 + $0x1cd] sm:$0xff]
        %v3217 = vld [vmem:[%s3186 + $0x1e5] sm:$0xff]
        %v3218 = vld [vmem:[%s3186 + $0x1ed] sm:$0xff]
        %v3219 = vperm.slane %v2634, 0
        %v3220 = vmul.f32 %v3187, %v3219
        %v3221 = vmul.f32 %v3188, %v3219
        %v3222 = vmul.f32 %v3189, %v3219
        %v3223 = vmul.f32 %v3190, %v3219
        %v3224 = vmul.f32 %v3191, %v3219
        %v3225 = vmul.f32 %v3192, %v3219
        %v3226 = vmul.f32 %v3193, %v3219
        %v3227 = vmul.f32 %v3194, %v3219
        %v3228 = vmul.f32 %v3195, %v3219
        %v3229 = vmul.f32 %v3196, %v3219
        %v3230 = vmul.f32 %v3197, %v3219
        %v3231 = vmul.f32 %v3198, %v3219
        %v3232 = vmul.f32 %v3199, %v3219
        %v3233 = vmul.f32 %v3200, %v3219
        %v3234 = vmul.f32 %v3201, %v3219
        %v3235 = vmul.f32 %v3202, %v3219
        %v3236 = vmul.f32 %v3203, %v3219
        %v3237 = vmul.f32 %v3204, %v3219
        %v3238 = vmul.f32 %v3205, %v3219
        %v3239 = vmul.f32 %v3206, %v3219
        %v3240 = vmul.f32 %v3207, %v3219
        %v3241 = vmul.f32 %v3208, %v3219
        %v3242 = vmul.f32 %v3209, %v3219
        %v3243 = vmul.f32 %v3210, %v3219
        %v3244 = vmul.f32 %v3211, %v3219
        %v3245 = vmul.f32 %v3212, %v3219
        %v3246 = vmul.f32 %v3213, %v3219
        %v3247 = vmul.f32 %v3214, %v3219
        %v3248 = vmul.f32 %v3215, %v3219
        %v3249 = vmul.f32 %v3216, %v3219
        %v3250 = vmul.f32 %v3217, %v3219
        %v3251 = vmul.f32 %v3218, %v3219
        %v3252 = vadd.f32 %v3154, %v3220
        %v3253 = vadd.f32 %v3155, %v3221
        %v3254 = vadd.f32 %v3156, %v3222
        %v3255 = vadd.f32 %v3157, %v3223
        %v3256 = vadd.f32 %v3158, %v3224
        %v3257 = vadd.f32 %v3159, %v3225
        %v3258 = vadd.f32 %v3160, %v3226
        %v3259 = vadd.f32 %v3161, %v3227
        %v3260 = vadd.f32 %v3162, %v3228
        %v3261 = vadd.f32 %v3163, %v3229
        %v3262 = vadd.f32 %v3164, %v3230
        %v3263 = vadd.f32 %v3165, %v3231
        %v3264 = vadd.f32 %v3166, %v3232
        %v3265 = vadd.f32 %v3167, %v3233
        %v3266 = vadd.f32 %v3168, %v3234
        %v3267 = vadd.f32 %v3169, %v3235
        %v3268 = vadd.f32 %v3170, %v3236
        %v3269 = vadd.f32 %v3171, %v3237
        %v3270 = vadd.f32 %v3172, %v3238
        %v3271 = vadd.f32 %v3173, %v3239
        %v3272 = vadd.f32 %v3174, %v3240
        %v3273 = vadd.f32 %v3175, %v3241
        %v3274 = vadd.f32 %v3176, %v3242
        %v3275 = vadd.f32 %v3177, %v3243
        %v3276 = vadd.f32 %v3178, %v3244
        %v3277 = vadd.f32 %v3179, %v3245
        %v3278 = vadd.f32 %v3180, %v3246
        %v3279 = vadd.f32 %v3181, %v3247
        %v3280 = vadd.f32 %v3182, %v3248
        %v3281 = vadd.f32 %v3183, %v3249
        %v3282 = vadd.f32 %v3184, %v3250
        %v3283 = vadd.f32 %v3185, %v3251
        %v3284 = vld [vmem:[%s3186 + $0x8] sm:$0xff]
        %v3285 = vld [vmem:[%s3186 + $0x10] sm:$0xff]
        %v3286 = vld [vmem:[%s3186 + $0x28] sm:$0xff]
        %v3287 = vld [vmem:[%s3186 + $0x30] sm:$0xff]
        %v3288 = vld [vmem:[%s3186 + $0x48] sm:$0xff]
        %v3289 = vld [vmem:[%s3186 + $0x50] sm:$0xff]
        %v3290 = vld [vmem:[%s3186 + $0x68] sm:$0xff]
        %v3291 = vld [vmem:[%s3186 + $0x70] sm:$0xff]
        %v3292 = vld [vmem:[%s3186 + $0x88] sm:$0xff]
        %v3293 = vld [vmem:[%s3186 + $0x90] sm:$0xff]
        %v3294 = vld [vmem:[%s3186 + $0xa8] sm:$0xff]
        %v3295 = vld [vmem:[%s3186 + $0xb0] sm:$0xff]
        %v3296 = vld [vmem:[%s3186 + $0xc8] sm:$0xff]
        %v3297 = vld [vmem:[%s3186 + $0xd0] sm:$0xff]
        %v3298 = vld [vmem:[%s3186 + $0xe8] sm:$0xff]
        %v3299 = vld [vmem:[%s3186 + $0xf0] sm:$0xff]
        %v3300 = vld [vmem:[%s3186 + $0x108] sm:$0xff]
        %v3301 = vld [vmem:[%s3186 + $0x110] sm:$0xff]
        %v3302 = vld [vmem:[%s3186 + $0x128] sm:$0xff]
        %v3303 = vld [vmem:[%s3186 + $0x130] sm:$0xff]
        %v3304 = vld [vmem:[%s3186 + $0x148] sm:$0xff]
        %v3305 = vld [vmem:[%s3186 + $0x150] sm:$0xff]
        %v3306 = vld [vmem:[%s3186 + $0x168] sm:$0xff]
        %v3307 = vld [vmem:[%s3186 + $0x170] sm:$0xff]
        %v3308 = vld [vmem:[%s3186 + $0x188] sm:$0xff]
        %v3309 = vld [vmem:[%s3186 + $0x190] sm:$0xff]
        %v3310 = vld [vmem:[%s3186 + $0x1a8] sm:$0xff]
        %v3311 = vld [vmem:[%s3186 + $0x1b0] sm:$0xff]
        %v3312 = vld [vmem:[%s3186 + $0x1c8] sm:$0xff]
        %v3313 = vld [vmem:[%s3186 + $0x1d0] sm:$0xff]
        %v3314 = vld [vmem:[%s3186 + $0x1e8] sm:$0xff]
        %v3315 = vld [vmem:[%s3186 + $0x1f0] sm:$0xff]
        %v3316 = vperm.slane %v2634, 1
        %v3317 = vmul.f32 %v3284, %v3316
        %v3318 = vmul.f32 %v3285, %v3316
        %v3319 = vmul.f32 %v3286, %v3316
        %v3320 = vmul.f32 %v3287, %v3316
        %v3321 = vmul.f32 %v3288, %v3316
        %v3322 = vmul.f32 %v3289, %v3316
        %v3323 = vmul.f32 %v3290, %v3316
        %v3324 = vmul.f32 %v3291, %v3316
        %v3325 = vmul.f32 %v3292, %v3316
        %v3326 = vmul.f32 %v3293, %v3316
        %v3327 = vmul.f32 %v3294, %v3316
        %v3328 = vmul.f32 %v3295, %v3316
        %v3329 = vmul.f32 %v3296, %v3316
        %v3330 = vmul.f32 %v3297, %v3316
        %v3331 = vmul.f32 %v3298, %v3316
        %v3332 = vmul.f32 %v3299, %v3316
        %v3333 = vmul.f32 %v3300, %v3316
        %v3334 = vmul.f32 %v3301, %v3316
        %v3335 = vmul.f32 %v3302, %v3316
        %v3336 = vmul.f32 %v3303, %v3316
        %v3337 = vmul.f32 %v3304, %v3316
        %v3338 = vmul.f32 %v3305, %v3316
        %v3339 = vmul.f32 %v3306, %v3316
        %v3340 = vmul.f32 %v3307, %v3316
        %v3341 = vmul.f32 %v3308, %v3316
        %v3342 = vmul.f32 %v3309, %v3316
        %v3343 = vmul.f32 %v3310, %v3316
        %v3344 = vmul.f32 %v3311, %v3316
        %v3345 = vmul.f32 %v3312, %v3316
        %v3346 = vmul.f32 %v3313, %v3316
        %v3347 = vmul.f32 %v3314, %v3316
        %v3348 = vmul.f32 %v3315, %v3316
        %v3349 = vadd.f32 %v3252, %v3317
        %v3350 = vadd.f32 %v3253, %v3318
        %v3351 = vadd.f32 %v3254, %v3319
        %v3352 = vadd.f32 %v3255, %v3320
        %v3353 = vadd.f32 %v3256, %v3321
        %v3354 = vadd.f32 %v3257, %v3322
        %v3355 = vadd.f32 %v3258, %v3323
        %v3356 = vadd.f32 %v3259, %v3324
        %v3357 = vadd.f32 %v3260, %v3325
        %v3358 = vadd.f32 %v3261, %v3326
        %v3359 = vadd.f32 %v3262, %v3327
        %v3360 = vadd.f32 %v3263, %v3328
        %v3361 = vadd.f32 %v3264, %v3329
        %v3362 = vadd.f32 %v3265, %v3330
        %v3363 = vadd.f32 %v3266, %v3331
        %v3364 = vadd.f32 %v3267, %v3332
        %v3365 = vadd.f32 %v3268, %v3333
        %v3366 = vadd.f32 %v3269, %v3334
        %v3367 = vadd.f32 %v3270, %v3335
        %v3368 = vadd.f32 %v3271, %v3336
        %v3369 = vadd.f32 %v3272, %v3337
        %v3370 = vadd.f32 %v3273, %v3338
        %v3371 = vadd.f32 %v3274, %v3339
        %v3372 = vadd.f32 %v3275, %v3340
        %v3373 = vadd.f32 %v3276, %v3341
        %v3374 = vadd.f32 %v3277, %v3342
        %v3375 = vadd.f32 %v3278, %v3343
        %v3376 = vadd.f32 %v3279, %v3344
        %v3377 = vadd.f32 %v3280, %v3345
        %v3378 = vadd.f32 %v3281, %v3346
        %v3379 = vadd.f32 %v3282, %v3347
        %v3380 = vadd.f32 %v3283, %v3348
        %v3381 = vld [vmem:[%s3186 + $0xb] sm:$0xff]
        %v3382 = vld [vmem:[%s3186 + $0x13] sm:$0xff]
        %v3383 = vld [vmem:[%s3186 + $0x2b] sm:$0xff]
        %v3384 = vld [vmem:[%s3186 + $0x33] sm:$0xff]
        %v3385 = vld [vmem:[%s3186 + $0x4b] sm:$0xff]
        %v3386 = vld [vmem:[%s3186 + $0x53] sm:$0xff]
        %v3387 = vld [vmem:[%s3186 + $0x6b] sm:$0xff]
        %v3388 = vld [vmem:[%s3186 + $0x73] sm:$0xff]
        %v3389 = vld [vmem:[%s3186 + $0x8b] sm:$0xff]
        %v3390 = vld [vmem:[%s3186 + $0x93] sm:$0xff]
        %v3391 = vld [vmem:[%s3186 + $0xab] sm:$0xff]
        %v3392 = vld [vmem:[%s3186 + $0xb3] sm:$0xff]
        %v3393 = vld [vmem:[%s3186 + $0xcb] sm:$0xff]
        %v3394 = vld [vmem:[%s3186 + $0xd3] sm:$0xff]
        %v3395 = vld [vmem:[%s3186 + $0xeb] sm:$0xff]
        %v3396 = vld [vmem:[%s3186 + $0xf3] sm:$0xff]
        %v3397 = vld [vmem:[%s3186 + $0x10b] sm:$0xff]
        %v3398 = vld [vmem:[%s3186 + $0x113] sm:$0xff]
        %v3399 = vld [vmem:[%s3186 + $0x12b] sm:$0xff]
        %v3400 = vld [vmem:[%s3186 + $0x133] sm:$0xff]
        %v3401 = vld [vmem:[%s3186 + $0x14b] sm:$0xff]
        %v3402 = vld [vmem:[%s3186 + $0x153] sm:$0xff]
        %v3403 = vld [vmem:[%s3186 + $0x16b] sm:$0xff]
        %v3404 = vld [vmem:[%s3186 + $0x173] sm:$0xff]
        %v3405 = vld [vmem:[%s3186 + $0x18b] sm:$0xff]
        %v3406 = vld [vmem:[%s3186 + $0x193] sm:$0xff]
        %v3407 = vld [vmem:[%s3186 + $0x1ab] sm:$0xff]
        %v3408 = vld [vmem:[%s3186 + $0x1b3] sm:$0xff]
        %v3409 = vld [vmem:[%s3186 + $0x1cb] sm:$0xff]
        %v3410 = vld [vmem:[%s3186 + $0x1d3] sm:$0xff]
        %v3411 = vld [vmem:[%s3186 + $0x1eb] sm:$0xff]
        %v3412 = vld [vmem:[%s3186 + $0x1f3] sm:$0xff]
        %v3413 = vperm.slane %v2634, 2
        %v3414 = vmul.f32 %v3381, %v3413
        %v3415 = vmul.f32 %v3382, %v3413
        %v3416 = vmul.f32 %v3383, %v3413
        %v3417 = vmul.f32 %v3384, %v3413
        %v3418 = vmul.f32 %v3385, %v3413
        %v3419 = vmul.f32 %v3386, %v3413
        %v3420 = vmul.f32 %v3387, %v3413
        %v3421 = vmul.f32 %v3388, %v3413
        %v3422 = vmul.f32 %v3389, %v3413
        %v3423 = vmul.f32 %v3390, %v3413
        %v3424 = vmul.f32 %v3391, %v3413
        %v3425 = vmul.f32 %v3392, %v3413
        %v3426 = vmul.f32 %v3393, %v3413
        %v3427 = vmul.f32 %v3394, %v3413
        %v3428 = vmul.f32 %v3395, %v3413
        %v3429 = vmul.f32 %v3396, %v3413
        %v3430 = vmul.f32 %v3397, %v3413
        %v3431 = vmul.f32 %v3398, %v3413
        %v3432 = vmul.f32 %v3399, %v3413
        %v3433 = vmul.f32 %v3400, %v3413
        %v3434 = vmul.f32 %v3401, %v3413
        %v3435 = vmul.f32 %v3402, %v3413
        %v3436 = vmul.f32 %v3403, %v3413
        %v3437 = vmul.f32 %v3404, %v3413
        %v3438 = vmul.f32 %v3405, %v3413
        %v3439 = vmul.f32 %v3406, %v3413
        %v3440 = vmul.f32 %v3407, %v3413
        %v3441 = vmul.f32 %v3408, %v3413
        %v3442 = vmul.f32 %v3409, %v3413
        %v3443 = vmul.f32 %v3410, %v3413
        %v3444 = vmul.f32 %v3411, %v3413
        %v3445 = vmul.f32 %v3412, %v3413
        %v3446 = vadd.f32 %v3349, %v3414
        %v3447 = vadd.f32 %v3350, %v3415
        %v3448 = vadd.f32 %v3351, %v3416
        %v3449 = vadd.f32 %v3352, %v3417
        %v3450 = vadd.f32 %v3353, %v3418
        %v3451 = vadd.f32 %v3354, %v3419
        %v3452 = vadd.f32 %v3355, %v3420
        %v3453 = vadd.f32 %v3356, %v3421
        %v3454 = vadd.f32 %v3357, %v3422
        %v3455 = vadd.f32 %v3358, %v3423
        %v3456 = vadd.f32 %v3359, %v3424
        %v3457 = vadd.f32 %v3360, %v3425
        %v3458 = vadd.f32 %v3361, %v3426
        %v3459 = vadd.f32 %v3362, %v3427
        %v3460 = vadd.f32 %v3363, %v3428
        %v3461 = vadd.f32 %v3364, %v3429
        %v3462 = vadd.f32 %v3365, %v3430
        %v3463 = vadd.f32 %v3366, %v3431
        %v3464 = vadd.f32 %v3367, %v3432
        %v3465 = vadd.f32 %v3368, %v3433
        %v3466 = vadd.f32 %v3369, %v3434
        %v3467 = vadd.f32 %v3370, %v3435
        %v3468 = vadd.f32 %v3371, %v3436
        %v3469 = vadd.f32 %v3372, %v3437
        %v3470 = vadd.f32 %v3373, %v3438
        %v3471 = vadd.f32 %v3374, %v3439
        %v3472 = vadd.f32 %v3375, %v3440
        %v3473 = vadd.f32 %v3376, %v3441
        %v3474 = vadd.f32 %v3377, %v3442
        %v3475 = vadd.f32 %v3378, %v3443
        %v3476 = vadd.f32 %v3379, %v3444
        %v3477 = vadd.f32 %v3380, %v3445
        %v3478 = vld [vmem:[%s4] sm:$0x1]
        %v3480 = vperm.slane %v3478, 0
        %v3482 = vadd.f32 %v3446, %v3480
        %v3483 = vadd.f32 %v3447, %v3480
        %v3484 = vadd.f32 %v3448, %v3480
        %v3485 = vadd.f32 %v3449, %v3480
        %v3486 = vadd.f32 %v3450, %v3480
        %v3487 = vadd.f32 %v3451, %v3480
        %v3488 = vadd.f32 %v3452, %v3480
        %v3489 = vadd.f32 %v3453, %v3480
        %v3490 = vadd.f32 %v3454, %v3480
        %v3491 = vadd.f32 %v3455, %v3480
        %v3492 = vadd.f32 %v3456, %v3480
        %v3493 = vadd.f32 %v3457, %v3480
        %v3494 = vadd.f32 %v3458, %v3480
        %v3495 = vadd.f32 %v3459, %v3480
        %v3496 = vadd.f32 %v3460, %v3480
        %v3497 = vadd.f32 %v3461, %v3480
        %v3498 = vadd.f32 %v3462, %v3480
        %v3499 = vadd.f32 %v3463, %v3480
        %v3500 = vadd.f32 %v3464, %v3480
        %v3501 = vadd.f32 %v3465, %v3480
        %v3502 = vadd.f32 %v3466, %v3480
        %v3503 = vadd.f32 %v3467, %v3480
        %v3504 = vadd.f32 %v3468, %v3480
        %v3505 = vadd.f32 %v3469, %v3480
        %v3506 = vadd.f32 %v3470, %v3480
        %v3507 = vadd.f32 %v3471, %v3480
        %v3508 = vadd.f32 %v3472, %v3480
        %v3509 = vadd.f32 %v3473, %v3480
        %v3510 = vadd.f32 %v3474, %v3480
        %v3511 = vadd.f32 %v3475, %v3480
        %v3512 = vadd.f32 %v3476, %v3480
        %v3513 = vadd.f32 %v3477, %v3480
        %3514 = vst [vmem:[#allocation4] sm:$0xff] %v3482
        %3515 = vst [vmem:[#allocation4 + $0x8] sm:$0xff] %v3483
        %3516 = vst [vmem:[#allocation4 + $0x10] sm:$0xff] %v3484
        %3517 = vst [vmem:[#allocation4 + $0x18] sm:$0xff] %v3485
        %3518 = vst [vmem:[#allocation4 + $0x20] sm:$0xff] %v3486
        %3519 = vst [vmem:[#allocation4 + $0x28] sm:$0xff] %v3487
        %3520 = vst [vmem:[#allocation4 + $0x30] sm:$0xff] %v3488
        %3521 = vst [vmem:[#allocation4 + $0x38] sm:$0xff] %v3489
        %3522 = vst [vmem:[#allocation4 + $0x40] sm:$0xff] %v3490
        %3523 = vst [vmem:[#allocation4 + $0x48] sm:$0xff] %v3491
        %3524 = vst [vmem:[#allocation4 + $0x50] sm:$0xff] %v3492
        %3525 = vst [vmem:[#allocation4 + $0x58] sm:$0xff] %v3493
        %3526 = vst [vmem:[#allocation4 + $0x60] sm:$0xff] %v3494
        %3527 = vst [vmem:[#allocation4 + $0x68] sm:$0xff] %v3495
        %3528 = vst [vmem:[#allocation4 + $0x70] sm:$0xff] %v3496
        %3529 = vst [vmem:[#allocation4 + $0x78] sm:$0xff] %v3497
        %3530 = vst [vmem:[#allocation4 + $0x80] sm:$0xff] %v3498
        %3531 = vst [vmem:[#allocation4 + $0x88] sm:$0xff] %v3499
        %3532 = vst [vmem:[#allocation4 + $0x90] sm:$0xff] %v3500
        %3533 = vst [vmem:[#allocation4 + $0x98] sm:$0xff] %v3501
        %3534 = vst [vmem:[#allocation4 + $0xa0] sm:$0xff] %v3502
        %3535 = vst [vmem:[#allocation4 + $0xa8] sm:$0xff] %v3503
        %3536 = vst [vmem:[#allocation4 + $0xb0] sm:$0xff] %v3504
        %3537 = vst [vmem:[#allocation4 + $0xb8] sm:$0xff] %v3505
        %3538 = vst [vmem:[#allocation4 + $0xc0] sm:$0xff] %v3506
        %3539 = vst [vmem:[#allocation4 + $0xc8] sm:$0xff] %v3507
        %3540 = vst [vmem:[#allocation4 + $0xd0] sm:$0xff] %v3508
        %3541 = vst [vmem:[#allocation4 + $0xd8] sm:$0xff] %v3509
        %3542 = vst [vmem:[#allocation4 + $0xe0] sm:$0xff] %v3510
        %3543 = vst [vmem:[#allocation4 + $0xe8] sm:$0xff] %v3511
        %3544 = vst [vmem:[#allocation4 + $0xf0] sm:$0xff] %v3512
        %3545 = vst [vmem:[#allocation4 + $0xf8] sm:$0xff] %v3513
        %v3546 = vlaneseq
        %v3547 = vshrl.u32 %v3546, 7
        %v3548 = vadd.s32 %v3547, 8
        %v3549 = vlaneseq
        %v3550 = vand.u32 %v3549, 127
        %v3551 = vld [vmem:[#allocation4] sm:$0xff]
        %v3552 = vld [vmem:[#allocation4 + $0x8] sm:$0xff]
        %v3553 = vmax.f32 %v3551, %v3552
        %v3554 = vrot.slane %v3553, 4
        %v3555 = vmax.f32 %v3553, %v3554
        %v3556 = vrot.slane %v3555, 2
        %v3557 = vmax.f32 %v3555, %v3556
        %v3558 = vrot.slane %v3557, 1
        %v3559 = vmax.f32 %v3557, %v3558
        %v3560 = vadd.f32 %v3551, %v3552
        %v3561 = vrot.slane %v3560, 4
        %v3562 = vadd.f32 %v3560, %v3561
        %v3563 = vrot.slane %v3562, 2
        %v3564 = vadd.f32 %v3562, %v3563
        %v3565 = vrot.slane %v3564, 1
        %v3566 = vadd.f32 %v3564, %v3565
        %vm3567 = vcmp.eq.s32.totalorder %v3547, 0
        %vm3568 = vcmp.eq.s32.totalorder %v3548, 0
        %v3569 = vsel %vm3567, %v3559, 0.0
        %v3570 = vsel %vm3568, %v3559, 0.0
        %v3571 = vsel %vm3567, %v3566, 0.0
        %v3572 = vsel %vm3568, %v3566, 0.0
        %3573 = vmax.xlane.f32.xlu0 %v3551
        %v3574 = vpop.xlane.xlu0 %3573
        %3575 = vmax.xlane.f32.xlu0 %v3552
        %v3576 = vpop.xlane.xlu0 %3575
        %3577 = vadd.xlane.f32.xlu0 %v3551
        %v3578 = vpop.xlane.xlu0 %3577
        %3579 = vadd.xlane.f32.xlu0 %v3552
        %v3580 = vpop.xlane.xlu0 %3579
        %vm3581 = vcmp.eq.s32.totalorder %v3550, 0
        %v3582 = vsel %vm3581, %v3574, 0.0
        %v3583 = vsel %vm3581, %v3576, 0.0
        %v3584 = vsel %vm3581, %v3578, 0.0
        %v3585 = vsel %vm3581, %v3580, 0.0
        %s3586 = scalar_lea.vmem [#allocation4], 16
        %v3587 = vld [vmem:[%s3586] sm:$0xff]
        %v3588 = vld [vmem:[%s3586 + $0x8] sm:$0xff]
        %v3589 = vmax.f32 %v3551, %v3587
        %v3590 = vmax.f32 %v3552, %v3588
        %v3591 = vadd.f32 %v3551, %v3587
        %v3592 = vadd.f32 %v3552, %v3588
        %v3593 = vmax.f32 %v3587, %v3588
        %v3594 = vrot.slane %v3593, 4
        %v3595 = vmax.f32 %v3593, %v3594
        %v3596 = vrot.slane %v3595, 2
        %v3597 = vmax.f32 %v3595, %v3596
        %v3598 = vrot.slane %v3597, 1
        %v3599 = vmax.f32 %v3597, %v3598
        %v3600 = vadd.f32 %v3587, %v3588
        %v3601 = vrot.slane %v3600, 4
        %v3602 = vadd.f32 %v3600, %v3601
        %v3603 = vrot.slane %v3602, 2
        %v3604 = vadd.f32 %v3602, %v3603
        %v3605 = vrot.slane %v3604, 1
        %v3606 = vadd.f32 %v3604, %v3605
        %vm3607 = vcmp.eq.s32.totalorder %v3547, 1
        %vm3608 = vcmp.eq.s32.totalorder %v3548, 1
        %v3609 = vsel %vm3607, %v3599, %v3569
        %v3610 = vsel %vm3608, %v3599, %v3570
        %v3611 = vsel %vm3607, %v3606, %v3571
        %v3612 = vsel %vm3608, %v3606, %v3572
        %3613 = vmax.xlane.f32.xlu0 %v3587
        %v3614 = vpop.xlane.xlu0 %3613
        %3615 = vmax.xlane.f32.xlu0 %v3588
        %v3616 = vpop.xlane.xlu0 %3615
        %3617 = vadd.xlane.f32.xlu0 %v3587
        %v3618 = vpop.xlane.xlu0 %3617
        %3619 = vadd.xlane.f32.xlu0 %v3588
        %v3620 = vpop.xlane.xlu0 %3619
        %vm3621 = vcmp.eq.s32.totalorder %v3550, 1
        %v3622 = vsel %vm3621, %v3614, %v3582
        %v3623 = vsel %vm3621, %v3616, %v3583
        %v3624 = vsel %vm3621, %v3618, %v3584
        %v3625 = vsel %vm3621, %v3620, %v3585
        %s3626 = scalar_lea.vmem [#allocation4], 32
        %v3627 = vld [vmem:[%s3626] sm:$0xff]
        %v3628 = vld [vmem:[%s3626 + $0x8] sm:$0xff]
        %v3629 = vmax.f32 %v3589, %v3627
        %v3630 = vmax.f32 %v3590, %v3628
        %v3631 = vadd.f32 %v3591, %v3627
        %v3632 = vadd.f32 %v3592, %v3628
        %v3633 = vmax.f32 %v3627, %v3628
        %v3634 = vrot.slane %v3633, 4
        %v3635 = vmax.f32 %v3633, %v3634
        %v3636 = vrot.slane %v3635, 2
        %v3637 = vmax.f32 %v3635, %v3636
        %v3638 = vrot.slane %v3637, 1
        %v3639 = vmax.f32 %v3637, %v3638
        %v3640 = vadd.f32 %v3627, %v3628
        %v3641 = vrot.slane %v3640, 4
        %v3642 = vadd.f32 %v3640, %v3641
        %v3643 = vrot.slane %v3642, 2
        %v3644 = vadd.f32 %v3642, %v3643
        %v3645 = vrot.slane %v3644, 1
        %v3646 = vadd.f32 %v3644, %v3645
        %vm3647 = vcmp.eq.s32.totalorder %v3547, 2
        %vm3648 = vcmp.eq.s32.totalorder %v3548, 2
        %v3649 = vsel %vm3647, %v3639, %v3609
        %v3650 = vsel %vm3648, %v3639, %v3610
        %v3651 = vsel %vm3647, %v3646, %v3611
        %v3652 = vsel %vm3648, %v3646, %v3612
        %3653 = vmax.xlane.f32.xlu0 %v3627
        %v3654 = vpop.xlane.xlu0 %3653
        %3655 = vmax.xlane.f32.xlu0 %v3628
        %v3656 = vpop.xlane.xlu0 %3655
        %3657 = vadd.xlane.f32.xlu0 %v3627
        %v3658 = vpop.xlane.xlu0 %3657
        %3659 = vadd.xlane.f32.xlu0 %v3628
        %v3660 = vpop.xlane.xlu0 %3659
        %vm3661 = vcmp.eq.s32.totalorder %v3550, 2
        %v3662 = vsel %vm3661, %v3654, %v3622
        %v3663 = vsel %vm3661, %v3656, %v3623
        %v3664 = vsel %vm3661, %v3658, %v3624
        %v3665 = vsel %vm3661, %v3660, %v3625
        %s3666 = scalar_lea.vmem [#allocation4], 48
        %v3667 = vld [vmem:[%s3666] sm:$0xff]
        %v3668 = vld [vmem:[%s3666 + $0x8] sm:$0xff]
        %v3669 = vmax.f32 %v3629, %v3667
        %v3670 = vmax.f32 %v3630, %v3668
        %v3671 = vadd.f32 %v3631, %v3667
        %v3672 = vadd.f32 %v3632, %v3668
        %v3673 = vmax.f32 %v3667, %v3668
        %v3674 = vrot.slane %v3673, 4
        %v3675 = vmax.f32 %v3673, %v3674
        %v3676 = vrot.slane %v3675, 2
        %v3677 = vmax.f32 %v3675, %v3676
        %v3678 = vrot.slane %v3677, 1
        %v3679 = vmax.f32 %v3677, %v3678
        %v3680 = vadd.f32 %v3667, %v3668
        %v3681 = vrot.slane %v3680, 4
        %v3682 = vadd.f32 %v3680, %v3681
        %v3683 = vrot.slane %v3682, 2
        %v3684 = vadd.f32 %v3682, %v3683
        %v3685 = vrot.slane %v3684, 1
        %v3686 = vadd.f32 %v3684, %v3685
        %vm3687 = vcmp.eq.s32.totalorder %v3547, 3
        %vm3688 = vcmp.eq.s32.totalorder %v3548, 3
        %v3689 = vsel %vm3687, %v3679, %v3649
        %v3690 = vsel %vm3688, %v3679, %v3650
        %v3691 = vsel %vm3687, %v3686, %v3651
        %v3692 = vsel %vm3688, %v3686, %v3652
        %3693 = vmax.xlane.f32.xlu0 %v3667
        %v3694 = vpop.xlane.xlu0 %3693
        %3695 = vmax.xlane.f32.xlu0 %v3668
        %v3696 = vpop.xlane.xlu0 %3695
        %3697 = vadd.xlane.f32.xlu0 %v3667
        %v3698 = vpop.xlane.xlu0 %3697
        %3699 = vadd.xlane.f32.xlu0 %v3668
        %v3700 = vpop.xlane.xlu0 %3699
        %vm3701 = vcmp.eq.s32.totalorder %v3550, 3
        %v3702 = vsel %vm3701, %v3694, %v3662
        %v3703 = vsel %vm3701, %v3696, %v3663
        %v3704 = vsel %vm3701, %v3698, %v3664
        %v3705 = vsel %vm3701, %v3700, %v3665
        %s3706 = scalar_lea.vmem [#allocation4], 64
        %v3707 = vld [vmem:[%s3706] sm:$0xff]
        %v3708 = vld [vmem:[%s3706 + $0x8] sm:$0xff]
        %v3709 = vmax.f32 %v3669, %v3707
        %v3710 = vmax.f32 %v3670, %v3708
        %v3711 = vadd.f32 %v3671, %v3707
        %v3712 = vadd.f32 %v3672, %v3708
        %v3713 = vmax.f32 %v3707, %v3708
        %v3714 = vrot.slane %v3713, 4
        %v3715 = vmax.f32 %v3713, %v3714
        %v3716 = vrot.slane %v3715, 2
        %v3717 = vmax.f32 %v3715, %v3716
        %v3718 = vrot.slane %v3717, 1
        %v3719 = vmax.f32 %v3717, %v3718
        %v3720 = vadd.f32 %v3707, %v3708
        %v3721 = vrot.slane %v3720, 4
        %v3722 = vadd.f32 %v3720, %v3721
        %v3723 = vrot.slane %v3722, 2
        %v3724 = vadd.f32 %v3722, %v3723
        %v3725 = vrot.slane %v3724, 1
        %v3726 = vadd.f32 %v3724, %v3725
        %vm3727 = vcmp.eq.s32.totalorder %v3547, 4
        %vm3728 = vcmp.eq.s32.totalorder %v3548, 4
        %v3729 = vsel %vm3727, %v3719, %v3689
        %v3730 = vsel %vm3728, %v3719, %v3690
        %v3731 = vsel %vm3727, %v3726, %v3691
        %v3732 = vsel %vm3728, %v3726, %v3692
        %3733 = vmax.xlane.f32.xlu0 %v3707
        %v3734 = vpop.xlane.xlu0 %3733
        %3735 = vmax.xlane.f32.xlu0 %v3708
        %v3736 = vpop.xlane.xlu0 %3735
        %3737 = vadd.xlane.f32.xlu0 %v3707
        %v3738 = vpop.xlane.xlu0 %3737
        %3739 = vadd.xlane.f32.xlu0 %v3708
        %v3740 = vpop.xlane.xlu0 %3739
        %vm3741 = vcmp.eq.s32.totalorder %v3550, 4
        %v3742 = vsel %vm3741, %v3734, %v3702
        %v3743 = vsel %vm3741, %v3736, %v3703
        %v3744 = vsel %vm3741, %v3738, %v3704
        %v3745 = vsel %vm3741, %v3740, %v3705
        %s3746 = scalar_lea.vmem [#allocation4], 80
        %v3747 = vld [vmem:[%s3746] sm:$0xff]
        %v3748 = vld [vmem:[%s3746 + $0x8] sm:$0xff]
        %v3749 = vmax.f32 %v3709, %v3747
        %v3750 = vmax.f32 %v3710, %v3748
        %v3751 = vadd.f32 %v3711, %v3747
        %v3752 = vadd.f32 %v3712, %v3748
        %v3753 = vmax.f32 %v3747, %v3748
        %v3754 = vrot.slane %v3753, 4
        %v3755 = vmax.f32 %v3753, %v3754
        %v3756 = vrot.slane %v3755, 2
        %v3757 = vmax.f32 %v3755, %v3756
        %v3758 = vrot.slane %v3757, 1
        %v3759 = vmax.f32 %v3757, %v3758
        %v3760 = vadd.f32 %v3747, %v3748
        %v3761 = vrot.slane %v3760, 4
        %v3762 = vadd.f32 %v3760, %v3761
        %v3763 = vrot.slane %v3762, 2
        %v3764 = vadd.f32 %v3762, %v3763
        %v3765 = vrot.slane %v3764, 1
        %v3766 = vadd.f32 %v3764, %v3765
        %vm3767 = vcmp.eq.s32.totalorder %v3547, 5
        %vm3768 = vcmp.eq.s32.totalorder %v3548, 5
        %v3769 = vsel %vm3767, %v3759, %v3729
        %v3770 = vsel %vm3768, %v3759, %v3730
        %v3771 = vsel %vm3767, %v3766, %v3731
        %v3772 = vsel %vm3768, %v3766, %v3732
        %3773 = vmax.xlane.f32.xlu0 %v3747
        %v3774 = vpop.xlane.xlu0 %3773
        %3775 = vmax.xlane.f32.xlu0 %v3748
        %v3776 = vpop.xlane.xlu0 %3775
        %3777 = vadd.xlane.f32.xlu0 %v3747
        %v3778 = vpop.xlane.xlu0 %3777
        %3779 = vadd.xlane.f32.xlu0 %v3748
        %v3780 = vpop.xlane.xlu0 %3779
        %vm3781 = vcmp.eq.s32.totalorder %v3550, 5
        %v3782 = vsel %vm3781, %v3774, %v3742
        %v3783 = vsel %vm3781, %v3776, %v3743
        %v3784 = vsel %vm3781, %v3778, %v3744
        %v3785 = vsel %vm3781, %v3780, %v3745
        %s3786 = scalar_lea.vmem [#allocation4], 96
        %v3787 = vld [vmem:[%s3786] sm:$0xff]
        %v3788 = vld [vmem:[%s3786 + $0x8] sm:$0xff]
        %v3789 = vmax.f32 %v3749, %v3787
        %v3790 = vmax.f32 %v3750, %v3788
        %v3791 = vadd.f32 %v3751, %v3787
        %v3792 = vadd.f32 %v3752, %v3788
        %v3793 = vmax.f32 %v3787, %v3788
        %v3794 = vrot.slane %v3793, 4
        %v3795 = vmax.f32 %v3793, %v3794
        %v3796 = vrot.slane %v3795, 2
        %v3797 = vmax.f32 %v3795, %v3796
        %v3798 = vrot.slane %v3797, 1
        %v3799 = vmax.f32 %v3797, %v3798
        %v3800 = vadd.f32 %v3787, %v3788
        %v3801 = vrot.slane %v3800, 4
        %v3802 = vadd.f32 %v3800, %v3801
        %v3803 = vrot.slane %v3802, 2
        %v3804 = vadd.f32 %v3802, %v3803
        %v3805 = vrot.slane %v3804, 1
        %v3806 = vadd.f32 %v3804, %v3805
        %vm3807 = vcmp.eq.s32.totalorder %v3547, 6
        %vm3808 = vcmp.eq.s32.totalorder %v3548, 6
        %v3809 = vsel %vm3807, %v3799, %v3769
        %v3810 = vsel %vm3808, %v3799, %v3770
        %v3811 = vsel %vm3807, %v3806, %v3771
        %v3812 = vsel %vm3808, %v3806, %v3772
        %3813 = vmax.xlane.f32.xlu0 %v3787
        %v3814 = vpop.xlane.xlu0 %3813
        %3815 = vmax.xlane.f32.xlu0 %v3788
        %v3816 = vpop.xlane.xlu0 %3815
        %3817 = vadd.xlane.f32.xlu0 %v3787
        %v3818 = vpop.xlane.xlu0 %3817
        %3819 = vadd.xlane.f32.xlu0 %v3788
        %v3820 = vpop.xlane.xlu0 %3819
        %vm3821 = vcmp.eq.s32.totalorder %v3550, 6
        %v3822 = vsel %vm3821, %v3814, %v3782
        %v3823 = vsel %vm3821, %v3816, %v3783
        %v3824 = vsel %vm3821, %v3818, %v3784
        %v3825 = vsel %vm3821, %v3820, %v3785
        %s3826 = scalar_lea.vmem [#allocation4], 112
        %v3827 = vld [vmem:[%s3826] sm:$0xff]
        %v3828 = vld [vmem:[%s3826 + $0x8] sm:$0xff]
        %v3829 = vmax.f32 %v3789, %v3827
        %v3830 = vmax.f32 %v3790, %v3828
        %v3831 = vadd.f32 %v3791, %v3827
        %v3832 = vadd.f32 %v3792, %v3828
        %v3833 = vmax.f32 %v3827, %v3828
        %v3834 = vrot.slane %v3833, 4
        %v3835 = vmax.f32 %v3833, %v3834
        %v3836 = vrot.slane %v3835, 2
        %v3837 = vmax.f32 %v3835, %v3836
        %v3838 = vrot.slane %v3837, 1
        %v3839 = vmax.f32 %v3837, %v3838
        %v3840 = vadd.f32 %v3827, %v3828
        %v3841 = vrot.slane %v3840, 4
        %v3842 = vadd.f32 %v3840, %v3841
        %v3843 = vrot.slane %v3842, 2
        %v3844 = vadd.f32 %v3842, %v3843
        %v3845 = vrot.slane %v3844, 1
        %v3846 = vadd.f32 %v3844, %v3845
        %vm3847 = vcmp.eq.s32.totalorder %v3547, 7
        %vm3848 = vcmp.eq.s32.totalorder %v3548, 7
        %v3849 = vsel %vm3847, %v3839, %v3809
        %v3850 = vsel %vm3848, %v3839, %v3810
        %v3851 = vsel %vm3847, %v3846, %v3811
        %v3852 = vsel %vm3848, %v3846, %v3812
        %3853 = vmax.xlane.f32.xlu0 %v3827
        %v3854 = vpop.xlane.xlu0 %3853
        %3855 = vmax.xlane.f32.xlu0 %v3828
        %v3856 = vpop.xlane.xlu0 %3855
        %3857 = vadd.xlane.f32.xlu0 %v3827
        %v3858 = vpop.xlane.xlu0 %3857
        %3859 = vadd.xlane.f32.xlu0 %v3828
        %v3860 = vpop.xlane.xlu0 %3859
        %vm3861 = vcmp.eq.s32.totalorder %v3550, 7
        %v3862 = vsel %vm3861, %v3854, %v3822
        %v3863 = vsel %vm3861, %v3856, %v3823
        %v3864 = vsel %vm3861, %v3858, %v3824
        %v3865 = vsel %vm3861, %v3860, %v3825
        %s3866 = scalar_lea.vmem [#allocation4], 128
        %v3867 = vld [vmem:[%s3866] sm:$0xff]
        %v3868 = vld [vmem:[%s3866 + $0x8] sm:$0xff]
        %v3869 = vmax.f32 %v3829, %v3867
        %v3870 = vmax.f32 %v3830, %v3868
        %v3871 = vadd.f32 %v3831, %v3867
        %v3872 = vadd.f32 %v3832, %v3868
        %v3873 = vmax.f32 %v3867, %v3868
        %v3874 = vrot.slane %v3873, 4
        %v3875 = vmax.f32 %v3873, %v3874
        %v3876 = vrot.slane %v3875, 2
        %v3877 = vmax.f32 %v3875, %v3876
        %v3878 = vrot.slane %v3877, 1
        %v3879 = vmax.f32 %v3877, %v3878
        %v3880 = vadd.f32 %v3867, %v3868
        %v3881 = vrot.slane %v3880, 4
        %v3882 = vadd.f32 %v3880, %v3881
        %v3883 = vrot.slane %v3882, 2
        %v3884 = vadd.f32 %v3882, %v3883
        %v3885 = vrot.slane %v3884, 1
        %v3886 = vadd.f32 %v3884, %v3885
        %vm3887 = vcmp.eq.s32.totalorder %v3547, 8
        %vm3888 = vcmp.eq.s32.totalorder %v3548, 8
        %v3889 = vsel %vm3887, %v3879, %v3849
        %v3890 = vsel %vm3888, %v3879, %v3850
        %v3891 = vsel %vm3887, %v3886, %v3851
        %v3892 = vsel %vm3888, %v3886, %v3852
        %3893 = vmax.xlane.f32.xlu0 %v3867
        %v3894 = vpop.xlane.xlu0 %3893
        %3895 = vmax.xlane.f32.xlu0 %v3868
        %v3896 = vpop.xlane.xlu0 %3895
        %3897 = vadd.xlane.f32.xlu0 %v3867
        %v3898 = vpop.xlane.xlu0 %3897
        %3899 = vadd.xlane.f32.xlu0 %v3868
        %v3900 = vpop.xlane.xlu0 %3899
        %vm3901 = vcmp.eq.s32.totalorder %v3550, 8
        %v3902 = vsel %vm3901, %v3894, %v3862
        %v3903 = vsel %vm3901, %v3896, %v3863
        %v3904 = vsel %vm3901, %v3898, %v3864
        %v3905 = vsel %vm3901, %v3900, %v3865
        %s3906 = scalar_lea.vmem [#allocation4], 144
        %v3907 = vld [vmem:[%s3906] sm:$0xff]
        %v3908 = vld [vmem:[%s3906 + $0x8] sm:$0xff]
        %v3909 = vmax.f32 %v3869, %v3907
        %v3910 = vmax.f32 %v3870, %v3908
        %v3911 = vadd.f32 %v3871, %v3907
        %v3912 = vadd.f32 %v3872, %v3908
        %v3913 = vmax.f32 %v3907, %v3908
        %v3914 = vrot.slane %v3913, 4
        %v3915 = vmax.f32 %v3913, %v3914
        %v3916 = vrot.slane %v3915, 2
        %v3917 = vmax.f32 %v3915, %v3916
        %v3918 = vrot.slane %v3917, 1
        %v3919 = vmax.f32 %v3917, %v3918
        %v3920 = vadd.f32 %v3907, %v3908
        %v3921 = vrot.slane %v3920, 4
        %v3922 = vadd.f32 %v3920, %v3921
        %v3923 = vrot.slane %v3922, 2
        %v3924 = vadd.f32 %v3922, %v3923
        %v3925 = vrot.slane %v3924, 1
        %v3926 = vadd.f32 %v3924, %v3925
        %vm3927 = vcmp.eq.s32.totalorder %v3547, 9
        %vm3928 = vcmp.eq.s32.totalorder %v3548, 9
        %v3929 = vsel %vm3927, %v3919, %v3889
        %v3930 = vsel %vm3928, %v3919, %v3890
        %v3931 = vsel %vm3927, %v3926, %v3891
        %v3932 = vsel %vm3928, %v3926, %v3892
        %3933 = vmax.xlane.f32.xlu0 %v3907
        %v3934 = vpop.xlane.xlu0 %3933
        %3935 = vmax.xlane.f32.xlu0 %v3908
        %v3936 = vpop.xlane.xlu0 %3935
        %3937 = vadd.xlane.f32.xlu0 %v3907
        %v3938 = vpop.xlane.xlu0 %3937
        %3939 = vadd.xlane.f32.xlu0 %v3908
        %v3940 = vpop.xlane.xlu0 %3939
        %vm3941 = vcmp.eq.s32.totalorder %v3550, 9
        %v3942 = vsel %vm3941, %v3934, %v3902
        %v3943 = vsel %vm3941, %v3936, %v3903
        %v3944 = vsel %vm3941, %v3938, %v3904
        %v3945 = vsel %vm3941, %v3940, %v3905
        %s3946 = scalar_lea.vmem [#allocation4], 160
        %v3947 = vld [vmem:[%s3946] sm:$0xff]
        %v3948 = vld [vmem:[%s3946 + $0x8] sm:$0xff]
        %v3949 = vmax.f32 %v3909, %v3947
        %v3950 = vmax.f32 %v3910, %v3948
        %v3951 = vadd.f32 %v3911, %v3947
        %v3952 = vadd.f32 %v3912, %v3948
        %v3953 = vmax.f32 %v3947, %v3948
        %v3954 = vrot.slane %v3953, 4
        %v3955 = vmax.f32 %v3953, %v3954
        %v3956 = vrot.slane %v3955, 2
        %v3957 = vmax.f32 %v3955, %v3956
        %v3958 = vrot.slane %v3957, 1
        %v3959 = vmax.f32 %v3957, %v3958
        %v3960 = vadd.f32 %v3947, %v3948
        %v3961 = vrot.slane %v3960, 4
        %v3962 = vadd.f32 %v3960, %v3961
        %v3963 = vrot.slane %v3962, 2
        %v3964 = vadd.f32 %v3962, %v3963
        %v3965 = vrot.slane %v3964, 1
        %v3966 = vadd.f32 %v3964, %v3965
        %vm3967 = vcmp.eq.s32.totalorder %v3547, 10
        %vm3968 = vcmp.eq.s32.totalorder %v3548, 10
        %v3969 = vsel %vm3967, %v3959, %v3929
        %v3970 = vsel %vm3968, %v3959, %v3930
        %v3971 = vsel %vm3967, %v3966, %v3931
        %v3972 = vsel %vm3968, %v3966, %v3932
        %3973 = vmax.xlane.f32.xlu0 %v3947
        %v3974 = vpop.xlane.xlu0 %3973
        %3975 = vmax.xlane.f32.xlu0 %v3948
        %v3976 = vpop.xlane.xlu0 %3975
        %3977 = vadd.xlane.f32.xlu0 %v3947
        %v3978 = vpop.xlane.xlu0 %3977
        %3979 = vadd.xlane.f32.xlu0 %v3948
        %v3980 = vpop.xlane.xlu0 %3979
        %vm3981 = vcmp.eq.s32.totalorder %v3550, 10
        %v3982 = vsel %vm3981, %v3974, %v3942
        %v3983 = vsel %vm3981, %v3976, %v3943
        %v3984 = vsel %vm3981, %v3978, %v3944
        %v3985 = vsel %vm3981, %v3980, %v3945
        %s3986 = scalar_lea.vmem [#allocation4], 176
        %v3987 = vld [vmem:[%s3986] sm:$0xff]
        %v3988 = vld [vmem:[%s3986 + $0x8] sm:$0xff]
        %v3989 = vmax.f32 %v3949, %v3987
        %v3990 = vmax.f32 %v3950, %v3988
        %v3991 = vadd.f32 %v3951, %v3987
        %v3992 = vadd.f32 %v3952, %v3988
        %v3993 = vmax.f32 %v3987, %v3988
        %v3994 = vrot.slane %v3993, 4
        %v3995 = vmax.f32 %v3993, %v3994
        %v3996 = vrot.slane %v3995, 2
        %v3997 = vmax.f32 %v3995, %v3996
        %v3998 = vrot.slane %v3997, 1
        %v3999 = vmax.f32 %v3997, %v3998
        %v4000 = vadd.f32 %v3987, %v3988
        %v4001 = vrot.slane %v4000, 4
        %v4002 = vadd.f32 %v4000, %v4001
        %v4003 = vrot.slane %v4002, 2
        %v4004 = vadd.f32 %v4002, %v4003
        %v4005 = vrot.slane %v4004, 1
        %v4006 = vadd.f32 %v4004, %v4005
        %vm4007 = vcmp.eq.s32.totalorder %v3547, 11
        %vm4008 = vcmp.eq.s32.totalorder %v3548, 11
        %v4009 = vsel %vm4007, %v3999, %v3969
        %v4010 = vsel %vm4008, %v3999, %v3970
        %v4011 = vsel %vm4007, %v4006, %v3971
        %v4012 = vsel %vm4008, %v4006, %v3972
        %4013 = vmax.xlane.f32.xlu0 %v3987
        %v4014 = vpop.xlane.xlu0 %4013
        %4015 = vmax.xlane.f32.xlu0 %v3988
        %v4016 = vpop.xlane.xlu0 %4015
        %4017 = vadd.xlane.f32.xlu0 %v3987
        %v4018 = vpop.xlane.xlu0 %4017
        %4019 = vadd.xlane.f32.xlu0 %v3988
        %v4020 = vpop.xlane.xlu0 %4019
        %vm4021 = vcmp.eq.s32.totalorder %v3550, 11
        %v4022 = vsel %vm4021, %v4014, %v3982
        %v4023 = vsel %vm4021, %v4016, %v3983
        %v4024 = vsel %vm4021, %v4018, %v3984
        %v4025 = vsel %vm4021, %v4020, %v3985
        %s4026 = scalar_lea.vmem [#allocation4], 192
        %v4027 = vld [vmem:[%s4026] sm:$0xff]
        %v4028 = vld [vmem:[%s4026 + $0x8] sm:$0xff]
        %v4029 = vmax.f32 %v3989, %v4027
        %v4030 = vmax.f32 %v3990, %v4028
        %v4031 = vadd.f32 %v3991, %v4027
        %v4032 = vadd.f32 %v3992, %v4028
        %v4033 = vmax.f32 %v4027, %v4028
        %v4034 = vrot.slane %v4033, 4
        %v4035 = vmax.f32 %v4033, %v4034
        %v4036 = vrot.slane %v4035, 2
        %v4037 = vmax.f32 %v4035, %v4036
        %v4038 = vrot.slane %v4037, 1
        %v4039 = vmax.f32 %v4037, %v4038
        %v4040 = vadd.f32 %v4027, %v4028
        %v4041 = vrot.slane %v4040, 4
        %v4042 = vadd.f32 %v4040, %v4041
        %v4043 = vrot.slane %v4042, 2
        %v4044 = vadd.f32 %v4042, %v4043
        %v4045 = vrot.slane %v4044, 1
        %v4046 = vadd.f32 %v4044, %v4045
        %vm4047 = vcmp.eq.s32.totalorder %v3547, 12
        %vm4048 = vcmp.eq.s32.totalorder %v3548, 12
        %v4049 = vsel %vm4047, %v4039, %v4009
        %v4050 = vsel %vm4048, %v4039, %v4010
        %v4051 = vsel %vm4047, %v4046, %v4011
        %v4052 = vsel %vm4048, %v4046, %v4012
        %4053 = vmax.xlane.f32.xlu0 %v4027
        %v4054 = vpop.xlane.xlu0 %4053
        %4055 = vmax.xlane.f32.xlu0 %v4028
        %v4056 = vpop.xlane.xlu0 %4055
        %4057 = vadd.xlane.f32.xlu0 %v4027
        %v4058 = vpop.xlane.xlu0 %4057
        %4059 = vadd.xlane.f32.xlu0 %v4028
        %v4060 = vpop.xlane.xlu0 %4059
        %vm4061 = vcmp.eq.s32.totalorder %v3550, 12
        %v4062 = vsel %vm4061, %v4054, %v4022
        %v4063 = vsel %vm4061, %v4056, %v4023
        %v4064 = vsel %vm4061, %v4058, %v4024
        %v4065 = vsel %vm4061, %v4060, %v4025
        %s4066 = scalar_lea.vmem [#allocation4], 208
        %v4067 = vld [vmem:[%s4066] sm:$0xff]
        %v4068 = vld [vmem:[%s4066 + $0x8] sm:$0xff]
        %v4069 = vmax.f32 %v4029, %v4067
        %v4070 = vmax.f32 %v4030, %v4068
        %v4071 = vadd.f32 %v4031, %v4067
        %v4072 = vadd.f32 %v4032, %v4068
        %v4073 = vmax.f32 %v4067, %v4068
        %v4074 = vrot.slane %v4073, 4
        %v4075 = vmax.f32 %v4073, %v4074
        %v4076 = vrot.slane %v4075, 2
        %v4077 = vmax.f32 %v4075, %v4076
        %v4078 = vrot.slane %v4077, 1
        %v4079 = vmax.f32 %v4077, %v4078
        %v4080 = vadd.f32 %v4067, %v4068
        %v4081 = vrot.slane %v4080, 4
        %v4082 = vadd.f32 %v4080, %v4081
        %v4083 = vrot.slane %v4082, 2
        %v4084 = vadd.f32 %v4082, %v4083
        %v4085 = vrot.slane %v4084, 1
        %v4086 = vadd.f32 %v4084, %v4085
        %vm4087 = vcmp.eq.s32.totalorder %v3547, 13
        %vm4088 = vcmp.eq.s32.totalorder %v3548, 13
        %v4089 = vsel %vm4087, %v4079, %v4049
        %v4090 = vsel %vm4088, %v4079, %v4050
        %v4091 = vsel %vm4087, %v4086, %v4051
        %v4092 = vsel %vm4088, %v4086, %v4052
        %4093 = vmax.xlane.f32.xlu0 %v4067
        %v4094 = vpop.xlane.xlu0 %4093
        %4095 = vmax.xlane.f32.xlu0 %v4068
        %v4096 = vpop.xlane.xlu0 %4095
        %4097 = vadd.xlane.f32.xlu0 %v4067
        %v4098 = vpop.xlane.xlu0 %4097
        %4099 = vadd.xlane.f32.xlu0 %v4068
        %v4100 = vpop.xlane.xlu0 %4099
        %vm4101 = vcmp.eq.s32.totalorder %v3550, 13
        %v4102 = vsel %vm4101, %v4094, %v4062
        %v4103 = vsel %vm4101, %v4096, %v4063
        %v4104 = vsel %vm4101, %v4098, %v4064
        %v4105 = vsel %vm4101, %v4100, %v4065
        %s4106 = scalar_lea.vmem [#allocation4], 224
        %v4107 = vld [vmem:[%s4106] sm:$0xff]
        %v4108 = vld [vmem:[%s4106 + $0x8] sm:$0xff]
        %v4109 = vmax.f32 %v4069, %v4107
        %v4110 = vmax.f32 %v4070, %v4108
        %v4111 = vadd.f32 %v4071, %v4107
        %v4112 = vadd.f32 %v4072, %v4108
        %v4113 = vmax.f32 %v4107, %v4108
        %v4114 = vrot.slane %v4113, 4
        %v4115 = vmax.f32 %v4113, %v4114
        %v4116 = vrot.slane %v4115, 2
        %v4117 = vmax.f32 %v4115, %v4116
        %v4118 = vrot.slane %v4117, 1
        %v4119 = vmax.f32 %v4117, %v4118
        %v4120 = vadd.f32 %v4107, %v4108
        %v4121 = vrot.slane %v4120, 4
        %v4122 = vadd.f32 %v4120, %v4121
        %v4123 = vrot.slane %v4122, 2
        %v4124 = vadd.f32 %v4122, %v4123
        %v4125 = vrot.slane %v4124, 1
        %v4126 = vadd.f32 %v4124, %v4125
        %vm4127 = vcmp.eq.s32.totalorder %v3547, 14
        %vm4128 = vcmp.eq.s32.totalorder %v3548, 14
        %v4129 = vsel %vm4127, %v4119, %v4089
        %v4130 = vsel %vm4128, %v4119, %v4090
        %v4131 = vsel %vm4127, %v4126, %v4091
        %v4132 = vsel %vm4128, %v4126, %v4092
        %4133 = vmax.xlane.f32.xlu0 %v4107
        %v4134 = vpop.xlane.xlu0 %4133
        %4135 = vmax.xlane.f32.xlu0 %v4108
        %v4136 = vpop.xlane.xlu0 %4135
        %4137 = vadd.xlane.f32.xlu0 %v4107
        %v4138 = vpop.xlane.xlu0 %4137
        %4139 = vadd.xlane.f32.xlu0 %v4108
        %v4140 = vpop.xlane.xlu0 %4139
        %vm4141 = vcmp.eq.s32.totalorder %v3550, 14
        %v4142 = vsel %vm4141, %v4134, %v4102
        %v4143 = vsel %vm4141, %v4136, %v4103
        %v4144 = vsel %vm4141, %v4138, %v4104
        %v4145 = vsel %vm4141, %v4140, %v4105
        %s4146 = scalar_lea.vmem [#allocation4], 240
        %v4147 = vld [vmem:[%s4146] sm:$0xff]
        %v4148 = vld [vmem:[%s4146 + $0x8] sm:$0xff]
        %v4149 = vmax.f32 %v4109, %v4147
        %v4150 = vmax.f32 %v4110, %v4148
        %v4151 = vadd.f32 %v4111, %v4147
        %v4152 = vadd.f32 %v4112, %v4148
        %v4153 = vmax.f32 %v4147, %v4148
        %v4154 = vrot.slane %v4153, 4
        %v4155 = vmax.f32 %v4153, %v4154
        %v4156 = vrot.slane %v4155, 2
        %v4157 = vmax.f32 %v4155, %v4156
        %v4158 = vrot.slane %v4157, 1
        %v4159 = vmax.f32 %v4157, %v4158
        %v4160 = vadd.f32 %v4147, %v4148
        %v4161 = vrot.slane %v4160, 4
        %v4162 = vadd.f32 %v4160, %v4161
        %v4163 = vrot.slane %v4162, 2
        %v4164 = vadd.f32 %v4162, %v4163
        %v4165 = vrot.slane %v4164, 1
        %v4166 = vadd.f32 %v4164, %v4165
        %vm4167 = vcmp.eq.s32.totalorder %v3547, 15
        %vm4168 = vcmp.eq.s32.totalorder %v3548, 15
        %v4169 = vsel %vm4167, %v4159, %v4129
        %v4170 = vsel %vm4168, %v4159, %v4130
        %v4171 = vsel %vm4167, %v4166, %v4131
        %v4172 = vsel %vm4168, %v4166, %v4132
        %4173 = vmax.xlane.f32.xlu0 %v4147
        %v4174 = vpop.xlane.xlu0 %4173
        %4175 = vmax.xlane.f32.xlu0 %v4148
        %v4176 = vpop.xlane.xlu0 %4175
        %4177 = vadd.xlane.f32.xlu0 %v4147
        %v4178 = vpop.xlane.xlu0 %4177
        %4179 = vadd.xlane.f32.xlu0 %v4148
        %v4180 = vpop.xlane.xlu0 %4179
        %vm4181 = vcmp.eq.s32.totalorder %v3550, 15
        %v4182 = vsel %vm4181, %v4174, %v4142
        %v4183 = vsel %vm4181, %v4176, %v4143
        %v4184 = vsel %vm4181, %v4178, %v4144
        %v4185 = vsel %vm4181, %v4180, %v4145
        %vm4188 = vcmask 1042432
        %v4189 = vrot.slane %v4149, 5
        %v4190 = vrot.slane %v4150, 5
        %v4191 = vsel %vm4188, %v4189, %v4190
        %4195 = vst [vmem:[#allocation5] sm:$0xf8] %v4189
        %4196 = vst [vmem:[#allocation5 + $0x10] sm:$0xff] %v4191
        %4197 = vst [vmem:[#allocation5 + $0x20] sm:$0x7] %v4190
        %v4198 = vmul.f32 %v4151, 0.0625
        %v4199 = vmul.f32 %v4152, 0.0625
        %v4202 = vrot.slane %v4198, 5
        %v4203 = vrot.slane %v4199, 5
        %v4204 = vsel %vm4188, %v4202, %v4203
        %4208 = vst [vmem:[#allocation5 + $0x8] sm:$0xf8] %v4202
        %4209 = vst [vmem:[#allocation5 + $0x18] sm:$0xff] %v4204
        %4210 = vst [vmem:[#allocation5 + $0x28] sm:$0x7] %v4203
        %v4213 = vrot.slane %v4169, 5
        %v4214 = vrot.slane %v4170, 5
        %v4215 = vsel %vm4188, %v4213, %v4214
        %4219 = vst [vmem:[#allocation6] sm:$0xf8] %v4213
        %4220 = vst [vmem:[#allocation6 + $0x10] sm:$0xff] %v4215
        %4221 = vst [vmem:[#allocation6 + $0x20] sm:$0x7] %v4214
        %v4222 = vmul.f32 %v4171, 0.0625
        %v4223 = vmul.f32 %v4172, 0.0625
        %v4226 = vrot.slane %v4222, 5
        %v4227 = vrot.slane %v4223, 5
        %v4228 = vsel %vm4188, %v4226, %v4227
        %4232 = vst [vmem:[#allocation6 + $0x8] sm:$0xf8] %v4226
        %4233 = vst [vmem:[#allocation6 + $0x18] sm:$0xff] %v4228
        %4234 = vst [vmem:[#allocation6 + $0x28] sm:$0x7] %v4227
        %vm4235 = vcmask 130048
        %4236 = vst.msk [vmem:[#allocation7 + $0x3] sm:$0xff] %vm4235, %v4182
        %4237 = vst.msk [vmem:[#allocation7 + $0xb] sm:$0xff] %vm4235, %v4183
        %v4238 = vmul.f32 %v4184, 0.0078125
        %v4239 = vmul.f32 %v4185, 0.0078125
        %4242 = vrot.lane.b32.xlu0 %v4238, 16
        %v4243 = vpop.permute.xlu0 %4242
        %4244 = vrot.lane.b32.xlu0 %v4239, 16
        %v4245 = vpop.permute.xlu0 %4244
        %vm4248 = vcmask 261248
        %4249 = vst.msk [vmem:[#allocation7 + $0x3] sm:$0xff] %vm4248, %v4243
        %4250 = vst.msk [vmem:[#allocation7 + $0xb] sm:$0xff] %vm4248, %v4245
        %v4251 = vld [vmem:[#allocation5] sm:$0xff]
        %v4252 = vld [vmem:[#allocation5 + $0x8] sm:$0xff]
        %v4253 = vld [vmem:[#allocation5 + $0x10] sm:$0xff]
        %v4254 = vld [vmem:[#allocation5 + $0x18] sm:$0xff]
        %v4255 = vld [vmem:[%s5] sm:$0xff]
        %v4256 = vld [vmem:[%s5 + $0x8] sm:$0xff]
        %v4257 = vld [vmem:[%s5 + $0x10] sm:$0xff]
        %v4258 = vld [vmem:[%s5 + $0x18] sm:$0xff]
        %v4259 = vld [vmem:[%s5 + $0x20] sm:$0xff]
        %v4260 = vld [vmem:[%s5 + $0x28] sm:$0xff]
        %v4261 = vld [vmem:[%s5 + $0x30] sm:$0xff]
        %v4262 = vld [vmem:[%s5 + $0x38] sm:$0xff]
        %v4263 = vld [vmem:[%s5 + $0x40] sm:$0xff]
        %v4264 = vld [vmem:[%s5 + $0x48] sm:$0xff]
        %v4265 = vld [vmem:[%s5 + $0x50] sm:$0xff]
        %v4266 = vld [vmem:[%s5 + $0x58] sm:$0xff]
        %v4267 = vld [vmem:[%s5 + $0x60] sm:$0xff]
        %v4268 = vld [vmem:[%s5 + $0x68] sm:$0xff]
        %v4269 = vld [vmem:[%s5 + $0x70] sm:$0xff]
        %v4270 = vld [vmem:[%s5 + $0x78] sm:$0xff]
        %v4271 = vld [vmem:[%s5 + $0x80] sm:$0xff]
        %v4272 = vld [vmem:[%s5 + $0x88] sm:$0xff]
        %v4273 = vld [vmem:[%s5 + $0x90] sm:$0xff]
        %v4274 = vld [vmem:[%s5 + $0x98] sm:$0xff]
        %v4275 = vld [vmem:[%s5 + $0xa0] sm:$0xff]
        %v4276 = vld [vmem:[%s5 + $0xa8] sm:$0xff]
        %v4277 = vld [vmem:[%s5 + $0xb0] sm:$0xff]
        %v4278 = vld [vmem:[%s5 + $0xb8] sm:$0xff]
        %v4279 = vld [vmem:[%s5 + $0xc0] sm:$0xff]
        %v4280 = vld [vmem:[%s5 + $0xc8] sm:$0xff]
        %v4281 = vld [vmem:[%s5 + $0xd0] sm:$0xff]
        %v4282 = vld [vmem:[%s5 + $0xd8] sm:$0xff]
        %v4283 = vld [vmem:[%s5 + $0xe0] sm:$0xff]
        %v4284 = vld [vmem:[%s5 + $0xe8] sm:$0xff]
        %v4285 = vld [vmem:[%s5 + $0xf0] sm:$0xff]
        %v4286 = vld [vmem:[%s5 + $0xf8] sm:$0xff]
        %v4287 = vld [vmem:[#allocation5] sm:$0xfe]
        %v4288 = vld [vmem:[#allocation5 + $0x8] sm:$0xfe]
        %v4289 = vld [vmem:[#allocation5 + $0x20] sm:$0x1]
        %v4290 = vld [vmem:[#allocation5 + $0x28] sm:$0x1]
        %s4291 = scalar_lea.vmem %s5, 256
        %v4292 = vld [vmem:[%s4291] sm:$0xff]
        %v4293 = vld [vmem:[%s4291 + $0x8] sm:$0xff]
        %v4294 = vld [vmem:[%s4291 + $0x10] sm:$0xff]
        %v4295 = vld [vmem:[%s4291 + $0x18] sm:$0xff]
        %v4296 = vld [vmem:[%s4291 + $0x20] sm:$0xff]
        %v4297 = vld [vmem:[%s4291 + $0x28] sm:$0xff]
        %v4298 = vld [vmem:[%s4291 + $0x30] sm:$0xff]
        %v4299 = vld [vmem:[%s4291 + $0x38] sm:$0xff]
        %v4300 = vld [vmem:[%s4291 + $0x40] sm:$0xff]
        %v4301 = vld [vmem:[%s4291 + $0x48] sm:$0xff]
        %v4302 = vld [vmem:[%s4291 + $0x50] sm:$0xff]
        %v4303 = vld [vmem:[%s4291 + $0x58] sm:$0xff]
        %v4304 = vld [vmem:[%s4291 + $0x60] sm:$0xff]
        %v4305 = vld [vmem:[%s4291 + $0x68] sm:$0xff]
        %v4306 = vld [vmem:[%s4291 + $0x70] sm:$0xff]
        %v4307 = vld [vmem:[%s4291 + $0x78] sm:$0xff]
        %v4308 = vld [vmem:[%s4291 + $0x80] sm:$0xff]
        %v4309 = vld [vmem:[%s4291 + $0x88] sm:$0xff]
        %v4310 = vld [vmem:[%s4291 + $0x90] sm:$0xff]
        %v4311 = vld [vmem:[%s4291 + $0x98] sm:$0xff]
        %v4312 = vld [vmem:[%s4291 + $0xa0] sm:$0xff]
        %v4313 = vld [vmem:[%s4291 + $0xa8] sm:$0xff]
        %v4314 = vld [vmem:[%s4291 + $0xb0] sm:$0xff]
        %v4315 = vld [vmem:[%s4291 + $0xb8] sm:$0xff]
        %v4316 = vld [vmem:[%s4291 + $0xc0] sm:$0xff]
        %v4317 = vld [vmem:[%s4291 + $0xc8] sm:$0xff]
        %v4318 = vld [vmem:[%s4291 + $0xd0] sm:$0xff]
        %v4319 = vld [vmem:[%s4291 + $0xd8] sm:$0xff]
        %v4320 = vld [vmem:[%s4291 + $0xe0] sm:$0xff]
        %v4321 = vld [vmem:[%s4291 + $0xe8] sm:$0xff]
        %v4322 = vld [vmem:[%s4291 + $0xf0] sm:$0xff]
        %v4323 = vld [vmem:[%s4291 + $0xf8] sm:$0xff]
        %vm4330 = vcmask 1046528
        %v4331 = vrot.slane %v4287, 1
        %v4332 = vrot.slane %v4253, 1
        %v4333 = vsel %vm4330, %v4331, %v4332
        %v4334 = vrot.slane %v4288, 1
        %v4335 = vrot.slane %v4254, 1
        %v4336 = vsel %vm4330, %v4334, %v4335
        %v4337 = vrot.slane %v4289, 1
        %v4338 = vsel %vm4330, %v4332, %v4337
        %v4339 = vrot.slane %v4290, 1
        %v4340 = vsel %vm4330, %v4335, %v4339
        %4345 = vmatpush.msra.mxu0 %v4307
        %4346 = vmatpush.msra.mxu0 %v4306
        %4347 = vmatpush.msra.mxu0 %v4305
        %4348 = vmatpush.msra.mxu0 %v4304
        %4349 = vmatpush.msra.mxu0 %v4303
        %4350 = vmatpush.msra.mxu0 %v4302
        %4351 = vmatpush.msra.mxu0 %v4301
        %4352 = vmatpush.msra.mxu0 %v4300
        %4353 = vmatpush.msra.mxu0 %v4299
        %4354 = vmatpush.msra.mxu0 %v4298
        %4355 = vmatpush.msra.mxu0 %v4297
        %4356 = vmatpush.msra.mxu0 %v4296
        %4357 = vmatpush.msra.mxu0 %v4295
        %4358 = vmatpush.msra.mxu0 %v4294
        %4359 = vmatpush.msra.mxu0 %v4293
        %4360 = vmatpush.msra.mxu0 %v4292
        %4361 = vmatmul.f32.gmra.mxu0 %v4333
        %v4362 = vpop.f32.mrf.mxu0
        %v4363 = vadd.f32 0.0, %v4362
        %4364 = vmatmul.f32.gmra.mxu0 %v4338
        %v4365 = vpop.f32.mrf.mxu0
        %v4366 = vadd.f32 0.0, %v4365
        %4367 = vdwg.mxu0
        %4368 = vmatpush.msra.mxu0 %v4323
        %4369 = vmatpush.msra.mxu0 %v4322
        %4370 = vmatpush.msra.mxu0 %v4321
        %4371 = vmatpush.msra.mxu0 %v4320
        %4372 = vmatpush.msra.mxu0 %v4319
        %4373 = vmatpush.msra.mxu0 %v4318
        %4374 = vmatpush.msra.mxu0 %v4317
        %4375 = vmatpush.msra.mxu0 %v4316
        %4376 = vmatpush.msra.mxu0 %v4315
        %4377 = vmatpush.msra.mxu0 %v4314
        %4378 = vmatpush.msra.mxu0 %v4313
        %4379 = vmatpush.msra.mxu0 %v4312
        %4380 = vmatpush.msra.mxu0 %v4311
        %4381 = vmatpush.msra.mxu0 %v4310
        %4382 = vmatpush.msra.mxu0 %v4309
        %4383 = vmatpush.msra.mxu0 %v4308
        %4384 = vmatmul.f32.gmra.mxu0 %v4336
        %v4385 = vpop.f32.mrf.mxu0
        %v4386 = vadd.f32 %v4363, %v4385
        %4387 = vmatmul.f32.gmra.mxu0 %v4340
        %v4388 = vpop.f32.mrf.mxu0
        %v4389 = vadd.f32 %v4366, %v4388
        %4390 = vdwg.mxu0
        %4391 = vmatpush.msra.mxu0 %v4270
        %4392 = vmatpush.msra.mxu0 %v4269
        %4393 = vmatpush.msra.mxu0 %v4268
        %4394 = vmatpush.msra.mxu0 %v4267
        %4395 = vmatpush.msra.mxu0 %v4266
        %4396 = vmatpush.msra.mxu0 %v4265
        %4397 = vmatpush.msra.mxu0 %v4264
        %4398 = vmatpush.msra.mxu0 %v4263
        %4399 = vmatpush.msra.mxu0 %v4262
        %4400 = vmatpush.msra.mxu0 %v4261
        %4401 = vmatpush.msra.mxu0 %v4260
        %4402 = vmatpush.msra.mxu0 %v4259
        %4403 = vmatpush.msra.mxu0 %v4258
        %4404 = vmatpush.msra.mxu0 %v4257
        %4405 = vmatpush.msra.mxu0 %v4256
        %4406 = vmatpush.msra.mxu0 %v4255
        %4407 = vmatmul.f32.gmra.mxu0 %v4251
        %v4408 = vpop.f32.mrf.mxu0
        %v4409 = vadd.f32 %v4386, %v4408
        %4410 = vmatmul.f32.gmra.mxu0 %v4253
        %v4411 = vpop.f32.mrf.mxu0
        %v4412 = vadd.f32 %v4389, %v4411
        %4413 = vdwg.mxu0
        %4414 = vmatpush.msra.mxu0 %v4286
        %4415 = vmatpush.msra.mxu0 %v4285
        %4416 = vmatpush.msra.mxu0 %v4284
        %4417 = vmatpush.msra.mxu0 %v4283
        %4418 = vmatpush.msra.mxu0 %v4282
        %4419 = vmatpush.msra.mxu0 %v4281
        %4420 = vmatpush.msra.mxu0 %v4280
        %4421 = vmatpush.msra.mxu0 %v4279
        %4422 = vmatpush.msra.mxu0 %v4278
        %4423 = vmatpush.msra.mxu0 %v4277
        %4424 = vmatpush.msra.mxu0 %v4276
        %4425 = vmatpush.msra.mxu0 %v4275
        %4426 = vmatpush.msra.mxu0 %v4274
        %4427 = vmatpush.msra.mxu0 %v4273
        %4428 = vmatpush.msra.mxu0 %v4272
        %4429 = vmatpush.msra.mxu0 %v4271
        %4430 = vmatmul.f32.gmra.mxu0 %v4252
        %v4431 = vpop.f32.mrf.mxu0
        %v4432 = vadd.f32 %v4409, %v4431
        %4433 = vmatmul.f32.gmra.mxu0 %v4254
        %v4434 = vpop.f32.mrf.mxu0
        %v4435 = vadd.f32 %v4412, %v4434
        %4436 = vdwg.mxu0
        %v4437 = vld [vmem:[#allocation5] sm:$0xfc]
        %v4438 = vld [vmem:[#allocation5 + $0x8] sm:$0xfc]
        %v4439 = vld [vmem:[#allocation5 + $0x20] sm:$0x3]
        %v4440 = vld [vmem:[#allocation5 + $0x28] sm:$0x3]
        %s4441 = scalar_lea.vmem %s5, 512
        %v4442 = vld [vmem:[%s4441] sm:$0xff]
        %v4443 = vld [vmem:[%s4441 + $0x8] sm:$0xff]
        %v4444 = vld [vmem:[%s4441 + $0x10] sm:$0xff]
        %v4445 = vld [vmem:[%s4441 + $0x18] sm:$0xff]
        %v4446 = vld [vmem:[%s4441 + $0x20] sm:$0xff]
        %v4447 = vld [vmem:[%s4441 + $0x28] sm:$0xff]
        %v4448 = vld [vmem:[%s4441 + $0x30] sm:$0xff]
        %v4449 = vld [vmem:[%s4441 + $0x38] sm:$0xff]
        %v4450 = vld [vmem:[%s4441 + $0x40] sm:$0xff]
        %v4451 = vld [vmem:[%s4441 + $0x48] sm:$0xff]
        %v4452 = vld [vmem:[%s4441 + $0x50] sm:$0xff]
        %v4453 = vld [vmem:[%s4441 + $0x58] sm:$0xff]
        %v4454 = vld [vmem:[%s4441 + $0x60] sm:$0xff]
        %v4455 = vld [vmem:[%s4441 + $0x68] sm:$0xff]
        %v4456 = vld [vmem:[%s4441 + $0x70] sm:$0xff]
        %v4457 = vld [vmem:[%s4441 + $0x78] sm:$0xff]
        %v4458 = vld [vmem:[%s4441 + $0x80] sm:$0xff]
        %v4459 = vld [vmem:[%s4441 + $0x88] sm:$0xff]
        %v4460 = vld [vmem:[%s4441 + $0x90] sm:$0xff]
        %v4461 = vld [vmem:[%s4441 + $0x98] sm:$0xff]
        %v4462 = vld [vmem:[%s4441 + $0xa0] sm:$0xff]
        %v4463 = vld [vmem:[%s4441 + $0xa8] sm:$0xff]
        %v4464 = vld [vmem:[%s4441 + $0xb0] sm:$0xff]
        %v4465 = vld [vmem:[%s4441 + $0xb8] sm:$0xff]
        %v4466 = vld [vmem:[%s4441 + $0xc0] sm:$0xff]
        %v4467 = vld [vmem:[%s4441 + $0xc8] sm:$0xff]
        %v4468 = vld [vmem:[%s4441 + $0xd0] sm:$0xff]
        %v4469 = vld [vmem:[%s4441 + $0xd8] sm:$0xff]
        %v4470 = vld [vmem:[%s4441 + $0xe0] sm:$0xff]
        %v4471 = vld [vmem:[%s4441 + $0xe8] sm:$0xff]
        %v4472 = vld [vmem:[%s4441 + $0xf0] sm:$0xff]
        %v4473 = vld [vmem:[%s4441 + $0xf8] sm:$0xff]
        %vm4478 = vcmask 1045504
        %v4479 = vrot.slane %v4437, 2
        %v4480 = vrot.slane %v4253, 2
        %v4481 = vsel %vm4478, %v4479, %v4480
        %v4482 = vrot.slane %v4438, 2
        %v4483 = vrot.slane %v4254, 2
        %v4484 = vsel %vm4478, %v4482, %v4483
        %v4485 = vrot.slane %v4439, 2
        %v4486 = vsel %vm4478, %v4480, %v4485
        %v4487 = vrot.slane %v4440, 2
        %v4488 = vsel %vm4478, %v4483, %v4487
        %4493 = vmatpush.msra.mxu0 %v4457
        %4494 = vmatpush.msra.mxu0 %v4456
        %4495 = vmatpush.msra.mxu0 %v4455
        %4496 = vmatpush.msra.mxu0 %v4454
        %4497 = vmatpush.msra.mxu0 %v4453
        %4498 = vmatpush.msra.mxu0 %v4452
        %4499 = vmatpush.msra.mxu0 %v4451
        %4500 = vmatpush.msra.mxu0 %v4450
        %4501 = vmatpush.msra.mxu0 %v4449
        %4502 = vmatpush.msra.mxu0 %v4448
        %4503 = vmatpush.msra.mxu0 %v4447
        %4504 = vmatpush.msra.mxu0 %v4446
        %4505 = vmatpush.msra.mxu0 %v4445
        %4506 = vmatpush.msra.mxu0 %v4444
        %4507 = vmatpush.msra.mxu0 %v4443
        %4508 = vmatpush.msra.mxu0 %v4442
        %4509 = vmatmul.f32.gmra.mxu0 %v4481
        %v4510 = vpop.f32.mrf.mxu0
        %v4511 = vadd.f32 0.0, %v4510
        %4512 = vmatmul.f32.gmra.mxu0 %v4486
        %v4513 = vpop.f32.mrf.mxu0
        %v4514 = vadd.f32 0.0, %v4513
        %4515 = vdwg.mxu0
        %4516 = vmatpush.msra.mxu0 %v4473
        %4517 = vmatpush.msra.mxu0 %v4472
        %4518 = vmatpush.msra.mxu0 %v4471
        %4519 = vmatpush.msra.mxu0 %v4470
        %4520 = vmatpush.msra.mxu0 %v4469
        %4521 = vmatpush.msra.mxu0 %v4468
        %4522 = vmatpush.msra.mxu0 %v4467
        %4523 = vmatpush.msra.mxu0 %v4466
        %4524 = vmatpush.msra.mxu0 %v4465
        %4525 = vmatpush.msra.mxu0 %v4464
        %4526 = vmatpush.msra.mxu0 %v4463
        %4527 = vmatpush.msra.mxu0 %v4462
        %4528 = vmatpush.msra.mxu0 %v4461
        %4529 = vmatpush.msra.mxu0 %v4460
        %4530 = vmatpush.msra.mxu0 %v4459
        %4531 = vmatpush.msra.mxu0 %v4458
        %4532 = vmatmul.f32.gmra.mxu0 %v4484
        %v4533 = vpop.f32.mrf.mxu0
        %v4534 = vadd.f32 %v4511, %v4533
        %4535 = vmatmul.f32.gmra.mxu0 %v4488
        %v4536 = vpop.f32.mrf.mxu0
        %v4537 = vadd.f32 %v4514, %v4536
        %4538 = vdwg.mxu0
        %v4539 = vadd.f32 %v4432, %v4534
        %v4540 = vadd.f32 %v4435, %v4537
        %v4541 = vld [vmem:[#allocation5] sm:$0xf8]
        %v4542 = vld [vmem:[#allocation5 + $0x8] sm:$0xf8]
        %v4543 = vld [vmem:[#allocation5 + $0x20] sm:$0x7]
        %v4544 = vld [vmem:[#allocation5 + $0x28] sm:$0x7]
        %s4545 = scalar_lea.vmem %s5, 768
        %v4546 = vld [vmem:[%s4545] sm:$0xff]
        %v4547 = vld [vmem:[%s4545 + $0x8] sm:$0xff]
        %v4548 = vld [vmem:[%s4545 + $0x10] sm:$0xff]
        %v4549 = vld [vmem:[%s4545 + $0x18] sm:$0xff]
        %v4550 = vld [vmem:[%s4545 + $0x20] sm:$0xff]
        %v4551 = vld [vmem:[%s4545 + $0x28] sm:$0xff]
        %v4552 = vld [vmem:[%s4545 + $0x30] sm:$0xff]
        %v4553 = vld [vmem:[%s4545 + $0x38] sm:$0xff]
        %v4554 = vld [vmem:[%s4545 + $0x40] sm:$0xff]
        %v4555 = vld [vmem:[%s4545 + $0x48] sm:$0xff]
        %v4556 = vld [vmem:[%s4545 + $0x50] sm:$0xff]
        %v4557 = vld [vmem:[%s4545 + $0x58] sm:$0xff]
        %v4558 = vld [vmem:[%s4545 + $0x60] sm:$0xff]
        %v4559 = vld [vmem:[%s4545 + $0x68] sm:$0xff]
        %v4560 = vld [vmem:[%s4545 + $0x70] sm:$0xff]
        %v4561 = vld [vmem:[%s4545 + $0x78] sm:$0xff]
        %v4562 = vld [vmem:[%s4545 + $0x80] sm:$0xff]
        %v4563 = vld [vmem:[%s4545 + $0x88] sm:$0xff]
        %v4564 = vld [vmem:[%s4545 + $0x90] sm:$0xff]
        %v4565 = vld [vmem:[%s4545 + $0x98] sm:$0xff]
        %v4566 = vld [vmem:[%s4545 + $0xa0] sm:$0xff]
        %v4567 = vld [vmem:[%s4545 + $0xa8] sm:$0xff]
        %v4568 = vld [vmem:[%s4545 + $0xb0] sm:$0xff]
        %v4569 = vld [vmem:[%s4545 + $0xb8] sm:$0xff]
        %v4570 = vld [vmem:[%s4545 + $0xc0] sm:$0xff]
        %v4571 = vld [vmem:[%s4545 + $0xc8] sm:$0xff]
        %v4572 = vld [vmem:[%s4545 + $0xd0] sm:$0xff]
        %v4573 = vld [vmem:[%s4545 + $0xd8] sm:$0xff]
        %v4574 = vld [vmem:[%s4545 + $0xe0] sm:$0xff]
        %v4575 = vld [vmem:[%s4545 + $0xe8] sm:$0xff]
        %v4576 = vld [vmem:[%s4545 + $0xf0] sm:$0xff]
        %v4577 = vld [vmem:[%s4545 + $0xf8] sm:$0xff]
        %vm4582 = vcmask 1044480
        %v4583 = vrot.slane %v4541, 3
        %v4584 = vrot.slane %v4253, 3
        %v4585 = vsel %vm4582, %v4583, %v4584
        %v4586 = vrot.slane %v4542, 3
        %v4587 = vrot.slane %v4254, 3
        %v4588 = vsel %vm4582, %v4586, %v4587
        %v4589 = vrot.slane %v4543, 3
        %v4590 = vsel %vm4582, %v4584, %v4589
        %v4591 = vrot.slane %v4544, 3
        %v4592 = vsel %vm4582, %v4587, %v4591
        %4597 = vmatpush.msra.mxu0 %v4561
        %4598 = vmatpush.msra.mxu0 %v4560
        %4599 = vmatpush.msra.mxu0 %v4559
        %4600 = vmatpush.msra.mxu0 %v4558
        %4601 = vmatpush.msra.mxu0 %v4557
        %4602 = vmatpush.msra.mxu0 %v4556
        %4603 = vmatpush.msra.mxu0 %v4555
        %4604 = vmatpush.msra.mxu0 %v4554
        %4605 = vmatpush.msra.mxu0 %v4553
        %4606 = vmatpush.msra.mxu0 %v4552
        %4607 = vmatpush.msra.mxu0 %v4551
        %4608 = vmatpush.msra.mxu0 %v4550
        %4609 = vmatpush.msra.mxu0 %v4549
        %4610 = vmatpush.msra.mxu0 %v4548
        %4611 = vmatpush.msra.mxu0 %v4547
        %4612 = vmatpush.msra.mxu0 %v4546
        %4613 = vmatmul.f32.gmra.mxu0 %v4585
        %v4614 = vpop.f32.mrf.mxu0
        %v4615 = vadd.f32 0.0, %v4614
        %4616 = vmatmul.f32.gmra.mxu0 %v4590
        %v4617 = vpop.f32.mrf.mxu0
        %v4618 = vadd.f32 0.0, %v4617
        %4619 = vdwg.mxu0
        %4620 = vmatpush.msra.mxu0 %v4577
        %4621 = vmatpush.msra.mxu0 %v4576
        %4622 = vmatpush.msra.mxu0 %v4575
        %4623 = vmatpush.msra.mxu0 %v4574
        %4624 = vmatpush.msra.mxu0 %v4573
        %4625 = vmatpush.msra.mxu0 %v4572
        %4626 = vmatpush.msra.mxu0 %v4571
        %4627 = vmatpush.msra.mxu0 %v4570
        %4628 = vmatpush.msra.mxu0 %v4569
        %4629 = vmatpush.msra.mxu0 %v4568
        %4630 = vmatpush.msra.mxu0 %v4567
        %4631 = vmatpush.msra.mxu0 %v4566
        %4632 = vmatpush.msra.mxu0 %v4565
        %4633 = vmatpush.msra.mxu0 %v4564
        %4634 = vmatpush.msra.mxu0 %v4563
        %4635 = vmatpush.msra.mxu0 %v4562
        %4636 = vmatmul.f32.gmra.mxu0 %v4588
        %v4637 = vpop.f32.mrf.mxu0
        %v4638 = vadd.f32 %v4615, %v4637
        %4639 = vmatmul.f32.gmra.mxu0 %v4592
        %v4640 = vpop.f32.mrf.mxu0
        %v4641 = vadd.f32 %v4618, %v4640
        %4642 = vdwg.mxu0
        %v4643 = vadd.f32 %v4539, %v4638
        %v4644 = vadd.f32 %v4540, %v4641
        %v4645 = vld [vmem:[#allocation5] sm:$0xf0]
        %v4646 = vld [vmem:[#allocation5 + $0x8] sm:$0xf0]
        %v4647 = vld [vmem:[#allocation5 + $0x20] sm:$0xf]
        %v4648 = vld [vmem:[#allocation5 + $0x28] sm:$0xf]
        %s4649 = scalar_lea.vmem %s5, 1024
        %v4650 = vld [vmem:[%s4649] sm:$0xff]
        %v4651 = vld [vmem:[%s4649 + $0x8] sm:$0xff]
        %v4652 = vld [vmem:[%s4649 + $0x10] sm:$0xff]
        %v4653 = vld [vmem:[%s4649 + $0x18] sm:$0xff]
        %v4654 = vld [vmem:[%s4649 + $0x20] sm:$0xff]
        %v4655 = vld [vmem:[%s4649 + $0x28] sm:$0xff]
        %v4656 = vld [vmem:[%s4649 + $0x30] sm:$0xff]
        %v4657 = vld [vmem:[%s4649 + $0x38] sm:$0xff]
        %v4658 = vld [vmem:[%s4649 + $0x40] sm:$0xff]
        %v4659 = vld [vmem:[%s4649 + $0x48] sm:$0xff]
        %v4660 = vld [vmem:[%s4649 + $0x50] sm:$0xff]
        %v4661 = vld [vmem:[%s4649 + $0x58] sm:$0xff]
        %v4662 = vld [vmem:[%s4649 + $0x60] sm:$0xff]
        %v4663 = vld [vmem:[%s4649 + $0x68] sm:$0xff]
        %v4664 = vld [vmem:[%s4649 + $0x70] sm:$0xff]
        %v4665 = vld [vmem:[%s4649 + $0x78] sm:$0xff]
        %v4666 = vld [vmem:[%s4649 + $0x80] sm:$0xff]
        %v4667 = vld [vmem:[%s4649 + $0x88] sm:$0xff]
        %v4668 = vld [vmem:[%s4649 + $0x90] sm:$0xff]
        %v4669 = vld [vmem:[%s4649 + $0x98] sm:$0xff]
        %v4670 = vld [vmem:[%s4649 + $0xa0] sm:$0xff]
        %v4671 = vld [vmem:[%s4649 + $0xa8] sm:$0xff]
        %v4672 = vld [vmem:[%s4649 + $0xb0] sm:$0xff]
        %v4673 = vld [vmem:[%s4649 + $0xb8] sm:$0xff]
        %v4674 = vld [vmem:[%s4649 + $0xc0] sm:$0xff]
        %v4675 = vld [vmem:[%s4649 + $0xc8] sm:$0xff]
        %v4676 = vld [vmem:[%s4649 + $0xd0] sm:$0xff]
        %v4677 = vld [vmem:[%s4649 + $0xd8] sm:$0xff]
        %v4678 = vld [vmem:[%s4649 + $0xe0] sm:$0xff]
        %v4679 = vld [vmem:[%s4649 + $0xe8] sm:$0xff]
        %v4680 = vld [vmem:[%s4649 + $0xf0] sm:$0xff]
        %v4681 = vld [vmem:[%s4649 + $0xf8] sm:$0xff]
        %vm4686 = vcmask 1043456
        %v4687 = vrot.slane %v4645, 4
        %v4688 = vrot.slane %v4253, 4
        %v4689 = vsel %vm4686, %v4687, %v4688
        %v4690 = vrot.slane %v4646, 4
        %v4691 = vrot.slane %v4254, 4
        %v4692 = vsel %vm4686, %v4690, %v4691
        %v4693 = vrot.slane %v4647, 4
        %v4694 = vsel %vm4686, %v4688, %v4693
        %v4695 = vrot.slane %v4648, 4
        %v4696 = vsel %vm4686, %v4691, %v4695
        %4701 = vmatpush.msra.mxu0 %v4665
        %4702 = vmatpush.msra.mxu0 %v4664
        %4703 = vmatpush.msra.mxu0 %v4663
        %4704 = vmatpush.msra.mxu0 %v4662
        %4705 = vmatpush.msra.mxu0 %v4661
        %4706 = vmatpush.msra.mxu0 %v4660
        %4707 = vmatpush.msra.mxu0 %v4659
        %4708 = vmatpush.msra.mxu0 %v4658
        %4709 = vmatpush.msra.mxu0 %v4657
        %4710 = vmatpush.msra.mxu0 %v4656
        %4711 = vmatpush.msra.mxu0 %v4655
        %4712 = vmatpush.msra.mxu0 %v4654
        %4713 = vmatpush.msra.mxu0 %v4653
        %4714 = vmatpush.msra.mxu0 %v4652
        %4715 = vmatpush.msra.mxu0 %v4651
        %4716 = vmatpush.msra.mxu0 %v4650
        %4717 = vmatmul.f32.gmra.mxu0 %v4689
        %v4718 = vpop.f32.mrf.mxu0
        %v4719 = vadd.f32 0.0, %v4718
        %4720 = vmatmul.f32.gmra.mxu0 %v4694
        %v4721 = vpop.f32.mrf.mxu0
        %v4722 = vadd.f32 0.0, %v4721
        %4723 = vdwg.mxu0
        %4724 = vmatpush.msra.mxu0 %v4681
        %4725 = vmatpush.msra.mxu0 %v4680
        %4726 = vmatpush.msra.mxu0 %v4679
        %4727 = vmatpush.msra.mxu0 %v4678
        %4728 = vmatpush.msra.mxu0 %v4677
        %4729 = vmatpush.msra.mxu0 %v4676
        %4730 = vmatpush.msra.mxu0 %v4675
        %4731 = vmatpush.msra.mxu0 %v4674
        %4732 = vmatpush.msra.mxu0 %v4673
        %4733 = vmatpush.msra.mxu0 %v4672
        %4734 = vmatpush.msra.mxu0 %v4671
        %4735 = vmatpush.msra.mxu0 %v4670
        %4736 = vmatpush.msra.mxu0 %v4669
        %4737 = vmatpush.msra.mxu0 %v4668
        %4738 = vmatpush.msra.mxu0 %v4667
        %4739 = vmatpush.msra.mxu0 %v4666
        %4740 = vmatmul.f32.gmra.mxu0 %v4692
        %v4741 = vpop.f32.mrf.mxu0
        %v4742 = vadd.f32 %v4719, %v4741
        %4743 = vmatmul.f32.gmra.mxu0 %v4696
        %v4744 = vpop.f32.mrf.mxu0
        %v4745 = vadd.f32 %v4722, %v4744
        %4746 = vdwg.mxu0
        %v4747 = vadd.f32 %v4643, %v4742
        %v4748 = vadd.f32 %v4644, %v4745
        %v4749 = vld [vmem:[#allocation5] sm:$0xe0]
        %v4750 = vld [vmem:[#allocation5 + $0x8] sm:$0xe0]
        %v4751 = vld [vmem:[#allocation5 + $0x20] sm:$0x1f]
        %v4752 = vld [vmem:[#allocation5 + $0x28] sm:$0x1f]
        %s4753 = scalar_lea.vmem %s5, 1280
        %v4754 = vld [vmem:[%s4753] sm:$0xff]
        %v4755 = vld [vmem:[%s4753 + $0x8] sm:$0xff]
        %v4756 = vld [vmem:[%s4753 + $0x10] sm:$0xff]
        %v4757 = vld [vmem:[%s4753 + $0x18] sm:$0xff]
        %v4758 = vld [vmem:[%s4753 + $0x20] sm:$0xff]
        %v4759 = vld [vmem:[%s4753 + $0x28] sm:$0xff]
        %v4760 = vld [vmem:[%s4753 + $0x30] sm:$0xff]
        %v4761 = vld [vmem:[%s4753 + $0x38] sm:$0xff]
        %v4762 = vld [vmem:[%s4753 + $0x40] sm:$0xff]
        %v4763 = vld [vmem:[%s4753 + $0x48] sm:$0xff]
        %v4764 = vld [vmem:[%s4753 + $0x50] sm:$0xff]
        %v4765 = vld [vmem:[%s4753 + $0x58] sm:$0xff]
        %v4766 = vld [vmem:[%s4753 + $0x60] sm:$0xff]
        %v4767 = vld [vmem:[%s4753 + $0x68] sm:$0xff]
        %v4768 = vld [vmem:[%s4753 + $0x70] sm:$0xff]
        %v4769 = vld [vmem:[%s4753 + $0x78] sm:$0xff]
        %v4770 = vld [vmem:[%s4753 + $0x80] sm:$0xff]
        %v4771 = vld [vmem:[%s4753 + $0x88] sm:$0xff]
        %v4772 = vld [vmem:[%s4753 + $0x90] sm:$0xff]
        %v4773 = vld [vmem:[%s4753 + $0x98] sm:$0xff]
        %v4774 = vld [vmem:[%s4753 + $0xa0] sm:$0xff]
        %v4775 = vld [vmem:[%s4753 + $0xa8] sm:$0xff]
        %v4776 = vld [vmem:[%s4753 + $0xb0] sm:$0xff]
        %v4777 = vld [vmem:[%s4753 + $0xb8] sm:$0xff]
        %v4778 = vld [vmem:[%s4753 + $0xc0] sm:$0xff]
        %v4779 = vld [vmem:[%s4753 + $0xc8] sm:$0xff]
        %v4780 = vld [vmem:[%s4753 + $0xd0] sm:$0xff]
        %v4781 = vld [vmem:[%s4753 + $0xd8] sm:$0xff]
        %v4782 = vld [vmem:[%s4753 + $0xe0] sm:$0xff]
        %v4783 = vld [vmem:[%s4753 + $0xe8] sm:$0xff]
        %v4784 = vld [vmem:[%s4753 + $0xf0] sm:$0xff]
        %v4785 = vld [vmem:[%s4753 + $0xf8] sm:$0xff]
        %v4790 = vrot.slane %v4749, 5
        %v4791 = vrot.slane %v4253, 5
        %v4792 = vsel %vm4188, %v4790, %v4791
        %v4793 = vrot.slane %v4750, 5
        %v4794 = vrot.slane %v4254, 5
        %v4795 = vsel %vm4188, %v4793, %v4794
        %v4796 = vrot.slane %v4751, 5
        %v4797 = vsel %vm4188, %v4791, %v4796
        %v4798 = vrot.slane %v4752, 5
        %v4799 = vsel %vm4188, %v4794, %v4798
        %4804 = vmatpush.msra.mxu0 %v4769
        %4805 = vmatpush.msra.mxu0 %v4768
        %4806 = vmatpush.msra.mxu0 %v4767
        %4807 = vmatpush.msra.mxu0 %v4766
        %4808 = vmatpush.msra.mxu0 %v4765
        %4809 = vmatpush.msra.mxu0 %v4764
        %4810 = vmatpush.msra.mxu0 %v4763
        %4811 = vmatpush.msra.mxu0 %v4762
        %4812 = vmatpush.msra.mxu0 %v4761
        %4813 = vmatpush.msra.mxu0 %v4760
        %4814 = vmatpush.msra.mxu0 %v4759
        %4815 = vmatpush.msra.mxu0 %v4758
        %4816 = vmatpush.msra.mxu0 %v4757
        %4817 = vmatpush.msra.mxu0 %v4756
        %4818 = vmatpush.msra.mxu0 %v4755
        %4819 = vmatpush.msra.mxu0 %v4754
        %4820 = vmatmul.f32.gmra.mxu0 %v4792
        %v4821 = vpop.f32.mrf.mxu0
        %v4822 = vadd.f32 0.0, %v4821
        %4823 = vmatmul.f32.gmra.mxu0 %v4797
        %v4824 = vpop.f32.mrf.mxu0
        %v4825 = vadd.f32 0.0, %v4824
        %4826 = vdwg.mxu0
        %4827 = vmatpush.msra.mxu0 %v4785
        %4828 = vmatpush.msra.mxu0 %v4784
        %4829 = vmatpush.msra.mxu0 %v4783
        %4830 = vmatpush.msra.mxu0 %v4782
        %4831 = vmatpush.msra.mxu0 %v4781
        %4832 = vmatpush.msra.mxu0 %v4780
        %4833 = vmatpush.msra.mxu0 %v4779
        %4834 = vmatpush.msra.mxu0 %v4778
        %4835 = vmatpush.msra.mxu0 %v4777
        %4836 = vmatpush.msra.mxu0 %v4776
        %4837 = vmatpush.msra.mxu0 %v4775
        %4838 = vmatpush.msra.mxu0 %v4774
        %4839 = vmatpush.msra.mxu0 %v4773
        %4840 = vmatpush.msra.mxu0 %v4772
        %4841 = vmatpush.msra.mxu0 %v4771
        %4842 = vmatpush.msra.mxu0 %v4770
        %4843 = vmatmul.f32.gmra.mxu0 %v4795
        %v4844 = vpop.f32.mrf.mxu0
        %v4845 = vadd.f32 %v4822, %v4844
        %4846 = vmatmul.f32.gmra.mxu0 %v4799
        %v4847 = vpop.f32.mrf.mxu0
        %v4848 = vadd.f32 %v4825, %v4847
        %4849 = vdwg.mxu0
        %v4850 = vadd.f32 %v4747, %v4845
        %v4851 = vadd.f32 %v4748, %v4848
        %v4852 = vld [vmem:[#allocation5] sm:$0xc0]
        %v4853 = vld [vmem:[#allocation5 + $0x8] sm:$0xc0]
        %v4854 = vld [vmem:[#allocation5 + $0x20] sm:$0x3f]
        %v4855 = vld [vmem:[#allocation5 + $0x28] sm:$0x3f]
        %s4856 = scalar_lea.vmem %s5, 1536
        %v4857 = vld [vmem:[%s4856] sm:$0xff]
        %v4858 = vld [vmem:[%s4856 + $0x8] sm:$0xff]
        %v4859 = vld [vmem:[%s4856 + $0x10] sm:$0xff]
        %v4860 = vld [vmem:[%s4856 + $0x18] sm:$0xff]
        %v4861 = vld [vmem:[%s4856 + $0x20] sm:$0xff]
        %v4862 = vld [vmem:[%s4856 + $0x28] sm:$0xff]
        %v4863 = vld [vmem:[%s4856 + $0x30] sm:$0xff]
        %v4864 = vld [vmem:[%s4856 + $0x38] sm:$0xff]
        %v4865 = vld [vmem:[%s4856 + $0x40] sm:$0xff]
        %v4866 = vld [vmem:[%s4856 + $0x48] sm:$0xff]
        %v4867 = vld [vmem:[%s4856 + $0x50] sm:$0xff]
        %v4868 = vld [vmem:[%s4856 + $0x58] sm:$0xff]
        %v4869 = vld [vmem:[%s4856 + $0x60] sm:$0xff]
        %v4870 = vld [vmem:[%s4856 + $0x68] sm:$0xff]
        %v4871 = vld [vmem:[%s4856 + $0x70] sm:$0xff]
        %v4872 = vld [vmem:[%s4856 + $0x78] sm:$0xff]
        %v4873 = vld [vmem:[%s4856 + $0x80] sm:$0xff]
        %v4874 = vld [vmem:[%s4856 + $0x88] sm:$0xff]
        %v4875 = vld [vmem:[%s4856 + $0x90] sm:$0xff]
        %v4876 = vld [vmem:[%s4856 + $0x98] sm:$0xff]
        %v4877 = vld [vmem:[%s4856 + $0xa0] sm:$0xff]
        %v4878 = vld [vmem:[%s4856 + $0xa8] sm:$0xff]
        %v4879 = vld [vmem:[%s4856 + $0xb0] sm:$0xff]
        %v4880 = vld [vmem:[%s4856 + $0xb8] sm:$0xff]
        %v4881 = vld [vmem:[%s4856 + $0xc0] sm:$0xff]
        %v4882 = vld [vmem:[%s4856 + $0xc8] sm:$0xff]
        %v4883 = vld [vmem:[%s4856 + $0xd0] sm:$0xff]
        %v4884 = vld [vmem:[%s4856 + $0xd8] sm:$0xff]
        %v4885 = vld [vmem:[%s4856 + $0xe0] sm:$0xff]
        %v4886 = vld [vmem:[%s4856 + $0xe8] sm:$0xff]
        %v4887 = vld [vmem:[%s4856 + $0xf0] sm:$0xff]
        %v4888 = vld [vmem:[%s4856 + $0xf8] sm:$0xff]
        %vm4893 = vcmask 1041408
        %v4894 = vrot.slane %v4852, 6
        %v4895 = vrot.slane %v4253, 6
        %v4896 = vsel %vm4893, %v4894, %v4895
        %v4897 = vrot.slane %v4853, 6
        %v4898 = vrot.slane %v4254, 6
        %v4899 = vsel %vm4893, %v4897, %v4898
        %v4900 = vrot.slane %v4854, 6
        %v4901 = vsel %vm4893, %v4895, %v4900
        %v4902 = vrot.slane %v4855, 6
        %v4903 = vsel %vm4893, %v4898, %v4902
        %4908 = vmatpush.msra.mxu0 %v4872
        %4909 = vmatpush.msra.mxu0 %v4871
        %4910 = vmatpush.msra.mxu0 %v4870
        %4911 = vmatpush.msra.mxu0 %v4869
        %4912 = vmatpush.msra.mxu0 %v4868
        %4913 = vmatpush.msra.mxu0 %v4867
        %4914 = vmatpush.msra.mxu0 %v4866
        %4915 = vmatpush.msra.mxu0 %v4865
        %4916 = vmatpush.msra.mxu0 %v4864
        %4917 = vmatpush.msra.mxu0 %v4863
        %4918 = vmatpush.msra.mxu0 %v4862
        %4919 = vmatpush.msra.mxu0 %v4861
        %4920 = vmatpush.msra.mxu0 %v4860
        %4921 = vmatpush.msra.mxu0 %v4859
        %4922 = vmatpush.msra.mxu0 %v4858
        %4923 = vmatpush.msra.mxu0 %v4857
        %4924 = vmatmul.f32.gmra.mxu0 %v4896
        %v4925 = vpop.f32.mrf.mxu0
        %v4926 = vadd.f32 0.0, %v4925
        %4927 = vmatmul.f32.gmra.mxu0 %v4901
        %v4928 = vpop.f32.mrf.mxu0
        %v4929 = vadd.f32 0.0, %v4928
        %4930 = vdwg.mxu0
        %4931 = vmatpush.msra.mxu0 %v4888
        %4932 = vmatpush.msra.mxu0 %v4887
        %4933 = vmatpush.msra.mxu0 %v4886
        %4934 = vmatpush.msra.mxu0 %v4885
        %4935 = vmatpush.msra.mxu0 %v4884
        %4936 = vmatpush.msra.mxu0 %v4883
        %4937 = vmatpush.msra.mxu0 %v4882
        %4938 = vmatpush.msra.mxu0 %v4881
        %4939 = vmatpush.msra.mxu0 %v4880
        %4940 = vmatpush.msra.mxu0 %v4879
        %4941 = vmatpush.msra.mxu0 %v4878
        %4942 = vmatpush.msra.mxu0 %v4877
        %4943 = vmatpush.msra.mxu0 %v4876
        %4944 = vmatpush.msra.mxu0 %v4875
        %4945 = vmatpush.msra.mxu0 %v4874
        %4946 = vmatpush.msra.mxu0 %v4873
        %4947 = vmatmul.f32.gmra.mxu0 %v4899
        %v4948 = vpop.f32.mrf.mxu0
        %v4949 = vadd.f32 %v4926, %v4948
        %4950 = vmatmul.f32.gmra.mxu0 %v4903
        %v4951 = vpop.f32.mrf.mxu0
        %v4952 = vadd.f32 %v4929, %v4951
        %4953 = vdwg.mxu0
        %v4954 = vadd.f32 %v4850, %v4949
        %v4955 = vadd.f32 %v4851, %v4952
        %s4956 = sld [smem:[#allocation10]]
        %v4957 = vstv %s4956
        %v4958 = vadd.f32 %v4954, %v4957
        %v4959 = vadd.f32 %v4955, %v4957
        %v4960 = vxor.u32 %v4958, 2147483648
        %v4961 = vxor.u32 %v4959, 2147483648
        %v4962 = vmul.f32 %v4960, 1.442695
        %v4963 = vpow.pop %v4962
        %v4964 = vmul.f32 %v4961, 1.442695
        %v4965 = vpow.pop %v4964
        %v4966 = vadd.f32 %v4963, 1.0
        %v4967 = vadd.f32 %v4965, 1.0
        %v4968 = vrcp.pop %v4966
        %v4969 = vmul.f32 %v4966, %v4968
        %v4970 = vsub.f32 1.0, %v4969
        %v4971 = vmul.f32 %v4968, %v4970
        %v4972 = vadd.f32 %v4968, %v4971
        %vm4973 = vweird.f32 %v4966
        %vm4974 = vweird.f32 %v4968
        %vm4975 = vmor %vm4973, %vm4974
        %v4976 = vsel %vm4975, %v4968, %v4972
        %v4977 = vand.u32 2147483647, %v4966
        %vm4978 = vcmp.eq.f32.partialorder %v4977, 8.507059e+37
        %v4979 = vand.u32 %v4966, 2147483648
        %v4980 = vor.u32 1.1754944e-38, %v4979
        %v4981 = vsel %vm4978, %v4980, %v4976
        %v4982 = vmul.f32 1.0, %v4981
        %v4983 = vrcp.pop %v4967
        %v4984 = vmul.f32 %v4967, %v4983
        %v4985 = vsub.f32 1.0, %v4984
        %v4986 = vmul.f32 %v4983, %v4985
        %v4987 = vadd.f32 %v4983, %v4986
        %vm4988 = vweird.f32 %v4967
        %vm4989 = vweird.f32 %v4983
        %vm4990 = vmor %vm4988, %vm4989
        %v4991 = vsel %vm4990, %v4983, %v4987
        %v4992 = vand.u32 2147483647, %v4967
        %vm4993 = vcmp.eq.f32.partialorder %v4992, 8.507059e+37
        %v4994 = vand.u32 %v4967, 2147483648
        %v4995 = vor.u32 1.1754944e-38, %v4994
        %v4996 = vsel %vm4993, %v4995, %v4991
        %v4997 = vmul.f32 1.0, %v4996
        %v4998 = vld [vmem:[#allocation6] sm:$0xff]
        %v4999 = vld [vmem:[#allocation6 + $0x8] sm:$0xff]
        %v5000 = vld [vmem:[#allocation6 + $0x10] sm:$0xff]
        %v5001 = vld [vmem:[#allocation6 + $0x18] sm:$0xff]
        %s5002 = scalar_lea.vmem %s5, 1792
        %v5003 = vld [vmem:[%s5002] sm:$0xff]
        %v5004 = vld [vmem:[%s5002 + $0x8] sm:$0xff]
        %v5005 = vld [vmem:[%s5002 + $0x10] sm:$0xff]
        %v5006 = vld [vmem:[%s5002 + $0x18] sm:$0xff]
        %v5007 = vld [vmem:[%s5002 + $0x20] sm:$0xff]
        %v5008 = vld [vmem:[%s5002 + $0x28] sm:$0xff]
        %v5009 = vld [vmem:[%s5002 + $0x30] sm:$0xff]
        %v5010 = vld [vmem:[%s5002 + $0x38] sm:$0xff]
        %v5011 = vld [vmem:[%s5002 + $0x40] sm:$0xff]
        %v5012 = vld [vmem:[%s5002 + $0x48] sm:$0xff]
        %v5013 = vld [vmem:[%s5002 + $0x50] sm:$0xff]
        %v5014 = vld [vmem:[%s5002 + $0x58] sm:$0xff]
        %v5015 = vld [vmem:[%s5002 + $0x60] sm:$0xff]
        %v5016 = vld [vmem:[%s5002 + $0x68] sm:$0xff]
        %v5017 = vld [vmem:[%s5002 + $0x70] sm:$0xff]
        %v5018 = vld [vmem:[%s5002 + $0x78] sm:$0xff]
        %v5019 = vld [vmem:[%s5002 + $0x80] sm:$0xff]
        %v5020 = vld [vmem:[%s5002 + $0x88] sm:$0xff]
        %v5021 = vld [vmem:[%s5002 + $0x90] sm:$0xff]
        %v5022 = vld [vmem:[%s5002 + $0x98] sm:$0xff]
        %v5023 = vld [vmem:[%s5002 + $0xa0] sm:$0xff]
        %v5024 = vld [vmem:[%s5002 + $0xa8] sm:$0xff]
        %v5025 = vld [vmem:[%s5002 + $0xb0] sm:$0xff]
        %v5026 = vld [vmem:[%s5002 + $0xb8] sm:$0xff]
        %v5027 = vld [vmem:[%s5002 + $0xc0] sm:$0xff]
        %v5028 = vld [vmem:[%s5002 + $0xc8] sm:$0xff]
        %v5029 = vld [vmem:[%s5002 + $0xd0] sm:$0xff]
        %v5030 = vld [vmem:[%s5002 + $0xd8] sm:$0xff]
        %v5031 = vld [vmem:[%s5002 + $0xe0] sm:$0xff]
        %v5032 = vld [vmem:[%s5002 + $0xe8] sm:$0xff]
        %v5033 = vld [vmem:[%s5002 + $0xf0] sm:$0xff]
        %v5034 = vld [vmem:[%s5002 + $0xf8] sm:$0xff]
        %v5035 = vld [vmem:[#allocation6] sm:$0xfe]
        %v5036 = vld [vmem:[#allocation6 + $0x8] sm:$0xfe]
        %v5037 = vld [vmem:[#allocation6 + $0x20] sm:$0x1]
        %v5038 = vld [vmem:[#allocation6 + $0x28] sm:$0x1]
        %s5039 = scalar_lea.vmem %s5, 2048
        %v5040 = vld [vmem:[%s5039] sm:$0xff]
        %v5041 = vld [vmem:[%s5039 + $0x8] sm:$0xff]
        %v5042 = vld [vmem:[%s5039 + $0x10] sm:$0xff]
        %v5043 = vld [vmem:[%s5039 + $0x18] sm:$0xff]
        %v5044 = vld [vmem:[%s5039 + $0x20] sm:$0xff]
        %v5045 = vld [vmem:[%s5039 + $0x28] sm:$0xff]
        %v5046 = vld [vmem:[%s5039 + $0x30] sm:$0xff]
        %v5047 = vld [vmem:[%s5039 + $0x38] sm:$0xff]
        %v5048 = vld [vmem:[%s5039 + $0x40] sm:$0xff]
        %v5049 = vld [vmem:[%s5039 + $0x48] sm:$0xff]
        %v5050 = vld [vmem:[%s5039 + $0x50] sm:$0xff]
        %v5051 = vld [vmem:[%s5039 + $0x58] sm:$0xff]
        %v5052 = vld [vmem:[%s5039 + $0x60] sm:$0xff]
        %v5053 = vld [vmem:[%s5039 + $0x68] sm:$0xff]
        %v5054 = vld [vmem:[%s5039 + $0x70] sm:$0xff]
        %v5055 = vld [vmem:[%s5039 + $0x78] sm:$0xff]
        %v5056 = vld [vmem:[%s5039 + $0x80] sm:$0xff]
        %v5057 = vld [vmem:[%s5039 + $0x88] sm:$0xff]
        %v5058 = vld [vmem:[%s5039 + $0x90] sm:$0xff]
        %v5059 = vld [vmem:[%s5039 + $0x98] sm:$0xff]
        %v5060 = vld [vmem:[%s5039 + $0xa0] sm:$0xff]
        %v5061 = vld [vmem:[%s5039 + $0xa8] sm:$0xff]
        %v5062 = vld [vmem:[%s5039 + $0xb0] sm:$0xff]
        %v5063 = vld [vmem:[%s5039 + $0xb8] sm:$0xff]
        %v5064 = vld [vmem:[%s5039 + $0xc0] sm:$0xff]
        %v5065 = vld [vmem:[%s5039 + $0xc8] sm:$0xff]
        %v5066 = vld [vmem:[%s5039 + $0xd0] sm:$0xff]
        %v5067 = vld [vmem:[%s5039 + $0xd8] sm:$0xff]
        %v5068 = vld [vmem:[%s5039 + $0xe0] sm:$0xff]
        %v5069 = vld [vmem:[%s5039 + $0xe8] sm:$0xff]
        %v5070 = vld [vmem:[%s5039 + $0xf0] sm:$0xff]
        %v5071 = vld [vmem:[%s5039 + $0xf8] sm:$0xff]
        %v5078 = vrot.slane %v5035, 1
        %v5079 = vrot.slane %v5000, 1
        %v5080 = vsel %vm4330, %v5078, %v5079
        %v5081 = vrot.slane %v5036, 1
        %v5082 = vrot.slane %v5001, 1
        %v5083 = vsel %vm4330, %v5081, %v5082
        %v5084 = vrot.slane %v5037, 1
        %v5085 = vsel %vm4330, %v5079, %v5084
        %v5086 = vrot.slane %v5038, 1
        %v5087 = vsel %vm4330, %v5082, %v5086
        %5092 = vmatpush.msra.mxu0 %v5055
        %5093 = vmatpush.msra.mxu0 %v5054
        %5094 = vmatpush.msra.mxu0 %v5053
        %5095 = vmatpush.msra.mxu0 %v5052
        %5096 = vmatpush.msra.mxu0 %v5051
        %5097 = vmatpush.msra.mxu0 %v5050
        %5098 = vmatpush.msra.mxu0 %v5049
        %5099 = vmatpush.msra.mxu0 %v5048
        %5100 = vmatpush.msra.mxu0 %v5047
        %5101 = vmatpush.msra.mxu0 %v5046
        %5102 = vmatpush.msra.mxu0 %v5045
        %5103 = vmatpush.msra.mxu0 %v5044
        %5104 = vmatpush.msra.mxu0 %v5043
        %5105 = vmatpush.msra.mxu0 %v5042
        %5106 = vmatpush.msra.mxu0 %v5041
        %5107 = vmatpush.msra.mxu0 %v5040
        %5108 = vmatmul.f32.gmra.mxu0 %v5080
        %v5109 = vpop.f32.mrf.mxu0
        %v5110 = vadd.f32 0.0, %v5109
        %5111 = vmatmul.f32.gmra.mxu0 %v5085
        %v5112 = vpop.f32.mrf.mxu0
        %v5113 = vadd.f32 0.0, %v5112
        %5114 = vdwg.mxu0
        %5115 = vmatpush.msra.mxu0 %v5071
        %5116 = vmatpush.msra.mxu0 %v5070
        %5117 = vmatpush.msra.mxu0 %v5069
        %5118 = vmatpush.msra.mxu0 %v5068
        %5119 = vmatpush.msra.mxu0 %v5067
        %5120 = vmatpush.msra.mxu0 %v5066
        %5121 = vmatpush.msra.mxu0 %v5065
        %5122 = vmatpush.msra.mxu0 %v5064
        %5123 = vmatpush.msra.mxu0 %v5063
        %5124 = vmatpush.msra.mxu0 %v5062
        %5125 = vmatpush.msra.mxu0 %v5061
        %5126 = vmatpush.msra.mxu0 %v5060
        %5127 = vmatpush.msra.mxu0 %v5059
        %5128 = vmatpush.msra.mxu0 %v5058
        %5129 = vmatpush.msra.mxu0 %v5057
        %5130 = vmatpush.msra.mxu0 %v5056
        %5131 = vmatmul.f32.gmra.mxu0 %v5083
        %v5132 = vpop.f32.mrf.mxu0
        %v5133 = vadd.f32 %v5110, %v5132
        %5134 = vmatmul.f32.gmra.mxu0 %v5087
        %v5135 = vpop.f32.mrf.mxu0
        %v5136 = vadd.f32 %v5113, %v5135
        %5137 = vdwg.mxu0
        %5138 = vmatpush.msra.mxu0 %v5018
        %5139 = vmatpush.msra.mxu0 %v5017
        %5140 = vmatpush.msra.mxu0 %v5016
        %5141 = vmatpush.msra.mxu0 %v5015
        %5142 = vmatpush.msra.mxu0 %v5014
        %5143 = vmatpush.msra.mxu0 %v5013
        %5144 = vmatpush.msra.mxu0 %v5012
        %5145 = vmatpush.msra.mxu0 %v5011
        %5146 = vmatpush.msra.mxu0 %v5010
        %5147 = vmatpush.msra.mxu0 %v5009
        %5148 = vmatpush.msra.mxu0 %v5008
        %5149 = vmatpush.msra.mxu0 %v5007
        %5150 = vmatpush.msra.mxu0 %v5006
        %5151 = vmatpush.msra.mxu0 %v5005
        %5152 = vmatpush.msra.mxu0 %v5004
        %5153 = vmatpush.msra.mxu0 %v5003
        %5154 = vmatmul.f32.gmra.mxu0 %v4998
        %v5155 = vpop.f32.mrf.mxu0
        %v5156 = vadd.f32 %v5133, %v5155
        %5157 = vmatmul.f32.gmra.mxu0 %v5000
        %v5158 = vpop.f32.mrf.mxu0
        %v5159 = vadd.f32 %v5136, %v5158
        %5160 = vdwg.mxu0
        %5161 = vmatpush.msra.mxu0 %v5034
        %5162 = vmatpush.msra.mxu0 %v5033
        %5163 = vmatpush.msra.mxu0 %v5032
        %5164 = vmatpush.msra.mxu0 %v5031
        %5165 = vmatpush.msra.mxu0 %v5030
        %5166 = vmatpush.msra.mxu0 %v5029
        %5167 = vmatpush.msra.mxu0 %v5028
        %5168 = vmatpush.msra.mxu0 %v5027
        %5169 = vmatpush.msra.mxu0 %v5026
        %5170 = vmatpush.msra.mxu0 %v5025
        %5171 = vmatpush.msra.mxu0 %v5024
        %5172 = vmatpush.msra.mxu0 %v5023
        %5173 = vmatpush.msra.mxu0 %v5022
        %5174 = vmatpush.msra.mxu0 %v5021
        %5175 = vmatpush.msra.mxu0 %v5020
        %5176 = vmatpush.msra.mxu0 %v5019
        %5177 = vmatmul.f32.gmra.mxu0 %v4999
        %v5178 = vpop.f32.mrf.mxu0
        %v5179 = vadd.f32 %v5156, %v5178
        %5180 = vmatmul.f32.gmra.mxu0 %v5001
        %v5181 = vpop.f32.mrf.mxu0
        %v5182 = vadd.f32 %v5159, %v5181
        %5183 = vdwg.mxu0
        %v5184 = vld [vmem:[#allocation6] sm:$0xfc]
        %v5185 = vld [vmem:[#allocation6 + $0x8] sm:$0xfc]
        %v5186 = vld [vmem:[#allocation6 + $0x20] sm:$0x3]
        %v5187 = vld [vmem:[#allocation6 + $0x28] sm:$0x3]
        %s5188 = scalar_lea.vmem %s5, 2304
        %v5189 = vld [vmem:[%s5188] sm:$0xff]
        %v5190 = vld [vmem:[%s5188 + $0x8] sm:$0xff]
        %v5191 = vld [vmem:[%s5188 + $0x10] sm:$0xff]
        %v5192 = vld [vmem:[%s5188 + $0x18] sm:$0xff]
        %v5193 = vld [vmem:[%s5188 + $0x20] sm:$0xff]
        %v5194 = vld [vmem:[%s5188 + $0x28] sm:$0xff]
        %v5195 = vld [vmem:[%s5188 + $0x30] sm:$0xff]
        %v5196 = vld [vmem:[%s5188 + $0x38] sm:$0xff]
        %v5197 = vld [vmem:[%s5188 + $0x40] sm:$0xff]
        %v5198 = vld [vmem:[%s5188 + $0x48] sm:$0xff]
        %v5199 = vld [vmem:[%s5188 + $0x50] sm:$0xff]
        %v5200 = vld [vmem:[%s5188 + $0x58] sm:$0xff]
        %v5201 = vld [vmem:[%s5188 + $0x60] sm:$0xff]
        %v5202 = vld [vmem:[%s5188 + $0x68] sm:$0xff]
        %v5203 = vld [vmem:[%s5188 + $0x70] sm:$0xff]
        %v5204 = vld [vmem:[%s5188 + $0x78] sm:$0xff]
        %v5205 = vld [vmem:[%s5188 + $0x80] sm:$0xff]
        %v5206 = vld [vmem:[%s5188 + $0x88] sm:$0xff]
        %v5207 = vld [vmem:[%s5188 + $0x90] sm:$0xff]
        %v5208 = vld [vmem:[%s5188 + $0x98] sm:$0xff]
        %v5209 = vld [vmem:[%s5188 + $0xa0] sm:$0xff]
        %v5210 = vld [vmem:[%s5188 + $0xa8] sm:$0xff]
        %v5211 = vld [vmem:[%s5188 + $0xb0] sm:$0xff]
        %v5212 = vld [vmem:[%s5188 + $0xb8] sm:$0xff]
        %v5213 = vld [vmem:[%s5188 + $0xc0] sm:$0xff]
        %v5214 = vld [vmem:[%s5188 + $0xc8] sm:$0xff]
        %v5215 = vld [vmem:[%s5188 + $0xd0] sm:$0xff]
        %v5216 = vld [vmem:[%s5188 + $0xd8] sm:$0xff]
        %v5217 = vld [vmem:[%s5188 + $0xe0] sm:$0xff]
        %v5218 = vld [vmem:[%s5188 + $0xe8] sm:$0xff]
        %v5219 = vld [vmem:[%s5188 + $0xf0] sm:$0xff]
        %v5220 = vld [vmem:[%s5188 + $0xf8] sm:$0xff]
        %v5225 = vrot.slane %v5184, 2
        %v5226 = vrot.slane %v5000, 2
        %v5227 = vsel %vm4478, %v5225, %v5226
        %v5228 = vrot.slane %v5185, 2
        %v5229 = vrot.slane %v5001, 2
        %v5230 = vsel %vm4478, %v5228, %v5229
        %v5231 = vrot.slane %v5186, 2
        %v5232 = vsel %vm4478, %v5226, %v5231
        %v5233 = vrot.slane %v5187, 2
        %v5234 = vsel %vm4478, %v5229, %v5233
        %5239 = vmatpush.msra.mxu0 %v5204
        %5240 = vmatpush.msra.mxu0 %v5203
        %5241 = vmatpush.msra.mxu0 %v5202
        %5242 = vmatpush.msra.mxu0 %v5201
        %5243 = vmatpush.msra.mxu0 %v5200
        %5244 = vmatpush.msra.mxu0 %v5199
        %5245 = vmatpush.msra.mxu0 %v5198
        %5246 = vmatpush.msra.mxu0 %v5197
        %5247 = vmatpush.msra.mxu0 %v5196
        %5248 = vmatpush.msra.mxu0 %v5195
        %5249 = vmatpush.msra.mxu0 %v5194
        %5250 = vmatpush.msra.mxu0 %v5193
        %5251 = vmatpush.msra.mxu0 %v5192
        %5252 = vmatpush.msra.mxu0 %v5191
        %5253 = vmatpush.msra.mxu0 %v5190
        %5254 = vmatpush.msra.mxu0 %v5189
        %5255 = vmatmul.f32.gmra.mxu0 %v5227
        %v5256 = vpop.f32.mrf.mxu0
        %v5257 = vadd.f32 0.0, %v5256
        %5258 = vmatmul.f32.gmra.mxu0 %v5232
        %v5259 = vpop.f32.mrf.mxu0
        %v5260 = vadd.f32 0.0, %v5259
        %5261 = vdwg.mxu0
        %5262 = vmatpush.msra.mxu0 %v5220
        %5263 = vmatpush.msra.mxu0 %v5219
        %5264 = vmatpush.msra.mxu0 %v5218
        %5265 = vmatpush.msra.mxu0 %v5217
        %5266 = vmatpush.msra.mxu0 %v5216
        %5267 = vmatpush.msra.mxu0 %v5215
        %5268 = vmatpush.msra.mxu0 %v5214
        %5269 = vmatpush.msra.mxu0 %v5213
        %5270 = vmatpush.msra.mxu0 %v5212
        %5271 = vmatpush.msra.mxu0 %v5211
        %5272 = vmatpush.msra.mxu0 %v5210
        %5273 = vmatpush.msra.mxu0 %v5209
        %5274 = vmatpush.msra.mxu0 %v5208
        %5275 = vmatpush.msra.mxu0 %v5207
        %5276 = vmatpush.msra.mxu0 %v5206
        %5277 = vmatpush.msra.mxu0 %v5205
        %5278 = vmatmul.f32.gmra.mxu0 %v5230
        %v5279 = vpop.f32.mrf.mxu0
        %v5280 = vadd.f32 %v5257, %v5279
        %5281 = vmatmul.f32.gmra.mxu0 %v5234
        %v5282 = vpop.f32.mrf.mxu0
        %v5283 = vadd.f32 %v5260, %v5282
        %5284 = vdwg.mxu0
        %v5285 = vadd.f32 %v5179, %v5280
        %v5286 = vadd.f32 %v5182, %v5283
        %v5287 = vld [vmem:[#allocation6] sm:$0xf8]
        %v5288 = vld [vmem:[#allocation6 + $0x8] sm:$0xf8]
        %v5289 = vld [vmem:[#allocation6 + $0x20] sm:$0x7]
        %v5290 = vld [vmem:[#allocation6 + $0x28] sm:$0x7]
        %s5291 = scalar_lea.vmem %s5, 2560
        %v5292 = vld [vmem:[%s5291] sm:$0xff]
        %v5293 = vld [vmem:[%s5291 + $0x8] sm:$0xff]
        %v5294 = vld [vmem:[%s5291 + $0x10] sm:$0xff]
        %v5295 = vld [vmem:[%s5291 + $0x18] sm:$0xff]
        %v5296 = vld [vmem:[%s5291 + $0x20] sm:$0xff]
        %v5297 = vld [vmem:[%s5291 + $0x28] sm:$0xff]
        %v5298 = vld [vmem:[%s5291 + $0x30] sm:$0xff]
        %v5299 = vld [vmem:[%s5291 + $0x38] sm:$0xff]
        %v5300 = vld [vmem:[%s5291 + $0x40] sm:$0xff]
        %v5301 = vld [vmem:[%s5291 + $0x48] sm:$0xff]
        %v5302 = vld [vmem:[%s5291 + $0x50] sm:$0xff]
        %v5303 = vld [vmem:[%s5291 + $0x58] sm:$0xff]
        %v5304 = vld [vmem:[%s5291 + $0x60] sm:$0xff]
        %v5305 = vld [vmem:[%s5291 + $0x68] sm:$0xff]
        %v5306 = vld [vmem:[%s5291 + $0x70] sm:$0xff]
        %v5307 = vld [vmem:[%s5291 + $0x78] sm:$0xff]
        %v5308 = vld [vmem:[%s5291 + $0x80] sm:$0xff]
        %v5309 = vld [vmem:[%s5291 + $0x88] sm:$0xff]
        %v5310 = vld [vmem:[%s5291 + $0x90] sm:$0xff]
        %v5311 = vld [vmem:[%s5291 + $0x98] sm:$0xff]
        %v5312 = vld [vmem:[%s5291 + $0xa0] sm:$0xff]
        %v5313 = vld [vmem:[%s5291 + $0xa8] sm:$0xff]
        %v5314 = vld [vmem:[%s5291 + $0xb0] sm:$0xff]
        %v5315 = vld [vmem:[%s5291 + $0xb8] sm:$0xff]
        %v5316 = vld [vmem:[%s5291 + $0xc0] sm:$0xff]
        %v5317 = vld [vmem:[%s5291 + $0xc8] sm:$0xff]
        %v5318 = vld [vmem:[%s5291 + $0xd0] sm:$0xff]
        %v5319 = vld [vmem:[%s5291 + $0xd8] sm:$0xff]
        %v5320 = vld [vmem:[%s5291 + $0xe0] sm:$0xff]
        %v5321 = vld [vmem:[%s5291 + $0xe8] sm:$0xff]
        %v5322 = vld [vmem:[%s5291 + $0xf0] sm:$0xff]
        %v5323 = vld [vmem:[%s5291 + $0xf8] sm:$0xff]
        %v5328 = vrot.slane %v5287, 3
        %v5329 = vrot.slane %v5000, 3
        %v5330 = vsel %vm4582, %v5328, %v5329
        %v5331 = vrot.slane %v5288, 3
        %v5332 = vrot.slane %v5001, 3
        %v5333 = vsel %vm4582, %v5331, %v5332
        %v5334 = vrot.slane %v5289, 3
        %v5335 = vsel %vm4582, %v5329, %v5334
        %v5336 = vrot.slane %v5290, 3
        %v5337 = vsel %vm4582, %v5332, %v5336
        %5342 = vmatpush.msra.mxu0 %v5307
        %5343 = vmatpush.msra.mxu0 %v5306
        %5344 = vmatpush.msra.mxu0 %v5305
        %5345 = vmatpush.msra.mxu0 %v5304
        %5346 = vmatpush.msra.mxu0 %v5303
        %5347 = vmatpush.msra.mxu0 %v5302
        %5348 = vmatpush.msra.mxu0 %v5301
        %5349 = vmatpush.msra.mxu0 %v5300
        %5350 = vmatpush.msra.mxu0 %v5299
        %5351 = vmatpush.msra.mxu0 %v5298
        %5352 = vmatpush.msra.mxu0 %v5297
        %5353 = vmatpush.msra.mxu0 %v5296
        %5354 = vmatpush.msra.mxu0 %v5295
        %5355 = vmatpush.msra.mxu0 %v5294
        %5356 = vmatpush.msra.mxu0 %v5293
        %5357 = vmatpush.msra.mxu0 %v5292
        %5358 = vmatmul.f32.gmra.mxu0 %v5330
        %v5359 = vpop.f32.mrf.mxu0
        %v5360 = vadd.f32 0.0, %v5359
        %5361 = vmatmul.f32.gmra.mxu0 %v5335
        %v5362 = vpop.f32.mrf.mxu0
        %v5363 = vadd.f32 0.0, %v5362
        %5364 = vdwg.mxu0
        %5365 = vmatpush.msra.mxu0 %v5323
        %5366 = vmatpush.msra.mxu0 %v5322
        %5367 = vmatpush.msra.mxu0 %v5321
        %5368 = vmatpush.msra.mxu0 %v5320
        %5369 = vmatpush.msra.mxu0 %v5319
        %5370 = vmatpush.msra.mxu0 %v5318
        %5371 = vmatpush.msra.mxu0 %v5317
        %5372 = vmatpush.msra.mxu0 %v5316
        %5373 = vmatpush.msra.mxu0 %v5315
        %5374 = vmatpush.msra.mxu0 %v5314
        %5375 = vmatpush.msra.mxu0 %v5313
        %5376 = vmatpush.msra.mxu0 %v5312
        %5377 = vmatpush.msra.mxu0 %v5311
        %5378 = vmatpush.msra.mxu0 %v5310
        %5379 = vmatpush.msra.mxu0 %v5309
        %5380 = vmatpush.msra.mxu0 %v5308
        %5381 = vmatmul.f32.gmra.mxu0 %v5333
        %v5382 = vpop.f32.mrf.mxu0
        %v5383 = vadd.f32 %v5360, %v5382
        %5384 = vmatmul.f32.gmra.mxu0 %v5337
        %v5385 = vpop.f32.mrf.mxu0
        %v5386 = vadd.f32 %v5363, %v5385
        %5387 = vdwg.mxu0
        %v5388 = vadd.f32 %v5285, %v5383
        %v5389 = vadd.f32 %v5286, %v5386
        %v5390 = vld [vmem:[#allocation6] sm:$0xf0]
        %v5391 = vld [vmem:[#allocation6 + $0x8] sm:$0xf0]
        %v5392 = vld [vmem:[#allocation6 + $0x20] sm:$0xf]
        %v5393 = vld [vmem:[#allocation6 + $0x28] sm:$0xf]
        %s5394 = scalar_lea.vmem %s5, 2816
        %v5395 = vld [vmem:[%s5394] sm:$0xff]
        %v5396 = vld [vmem:[%s5394 + $0x8] sm:$0xff]
        %v5397 = vld [vmem:[%s5394 + $0x10] sm:$0xff]
        %v5398 = vld [vmem:[%s5394 + $0x18] sm:$0xff]
        %v5399 = vld [vmem:[%s5394 + $0x20] sm:$0xff]
        %v5400 = vld [vmem:[%s5394 + $0x28] sm:$0xff]
        %v5401 = vld [vmem:[%s5394 + $0x30] sm:$0xff]
        %v5402 = vld [vmem:[%s5394 + $0x38] sm:$0xff]
        %v5403 = vld [vmem:[%s5394 + $0x40] sm:$0xff]
        %v5404 = vld [vmem:[%s5394 + $0x48] sm:$0xff]
        %v5405 = vld [vmem:[%s5394 + $0x50] sm:$0xff]
        %v5406 = vld [vmem:[%s5394 + $0x58] sm:$0xff]
        %v5407 = vld [vmem:[%s5394 + $0x60] sm:$0xff]
        %v5408 = vld [vmem:[%s5394 + $0x68] sm:$0xff]
        %v5409 = vld [vmem:[%s5394 + $0x70] sm:$0xff]
        %v5410 = vld [vmem:[%s5394 + $0x78] sm:$0xff]
        %v5411 = vld [vmem:[%s5394 + $0x80] sm:$0xff]
        %v5412 = vld [vmem:[%s5394 + $0x88] sm:$0xff]
        %v5413 = vld [vmem:[%s5394 + $0x90] sm:$0xff]
        %v5414 = vld [vmem:[%s5394 + $0x98] sm:$0xff]
        %v5415 = vld [vmem:[%s5394 + $0xa0] sm:$0xff]
        %v5416 = vld [vmem:[%s5394 + $0xa8] sm:$0xff]
        %v5417 = vld [vmem:[%s5394 + $0xb0] sm:$0xff]
        %v5418 = vld [vmem:[%s5394 + $0xb8] sm:$0xff]
        %v5419 = vld [vmem:[%s5394 + $0xc0] sm:$0xff]
        %v5420 = vld [vmem:[%s5394 + $0xc8] sm:$0xff]
        %v5421 = vld [vmem:[%s5394 + $0xd0] sm:$0xff]
        %v5422 = vld [vmem:[%s5394 + $0xd8] sm:$0xff]
        %v5423 = vld [vmem:[%s5394 + $0xe0] sm:$0xff]
        %v5424 = vld [vmem:[%s5394 + $0xe8] sm:$0xff]
        %v5425 = vld [vmem:[%s5394 + $0xf0] sm:$0xff]
        %v5426 = vld [vmem:[%s5394 + $0xf8] sm:$0xff]
        %v5431 = vrot.slane %v5390, 4
        %v5432 = vrot.slane %v5000, 4
        %v5433 = vsel %vm4686, %v5431, %v5432
        %v5434 = vrot.slane %v5391, 4
        %v5435 = vrot.slane %v5001, 4
        %v5436 = vsel %vm4686, %v5434, %v5435
        %v5437 = vrot.slane %v5392, 4
        %v5438 = vsel %vm4686, %v5432, %v5437
        %v5439 = vrot.slane %v5393, 4
        %v5440 = vsel %vm4686, %v5435, %v5439
        %5445 = vmatpush.msra.mxu0 %v5410
        %5446 = vmatpush.msra.mxu0 %v5409
        %5447 = vmatpush.msra.mxu0 %v5408
        %5448 = vmatpush.msra.mxu0 %v5407
        %5449 = vmatpush.msra.mxu0 %v5406
        %5450 = vmatpush.msra.mxu0 %v5405
        %5451 = vmatpush.msra.mxu0 %v5404
        %5452 = vmatpush.msra.mxu0 %v5403
        %5453 = vmatpush.msra.mxu0 %v5402
        %5454 = vmatpush.msra.mxu0 %v5401
        %5455 = vmatpush.msra.mxu0 %v5400
        %5456 = vmatpush.msra.mxu0 %v5399
        %5457 = vmatpush.msra.mxu0 %v5398
        %5458 = vmatpush.msra.mxu0 %v5397
        %5459 = vmatpush.msra.mxu0 %v5396
        %5460 = vmatpush.msra.mxu0 %v5395
        %5461 = vmatmul.f32.gmra.mxu0 %v5433
        %v5462 = vpop.f32.mrf.mxu0
        %v5463 = vadd.f32 0.0, %v5462
        %5464 = vmatmul.f32.gmra.mxu0 %v5438
        %v5465 = vpop.f32.mrf.mxu0
        %v5466 = vadd.f32 0.0, %v5465
        %5467 = vdwg.mxu0
        %5468 = vmatpush.msra.mxu0 %v5426
        %5469 = vmatpush.msra.mxu0 %v5425
        %5470 = vmatpush.msra.mxu0 %v5424
        %5471 = vmatpush.msra.mxu0 %v5423
        %5472 = vmatpush.msra.mxu0 %v5422
        %5473 = vmatpush.msra.mxu0 %v5421
        %5474 = vmatpush.msra.mxu0 %v5420
        %5475 = vmatpush.msra.mxu0 %v5419
        %5476 = vmatpush.msra.mxu0 %v5418
        %5477 = vmatpush.msra.mxu0 %v5417
        %5478 = vmatpush.msra.mxu0 %v5416
        %5479 = vmatpush.msra.mxu0 %v5415
        %5480 = vmatpush.msra.mxu0 %v5414
        %5481 = vmatpush.msra.mxu0 %v5413
        %5482 = vmatpush.msra.mxu0 %v5412
        %5483 = vmatpush.msra.mxu0 %v5411
        %5484 = vmatmul.f32.gmra.mxu0 %v5436
        %v5485 = vpop.f32.mrf.mxu0
        %v5486 = vadd.f32 %v5463, %v5485
        %5487 = vmatmul.f32.gmra.mxu0 %v5440
        %v5488 = vpop.f32.mrf.mxu0
        %v5489 = vadd.f32 %v5466, %v5488
        %5490 = vdwg.mxu0
        %v5491 = vadd.f32 %v5388, %v5486
        %v5492 = vadd.f32 %v5389, %v5489
        %v5493 = vld [vmem:[#allocation6] sm:$0xe0]
        %v5494 = vld [vmem:[#allocation6 + $0x8] sm:$0xe0]
        %v5495 = vld [vmem:[#allocation6 + $0x20] sm:$0x1f]
        %v5496 = vld [vmem:[#allocation6 + $0x28] sm:$0x1f]
        %s5497 = scalar_lea.vmem %s5, 3072
        %v5498 = vld [vmem:[%s5497] sm:$0xff]
        %v5499 = vld [vmem:[%s5497 + $0x8] sm:$0xff]
        %v5500 = vld [vmem:[%s5497 + $0x10] sm:$0xff]
        %v5501 = vld [vmem:[%s5497 + $0x18] sm:$0xff]
        %v5502 = vld [vmem:[%s5497 + $0x20] sm:$0xff]
        %v5503 = vld [vmem:[%s5497 + $0x28] sm:$0xff]
        %v5504 = vld [vmem:[%s5497 + $0x30] sm:$0xff]
        %v5505 = vld [vmem:[%s5497 + $0x38] sm:$0xff]
        %v5506 = vld [vmem:[%s5497 + $0x40] sm:$0xff]
        %v5507 = vld [vmem:[%s5497 + $0x48] sm:$0xff]
        %v5508 = vld [vmem:[%s5497 + $0x50] sm:$0xff]
        %v5509 = vld [vmem:[%s5497 + $0x58] sm:$0xff]
        %v5510 = vld [vmem:[%s5497 + $0x60] sm:$0xff]
        %v5511 = vld [vmem:[%s5497 + $0x68] sm:$0xff]
        %v5512 = vld [vmem:[%s5497 + $0x70] sm:$0xff]
        %v5513 = vld [vmem:[%s5497 + $0x78] sm:$0xff]
        %v5514 = vld [vmem:[%s5497 + $0x80] sm:$0xff]
        %v5515 = vld [vmem:[%s5497 + $0x88] sm:$0xff]
        %v5516 = vld [vmem:[%s5497 + $0x90] sm:$0xff]
        %v5517 = vld [vmem:[%s5497 + $0x98] sm:$0xff]
        %v5518 = vld [vmem:[%s5497 + $0xa0] sm:$0xff]
        %v5519 = vld [vmem:[%s5497 + $0xa8] sm:$0xff]
        %v5520 = vld [vmem:[%s5497 + $0xb0] sm:$0xff]
        %v5521 = vld [vmem:[%s5497 + $0xb8] sm:$0xff]
        %v5522 = vld [vmem:[%s5497 + $0xc0] sm:$0xff]
        %v5523 = vld [vmem:[%s5497 + $0xc8] sm:$0xff]
        %v5524 = vld [vmem:[%s5497 + $0xd0] sm:$0xff]
        %v5525 = vld [vmem:[%s5497 + $0xd8] sm:$0xff]
        %v5526 = vld [vmem:[%s5497 + $0xe0] sm:$0xff]
        %v5527 = vld [vmem:[%s5497 + $0xe8] sm:$0xff]
        %v5528 = vld [vmem:[%s5497 + $0xf0] sm:$0xff]
        %v5529 = vld [vmem:[%s5497 + $0xf8] sm:$0xff]
        %v5534 = vrot.slane %v5493, 5
        %v5535 = vrot.slane %v5000, 5
        %v5536 = vsel %vm4188, %v5534, %v5535
        %v5537 = vrot.slane %v5494, 5
        %v5538 = vrot.slane %v5001, 5
        %v5539 = vsel %vm4188, %v5537, %v5538
        %v5540 = vrot.slane %v5495, 5
        %v5541 = vsel %vm4188, %v5535, %v5540
        %v5542 = vrot.slane %v5496, 5
        %v5543 = vsel %vm4188, %v5538, %v5542
        %5548 = vmatpush.msra.mxu0 %v5513
        %5549 = vmatpush.msra.mxu0 %v5512
        %5550 = vmatpush.msra.mxu0 %v5511
        %5551 = vmatpush.msra.mxu0 %v5510
        %5552 = vmatpush.msra.mxu0 %v5509
        %5553 = vmatpush.msra.mxu0 %v5508
        %5554 = vmatpush.msra.mxu0 %v5507
        %5555 = vmatpush.msra.mxu0 %v5506
        %5556 = vmatpush.msra.mxu0 %v5505
        %5557 = vmatpush.msra.mxu0 %v5504
        %5558 = vmatpush.msra.mxu0 %v5503
        %5559 = vmatpush.msra.mxu0 %v5502
        %5560 = vmatpush.msra.mxu0 %v5501
        %5561 = vmatpush.msra.mxu0 %v5500
        %5562 = vmatpush.msra.mxu0 %v5499
        %5563 = vmatpush.msra.mxu0 %v5498
        %5564 = vmatmul.f32.gmra.mxu0 %v5536
        %v5565 = vpop.f32.mrf.mxu0
        %v5566 = vadd.f32 0.0, %v5565
        %5567 = vmatmul.f32.gmra.mxu0 %v5541
        %v5568 = vpop.f32.mrf.mxu0
        %v5569 = vadd.f32 0.0, %v5568
        %5570 = vdwg.mxu0
        %5571 = vmatpush.msra.mxu0 %v5529
        %5572 = vmatpush.msra.mxu0 %v5528
        %5573 = vmatpush.msra.mxu0 %v5527
        %5574 = vmatpush.msra.mxu0 %v5526
        %5575 = vmatpush.msra.mxu0 %v5525
        %5576 = vmatpush.msra.mxu0 %v5524
        %5577 = vmatpush.msra.mxu0 %v5523
        %5578 = vmatpush.msra.mxu0 %v5522
        %5579 = vmatpush.msra.mxu0 %v5521
        %5580 = vmatpush.msra.mxu0 %v5520
        %5581 = vmatpush.msra.mxu0 %v5519
        %5582 = vmatpush.msra.mxu0 %v5518
        %5583 = vmatpush.msra.mxu0 %v5517
        %5584 = vmatpush.msra.mxu0 %v5516
        %5585 = vmatpush.msra.mxu0 %v5515
        %5586 = vmatpush.msra.mxu0 %v5514
        %5587 = vmatmul.f32.gmra.mxu0 %v5539
        %v5588 = vpop.f32.mrf.mxu0
        %v5589 = vadd.f32 %v5566, %v5588
        %5590 = vmatmul.f32.gmra.mxu0 %v5543
        %v5591 = vpop.f32.mrf.mxu0
        %v5592 = vadd.f32 %v5569, %v5591
        %5593 = vdwg.mxu0
        %v5594 = vadd.f32 %v5491, %v5589
        %v5595 = vadd.f32 %v5492, %v5592
        %v5596 = vld [vmem:[#allocation6] sm:$0xc0]
        %v5597 = vld [vmem:[#allocation6 + $0x8] sm:$0xc0]
        %v5598 = vld [vmem:[#allocation6 + $0x20] sm:$0x3f]
        %v5599 = vld [vmem:[#allocation6 + $0x28] sm:$0x3f]
        %s5600 = scalar_lea.vmem %s5, 3328
        %v5601 = vld [vmem:[%s5600] sm:$0xff]
        %v5602 = vld [vmem:[%s5600 + $0x8] sm:$0xff]
        %v5603 = vld [vmem:[%s5600 + $0x10] sm:$0xff]
        %v5604 = vld [vmem:[%s5600 + $0x18] sm:$0xff]
        %v5605 = vld [vmem:[%s5600 + $0x20] sm:$0xff]
        %v5606 = vld [vmem:[%s5600 + $0x28] sm:$0xff]
        %v5607 = vld [vmem:[%s5600 + $0x30] sm:$0xff]
        %v5608 = vld [vmem:[%s5600 + $0x38] sm:$0xff]
        %v5609 = vld [vmem:[%s5600 + $0x40] sm:$0xff]
        %v5610 = vld [vmem:[%s5600 + $0x48] sm:$0xff]
        %v5611 = vld [vmem:[%s5600 + $0x50] sm:$0xff]
        %v5612 = vld [vmem:[%s5600 + $0x58] sm:$0xff]
        %v5613 = vld [vmem:[%s5600 + $0x60] sm:$0xff]
        %v5614 = vld [vmem:[%s5600 + $0x68] sm:$0xff]
        %v5615 = vld [vmem:[%s5600 + $0x70] sm:$0xff]
        %v5616 = vld [vmem:[%s5600 + $0x78] sm:$0xff]
        %v5617 = vld [vmem:[%s5600 + $0x80] sm:$0xff]
        %v5618 = vld [vmem:[%s5600 + $0x88] sm:$0xff]
        %v5619 = vld [vmem:[%s5600 + $0x90] sm:$0xff]
        %v5620 = vld [vmem:[%s5600 + $0x98] sm:$0xff]
        %v5621 = vld [vmem:[%s5600 + $0xa0] sm:$0xff]
        %v5622 = vld [vmem:[%s5600 + $0xa8] sm:$0xff]
        %v5623 = vld [vmem:[%s5600 + $0xb0] sm:$0xff]
        %v5624 = vld [vmem:[%s5600 + $0xb8] sm:$0xff]
        %v5625 = vld [vmem:[%s5600 + $0xc0] sm:$0xff]
        %v5626 = vld [vmem:[%s5600 + $0xc8] sm:$0xff]
        %v5627 = vld [vmem:[%s5600 + $0xd0] sm:$0xff]
        %v5628 = vld [vmem:[%s5600 + $0xd8] sm:$0xff]
        %v5629 = vld [vmem:[%s5600 + $0xe0] sm:$0xff]
        %v5630 = vld [vmem:[%s5600 + $0xe8] sm:$0xff]
        %v5631 = vld [vmem:[%s5600 + $0xf0] sm:$0xff]
        %v5632 = vld [vmem:[%s5600 + $0xf8] sm:$0xff]
        %v5637 = vrot.slane %v5596, 6
        %v5638 = vrot.slane %v5000, 6
        %v5639 = vsel %vm4893, %v5637, %v5638
        %v5640 = vrot.slane %v5597, 6
        %v5641 = vrot.slane %v5001, 6
        %v5642 = vsel %vm4893, %v5640, %v5641
        %v5643 = vrot.slane %v5598, 6
        %v5644 = vsel %vm4893, %v5638, %v5643
        %v5645 = vrot.slane %v5599, 6
        %v5646 = vsel %vm4893, %v5641, %v5645
        %5651 = vmatpush.msra.mxu0 %v5616
        %5652 = vmatpush.msra.mxu0 %v5615
        %5653 = vmatpush.msra.mxu0 %v5614
        %5654 = vmatpush.msra.mxu0 %v5613
        %5655 = vmatpush.msra.mxu0 %v5612
        %5656 = vmatpush.msra.mxu0 %v5611
        %5657 = vmatpush.msra.mxu0 %v5610
        %5658 = vmatpush.msra.mxu0 %v5609
        %5659 = vmatpush.msra.mxu0 %v5608
        %5660 = vmatpush.msra.mxu0 %v5607
        %5661 = vmatpush.msra.mxu0 %v5606
        %5662 = vmatpush.msra.mxu0 %v5605
        %5663 = vmatpush.msra.mxu0 %v5604
        %5664 = vmatpush.msra.mxu0 %v5603
        %5665 = vmatpush.msra.mxu0 %v5602
        %5666 = vmatpush.msra.mxu0 %v5601
        %5667 = vmatmul.f32.gmra.mxu0 %v5639
        %v5668 = vpop.f32.mrf.mxu0
        %v5669 = vadd.f32 0.0, %v5668
        %5670 = vmatmul.f32.gmra.mxu0 %v5644
        %v5671 = vpop.f32.mrf.mxu0
        %v5672 = vadd.f32 0.0, %v5671
        %5673 = vdwg.mxu0
        %5674 = vmatpush.msra.mxu0 %v5632
        %5675 = vmatpush.msra.mxu0 %v5631
        %5676 = vmatpush.msra.mxu0 %v5630
        %5677 = vmatpush.msra.mxu0 %v5629
        %5678 = vmatpush.msra.mxu0 %v5628
        %5679 = vmatpush.msra.mxu0 %v5627
        %5680 = vmatpush.msra.mxu0 %v5626
        %5681 = vmatpush.msra.mxu0 %v5625
        %5682 = vmatpush.msra.mxu0 %v5624
        %5683 = vmatpush.msra.mxu0 %v5623
        %5684 = vmatpush.msra.mxu0 %v5622
        %5685 = vmatpush.msra.mxu0 %v5621
        %5686 = vmatpush.msra.mxu0 %v5620
        %5687 = vmatpush.msra.mxu0 %v5619
        %5688 = vmatpush.msra.mxu0 %v5618
        %5689 = vmatpush.msra.mxu0 %v5617
        %5690 = vmatmul.f32.gmra.mxu0 %v5642
        %v5691 = vpop.f32.mrf.mxu0
        %v5692 = vadd.f32 %v5669, %v5691
        %5693 = vmatmul.f32.gmra.mxu0 %v5646
        %v5694 = vpop.f32.mrf.mxu0
        %v5695 = vadd.f32 %v5672, %v5694
        %5696 = vdwg.mxu0
        %v5697 = vadd.f32 %v5594, %v5692
        %v5698 = vadd.f32 %v5595, %v5695
        %s5699 = sld [smem:[#allocation10 + $0x1]]
        %v5700 = vstv %s5699
        %v5701 = vadd.f32 %v5697, %v5700
        %v5702 = vadd.f32 %v5698, %v5700
        %v5703 = vxor.u32 %v5701, 2147483648
        %v5704 = vxor.u32 %v5702, 2147483648
        %v5705 = vmul.f32 %v5703, 1.442695
        %v5706 = vpow.pop %v5705
        %v5707 = vmul.f32 %v5704, 1.442695
        %v5708 = vpow.pop %v5707
        %v5709 = vadd.f32 %v5706, 1.0
        %v5710 = vadd.f32 %v5708, 1.0
        %v5711 = vrcp.pop %v5709
        %v5712 = vmul.f32 %v5709, %v5711
        %v5713 = vsub.f32 1.0, %v5712
        %v5714 = vmul.f32 %v5711, %v5713
        %v5715 = vadd.f32 %v5711, %v5714
        %vm5716 = vweird.f32 %v5709
        %vm5717 = vweird.f32 %v5711
        %vm5718 = vmor %vm5716, %vm5717
        %v5719 = vsel %vm5718, %v5711, %v5715
        %v5720 = vand.u32 2147483647, %v5709
        %vm5721 = vcmp.eq.f32.partialorder %v5720, 8.507059e+37
        %v5722 = vand.u32 %v5709, 2147483648
        %v5723 = vor.u32 1.1754944e-38, %v5722
        %v5724 = vsel %vm5721, %v5723, %v5719
        %v5725 = vmul.f32 1.0, %v5724
        %v5726 = vrcp.pop %v5710
        %v5727 = vmul.f32 %v5710, %v5726
        %v5728 = vsub.f32 1.0, %v5727
        %v5729 = vmul.f32 %v5726, %v5728
        %v5730 = vadd.f32 %v5726, %v5729
        %vm5731 = vweird.f32 %v5710
        %vm5732 = vweird.f32 %v5726
        %vm5733 = vmor %vm5731, %vm5732
        %v5734 = vsel %vm5733, %v5726, %v5730
        %v5735 = vand.u32 2147483647, %v5710
        %vm5736 = vcmp.eq.f32.partialorder %v5735, 8.507059e+37
        %v5737 = vand.u32 %v5710, 2147483648
        %v5738 = vor.u32 1.1754944e-38, %v5737
        %v5739 = vsel %vm5736, %v5738, %v5734
        %v5740 = vmul.f32 1.0, %v5739
        %v5741 = vld [vmem:[#allocation7] sm:$0xff]
        %v5742 = vld [vmem:[#allocation7 + $0x8] sm:$0xff]
        %v5743 = vld [vmem:[%s6] sm:$0xff]
        %v5744 = vld [vmem:[%s6 + $0x8] sm:$0xff]
        %v5745 = vld [vmem:[%s6 + $0x10] sm:$0xff]
        %v5746 = vld [vmem:[%s6 + $0x18] sm:$0xff]
        %v5747 = vld [vmem:[#allocation7 + $0x1] sm:$0xff]
        %v5748 = vld [vmem:[#allocation7 + $0x9] sm:$0xff]
        %s5749 = scalar_lea.vmem %s6, 32
        %v5750 = vld [vmem:[%s5749] sm:$0xff]
        %v5751 = vld [vmem:[%s5749 + $0x8] sm:$0xff]
        %v5752 = vld [vmem:[%s5749 + $0x10] sm:$0xff]
        %v5753 = vld [vmem:[%s5749 + $0x18] sm:$0xff]
        %vm5754 = vcmask 261120
        %v5756 = vsel %vm5754, %v5747, 0
        %v5759 = vsel %vm5754, %v5748, 0
        %5761 = vmatpush.msra.mxu0 0.0
        %5762 = vmatpush.msra.mxu0 0.0
        %5763 = vmatpush.msra.mxu0 0.0
        %5764 = vmatpush.msra.mxu0 0.0
        %5765 = vmatpush.msra.mxu0 0.0
        %5766 = vmatpush.msra.mxu0 0.0
        %5767 = vmatpush.msra.mxu0 0.0
        %5768 = vmatpush.msra.mxu0 0.0
        %5769 = vmatpush.msra.mxu0 0.0
        %5770 = vmatpush.msra.mxu0 0.0
        %5771 = vmatpush.msra.mxu0 0.0
        %5772 = vmatpush.msra.mxu0 0.0
        %5773 = vmatpush.msra.mxu0 %v5753
        %5774 = vmatpush.msra.mxu0 %v5752
        %5775 = vmatpush.msra.mxu0 %v5751
        %5776 = vmatpush.msra.mxu0 %v5750
        %5777 = vmatmul.f32.gmra.mxu0 %v5756
        %v5778 = vpop.f32.mrf.mxu0
        %v5779 = vadd.f32 0.0, %v5778
        %5780 = vmatmul.f32.gmra.mxu0 %v5759
        %v5781 = vpop.f32.mrf.mxu0
        %v5782 = vadd.f32 0.0, %v5781
        %5783 = vdwg.mxu0
        %v5785 = vsel %vm5754, %v5741, 0
        %v5788 = vsel %vm5754, %v5742, 0
        %5790 = vmatpush.msra.mxu0 0.0
        %5791 = vmatpush.msra.mxu0 0.0
        %5792 = vmatpush.msra.mxu0 0.0
        %5793 = vmatpush.msra.mxu0 0.0
        %5794 = vmatpush.msra.mxu0 0.0
        %5795 = vmatpush.msra.mxu0 0.0
        %5796 = vmatpush.msra.mxu0 0.0
        %5797 = vmatpush.msra.mxu0 0.0
        %5798 = vmatpush.msra.mxu0 0.0
        %5799 = vmatpush.msra.mxu0 0.0
        %5800 = vmatpush.msra.mxu0 0.0
        %5801 = vmatpush.msra.mxu0 0.0
        %5802 = vmatpush.msra.mxu0 %v5746
        %5803 = vmatpush.msra.mxu0 %v5745
        %5804 = vmatpush.msra.mxu0 %v5744
        %5805 = vmatpush.msra.mxu0 %v5743
        %5806 = vmatmul.f32.gmra.mxu0 %v5785
        %v5807 = vpop.f32.mrf.mxu0
        %v5808 = vadd.f32 %v5779, %v5807
        %5809 = vmatmul.f32.gmra.mxu0 %v5788
        %v5810 = vpop.f32.mrf.mxu0
        %v5811 = vadd.f32 %v5782, %v5810
        %5812 = vdwg.mxu0
        %v5813 = vld [vmem:[#allocation7 + $0x2] sm:$0xff]
        %v5814 = vld [vmem:[#allocation7 + $0xa] sm:$0xff]
        %s5815 = scalar_lea.vmem %s6, 64
        %v5816 = vld [vmem:[%s5815] sm:$0xff]
        %v5817 = vld [vmem:[%s5815 + $0x8] sm:$0xff]
        %v5818 = vld [vmem:[%s5815 + $0x10] sm:$0xff]
        %v5819 = vld [vmem:[%s5815 + $0x18] sm:$0xff]
        %v5821 = vsel %vm5754, %v5813, 0
        %v5824 = vsel %vm5754, %v5814, 0
        %5826 = vmatpush.msra.mxu0 0.0
        %5827 = vmatpush.msra.mxu0 0.0
        %5828 = vmatpush.msra.mxu0 0.0
        %5829 = vmatpush.msra.mxu0 0.0
        %5830 = vmatpush.msra.mxu0 0.0
        %5831 = vmatpush.msra.mxu0 0.0
        %5832 = vmatpush.msra.mxu0 0.0
        %5833 = vmatpush.msra.mxu0 0.0
        %5834 = vmatpush.msra.mxu0 0.0
        %5835 = vmatpush.msra.mxu0 0.0
        %5836 = vmatpush.msra.mxu0 0.0
        %5837 = vmatpush.msra.mxu0 0.0
        %5838 = vmatpush.msra.mxu0 %v5819
        %5839 = vmatpush.msra.mxu0 %v5818
        %5840 = vmatpush.msra.mxu0 %v5817
        %5841 = vmatpush.msra.mxu0 %v5816
        %5842 = vmatmul.f32.gmra.mxu0 %v5821
        %v5843 = vpop.f32.mrf.mxu0
        %v5844 = vadd.f32 0.0, %v5843
        %5845 = vmatmul.f32.gmra.mxu0 %v5824
        %v5846 = vpop.f32.mrf.mxu0
        %v5847 = vadd.f32 0.0, %v5846
        %5848 = vdwg.mxu0
        %v5849 = vadd.f32 %v5808, %v5844
        %v5850 = vadd.f32 %v5811, %v5847
        %v5851 = vld [vmem:[#allocation7 + $0x3] sm:$0xff]
        %v5852 = vld [vmem:[#allocation7 + $0xb] sm:$0xff]
        %s5853 = scalar_lea.vmem %s6, 96
        %v5854 = vld [vmem:[%s5853] sm:$0xff]
        %v5855 = vld [vmem:[%s5853 + $0x8] sm:$0xff]
        %v5856 = vld [vmem:[%s5853 + $0x10] sm:$0xff]
        %v5857 = vld [vmem:[%s5853 + $0x18] sm:$0xff]
        %v5859 = vsel %vm5754, %v5851, 0
        %v5862 = vsel %vm5754, %v5852, 0
        %5864 = vmatpush.msra.mxu0 0.0
        %5865 = vmatpush.msra.mxu0 0.0
        %5866 = vmatpush.msra.mxu0 0.0
        %5867 = vmatpush.msra.mxu0 0.0
        %5868 = vmatpush.msra.mxu0 0.0
        %5869 = vmatpush.msra.mxu0 0.0
        %5870 = vmatpush.msra.mxu0 0.0
        %5871 = vmatpush.msra.mxu0 0.0
        %5872 = vmatpush.msra.mxu0 0.0
        %5873 = vmatpush.msra.mxu0 0.0
        %5874 = vmatpush.msra.mxu0 0.0
        %5875 = vmatpush.msra.mxu0 0.0
        %5876 = vmatpush.msra.mxu0 %v5857
        %5877 = vmatpush.msra.mxu0 %v5856
        %5878 = vmatpush.msra.mxu0 %v5855
        %5879 = vmatpush.msra.mxu0 %v5854
        %5880 = vmatmul.f32.gmra.mxu0 %v5859
        %v5881 = vpop.f32.mrf.mxu0
        %v5882 = vadd.f32 0.0, %v5881
        %5883 = vmatmul.f32.gmra.mxu0 %v5862
        %v5884 = vpop.f32.mrf.mxu0
        %v5885 = vadd.f32 0.0, %v5884
        %5886 = vdwg.mxu0
        %v5887 = vadd.f32 %v5849, %v5882
        %v5888 = vadd.f32 %v5850, %v5885
        %v5889 = vld [vmem:[#allocation7 + $0x4] sm:$0xff]
        %v5890 = vld [vmem:[#allocation7 + $0xc] sm:$0xff]
        %s5891 = scalar_lea.vmem %s6, 128
        %v5892 = vld [vmem:[%s5891] sm:$0xff]
        %v5893 = vld [vmem:[%s5891 + $0x8] sm:$0xff]
        %v5894 = vld [vmem:[%s5891 + $0x10] sm:$0xff]
        %v5895 = vld [vmem:[%s5891 + $0x18] sm:$0xff]
        %v5897 = vsel %vm5754, %v5889, 0
        %v5900 = vsel %vm5754, %v5890, 0
        %5902 = vmatpush.msra.mxu0 0.0
        %5903 = vmatpush.msra.mxu0 0.0
        %5904 = vmatpush.msra.mxu0 0.0
        %5905 = vmatpush.msra.mxu0 0.0
        %5906 = vmatpush.msra.mxu0 0.0
        %5907 = vmatpush.msra.mxu0 0.0
        %5908 = vmatpush.msra.mxu0 0.0
        %5909 = vmatpush.msra.mxu0 0.0
        %5910 = vmatpush.msra.mxu0 0.0
        %5911 = vmatpush.msra.mxu0 0.0
        %5912 = vmatpush.msra.mxu0 0.0
        %5913 = vmatpush.msra.mxu0 0.0
        %5914 = vmatpush.msra.mxu0 %v5895
        %5915 = vmatpush.msra.mxu0 %v5894
        %5916 = vmatpush.msra.mxu0 %v5893
        %5917 = vmatpush.msra.mxu0 %v5892
        %5918 = vmatmul.f32.gmra.mxu0 %v5897
        %v5919 = vpop.f32.mrf.mxu0
        %v5920 = vadd.f32 0.0, %v5919
        %5921 = vmatmul.f32.gmra.mxu0 %v5900
        %v5922 = vpop.f32.mrf.mxu0
        %v5923 = vadd.f32 0.0, %v5922
        %5924 = vdwg.mxu0
        %v5925 = vadd.f32 %v5887, %v5920
        %v5926 = vadd.f32 %v5888, %v5923
        %v5927 = vld [vmem:[#allocation7 + $0x5] sm:$0xff]
        %v5928 = vld [vmem:[#allocation7 + $0xd] sm:$0xff]
        %s5929 = scalar_lea.vmem %s6, 160
        %v5930 = vld [vmem:[%s5929] sm:$0xff]
        %v5931 = vld [vmem:[%s5929 + $0x8] sm:$0xff]
        %v5932 = vld [vmem:[%s5929 + $0x10] sm:$0xff]
        %v5933 = vld [vmem:[%s5929 + $0x18] sm:$0xff]
        %v5935 = vsel %vm5754, %v5927, 0
        %v5938 = vsel %vm5754, %v5928, 0
        %5940 = vmatpush.msra.mxu0 0.0
        %5941 = vmatpush.msra.mxu0 0.0
        %5942 = vmatpush.msra.mxu0 0.0
        %5943 = vmatpush.msra.mxu0 0.0
        %5944 = vmatpush.msra.mxu0 0.0
        %5945 = vmatpush.msra.mxu0 0.0
        %5946 = vmatpush.msra.mxu0 0.0
        %5947 = vmatpush.msra.mxu0 0.0
        %5948 = vmatpush.msra.mxu0 0.0
        %5949 = vmatpush.msra.mxu0 0.0
        %5950 = vmatpush.msra.mxu0 0.0
        %5951 = vmatpush.msra.mxu0 0.0
        %5952 = vmatpush.msra.mxu0 %v5933
        %5953 = vmatpush.msra.mxu0 %v5932
        %5954 = vmatpush.msra.mxu0 %v5931
        %5955 = vmatpush.msra.mxu0 %v5930
        %5956 = vmatmul.f32.gmra.mxu0 %v5935
        %v5957 = vpop.f32.mrf.mxu0
        %v5958 = vadd.f32 0.0, %v5957
        %5959 = vmatmul.f32.gmra.mxu0 %v5938
        %v5960 = vpop.f32.mrf.mxu0
        %v5961 = vadd.f32 0.0, %v5960
        %5962 = vdwg.mxu0
        %v5963 = vadd.f32 %v5925, %v5958
        %v5964 = vadd.f32 %v5926, %v5961
        %v5965 = vld [vmem:[#allocation7 + $0x6] sm:$0xff]
        %v5966 = vld [vmem:[#allocation7 + $0xe] sm:$0xff]
        %s5967 = scalar_lea.vmem %s6, 192
        %v5968 = vld [vmem:[%s5967] sm:$0xff]
        %v5969 = vld [vmem:[%s5967 + $0x8] sm:$0xff]
        %v5970 = vld [vmem:[%s5967 + $0x10] sm:$0xff]
        %v5971 = vld [vmem:[%s5967 + $0x18] sm:$0xff]
        %v5973 = vsel %vm5754, %v5965, 0
        %v5976 = vsel %vm5754, %v5966, 0
        %5978 = vmatpush.msra.mxu0 0.0
        %5979 = vmatpush.msra.mxu0 0.0
        %5980 = vmatpush.msra.mxu0 0.0
        %5981 = vmatpush.msra.mxu0 0.0
        %5982 = vmatpush.msra.mxu0 0.0
        %5983 = vmatpush.msra.mxu0 0.0
        %5984 = vmatpush.msra.mxu0 0.0
        %5985 = vmatpush.msra.mxu0 0.0
        %5986 = vmatpush.msra.mxu0 0.0
        %5987 = vmatpush.msra.mxu0 0.0
        %5988 = vmatpush.msra.mxu0 0.0
        %5989 = vmatpush.msra.mxu0 0.0
        %5990 = vmatpush.msra.mxu0 %v5971
        %5991 = vmatpush.msra.mxu0 %v5970
        %5992 = vmatpush.msra.mxu0 %v5969
        %5993 = vmatpush.msra.mxu0 %v5968
        %5994 = vmatmul.f32.gmra.mxu0 %v5973
        %v5995 = vpop.f32.mrf.mxu0
        %v5996 = vadd.f32 0.0, %v5995
        %5997 = vmatmul.f32.gmra.mxu0 %v5976
        %v5998 = vpop.f32.mrf.mxu0
        %v5999 = vadd.f32 0.0, %v5998
        %6000 = vdwg.mxu0
        %v6001 = vadd.f32 %v5963, %v5996
        %v6002 = vadd.f32 %v5964, %v5999
        %s6003 = sld [smem:[#allocation10 + $0x2]]
        %v6004 = vstv %s6003
        %v6005 = vadd.f32 %v6001, %v6004
        %v6006 = vadd.f32 %v6002, %v6004
        %v6007 = vxor.u32 %v6005, 2147483648
        %v6008 = vxor.u32 %v6006, 2147483648
        %v6009 = vmul.f32 %v6007, 1.442695
        %v6010 = vpow.pop %v6009
        %v6011 = vmul.f32 %v6008, 1.442695
        %v6012 = vpow.pop %v6011
        %v6013 = vadd.f32 %v6010, 1.0
        %v6014 = vadd.f32 %v6012, 1.0
        %v6015 = vrcp.pop %v6013
        %v6016 = vmul.f32 %v6013, %v6015
        %v6017 = vsub.f32 1.0, %v6016
        %v6018 = vmul.f32 %v6015, %v6017
        %v6019 = vadd.f32 %v6015, %v6018
        %vm6020 = vweird.f32 %v6013
        %vm6021 = vweird.f32 %v6015
        %vm6022 = vmor %vm6020, %vm6021
        %v6023 = vsel %vm6022, %v6015, %v6019
        %v6024 = vand.u32 2147483647, %v6013
        %vm6025 = vcmp.eq.f32.partialorder %v6024, 8.507059e+37
        %v6026 = vand.u32 %v6013, 2147483648
        %v6027 = vor.u32 1.1754944e-38, %v6026
        %v6028 = vsel %vm6025, %v6027, %v6023
        %v6029 = vmul.f32 1.0, %v6028
        %v6030 = vrcp.pop %v6014
        %v6031 = vmul.f32 %v6014, %v6030
        %v6032 = vsub.f32 1.0, %v6031
        %v6033 = vmul.f32 %v6030, %v6032
        %v6034 = vadd.f32 %v6030, %v6033
        %vm6035 = vweird.f32 %v6014
        %vm6036 = vweird.f32 %v6030
        %vm6037 = vmor %vm6035, %vm6036
        %v6038 = vsel %vm6037, %v6030, %v6034
        %v6039 = vand.u32 2147483647, %v6014
        %vm6040 = vcmp.eq.f32.partialorder %v6039, 8.507059e+37
        %v6041 = vand.u32 %v6014, 2147483648
        %v6042 = vor.u32 1.1754944e-38, %v6041
        %v6043 = vsel %vm6040, %v6042, %v6038
        %v6044 = vmul.f32 1.0, %v6043
        %6045 = vst.msk [vmem:[#allocation8] sm:$0xff] %vm4235, %v6029
        %6046 = vst.msk [vmem:[#allocation8 + $0x8] sm:$0xff] %vm4235, %v6044
        %v6047 = vld [vmem:[#allocation8] sm:$0xff]
        %v6048 = vld [vmem:[#allocation8 + $0x8] sm:$0xff]
        %v6049 = vperm.slane %v5725, 0
        %v6050 = vadd.f32 %v4982, %v6049
        %v6051 = vadd.f32 %v4997, %v6049
        %6053 = vset.pattern.permute.xlu0 0
        %6054 = vperm.xlu0 %6053, %v6047
        %v6055 = vpop.permute.xlu0 %6054
        %6058 = vset.pattern.permute.xlu0 0
        %6059 = vperm.xlu0 %6058, %v6048
        %v6060 = vpop.permute.xlu0 %6059
        %v6062 = vadd.f32 %v6050, %v6055
        %v6063 = vadd.f32 %v6051, %v6060
        %v6064 = vmul.f32 %v6062, 0.33333334
        %v6065 = vmul.f32 %v6063, 0.33333334
        %v6066 = vld [vmem:[%s476] sm:$0xff]
        %v6067 = vld [vmem:[%s476 + $0x8] sm:$0xff]
        %v6068 = vld [vmem:[#allocation4] sm:$0xff]
        %v6069 = vld [vmem:[#allocation4 + $0x8] sm:$0xff]
        %v6070 = vmul.f32 %v6068, %v6064
        %v6071 = vmul.f32 %v6069, %v6065
        %v6072 = vadd.f32 %v6066, %v6070
        %v6073 = vadd.f32 %v6067, %v6071
        %6074 = vst [vmem:[%s520] sm:$0xff] %v6072
        %6075 = vst [vmem:[%s520 + $0x8] sm:$0xff] %v6073
        %v6076 = vld [vmem:[#allocation8] sm:$0xff]
        %v6077 = vld [vmem:[#allocation8 + $0x8] sm:$0xff]
        %v6078 = vperm.slane %v5725, 1
        %v6079 = vadd.f32 %v4982, %v6078
        %v6080 = vadd.f32 %v4997, %v6078
        %6082 = vset.pattern.permute.xlu0 1
        %6083 = vperm.xlu0 %6082, %v6076
        %v6084 = vpop.permute.xlu0 %6083
        %6087 = vset.pattern.permute.xlu0 1
        %6088 = vperm.xlu0 %6087, %v6077
        %v6089 = vpop.permute.xlu0 %6088
        %v6091 = vadd.f32 %v6079, %v6084
        %v6092 = vadd.f32 %v6080, %v6089
        %v6093 = vmul.f32 %v6091, 0.33333334
        %v6094 = vmul.f32 %v6092, 0.33333334
        %s6095 = scalar_lea.vmem %s476, 16 [#allocation9]
        %v6096 = vld [vmem:[%s6095] sm:$0xff]
        %v6097 = vld [vmem:[%s6095 + $0x8] sm:$0xff]
        %v6098 = vld [vmem:[%s3586] sm:$0xff]
        %v6099 = vld [vmem:[%s3586 + $0x8] sm:$0xff]
        %v6100 = vmul.f32 %v6098, %v6093
        %v6101 = vmul.f32 %v6099, %v6094
        %v6102 = vadd.f32 %v6096, %v6100
        %v6103 = vadd.f32 %v6097, %v6101
        %s6104 = scalar_lea.vmem %s520, 16 [#allocation13]
        %6105 = vst [vmem:[%s6104] sm:$0xff] %v6102
        %6106 = vst [vmem:[%s6104 + $0x8] sm:$0xff] %v6103
        %v6107 = vld [vmem:[#allocation8] sm:$0xff]
        %v6108 = vld [vmem:[#allocation8 + $0x8] sm:$0xff]
        %v6109 = vperm.slane %v5725, 2
        %v6110 = vadd.f32 %v4982, %v6109
        %v6111 = vadd.f32 %v4997, %v6109
        %6113 = vset.pattern.permute.xlu0 2
        %6114 = vperm.xlu0 %6113, %v6107
        %v6115 = vpop.permute.xlu0 %6114
        %6118 = vset.pattern.permute.xlu0 2
        %6119 = vperm.xlu0 %6118, %v6108
        %v6120 = vpop.permute.xlu0 %6119
        %v6122 = vadd.f32 %v6110, %v6115
        %v6123 = vadd.f32 %v6111, %v6120
        %v6124 = vmul.f32 %v6122, 0.33333334
        %v6125 = vmul.f32 %v6123, 0.33333334
        %s6126 = scalar_lea.vmem %s476, 32 [#allocation9]
        %v6127 = vld [vmem:[%s6126] sm:$0xff]
        %v6128 = vld [vmem:[%s6126 + $0x8] sm:$0xff]
        %v6129 = vld [vmem:[%s3626] sm:$0xff]
        %v6130 = vld [vmem:[%s3626 + $0x8] sm:$0xff]
        %v6131 = vmul.f32 %v6129, %v6124
        %v6132 = vmul.f32 %v6130, %v6125
        %v6133 = vadd.f32 %v6127, %v6131
        %v6134 = vadd.f32 %v6128, %v6132
        %s6135 = scalar_lea.vmem %s520, 32 [#allocation13]
        %6136 = vst [vmem:[%s6135] sm:$0xff] %v6133
        %6137 = vst [vmem:[%s6135 + $0x8] sm:$0xff] %v6134
        %v6138 = vld [vmem:[#allocation8] sm:$0xff]
        %v6139 = vld [vmem:[#allocation8 + $0x8] sm:$0xff]
        %v6140 = vperm.slane %v5725, 3
        %v6141 = vadd.f32 %v4982, %v6140
        %v6142 = vadd.f32 %v4997, %v6140
        %6144 = vset.pattern.permute.xlu0 3
        %6145 = vperm.xlu0 %6144, %v6138
        %v6146 = vpop.permute.xlu0 %6145
        %6149 = vset.pattern.permute.xlu0 3
        %6150 = vperm.xlu0 %6149, %v6139
        %v6151 = vpop.permute.xlu0 %6150
        %v6153 = vadd.f32 %v6141, %v6146
        %v6154 = vadd.f32 %v6142, %v6151
        %v6155 = vmul.f32 %v6153, 0.33333334
        %v6156 = vmul.f32 %v6154, 0.33333334
        %s6157 = scalar_lea.vmem %s476, 48 [#allocation9]
        %v6158 = vld [vmem:[%s6157] sm:$0xff]
        %v6159 = vld [vmem:[%s6157 + $0x8] sm:$0xff]
        %v6160 = vld [vmem:[%s3666] sm:$0xff]
        %v6161 = vld [vmem:[%s3666 + $0x8] sm:$0xff]
        %v6162 = vmul.f32 %v6160, %v6155
        %v6163 = vmul.f32 %v6161, %v6156
        %v6164 = vadd.f32 %v6158, %v6162
        %v6165 = vadd.f32 %v6159, %v6163
        %s6166 = scalar_lea.vmem %s520, 48 [#allocation13]
        %6167 = vst [vmem:[%s6166] sm:$0xff] %v6164
        %6168 = vst [vmem:[%s6166 + $0x8] sm:$0xff] %v6165
        %v6169 = vld [vmem:[#allocation8] sm:$0xff]
        %v6170 = vld [vmem:[#allocation8 + $0x8] sm:$0xff]
        %v6171 = vperm.slane %v5725, 4
        %v6172 = vadd.f32 %v4982, %v6171
        %v6173 = vadd.f32 %v4997, %v6171
        %6175 = vset.pattern.permute.xlu0 4
        %6176 = vperm.xlu0 %6175, %v6169
        %v6177 = vpop.permute.xlu0 %6176
        %6180 = vset.pattern.permute.xlu0 4
        %6181 = vperm.xlu0 %6180, %v6170
        %v6182 = vpop.permute.xlu0 %6181
        %v6184 = vadd.f32 %v6172, %v6177
        %v6185 = vadd.f32 %v6173, %v6182
        %v6186 = vmul.f32 %v6184, 0.33333334
        %v6187 = vmul.f32 %v6185, 0.33333334
        %s6188 = scalar_lea.vmem %s476, 64 [#allocation9]
        %v6189 = vld [vmem:[%s6188] sm:$0xff]
        %v6190 = vld [vmem:[%s6188 + $0x8] sm:$0xff]
        %v6191 = vld [vmem:[%s3706] sm:$0xff]
        %v6192 = vld [vmem:[%s3706 + $0x8] sm:$0xff]
        %v6193 = vmul.f32 %v6191, %v6186
        %v6194 = vmul.f32 %v6192, %v6187
        %v6195 = vadd.f32 %v6189, %v6193
        %v6196 = vadd.f32 %v6190, %v6194
        %s6197 = scalar_lea.vmem %s520, 64 [#allocation13]
        %6198 = vst [vmem:[%s6197] sm:$0xff] %v6195
        %6199 = vst [vmem:[%s6197 + $0x8] sm:$0xff] %v6196
        %v6200 = vld [vmem:[#allocation8] sm:$0xff]
        %v6201 = vld [vmem:[#allocation8 + $0x8] sm:$0xff]
        %v6202 = vperm.slane %v5725, 5
        %v6203 = vadd.f32 %v4982, %v6202
        %v6204 = vadd.f32 %v4997, %v6202
        %6206 = vset.pattern.permute.xlu0 5
        %6207 = vperm.xlu0 %6206, %v6200
        %v6208 = vpop.permute.xlu0 %6207
        %6211 = vset.pattern.permute.xlu0 5
        %6212 = vperm.xlu0 %6211, %v6201
        %v6213 = vpop.permute.xlu0 %6212
        %v6215 = vadd.f32 %v6203, %v6208
        %v6216 = vadd.f32 %v6204, %v6213
        %v6217 = vmul.f32 %v6215, 0.33333334
        %v6218 = vmul.f32 %v6216, 0.33333334
        %s6219 = scalar_lea.vmem %s476, 80 [#allocation9]
        %v6220 = vld [vmem:[%s6219] sm:$0xff]
        %v6221 = vld [vmem:[%s6219 + $0x8] sm:$0xff]
        %v6222 = vld [vmem:[%s3746] sm:$0xff]
        %v6223 = vld [vmem:[%s3746 + $0x8] sm:$0xff]
        %v6224 = vmul.f32 %v6222, %v6217
        %v6225 = vmul.f32 %v6223, %v6218
        %v6226 = vadd.f32 %v6220, %v6224
        %v6227 = vadd.f32 %v6221, %v6225
        %s6228 = scalar_lea.vmem %s520, 80 [#allocation13]
        %6229 = vst [vmem:[%s6228] sm:$0xff] %v6226
        %6230 = vst [vmem:[%s6228 + $0x8] sm:$0xff] %v6227
        %v6231 = vld [vmem:[#allocation8] sm:$0xff]
        %v6232 = vld [vmem:[#allocation8 + $0x8] sm:$0xff]
        %v6233 = vperm.slane %v5725, 6
        %v6234 = vadd.f32 %v4982, %v6233
        %v6235 = vadd.f32 %v4997, %v6233
        %6237 = vset.pattern.permute.xlu0 6
        %6238 = vperm.xlu0 %6237, %v6231
        %v6239 = vpop.permute.xlu0 %6238
        %6242 = vset.pattern.permute.xlu0 6
        %6243 = vperm.xlu0 %6242, %v6232
        %v6244 = vpop.permute.xlu0 %6243
        %v6246 = vadd.f32 %v6234, %v6239
        %v6247 = vadd.f32 %v6235, %v6244
        %v6248 = vmul.f32 %v6246, 0.33333334
        %v6249 = vmul.f32 %v6247, 0.33333334
        %s6250 = scalar_lea.vmem %s476, 96 [#allocation9]
        %v6251 = vld [vmem:[%s6250] sm:$0xff]
        %v6252 = vld [vmem:[%s6250 + $0x8] sm:$0xff]
        %v6253 = vld [vmem:[%s3786] sm:$0xff]
        %v6254 = vld [vmem:[%s3786 + $0x8] sm:$0xff]
        %v6255 = vmul.f32 %v6253, %v6248
        %v6256 = vmul.f32 %v6254, %v6249
        %v6257 = vadd.f32 %v6251, %v6255
        %v6258 = vadd.f32 %v6252, %v6256
        %s6259 = scalar_lea.vmem %s520, 96 [#allocation13]
        %6260 = vst [vmem:[%s6259] sm:$0xff] %v6257
        %6261 = vst [vmem:[%s6259 + $0x8] sm:$0xff] %v6258
        %v6262 = vld [vmem:[#allocation8] sm:$0xff]
        %v6263 = vld [vmem:[#allocation8 + $0x8] sm:$0xff]
        %v6264 = vperm.slane %v5725, 7
        %v6265 = vadd.f32 %v4982, %v6264
        %v6266 = vadd.f32 %v4997, %v6264
        %6268 = vset.pattern.permute.xlu0 7
        %6269 = vperm.xlu0 %6268, %v6262
        %v6270 = vpop.permute.xlu0 %6269
        %6273 = vset.pattern.permute.xlu0 7
        %6274 = vperm.xlu0 %6273, %v6263
        %v6275 = vpop.permute.xlu0 %6274
        %v6277 = vadd.f32 %v6265, %v6270
        %v6278 = vadd.f32 %v6266, %v6275
        %v6279 = vmul.f32 %v6277, 0.33333334
        %v6280 = vmul.f32 %v6278, 0.33333334
        %s6281 = scalar_lea.vmem %s476, 112 [#allocation9]
        %v6282 = vld [vmem:[%s6281] sm:$0xff]
        %v6283 = vld [vmem:[%s6281 + $0x8] sm:$0xff]
        %v6284 = vld [vmem:[%s3826] sm:$0xff]
        %v6285 = vld [vmem:[%s3826 + $0x8] sm:$0xff]
        %v6286 = vmul.f32 %v6284, %v6279
        %v6287 = vmul.f32 %v6285, %v6280
        %v6288 = vadd.f32 %v6282, %v6286
        %v6289 = vadd.f32 %v6283, %v6287
        %s6290 = scalar_lea.vmem %s520, 112 [#allocation13]
        %6291 = vst [vmem:[%s6290] sm:$0xff] %v6288
        %6292 = vst [vmem:[%s6290 + $0x8] sm:$0xff] %v6289
        %v6293 = vld [vmem:[#allocation8] sm:$0xff]
        %v6294 = vld [vmem:[#allocation8 + $0x8] sm:$0xff]
        %v6295 = vperm.slane %v5740, 0
        %v6296 = vadd.f32 %v4982, %v6295
        %v6297 = vadd.f32 %v4997, %v6295
        %6299 = vset.pattern.permute.xlu0 8
        %6300 = vperm.xlu0 %6299, %v6293
        %v6301 = vpop.permute.xlu0 %6300
        %6304 = vset.pattern.permute.xlu0 8
        %6305 = vperm.xlu0 %6304, %v6294
        %v6306 = vpop.permute.xlu0 %6305
        %v6308 = vadd.f32 %v6296, %v6301
        %v6309 = vadd.f32 %v6297, %v6306
        %v6310 = vmul.f32 %v6308, 0.33333334
        %v6311 = vmul.f32 %v6309, 0.33333334
        %s6312 = scalar_lea.vmem %s476, 128 [#allocation9]
        %v6313 = vld [vmem:[%s6312] sm:$0xff]
        %v6314 = vld [vmem:[%s6312 + $0x8] sm:$0xff]
        %v6315 = vld [vmem:[%s3866] sm:$0xff]
        %v6316 = vld [vmem:[%s3866 + $0x8] sm:$0xff]
        %v6317 = vmul.f32 %v6315, %v6310
        %v6318 = vmul.f32 %v6316, %v6311
        %v6319 = vadd.f32 %v6313, %v6317
        %v6320 = vadd.f32 %v6314, %v6318
        %s6321 = scalar_lea.vmem %s520, 128 [#allocation13]
        %6322 = vst [vmem:[%s6321] sm:$0xff] %v6319
        %6323 = vst [vmem:[%s6321 + $0x8] sm:$0xff] %v6320
        %v6324 = vld [vmem:[#allocation8] sm:$0xff]
        %v6325 = vld [vmem:[#allocation8 + $0x8] sm:$0xff]
        %v6326 = vperm.slane %v5740, 1
        %v6327 = vadd.f32 %v4982, %v6326
        %v6328 = vadd.f32 %v4997, %v6326
        %6330 = vset.pattern.permute.xlu0 9
        %6331 = vperm.xlu0 %6330, %v6324
        %v6332 = vpop.permute.xlu0 %6331
        %6335 = vset.pattern.permute.xlu0 9
        %6336 = vperm.xlu0 %6335, %v6325
        %v6337 = vpop.permute.xlu0 %6336
        %v6339 = vadd.f32 %v6327, %v6332
        %v6340 = vadd.f32 %v6328, %v6337
        %v6341 = vmul.f32 %v6339, 0.33333334
        %v6342 = vmul.f32 %v6340, 0.33333334
        %s6343 = scalar_lea.vmem %s476, 144 [#allocation9]
        %v6344 = vld [vmem:[%s6343] sm:$0xff]
        %v6345 = vld [vmem:[%s6343 + $0x8] sm:$0xff]
        %v6346 = vld [vmem:[%s3906] sm:$0xff]
        %v6347 = vld [vmem:[%s3906 + $0x8] sm:$0xff]
        %v6348 = vmul.f32 %v6346, %v6341
        %v6349 = vmul.f32 %v6347, %v6342
        %v6350 = vadd.f32 %v6344, %v6348
        %v6351 = vadd.f32 %v6345, %v6349
        %s6352 = scalar_lea.vmem %s520, 144 [#allocation13]
        %6353 = vst [vmem:[%s6352] sm:$0xff] %v6350
        %6354 = vst [vmem:[%s6352 + $0x8] sm:$0xff] %v6351
        %v6355 = vld [vmem:[#allocation8] sm:$0xff]
        %v6356 = vld [vmem:[#allocation8 + $0x8] sm:$0xff]
        %v6357 = vperm.slane %v5740, 2
        %v6358 = vadd.f32 %v4982, %v6357
        %v6359 = vadd.f32 %v4997, %v6357
        %6361 = vset.pattern.permute.xlu0 10
        %6362 = vperm.xlu0 %6361, %v6355
        %v6363 = vpop.permute.xlu0 %6362
        %6366 = vset.pattern.permute.xlu0 10
        %6367 = vperm.xlu0 %6366, %v6356
        %v6368 = vpop.permute.xlu0 %6367
        %v6370 = vadd.f32 %v6358, %v6363
        %v6371 = vadd.f32 %v6359, %v6368
        %v6372 = vmul.f32 %v6370, 0.33333334
        %v6373 = vmul.f32 %v6371, 0.33333334
        %s6374 = scalar_lea.vmem %s476, 160 [#allocation9]
        %v6375 = vld [vmem:[%s6374] sm:$0xff]
        %v6376 = vld [vmem:[%s6374 + $0x8] sm:$0xff]
        %v6377 = vld [vmem:[%s3946] sm:$0xff]
        %v6378 = vld [vmem:[%s3946 + $0x8] sm:$0xff]
        %v6379 = vmul.f32 %v6377, %v6372
        %v6380 = vmul.f32 %v6378, %v6373
        %v6381 = vadd.f32 %v6375, %v6379
        %v6382 = vadd.f32 %v6376, %v6380
        %s6383 = scalar_lea.vmem %s520, 160 [#allocation13]
        %6384 = vst [vmem:[%s6383] sm:$0xff] %v6381
        %6385 = vst [vmem:[%s6383 + $0x8] sm:$0xff] %v6382
        %v6386 = vld [vmem:[#allocation8] sm:$0xff]
        %v6387 = vld [vmem:[#allocation8 + $0x8] sm:$0xff]
        %v6388 = vperm.slane %v5740, 3
        %v6389 = vadd.f32 %v4982, %v6388
        %v6390 = vadd.f32 %v4997, %v6388
        %6392 = vset.pattern.permute.xlu0 11
        %6393 = vperm.xlu0 %6392, %v6386
        %v6394 = vpop.permute.xlu0 %6393
        %6397 = vset.pattern.permute.xlu0 11
        %6398 = vperm.xlu0 %6397, %v6387
        %v6399 = vpop.permute.xlu0 %6398
        %v6401 = vadd.f32 %v6389, %v6394
        %v6402 = vadd.f32 %v6390, %v6399
        %v6403 = vmul.f32 %v6401, 0.33333334
        %v6404 = vmul.f32 %v6402, 0.33333334
        %s6405 = scalar_lea.vmem %s476, 176 [#allocation9]
        %v6406 = vld [vmem:[%s6405] sm:$0xff]
        %v6407 = vld [vmem:[%s6405 + $0x8] sm:$0xff]
        %v6408 = vld [vmem:[%s3986] sm:$0xff]
        %v6409 = vld [vmem:[%s3986 + $0x8] sm:$0xff]
        %v6410 = vmul.f32 %v6408, %v6403
        %v6411 = vmul.f32 %v6409, %v6404
        %v6412 = vadd.f32 %v6406, %v6410
        %v6413 = vadd.f32 %v6407, %v6411
        %s6414 = scalar_lea.vmem %s520, 176 [#allocation13]
        %6415 = vst [vmem:[%s6414] sm:$0xff] %v6412
        %6416 = vst [vmem:[%s6414 + $0x8] sm:$0xff] %v6413
        %v6417 = vld [vmem:[#allocation8] sm:$0xff]
        %v6418 = vld [vmem:[#allocation8 + $0x8] sm:$0xff]
        %v6419 = vperm.slane %v5740, 4
        %v6420 = vadd.f32 %v4982, %v6419
        %v6421 = vadd.f32 %v4997, %v6419
        %6423 = vset.pattern.permute.xlu0 12
        %6424 = vperm.xlu0 %6423, %v6417
        %v6425 = vpop.permute.xlu0 %6424
        %6428 = vset.pattern.permute.xlu0 12
        %6429 = vperm.xlu0 %6428, %v6418
        %v6430 = vpop.permute.xlu0 %6429
        %v6432 = vadd.f32 %v6420, %v6425
        %v6433 = vadd.f32 %v6421, %v6430
        %v6434 = vmul.f32 %v6432, 0.33333334
        %v6435 = vmul.f32 %v6433, 0.33333334
        %s6436 = scalar_lea.vmem %s476, 192 [#allocation9]
        %v6437 = vld [vmem:[%s6436] sm:$0xff]
        %v6438 = vld [vmem:[%s6436 + $0x8] sm:$0xff]
        %v6439 = vld [vmem:[%s4026] sm:$0xff]
        %v6440 = vld [vmem:[%s4026 + $0x8] sm:$0xff]
        %v6441 = vmul.f32 %v6439, %v6434
        %v6442 = vmul.f32 %v6440, %v6435
        %v6443 = vadd.f32 %v6437, %v6441
        %v6444 = vadd.f32 %v6438, %v6442
        %s6445 = scalar_lea.vmem %s520, 192 [#allocation13]
        %6446 = vst [vmem:[%s6445] sm:$0xff] %v6443
        %6447 = vst [vmem:[%s6445 + $0x8] sm:$0xff] %v6444
        %v6448 = vld [vmem:[#allocation8] sm:$0xff]
        %v6449 = vld [vmem:[#allocation8 + $0x8] sm:$0xff]
        %v6450 = vperm.slane %v5740, 5
        %v6451 = vadd.f32 %v4982, %v6450
        %v6452 = vadd.f32 %v4997, %v6450
        %6454 = vset.pattern.permute.xlu0 13
        %6455 = vperm.xlu0 %6454, %v6448
        %v6456 = vpop.permute.xlu0 %6455
        %6459 = vset.pattern.permute.xlu0 13
        %6460 = vperm.xlu0 %6459, %v6449
        %v6461 = vpop.permute.xlu0 %6460
        %v6463 = vadd.f32 %v6451, %v6456
        %v6464 = vadd.f32 %v6452, %v6461
        %v6465 = vmul.f32 %v6463, 0.33333334
        %v6466 = vmul.f32 %v6464, 0.33333334
        %s6467 = scalar_lea.vmem %s476, 208 [#allocation9]
        %v6468 = vld [vmem:[%s6467] sm:$0xff]
        %v6469 = vld [vmem:[%s6467 + $0x8] sm:$0xff]
        %v6470 = vld [vmem:[%s4066] sm:$0xff]
        %v6471 = vld [vmem:[%s4066 + $0x8] sm:$0xff]
        %v6472 = vmul.f32 %v6470, %v6465
        %v6473 = vmul.f32 %v6471, %v6466
        %v6474 = vadd.f32 %v6468, %v6472
        %v6475 = vadd.f32 %v6469, %v6473
        %s6476 = scalar_lea.vmem %s520, 208 [#allocation13]
        %6477 = vst [vmem:[%s6476] sm:$0xff] %v6474
        %6478 = vst [vmem:[%s6476 + $0x8] sm:$0xff] %v6475
        %v6479 = vld [vmem:[#allocation8] sm:$0xff]
        %v6480 = vld [vmem:[#allocation8 + $0x8] sm:$0xff]
        %v6481 = vperm.slane %v5740, 6
        %v6482 = vadd.f32 %v4982, %v6481
        %v6483 = vadd.f32 %v4997, %v6481
        %6485 = vset.pattern.permute.xlu0 14
        %6486 = vperm.xlu0 %6485, %v6479
        %v6487 = vpop.permute.xlu0 %6486
        %6490 = vset.pattern.permute.xlu0 14
        %6491 = vperm.xlu0 %6490, %v6480
        %v6492 = vpop.permute.xlu0 %6491
        %v6494 = vadd.f32 %v6482, %v6487
        %v6495 = vadd.f32 %v6483, %v6492
        %v6496 = vmul.f32 %v6494, 0.33333334
        %v6497 = vmul.f32 %v6495, 0.33333334
        %s6498 = scalar_lea.vmem %s476, 224 [#allocation9]
        %v6499 = vld [vmem:[%s6498] sm:$0xff]
        %v6500 = vld [vmem:[%s6498 + $0x8] sm:$0xff]
        %v6501 = vld [vmem:[%s4106] sm:$0xff]
        %v6502 = vld [vmem:[%s4106 + $0x8] sm:$0xff]
        %v6503 = vmul.f32 %v6501, %v6496
        %v6504 = vmul.f32 %v6502, %v6497
        %v6505 = vadd.f32 %v6499, %v6503
        %v6506 = vadd.f32 %v6500, %v6504
        %s6507 = scalar_lea.vmem %s520, 224 [#allocation13]
        %6508 = vst [vmem:[%s6507] sm:$0xff] %v6505
        %6509 = vst [vmem:[%s6507 + $0x8] sm:$0xff] %v6506
        %v6510 = vld [vmem:[#allocation8] sm:$0xff]
        %v6511 = vld [vmem:[#allocation8 + $0x8] sm:$0xff]
        %v6512 = vperm.slane %v5740, 7
        %v6513 = vadd.f32 %v4982, %v6512
        %v6514 = vadd.f32 %v4997, %v6512
        %6516 = vset.pattern.permute.xlu0 15
        %6517 = vperm.xlu0 %6516, %v6510
        %v6518 = vpop.permute.xlu0 %6517
        %6521 = vset.pattern.permute.xlu0 15
        %6522 = vperm.xlu0 %6521, %v6511
        %v6523 = vpop.permute.xlu0 %6522
        %v6525 = vadd.f32 %v6513, %v6518
        %v6526 = vadd.f32 %v6514, %v6523
        %v6527 = vmul.f32 %v6525, 0.33333334
        %v6528 = vmul.f32 %v6526, 0.33333334
        %s6529 = scalar_lea.vmem %s476, 240 [#allocation9]
        %v6530 = vld [vmem:[%s6529] sm:$0xff]
        %v6531 = vld [vmem:[%s6529 + $0x8] sm:$0xff]
        %v6532 = vld [vmem:[%s4146] sm:$0xff]
        %v6533 = vld [vmem:[%s4146 + $0x8] sm:$0xff]
        %v6534 = vmul.f32 %v6532, %v6527
        %v6535 = vmul.f32 %v6533, %v6528
        %v6536 = vadd.f32 %v6530, %v6534
        %v6537 = vadd.f32 %v6531, %v6535
        %s6538 = scalar_lea.vmem %s520, 240 [#allocation13]
        %6539 = vst [vmem:[%s6538] sm:$0xff] %v6536
        %6540 = vst [vmem:[%s6538 + $0x8] sm:$0xff] %v6537
        %s6541 = sand.u32 %s230, 1
        %s6542 = scalar_lea.sflag [#allocation11], %s6541
        %s6543 = sand.u32 %s230, 1
        %s6544 = smul.addr %s6543, 256
        %s6545 = scalar_lea.vmem [#allocation13], %s6544
        // Predicated region
        $region119: #{fem_forward.1} parent=85 // pred_check
          %p6546 = pneg %p240
        $region120: #{fem_forward.1} parent=85 // pred_check_branch
          %6548 = sbr.rel (%p6546) target = $region122
        $region121: #{fem_forward.1} parent=85 // pred_region
          %6550 = vsyncadd %s6542, 0
          %s6551 = smul.addr %s27, 128
          %s6552 = sadd.s32 %s28, %s6551
          %s6553 = smul.addr %s6552, 8
          %s6554 = scalar_lea.hbm %s8, %s6553
          %s6555 = sshll.u32 %s6545, 4
          %s6556 = int_to_ptr.vmem [resolvable:$true] %s6555
          %s6557 = sshll.u32 %s6554, 4
          %s6558 = int_to_ptr.hbm [resolvable:$true] %s6557
          %6563 = dma.vmem_to_hbm [thread:$0]  %s6556, 4096, %s6558, %s6542, 128, 512, 8
        $region122: #{fem_forward.1} parent=85 // pred_fallthru
          _
      $region86: #{fem_forward.1} parent=5 // pred_fallthru
        _
      %p6564 = scmp.le.s32.totalorder 2, %s18
      // Predicated region
      $region123: #{fem_forward.1} parent=5 // pred_check
        %p6565 = pneg %p6564
      $region124: #{fem_forward.1} parent=5 // pred_check_branch
        %6567 = sbr.rel (%p6565) target = $region126
      $region125: #{fem_forward.1} parent=5 // pred_region
        %s6568 = ssub.s32 %s18, 2
        // Predicated region
        $region127: #{fem_forward.1} parent=125 // pred_check
          %p6569 = pneg %p246
        $region128: #{fem_forward.1} parent=125 // pred_check_branch
          %6571 = sbr.rel (%p6569) target = $region130
        $region129: #{fem_forward.1} parent=125 // pred_region
          %s6572 = sand.u32 %s231, 1
          %s6573 = scalar_lea.sflag [#allocation11], %s6572
          %s6574 = sand.u32 %s231, 1
          %s6575 = smul.addr %s6574, 256
          %s6576 = scalar_lea.vmem [#allocation13], %s6575
          %6578 = dma.done %s6573, 4096
        $region130: #{fem_forward.1} parent=125 // pred_fallthru
          _
      $region126: #{fem_forward.1} parent=5 // pred_fallthru
        _
    $region6: #{fem_forward.1} parent=1 // loop_footer
      %s22 = sadd.s32 1, %s18
    $region7: #{fem_forward.1} parent=1 // loop_footer_branch
      %17 = sbr.rel target = $region3
    $region8: #{fem_forward.1} parent=1 // loop_exit
      _
    %6579 = vsyncpa [#allocation11], 1
    %s6580 = scalar_lea.sflag [#allocation11], 1
    %6581 = vsyncpa %s6580, 1
    %6582 = vsyncpa [#allocation12], 1
    %s6583 = scalar_lea.sflag [#allocation12], 1
    %6584 = vsyncpa %s6583, 1

</llo_original>
